<compile_context>
chip_gen: v6e
topology: v6e:2x2x1
jax: 0.10.0
libtpu: 0.0.40
codegen_flags: <defaults>
</compile_context>

<pallas_src>
import functools

import numpy as np
import jax
import jax.numpy as jnp
from jax.experimental import pallas as pl
from jax.experimental.pallas import tpu as pltpu

MAX_DEGREE = 10  # torch_geometric MFConv default max_degree

_CPARAMS = pltpu.CompilerParams(dimension_semantics=("arbitrary",))


def _full_spec(shape):
    nd = len(shape)
    return pl.BlockSpec(shape, lambda i, _nd=nd: (0,) * _nd)


# ------------------------------ fused kernel ----------------------------------

def _mfconv_fused(xs, xd, A, p):
    """MFConv with per-degree weights collapsed into one wide matmul + VPU select.

    out_i = W_{deg(i)} (sum_{j in N(i)} xs_j) + b_{deg(i)} + Wr_{deg(i)} xd_i
    """
    h = jnp.dot(A, xs, preferred_element_type=jnp.float32)                       # (Nd, Fs)
    deg = jnp.minimum(jnp.sum(A, axis=1, keepdims=True),
                      float(MAX_DEGREE)).astype(jnp.int32)                       # (Nd, 1) int32
    big = (jnp.dot(h, p["w1"], preferred_element_type=jnp.float32)
           + jnp.dot(xd, p["w2"], preferred_element_type=jnp.float32)
           + p["b"])                                                             # (Nd, (D+1)*H)
    hdim = p["w1"].shape[1] // (MAX_DEGREE + 1)
    out = jnp.zeros((xd.shape[0], hdim), jnp.float32)
    for d in range(MAX_DEGREE + 1):                                              # one-hot select
        out = out + jnp.where(deg == d, big[:, d * hdim:(d + 1) * hdim], 0.0)
    return out


def _masked_attn(q, k, v, M):
    # q is pre-scaled (1/sqrt(H) folded into wq at pack time).
    scores = jax.lax.dot_general(q, k, (((1,), (1,)), ((), ())),
                                 preferred_element_type=jnp.float32)             # (Nd, Ns)
    has_edge = jnp.sum(M, axis=1, keepdims=True) > 0.0
    masked = jnp.where(M > 0.0, scores, jnp.float32(-1e30))
    rowmax = jnp.where(has_edge, jnp.max(masked, axis=1, keepdims=True), 0.0)
    e = jnp.where(M > 0.0, jnp.exp(masked - rowmax), 0.0)                        # exp on masked
    alpha = e / (jnp.sum(e, axis=1, keepdims=True) + 1e-16)                      # PyG softmax eps
    return jnp.dot(alpha, v, preferred_element_type=jnp.float32)


def _transformer_pair(xg, xdn, xup, Mdg, Mug, p):
    """Two TransformerConv relations (down->god, up->god) sharing the destination, fused."""
    hdim = p["wqs"].shape[1] // 3
    qs = jnp.dot(xg, p["wqs"], preferred_element_type=jnp.float32) + p["bqs"]    # (Ng, 3H)
    kvd = jnp.dot(xdn, p["wkv_d"], preferred_element_type=jnp.float32) + p["bkv_d"]
    kvu = jnp.dot(xup, p["wkv_u"], preferred_element_type=jnp.float32) + p["bkv_u"]
    out = _masked_attn(qs[:, :hdim], kvd[:, :hdim], kvd[:, hdim:], Mdg)
    out = out + _masked_attn(qs[:, hdim:2 * hdim], kvu[:, :hdim], kvu[:, hdim:], Mug)
    return out + qs[:, 2 * hdim:]                                                # merged skips


def _dense(x, p):
    return jnp.dot(x, p["wt"], preferred_element_type=jnp.float32) + p["b"]


def _fused_forward_kernel(*refs, treedef, n_in):
    in_vals = [r[...] for r in refs[:n_in]]
    out_up_ref, out_down_ref, out_god_ref = refs[n_in:]
    inp = jax.tree_util.tree_unflatten(treedef, in_vals)

    x_up = inp["x"]["up"]
    x_down = inp["x"]["down"]
    x_god = inp["x"]["god"]
    adj = inp["adj"]
    # 'sectornode' features are dropped (never a destination type), as in the original module.

    for lp in inp["net"]["layers"]:
        new_up = (_mfconv_fused(x_up, x_up, adj["up_up"], lp["mf_uu"])
                  + _mfconv_fused(x_down, x_up, adj["down_up"], lp["mf_du"]))
        new_down = (_mfconv_fused(x_down, x_down, adj["down_down"], lp["mf_dd"])
                    + _mfconv_fused(x_up, x_down, adj["up_down"], lp["mf_ud"]))
        new_god = _transformer_pair(x_god, x_down, x_up,
                                    adj["down_god"], adj["up_god"], lp["tr_god"])
        # dropout(p=0.5) -> identity (inference)
        x_up = _dense(new_up, lp["lin_up"])
        x_down = _dense(new_down, lp["lin_down"])
        x_god = _dense(new_god, lp["lin_god"])

    heads = inp["net"]["heads"]
    out_up_ref[...] = jnp.tanh(_dense(x_up, heads["up"]))
    out_down_ref[...] = jnp.tanh(_dense(x_down, heads["down"]))
    out_god_ref[...] = jnp.tanh(_dense(x_god, heads["god"]))


# ------------------------------ weight packing ---------------------------------

def _pack_mfconv(p):
    d1, fs, h = p["w"].shape
    fd = p["wr"].shape[1]
    return {"w1": jnp.transpose(p["w"], (1, 0, 2)).reshape(fs, d1 * h),
            "w2": jnp.transpose(p["wr"], (1, 0, 2)).reshape(fd, d1 * h),
            "b": p["b"].reshape(1, d1 * h)}


def _pack_transformer_pair(p_dg, p_ug):
    h = p_dg["wq"].shape[1]
    scale = jnp.float32(1.0 / np.sqrt(h))
    return {
        "wqs": jnp.concatenate([p_dg["wq"] * scale, p_ug["wq"] * scale,
                                p_dg["ws"] + p_ug["ws"]], axis=1),
        "bqs": jnp.concatenate([p_dg["bq"] * scale, p_ug["bq"] * scale,
                                p_dg["bs"] + p_ug["bs"]], axis=1),
        "wkv_d": jnp.concatenate([p_dg["wk"], p_dg["wv"]], axis=1),
        "bkv_d": jnp.concatenate([p_dg["bk"], p_dg["bv"]], axis=1),
        "wkv_u": jnp.concatenate([p_ug["wk"], p_ug["wv"]], axis=1),
        "bkv_u": jnp.concatenate([p_ug["bk"], p_ug["bv"]], axis=1),
    }


def _pack_params(params):
    layers = []
    for lp in params["layers"]:
        layers.append({
            "mf_uu": _pack_mfconv(lp["mf_uu"]),
            "mf_dd": _pack_mfconv(lp["mf_dd"]),
            "mf_du": _pack_mfconv(lp["mf_du"]),
            "mf_ud": _pack_mfconv(lp["mf_ud"]),
            "tr_god": _pack_transformer_pair(lp["tr_dg"], lp["tr_ug"]),
            "lin_up": lp["lin_up"],
            "lin_down": lp["lin_down"],
            "lin_god": lp["lin_god"],
        })
    return {"layers": layers,
            "heads": {"up": params["lins2"]["phylonodes_up"],
                      "down": params["lins2"]["phylonodes_down"],
                      "god": params["lins2"]["godnode"]}}


# ------------------------------ pallas wrapper ----------------------------------

def hetero_gcn_forward_pallas(params, x_dict, adj_dict, out_channels):
    inputs = {
        "x": {"up": x_dict["phylonodes_up"],
              "down": x_dict["phylonodes_down"],
              "god": x_dict["godnode"]},
        "adj": {k: adj_dict[k] for k in
                ("up_up", "down_down", "down_up", "up_down", "down_god", "up_god")},
        "net": _pack_params(params),
    }
    leaves, treedef = jax.tree_util.tree_flatten(inputs)

    n_up = x_dict["phylonodes_up"].shape[0]
    n_down = x_dict["phylonodes_down"].shape[0]
    n_god = x_dict["godnode"].shape[0]
    out_shapes = ((n_up, out_channels), (n_down, out_channels), (n_god, out_channels))

    kernel = functools.partial(_fused_forward_kernel, treedef=treedef, n_in=len(leaves))
    outs = pl.pallas_call(
        kernel,
        out_shape=tuple(jax.ShapeDtypeStruct(s, jnp.float32) for s in out_shapes),
        grid=(1,),
        in_specs=[_full_spec(l.shape) for l in leaves],
        out_specs=tuple(_full_spec(s) for s in out_shapes),
        compiler_params=_CPARAMS,
    )(*leaves)
    return {"phylonodes_up": outs[0], "phylonodes_down": outs[1], "godnode": outs[2]}


# ------------------------------ pure-JAX reference ------------------------------

def ref_dense(x, wt, b, activation=None):
    y = x @ wt + b
    return jnp.tanh(y) if activation == "tanh" else y


def ref_mfconv(x_src, x_dst, adj, p):
    h = adj @ x_src
    deg = jnp.minimum(jnp.sum(adj, axis=1, keepdims=True), float(MAX_DEGREE))
    out = jnp.zeros((x_dst.shape[0], p["w"].shape[-1]), jnp.float32)
    for d in range(MAX_DEGREE + 1):
        r = h @ p["w"][d] + p["b"][d][None, :] + x_dst @ p["wr"][d]
        out = out + jnp.where(deg == float(d), r, 0.0)
    return out


def ref_transformerconv(x_src, x_dst, mask, p):
    hdim = p["wq"].shape[1]
    q = x_dst @ p["wq"] + p["bq"]
    k = x_src @ p["wk"] + p["bk"]
    v = x_src @ p["wv"] + p["bv"]
    scores = (q @ k.T) / np.sqrt(hdim)
    has = jnp.sum(mask, axis=1, keepdims=True) > 0
    masked = jnp.where(mask > 0, scores, -1e30)
    rowmax = jnp.where(has, jnp.max(masked, axis=1, keepdims=True), 0.0)
    e = jnp.where(mask > 0, jnp.exp(masked - rowmax), 0.0)
    alpha = e / (jnp.sum(e, axis=1, keepdims=True) + 1e-16)
    return alpha @ v + x_dst @ p["ws"] + p["bs"]


def hetero_gcn_forward_ref(params, x_dict, adj_dict):
    x_up = x_dict["phylonodes_up"]
    x_down = x_dict["phylonodes_down"]
    x_god = x_dict["godnode"]
    for lp in params["layers"]:
        new_up = (ref_mfconv(x_up, x_up, adj_dict["up_up"], lp["mf_uu"])
                  + ref_mfconv(x_down, x_up, adj_dict["down_up"], lp["mf_du"]))
        new_down = (ref_mfconv(x_down, x_down, adj_dict["down_down"], lp["mf_dd"])
                    + ref_mfconv(x_up, x_down, adj_dict["up_down"], lp["mf_ud"]))
        new_god = (ref_transformerconv(x_down, x_god, adj_dict["down_god"], lp["tr_dg"])
                   + ref_transformerconv(x_up, x_god, adj_dict["up_god"], lp["tr_ug"]))
        x_up = ref_dense(new_up, lp["lin_up"]["wt"], lp["lin_up"]["b"])
        x_down = ref_dense(new_down, lp["lin_down"]["wt"], lp["lin_down"]["b"])
        x_god = ref_dense(new_god, lp["lin_god"]["wt"], lp["lin_god"]["b"])
    out = {}
    for key, x in (("phylonodes_up", x_up), ("phylonodes_down", x_down), ("godnode", x_god)):
        p2 = params["lins2"][key]
        out[key] = ref_dense(x, p2["wt"], p2["b"], activation="tanh")
    return out


# ------------------------------ parameters --------------------------------------

def _dense_params(key, fin, fout):
    k1, k2 = jax.random.split(key)
    return {"wt": jax.random.normal(k1, (fin, fout), jnp.float32) / np.sqrt(fin),
            "b": jax.random.normal(k2, (1, fout), jnp.float32) * 0.1}


def _mfconv_params(key, fsrc, fdst, h):
    k1, k2, k3 = jax.random.split(key, 3)
    d1 = MAX_DEGREE + 1
    return {"w": jax.random.normal(k1, (d1, fsrc, h), jnp.float32) / np.sqrt(fsrc),
            "b": jax.random.normal(k2, (d1, h), jnp.float32) * 0.1,
            "wr": jax.random.normal(k3, (d1, fdst, h), jnp.float32) / np.sqrt(fdst)}


def _transformer_params(key, fsrc, fdst, h):
    ks = jax.random.split(key, 8)

    def lin(kw, kb, fin):
        return (jax.random.normal(kw, (fin, h), jnp.float32) / np.sqrt(fin),
                jax.random.normal(kb, (1, h), jnp.float32) * 0.1)

    wq, bq = lin(ks[0], ks[1], fdst)
    wk, bk = lin(ks[2], ks[3], fsrc)
    wv, bv = lin(ks[4], ks[5], fsrc)
    ws, bs = lin(ks[6], ks[7], fdst)
    return {"wq": wq, "bq": bq, "wk": wk, "bk": bk, "wv": wv, "bv": bv, "ws": ws, "bs": bs}


def init_params(key, in_dims, hidden, out_channels, num_layers):
    params = {"layers": [], "lins2": {}}
    dims = dict(in_dims)
    for _ in range(num_layers):
        key, *ks = jax.random.split(key, 10)
        lp = {
            "mf_uu": _mfconv_params(ks[0], dims["phylonodes_up"], dims["phylonodes_up"], hidden),
            "mf_dd": _mfconv_params(ks[1], dims["phylonodes_down"], dims["phylonodes_down"], hidden),
            "mf_du": _mfconv_params(ks[2], dims["phylonodes_down"], dims["phylonodes_up"], hidden),
            "mf_ud": _mfconv_params(ks[3], dims["phylonodes_up"], dims["phylonodes_down"], hidden),
            "tr_dg": _transformer_params(ks[4], dims["phylonodes_down"], dims["godnode"], hidden),
            "tr_ug": _transformer_params(ks[5], dims["phylonodes_up"], dims["godnode"], hidden),
            "lin_up": _dense_params(ks[6], hidden, hidden),
            "lin_down": _dense_params(ks[7], hidden, hidden),
            "lin_god": _dense_params(ks[8], hidden, hidden),
        }
        params["layers"].append(lp)
        dims = {"phylonodes_up": hidden, "phylonodes_down": hidden, "godnode": hidden}
    key, k1, k2, k3 = jax.random.split(key, 4)
    params["lins2"] = {"phylonodes_up": _dense_params(k1, hidden, out_channels),
                       "phylonodes_down": _dense_params(k2, hidden, out_channels),
                       "godnode": _dense_params(k3, hidden, out_channels)}
    return params


# ------------------------------ main ---------------------------------------------

if __name__ == "__main__":
    hidden, out_channels, num_layers = 32, 8, 2
    n_up, n_down, n_god, n_sector = 16, 16, 4, 8
    f_up, f_down, f_god, f_sector = 12, 12, 6, 6

    key = jax.random.PRNGKey(0)
    kx, kg, kp = jax.random.split(key, 3)

    kxs = jax.random.split(kx, 4)
    x_dict = {
        "phylonodes_up": jax.random.normal(kxs[0], (n_up, f_up), jnp.float32),
        "phylonodes_down": jax.random.normal(kxs[1], (n_down, f_down), jnp.float32),
        "godnode": jax.random.normal(kxs[2], (n_god, f_god), jnp.float32),
        "sectornode": jax.random.normal(kxs[3], (n_sector, f_sector), jnp.float32),
    }

    kgs = jax.random.split(kg, 6)
    adj_dict = {  # A[dst, src] in {0,1}
        "up_up": jax.random.bernoulli(kgs[0], 0.2, (n_up, n_up)).astype(jnp.float32),
        "down_down": jax.random.bernoulli(kgs[1], 0.2, (n_down, n_down)).astype(jnp.float32),
        "down_up": jax.random.bernoulli(kgs[2], 0.2, (n_up, n_down)).astype(jnp.float32),
        "up_down": jax.random.bernoulli(kgs[3], 0.2, (n_down, n_up)).astype(jnp.float32),
        "down_god": jax.random.bernoulli(kgs[4], 0.5, (n_god, n_down)).astype(jnp.float32),
        "up_god": jax.random.bernoulli(kgs[5], 0.5, (n_god, n_up)).astype(jnp.float32),
    }

    in_dims = {"phylonodes_up": f_up, "phylonodes_down": f_down, "godnode": f_god}
    params = init_params(kp, in_dims, hidden, out_channels, num_layers)

    out = hetero_gcn_forward_pallas(params, x_dict, adj_dict, out_channels)
    out = jax.block_until_ready(out)

    ref = hetero_gcn_forward_ref(params, x_dict, adj_dict)
    for k in out:
        o = np.asarray(out[k])
        assert np.all(np.isfinite(o))
        np.testing.assert_allclose(o, np.asarray(ref[k]), atol=1e-2, rtol=0)

    print("KERNEL_OK")
</pallas_src>

<mosaic_0001>
module attributes {stable_mosaic.version = 11 : i64} {
  func.func @_fused_forward_kernel(%arg0: i32, %arg1: memref<16x16xf32, #tpu.memory_space<vmem>>, %arg2: memref<4x16xf32, #tpu.memory_space<vmem>>, %arg3: memref<16x16xf32, #tpu.memory_space<vmem>>, %arg4: memref<16x16xf32, #tpu.memory_space<vmem>>, %arg5: memref<4x16xf32, #tpu.memory_space<vmem>>, %arg6: memref<16x16xf32, #tpu.memory_space<vmem>>, %arg7: memref<1x8xf32, #tpu.memory_space<vmem>>, %arg8: memref<32x8xf32, #tpu.memory_space<vmem>>, %arg9: memref<1x8xf32, #tpu.memory_space<vmem>>, %arg10: memref<32x8xf32, #tpu.memory_space<vmem>>, %arg11: memref<1x8xf32, #tpu.memory_space<vmem>>, %arg12: memref<32x8xf32, #tpu.memory_space<vmem>>, %arg13: memref<1x32xf32, #tpu.memory_space<vmem>>, %arg14: memref<32x32xf32, #tpu.memory_space<vmem>>, %arg15: memref<1x32xf32, #tpu.memory_space<vmem>>, %arg16: memref<32x32xf32, #tpu.memory_space<vmem>>, %arg17: memref<1x32xf32, #tpu.memory_space<vmem>>, %arg18: memref<32x32xf32, #tpu.memory_space<vmem>>, %arg19: memref<1x352xf32, #tpu.memory_space<vmem>>, %arg20: memref<12x352xf32, #tpu.memory_space<vmem>>, %arg21: memref<12x352xf32, #tpu.memory_space<vmem>>, %arg22: memref<1x352xf32, #tpu.memory_space<vmem>>, %arg23: memref<12x352xf32, #tpu.memory_space<vmem>>, %arg24: memref<12x352xf32, #tpu.memory_space<vmem>>, %arg25: memref<1x352xf32, #tpu.memory_space<vmem>>, %arg26: memref<12x352xf32, #tpu.memory_space<vmem>>, %arg27: memref<12x352xf32, #tpu.memory_space<vmem>>, %arg28: memref<1x352xf32, #tpu.memory_space<vmem>>, %arg29: memref<12x352xf32, #tpu.memory_space<vmem>>, %arg30: memref<12x352xf32, #tpu.memory_space<vmem>>, %arg31: memref<1x64xf32, #tpu.memory_space<vmem>>, %arg32: memref<1x64xf32, #tpu.memory_space<vmem>>, %arg33: memref<1x96xf32, #tpu.memory_space<vmem>>, %arg34: memref<12x64xf32, #tpu.memory_space<vmem>>, %arg35: memref<12x64xf32, #tpu.memory_space<vmem>>, %arg36: memref<6x96xf32, #tpu.memory_space<vmem>>, %arg37: memref<1x32xf32, #tpu.memory_space<vmem>>, %arg38: memref<32x32xf32, #tpu.memory_space<vmem>>, %arg39: memref<1x32xf32, #tpu.memory_space<vmem>>, %arg40: memref<32x32xf32, #tpu.memory_space<vmem>>, %arg41: memref<1x32xf32, #tpu.memory_space<vmem>>, %arg42: memref<32x32xf32, #tpu.memory_space<vmem>>, %arg43: memref<1x352xf32, #tpu.memory_space<vmem>>, %arg44: memref<32x352xf32, #tpu.memory_space<vmem>>, %arg45: memref<32x352xf32, #tpu.memory_space<vmem>>, %arg46: memref<1x352xf32, #tpu.memory_space<vmem>>, %arg47: memref<32x352xf32, #tpu.memory_space<vmem>>, %arg48: memref<32x352xf32, #tpu.memory_space<vmem>>, %arg49: memref<1x352xf32, #tpu.memory_space<vmem>>, %arg50: memref<32x352xf32, #tpu.memory_space<vmem>>, %arg51: memref<32x352xf32, #tpu.memory_space<vmem>>, %arg52: memref<1x352xf32, #tpu.memory_space<vmem>>, %arg53: memref<32x352xf32, #tpu.memory_space<vmem>>, %arg54: memref<32x352xf32, #tpu.memory_space<vmem>>, %arg55: memref<1x64xf32, #tpu.memory_space<vmem>>, %arg56: memref<1x64xf32, #tpu.memory_space<vmem>>, %arg57: memref<1x96xf32, #tpu.memory_space<vmem>>, %arg58: memref<32x64xf32, #tpu.memory_space<vmem>>, %arg59: memref<32x64xf32, #tpu.memory_space<vmem>>, %arg60: memref<32x96xf32, #tpu.memory_space<vmem>>, %arg61: memref<16x12xf32, #tpu.memory_space<vmem>>, %arg62: memref<4x6xf32, #tpu.memory_space<vmem>>, %arg63: memref<16x12xf32, #tpu.memory_space<vmem>>, %arg64: memref<16x8xf32, #tpu.memory_space<vmem>>, %arg65: memref<16x8xf32, #tpu.memory_space<vmem>>, %arg66: memref<4x8xf32, #tpu.memory_space<vmem>>) attributes {dimension_semantics = [#tpu.dimension_semantics<arbitrary>], iteration_bounds = array<i64: 1>, scalar_prefetch = 0 : i64, scratch_operands = 0 : i64, tpu.core_type = #tpu.core_type<tc>, window_params = [{pipeline_mode = #tpu.pipeline_mode<synchronous>, transform_indices = @transform_0, window_bounds = array<i64: 16, 16>}, {pipeline_mode = #tpu.pipeline_mode<synchronous>, transform_indices = @transform_1, window_bounds = array<i64: 4, 16>}, {pipeline_mode = #tpu.pipeline_mode<synchronous>, transform_indices = @transform_2, window_bounds = array<i64: 16, 16>}, {pipeline_mode = #tpu.pipeline_mode<synchronous>, transform_indices = @transform_3, window_bounds = array<i64: 16, 16>}, {pipeline_mode = #tpu.pipeline_mode<synchronous>, transform_indices = @transform_4, window_bounds = array<i64: 4, 16>}, {pipeline_mode = #tpu.pipeline_mode<synchronous>, transform_indices = @transform_5, window_bounds = array<i64: 16, 16>}, {pipeline_mode = #tpu.pipeline_mode<synchronous>, transform_indices = @transform_6, window_bounds = array<i64: 1, 8>}, {pipeline_mode = #tpu.pipeline_mode<synchronous>, transform_indices = @transform_7, window_bounds = array<i64: 32, 8>}, {pipeline_mode = #tpu.pipeline_mode<synchronous>, transform_indices = @transform_8, window_bounds = array<i64: 1, 8>}, {pipeline_mode = #tpu.pipeline_mode<synchronous>, transform_indices = @transform_9, window_bounds = array<i64: 32, 8>}, {pipeline_mode = #tpu.pipeline_mode<synchronous>, transform_indices = @transform_10, window_bounds = array<i64: 1, 8>}, {pipeline_mode = #tpu.pipeline_mode<synchronous>, transform_indices = @transform_11, window_bounds = array<i64: 32, 8>}, {pipeline_mode = #tpu.pipeline_mode<synchronous>, transform_indices = @transform_12, window_bounds = array<i64: 1, 32>}, {pipeline_mode = #tpu.pipeline_mode<synchronous>, transform_indices = @transform_13, window_bounds = array<i64: 32, 32>}, {pipeline_mode = #tpu.pipeline_mode<synchronous>, transform_indices = @transform_14, window_bounds = array<i64: 1, 32>}, {pipeline_mode = #tpu.pipeline_mode<synchronous>, transform_indices = @transform_15, window_bounds = array<i64: 32, 32>}, {pipeline_mode = #tpu.pipeline_mode<synchronous>, transform_indices = @transform_16, window_bounds = array<i64: 1, 32>}, {pipeline_mode = #tpu.pipeline_mode<synchronous>, transform_indices = @transform_17, window_bounds = array<i64: 32, 32>}, {pipeline_mode = #tpu.pipeline_mode<synchronous>, transform_indices = @transform_18, window_bounds = array<i64: 1, 352>}, {pipeline_mode = #tpu.pipeline_mode<synchronous>, transform_indices = @transform_19, window_bounds = array<i64: 12, 352>}, {pipeline_mode = #tpu.pipeline_mode<synchronous>, transform_indices = @transform_20, window_bounds = array<i64: 12, 352>}, {pipeline_mode = #tpu.pipeline_mode<synchronous>, transform_indices = @transform_21, window_bounds = array<i64: 1, 352>}, {pipeline_mode = #tpu.pipeline_mode<synchronous>, transform_indices = @transform_22, window_bounds = array<i64: 12, 352>}, {pipeline_mode = #tpu.pipeline_mode<synchronous>, transform_indices = @transform_23, window_bounds = array<i64: 12, 352>}, {pipeline_mode = #tpu.pipeline_mode<synchronous>, transform_indices = @transform_24, window_bounds = array<i64: 1, 352>}, {pipeline_mode = #tpu.pipeline_mode<synchronous>, transform_indices = @transform_25, window_bounds = array<i64: 12, 352>}, {pipeline_mode = #tpu.pipeline_mode<synchronous>, transform_indices = @transform_26, window_bounds = array<i64: 12, 352>}, {pipeline_mode = #tpu.pipeline_mode<synchronous>, transform_indices = @transform_27, window_bounds = array<i64: 1, 352>}, {pipeline_mode = #tpu.pipeline_mode<synchronous>, transform_indices = @transform_28, window_bounds = array<i64: 12, 352>}, {pipeline_mode = #tpu.pipeline_mode<synchronous>, transform_indices = @transform_29, window_bounds = array<i64: 12, 352>}, {pipeline_mode = #tpu.pipeline_mode<synchronous>, transform_indices = @transform_30, window_bounds = array<i64: 1, 64>}, {pipeline_mode = #tpu.pipeline_mode<synchronous>, transform_indices = @transform_31, window_bounds = array<i64: 1, 64>}, {pipeline_mode = #tpu.pipeline_mode<synchronous>, transform_indices = @transform_32, window_bounds = array<i64: 1, 96>}, {pipeline_mode = #tpu.pipeline_mode<synchronous>, transform_indices = @transform_33, window_bounds = array<i64: 12, 64>}, {pipeline_mode = #tpu.pipeline_mode<synchronous>, transform_indices = @transform_34, window_bounds = array<i64: 12, 64>}, {pipeline_mode = #tpu.pipeline_mode<synchronous>, transform_indices = @transform_35, window_bounds = array<i64: 6, 96>}, {pipeline_mode = #tpu.pipeline_mode<synchronous>, transform_indices = @transform_36, window_bounds = array<i64: 1, 32>}, {pipeline_mode = #tpu.pipeline_mode<synchronous>, transform_indices = @transform_37, window_bounds = array<i64: 32, 32>}, {pipeline_mode = #tpu.pipeline_mode<synchronous>, transform_indices = @transform_38, window_bounds = array<i64: 1, 32>}, {pipeline_mode = #tpu.pipeline_mode<synchronous>, transform_indices = @transform_39, window_bounds = array<i64: 32, 32>}, {pipeline_mode = #tpu.pipeline_mode<synchronous>, transform_indices = @transform_40, window_bounds = array<i64: 1, 32>}, {pipeline_mode = #tpu.pipeline_mode<synchronous>, transform_indices = @transform_41, window_bounds = array<i64: 32, 32>}, {pipeline_mode = #tpu.pipeline_mode<synchronous>, transform_indices = @transform_42, window_bounds = array<i64: 1, 352>}, {pipeline_mode = #tpu.pipeline_mode<synchronous>, transform_indices = @transform_43, window_bounds = array<i64: 32, 352>}, {pipeline_mode = #tpu.pipeline_mode<synchronous>, transform_indices = @transform_44, window_bounds = array<i64: 32, 352>}, {pipeline_mode = #tpu.pipeline_mode<synchronous>, transform_indices = @transform_45, window_bounds = array<i64: 1, 352>}, {pipeline_mode = #tpu.pipeline_mode<synchronous>, transform_indices = @transform_46, window_bounds = array<i64: 32, 352>}, {pipeline_mode = #tpu.pipeline_mode<synchronous>, transform_indices = @transform_47, window_bounds = array<i64: 32, 352>}, {pipeline_mode = #tpu.pipeline_mode<synchronous>, transform_indices = @transform_48, window_bounds = array<i64: 1, 352>}, {pipeline_mode = #tpu.pipeline_mode<synchronous>, transform_indices = @transform_49, window_bounds = array<i64: 32, 352>}, {pipeline_mode = #tpu.pipeline_mode<synchronous>, transform_indices = @transform_50, window_bounds = array<i64: 32, 352>}, {pipeline_mode = #tpu.pipeline_mode<synchronous>, transform_indices = @transform_51, window_bounds = array<i64: 1, 352>}, {pipeline_mode = #tpu.pipeline_mode<synchronous>, transform_indices = @transform_52, window_bounds = array<i64: 32, 352>}, {pipeline_mode = #tpu.pipeline_mode<synchronous>, transform_indices = @transform_53, window_bounds = array<i64: 32, 352>}, {pipeline_mode = #tpu.pipeline_mode<synchronous>, transform_indices = @transform_54, window_bounds = array<i64: 1, 64>}, {pipeline_mode = #tpu.pipeline_mode<synchronous>, transform_indices = @transform_55, window_bounds = array<i64: 1, 64>}, {pipeline_mode = #tpu.pipeline_mode<synchronous>, transform_indices = @transform_56, window_bounds = array<i64: 1, 96>}, {pipeline_mode = #tpu.pipeline_mode<synchronous>, transform_indices = @transform_57, window_bounds = array<i64: 32, 64>}, {pipeline_mode = #tpu.pipeline_mode<synchronous>, transform_indices = @transform_58, window_bounds = array<i64: 32, 64>}, {pipeline_mode = #tpu.pipeline_mode<synchronous>, transform_indices = @transform_59, window_bounds = array<i64: 32, 96>}, {pipeline_mode = #tpu.pipeline_mode<synchronous>, transform_indices = @transform_60, window_bounds = array<i64: 16, 12>}, {pipeline_mode = #tpu.pipeline_mode<synchronous>, transform_indices = @transform_61, window_bounds = array<i64: 4, 6>}, {pipeline_mode = #tpu.pipeline_mode<synchronous>, transform_indices = @transform_62, window_bounds = array<i64: 16, 12>}, {pipeline_mode = #tpu.pipeline_mode<synchronous>, transform_indices = @transform_63, window_bounds = array<i64: 16, 8>}, {pipeline_mode = #tpu.pipeline_mode<synchronous>, transform_indices = @transform_64, window_bounds = array<i64: 16, 8>}, {pipeline_mode = #tpu.pipeline_mode<synchronous>, transform_indices = @transform_65, window_bounds = array<i64: 4, 8>}]} {
    %c0 = arith.constant 0 : index
    %c0_0 = arith.constant 0 : index
    %0 = vector.load %arg1[%c0, %c0_0] : memref<16x16xf32, #tpu.memory_space<vmem>>, vector<16x16xf32>
    %c0_1 = arith.constant 0 : index
    %c0_2 = arith.constant 0 : index
    %1 = vector.load %arg2[%c0_1, %c0_2] : memref<4x16xf32, #tpu.memory_space<vmem>>, vector<4x16xf32>
    %c0_3 = arith.constant 0 : index
    %c0_4 = arith.constant 0 : index
    %2 = vector.load %arg3[%c0_3, %c0_4] : memref<16x16xf32, #tpu.memory_space<vmem>>, vector<16x16xf32>
    %c0_5 = arith.constant 0 : index
    %c0_6 = arith.constant 0 : index
    %3 = vector.load %arg4[%c0_5, %c0_6] : memref<16x16xf32, #tpu.memory_space<vmem>>, vector<16x16xf32>
    %c0_7 = arith.constant 0 : index
    %c0_8 = arith.constant 0 : index
    %4 = vector.load %arg5[%c0_7, %c0_8] : memref<4x16xf32, #tpu.memory_space<vmem>>, vector<4x16xf32>
    %c0_9 = arith.constant 0 : index
    %c0_10 = arith.constant 0 : index
    %5 = vector.load %arg6[%c0_9, %c0_10] : memref<16x16xf32, #tpu.memory_space<vmem>>, vector<16x16xf32>
    %c0_11 = arith.constant 0 : index
    %c0_12 = arith.constant 0 : index
    %6 = vector.load %arg7[%c0_11, %c0_12] : memref<1x8xf32, #tpu.memory_space<vmem>>, vector<1x8xf32>
    %c0_13 = arith.constant 0 : index
    %c0_14 = arith.constant 0 : index
    %7 = vector.load %arg8[%c0_13, %c0_14] : memref<32x8xf32, #tpu.memory_space<vmem>>, vector<32x8xf32>
    %c0_15 = arith.constant 0 : index
    %c0_16 = arith.constant 0 : index
    %8 = vector.load %arg9[%c0_15, %c0_16] : memref<1x8xf32, #tpu.memory_space<vmem>>, vector<1x8xf32>
    %c0_17 = arith.constant 0 : index
    %c0_18 = arith.constant 0 : index
    %9 = vector.load %arg10[%c0_17, %c0_18] : memref<32x8xf32, #tpu.memory_space<vmem>>, vector<32x8xf32>
    %c0_19 = arith.constant 0 : index
    %c0_20 = arith.constant 0 : index
    %10 = vector.load %arg11[%c0_19, %c0_20] : memref<1x8xf32, #tpu.memory_space<vmem>>, vector<1x8xf32>
    %c0_21 = arith.constant 0 : index
    %c0_22 = arith.constant 0 : index
    %11 = vector.load %arg12[%c0_21, %c0_22] : memref<32x8xf32, #tpu.memory_space<vmem>>, vector<32x8xf32>
    %c0_23 = arith.constant 0 : index
    %c0_24 = arith.constant 0 : index
    %12 = vector.load %arg13[%c0_23, %c0_24] : memref<1x32xf32, #tpu.memory_space<vmem>>, vector<1x32xf32>
    %c0_25 = arith.constant 0 : index
    %c0_26 = arith.constant 0 : index
    %13 = vector.load %arg14[%c0_25, %c0_26] : memref<32x32xf32, #tpu.memory_space<vmem>>, vector<32x32xf32>
    %c0_27 = arith.constant 0 : index
    %c0_28 = arith.constant 0 : index
    %14 = vector.load %arg15[%c0_27, %c0_28] : memref<1x32xf32, #tpu.memory_space<vmem>>, vector<1x32xf32>
    %c0_29 = arith.constant 0 : index
    %c0_30 = arith.constant 0 : index
    %15 = vector.load %arg16[%c0_29, %c0_30] : memref<32x32xf32, #tpu.memory_space<vmem>>, vector<32x32xf32>
    %c0_31 = arith.constant 0 : index
    %c0_32 = arith.constant 0 : index
    %16 = vector.load %arg17[%c0_31, %c0_32] : memref<1x32xf32, #tpu.memory_space<vmem>>, vector<1x32xf32>
    %c0_33 = arith.constant 0 : index
    %c0_34 = arith.constant 0 : index
    %17 = vector.load %arg18[%c0_33, %c0_34] : memref<32x32xf32, #tpu.memory_space<vmem>>, vector<32x32xf32>
    %c0_35 = arith.constant 0 : index
    %c0_36 = arith.constant 0 : index
    %18 = vector.load %arg19[%c0_35, %c0_36] : memref<1x352xf32, #tpu.memory_space<vmem>>, vector<1x352xf32>
    %c0_37 = arith.constant 0 : index
    %c0_38 = arith.constant 0 : index
    %19 = vector.load %arg20[%c0_37, %c0_38] : memref<12x352xf32, #tpu.memory_space<vmem>>, vector<12x352xf32>
    %c0_39 = arith.constant 0 : index
    %c0_40 = arith.constant 0 : index
    %20 = vector.load %arg21[%c0_39, %c0_40] : memref<12x352xf32, #tpu.memory_space<vmem>>, vector<12x352xf32>
    %c0_41 = arith.constant 0 : index
    %c0_42 = arith.constant 0 : index
    %21 = vector.load %arg22[%c0_41, %c0_42] : memref<1x352xf32, #tpu.memory_space<vmem>>, vector<1x352xf32>
    %c0_43 = arith.constant 0 : index
    %c0_44 = arith.constant 0 : index
    %22 = vector.load %arg23[%c0_43, %c0_44] : memref<12x352xf32, #tpu.memory_space<vmem>>, vector<12x352xf32>
    %c0_45 = arith.constant 0 : index
    %c0_46 = arith.constant 0 : index
    %23 = vector.load %arg24[%c0_45, %c0_46] : memref<12x352xf32, #tpu.memory_space<vmem>>, vector<12x352xf32>
    %c0_47 = arith.constant 0 : index
    %c0_48 = arith.constant 0 : index
    %24 = vector.load %arg25[%c0_47, %c0_48] : memref<1x352xf32, #tpu.memory_space<vmem>>, vector<1x352xf32>
    %c0_49 = arith.constant 0 : index
    %c0_50 = arith.constant 0 : index
    %25 = vector.load %arg26[%c0_49, %c0_50] : memref<12x352xf32, #tpu.memory_space<vmem>>, vector<12x352xf32>
    %c0_51 = arith.constant 0 : index
    %c0_52 = arith.constant 0 : index
    %26 = vector.load %arg27[%c0_51, %c0_52] : memref<12x352xf32, #tpu.memory_space<vmem>>, vector<12x352xf32>
    %c0_53 = arith.constant 0 : index
    %c0_54 = arith.constant 0 : index
    %27 = vector.load %arg28[%c0_53, %c0_54] : memref<1x352xf32, #tpu.memory_space<vmem>>, vector<1x352xf32>
    %c0_55 = arith.constant 0 : index
    %c0_56 = arith.constant 0 : index
    %28 = vector.load %arg29[%c0_55, %c0_56] : memref<12x352xf32, #tpu.memory_space<vmem>>, vector<12x352xf32>
    %c0_57 = arith.constant 0 : index
    %c0_58 = arith.constant 0 : index
    %29 = vector.load %arg30[%c0_57, %c0_58] : memref<12x352xf32, #tpu.memory_space<vmem>>, vector<12x352xf32>
    %c0_59 = arith.constant 0 : index
    %c0_60 = arith.constant 0 : index
    %30 = vector.load %arg31[%c0_59, %c0_60] : memref<1x64xf32, #tpu.memory_space<vmem>>, vector<1x64xf32>
    %c0_61 = arith.constant 0 : index
    %c0_62 = arith.constant 0 : index
    %31 = vector.load %arg32[%c0_61, %c0_62] : memref<1x64xf32, #tpu.memory_space<vmem>>, vector<1x64xf32>
    %c0_63 = arith.constant 0 : index
    %c0_64 = arith.constant 0 : index
    %32 = vector.load %arg33[%c0_63, %c0_64] : memref<1x96xf32, #tpu.memory_space<vmem>>, vector<1x96xf32>
    %c0_65 = arith.constant 0 : index
    %c0_66 = arith.constant 0 : index
    %33 = vector.load %arg34[%c0_65, %c0_66] : memref<12x64xf32, #tpu.memory_space<vmem>>, vector<12x64xf32>
    %c0_67 = arith.constant 0 : index
    %c0_68 = arith.constant 0 : index
    %34 = vector.load %arg35[%c0_67, %c0_68] : memref<12x64xf32, #tpu.memory_space<vmem>>, vector<12x64xf32>
    %c0_69 = arith.constant 0 : index
    %c0_70 = arith.constant 0 : index
    %35 = vector.load %arg36[%c0_69, %c0_70] : memref<6x96xf32, #tpu.memory_space<vmem>>, vector<6x96xf32>
    %c0_71 = arith.constant 0 : index
    %c0_72 = arith.constant 0 : index
    %36 = vector.load %arg37[%c0_71, %c0_72] : memref<1x32xf32, #tpu.memory_space<vmem>>, vector<1x32xf32>
    %c0_73 = arith.constant 0 : index
    %c0_74 = arith.constant 0 : index
    %37 = vector.load %arg38[%c0_73, %c0_74] : memref<32x32xf32, #tpu.memory_space<vmem>>, vector<32x32xf32>
    %c0_75 = arith.constant 0 : index
    %c0_76 = arith.constant 0 : index
    %38 = vector.load %arg39[%c0_75, %c0_76] : memref<1x32xf32, #tpu.memory_space<vmem>>, vector<1x32xf32>
    %c0_77 = arith.constant 0 : index
    %c0_78 = arith.constant 0 : index
    %39 = vector.load %arg40[%c0_77, %c0_78] : memref<32x32xf32, #tpu.memory_space<vmem>>, vector<32x32xf32>
    %c0_79 = arith.constant 0 : index
    %c0_80 = arith.constant 0 : index
    %40 = vector.load %arg41[%c0_79, %c0_80] : memref<1x32xf32, #tpu.memory_space<vmem>>, vector<1x32xf32>
    %c0_81 = arith.constant 0 : index
    %c0_82 = arith.constant 0 : index
    %41 = vector.load %arg42[%c0_81, %c0_82] : memref<32x32xf32, #tpu.memory_space<vmem>>, vector<32x32xf32>
    %c0_83 = arith.constant 0 : index
    %c0_84 = arith.constant 0 : index
    %42 = vector.load %arg43[%c0_83, %c0_84] : memref<1x352xf32, #tpu.memory_space<vmem>>, vector<1x352xf32>
    %c0_85 = arith.constant 0 : index
    %c0_86 = arith.constant 0 : index
    %43 = vector.load %arg44[%c0_85, %c0_86] : memref<32x352xf32, #tpu.memory_space<vmem>>, vector<32x352xf32>
    %c0_87 = arith.constant 0 : index
    %c0_88 = arith.constant 0 : index
    %44 = vector.load %arg45[%c0_87, %c0_88] : memref<32x352xf32, #tpu.memory_space<vmem>>, vector<32x352xf32>
    %c0_89 = arith.constant 0 : index
    %c0_90 = arith.constant 0 : index
    %45 = vector.load %arg46[%c0_89, %c0_90] : memref<1x352xf32, #tpu.memory_space<vmem>>, vector<1x352xf32>
    %c0_91 = arith.constant 0 : index
    %c0_92 = arith.constant 0 : index
    %46 = vector.load %arg47[%c0_91, %c0_92] : memref<32x352xf32, #tpu.memory_space<vmem>>, vector<32x352xf32>
    %c0_93 = arith.constant 0 : index
    %c0_94 = arith.constant 0 : index
    %47 = vector.load %arg48[%c0_93, %c0_94] : memref<32x352xf32, #tpu.memory_space<vmem>>, vector<32x352xf32>
    %c0_95 = arith.constant 0 : index
    %c0_96 = arith.constant 0 : index
    %48 = vector.load %arg49[%c0_95, %c0_96] : memref<1x352xf32, #tpu.memory_space<vmem>>, vector<1x352xf32>
    %c0_97 = arith.constant 0 : index
    %c0_98 = arith.constant 0 : index
    %49 = vector.load %arg50[%c0_97, %c0_98] : memref<32x352xf32, #tpu.memory_space<vmem>>, vector<32x352xf32>
    %c0_99 = arith.constant 0 : index
    %c0_100 = arith.constant 0 : index
    %50 = vector.load %arg51[%c0_99, %c0_100] : memref<32x352xf32, #tpu.memory_space<vmem>>, vector<32x352xf32>
    %c0_101 = arith.constant 0 : index
    %c0_102 = arith.constant 0 : index
    %51 = vector.load %arg52[%c0_101, %c0_102] : memref<1x352xf32, #tpu.memory_space<vmem>>, vector<1x352xf32>
    %c0_103 = arith.constant 0 : index
    %c0_104 = arith.constant 0 : index
    %52 = vector.load %arg53[%c0_103, %c0_104] : memref<32x352xf32, #tpu.memory_space<vmem>>, vector<32x352xf32>
    %c0_105 = arith.constant 0 : index
    %c0_106 = arith.constant 0 : index
    %53 = vector.load %arg54[%c0_105, %c0_106] : memref<32x352xf32, #tpu.memory_space<vmem>>, vector<32x352xf32>
    %c0_107 = arith.constant 0 : index
    %c0_108 = arith.constant 0 : index
    %54 = vector.load %arg55[%c0_107, %c0_108] : memref<1x64xf32, #tpu.memory_space<vmem>>, vector<1x64xf32>
    %c0_109 = arith.constant 0 : index
    %c0_110 = arith.constant 0 : index
    %55 = vector.load %arg56[%c0_109, %c0_110] : memref<1x64xf32, #tpu.memory_space<vmem>>, vector<1x64xf32>
    %c0_111 = arith.constant 0 : index
    %c0_112 = arith.constant 0 : index
    %56 = vector.load %arg57[%c0_111, %c0_112] : memref<1x96xf32, #tpu.memory_space<vmem>>, vector<1x96xf32>
    %c0_113 = arith.constant 0 : index
    %c0_114 = arith.constant 0 : index
    %57 = vector.load %arg58[%c0_113, %c0_114] : memref<32x64xf32, #tpu.memory_space<vmem>>, vector<32x64xf32>
    %c0_115 = arith.constant 0 : index
    %c0_116 = arith.constant 0 : index
    %58 = vector.load %arg59[%c0_115, %c0_116] : memref<32x64xf32, #tpu.memory_space<vmem>>, vector<32x64xf32>
    %c0_117 = arith.constant 0 : index
    %c0_118 = arith.constant 0 : index
    %59 = vector.load %arg60[%c0_117, %c0_118] : memref<32x96xf32, #tpu.memory_space<vmem>>, vector<32x96xf32>
    %c0_119 = arith.constant 0 : index
    %c0_120 = arith.constant 0 : index
    %60 = vector.load %arg61[%c0_119, %c0_120] : memref<16x12xf32, #tpu.memory_space<vmem>>, vector<16x12xf32>
    %c0_121 = arith.constant 0 : index
    %c0_122 = arith.constant 0 : index
    %61 = vector.load %arg62[%c0_121, %c0_122] : memref<4x6xf32, #tpu.memory_space<vmem>>, vector<4x6xf32>
    %c0_123 = arith.constant 0 : index
    %c0_124 = arith.constant 0 : index
    %62 = vector.load %arg63[%c0_123, %c0_124] : memref<16x12xf32, #tpu.memory_space<vmem>>, vector<16x12xf32>
    %cst = arith.constant dense<0.000000e+00> : vector<16x12xf32>
    %63 = tpu.matmul %5, %62, %cst {dimension_numbers = #tpu.dot_dimension_numbers<[1], [0], [0], [1], [0, 0, 1, 1], [], []>} : vector<16x16xf32>, vector<16x12xf32>, vector<16x12xf32> -> vector<16x12xf32>
    %cst_125 = arith.constant dense<0.000000e+00> : vector<16xf32>
    %64 = vector.multi_reduction <add>, %5, %cst_125 [1] : vector<16x16xf32> to vector<16xf32>
    %65 = vector.shape_cast %64 : vector<16xf32> to vector<16x1xf32>
    %cst_126 = arith.constant 1.000000e+01 : f32
    %66 = vector.broadcast %cst_126 : f32 to vector<16x1xf32>
    %67 = arith.minimumf %65, %66 : vector<16x1xf32>
    %68 = arith.fptosi %67 : vector<16x1xf32> to vector<16x1xi32>
    %cst_127 = arith.constant dense<0.000000e+00> : vector<16x352xf32>
    %69 = tpu.matmul %63, %28, %cst_127 {dimension_numbers = #tpu.dot_dimension_numbers<[1], [0], [0], [1], [0, 0, 1, 1], [], []>} : vector<16x12xf32>, vector<12x352xf32>, vector<16x352xf32> -> vector<16x352xf32>
    %cst_128 = arith.constant dense<0.000000e+00> : vector<16x352xf32>
    %70 = tpu.matmul %62, %29, %cst_128 {dimension_numbers = #tpu.dot_dimension_numbers<[1], [0], [0], [1], [0, 0, 1, 1], [], []>} : vector<16x12xf32>, vector<12x352xf32>, vector<16x352xf32> -> vector<16x352xf32>
    %71 = arith.addf %69, %70 : vector<16x352xf32>
    %72 = vector.broadcast %27 : vector<1x352xf32> to vector<16x352xf32>
    %73 = arith.addf %71, %72 : vector<16x352xf32>
    %cst_129 = arith.constant 0.000000e+00 : f32
    %74 = vector.broadcast %cst_129 : f32 to vector<16x32xf32>
    %c0_i32 = arith.constant 0 : i32
    %75 = vector.broadcast %c0_i32 : i32 to vector<16x1xi32>
    %76 = arith.cmpi eq, %68, %75 : vector<16x1xi32>
    %77 = vector.extract_strided_slice %73 {offsets = [0, 0], sizes = [16, 32], strides = [1, 1]} : vector<16x352xf32> to vector<16x32xf32>
    %cst_130 = arith.constant 0.000000e+00 : f32
    %78 = vector.shape_cast %76 : vector<16x1xi1> to vector<16x1xi1>
    %79 = vector.broadcast %78 : vector<16x1xi1> to vector<16x32xi1>
    %80 = vector.broadcast %cst_130 : f32 to vector<16x32xf32>
    %81 = arith.select %79, %77, %80 : vector<16x32xi1>, vector<16x32xf32>
    %82 = arith.addf %74, %81 : vector<16x32xf32>
    %c1_i32 = arith.constant 1 : i32
    %83 = vector.broadcast %c1_i32 : i32 to vector<16x1xi32>
    %84 = arith.cmpi eq, %68, %83 : vector<16x1xi32>
    %85 = vector.extract_strided_slice %73 {offsets = [0, 32], sizes = [16, 32], strides = [1, 1]} : vector<16x352xf32> to vector<16x32xf32>
    %cst_131 = arith.constant 0.000000e+00 : f32
    %86 = vector.shape_cast %84 : vector<16x1xi1> to vector<16x1xi1>
    %87 = vector.broadcast %86 : vector<16x1xi1> to vector<16x32xi1>
    %88 = vector.broadcast %cst_131 : f32 to vector<16x32xf32>
    %89 = arith.select %87, %85, %88 : vector<16x32xi1>, vector<16x32xf32>
    %90 = arith.addf %82, %89 : vector<16x32xf32>
    %c2_i32 = arith.constant 2 : i32
    %91 = vector.broadcast %c2_i32 : i32 to vector<16x1xi32>
    %92 = arith.cmpi eq, %68, %91 : vector<16x1xi32>
    %93 = vector.extract_strided_slice %73 {offsets = [0, 64], sizes = [16, 32], strides = [1, 1]} : vector<16x352xf32> to vector<16x32xf32>
    %cst_132 = arith.constant 0.000000e+00 : f32
    %94 = vector.shape_cast %92 : vector<16x1xi1> to vector<16x1xi1>
    %95 = vector.broadcast %94 : vector<16x1xi1> to vector<16x32xi1>
    %96 = vector.broadcast %cst_132 : f32 to vector<16x32xf32>
    %97 = arith.select %95, %93, %96 : vector<16x32xi1>, vector<16x32xf32>
    %98 = arith.addf %90, %97 : vector<16x32xf32>
    %c3_i32 = arith.constant 3 : i32
    %99 = vector.broadcast %c3_i32 : i32 to vector<16x1xi32>
    %100 = arith.cmpi eq, %68, %99 : vector<16x1xi32>
    %101 = vector.extract_strided_slice %73 {offsets = [0, 96], sizes = [16, 32], strides = [1, 1]} : vector<16x352xf32> to vector<16x32xf32>
    %cst_133 = arith.constant 0.000000e+00 : f32
    %102 = vector.shape_cast %100 : vector<16x1xi1> to vector<16x1xi1>
    %103 = vector.broadcast %102 : vector<16x1xi1> to vector<16x32xi1>
    %104 = vector.broadcast %cst_133 : f32 to vector<16x32xf32>
    %105 = arith.select %103, %101, %104 : vector<16x32xi1>, vector<16x32xf32>
    %106 = arith.addf %98, %105 : vector<16x32xf32>
    %c4_i32 = arith.constant 4 : i32
    %107 = vector.broadcast %c4_i32 : i32 to vector<16x1xi32>
    %108 = arith.cmpi eq, %68, %107 : vector<16x1xi32>
    %109 = vector.extract_strided_slice %73 {offsets = [0, 128], sizes = [16, 32], strides = [1, 1]} : vector<16x352xf32> to vector<16x32xf32>
    %cst_134 = arith.constant 0.000000e+00 : f32
    %110 = vector.shape_cast %108 : vector<16x1xi1> to vector<16x1xi1>
    %111 = vector.broadcast %110 : vector<16x1xi1> to vector<16x32xi1>
    %112 = vector.broadcast %cst_134 : f32 to vector<16x32xf32>
    %113 = arith.select %111, %109, %112 : vector<16x32xi1>, vector<16x32xf32>
    %114 = arith.addf %106, %113 : vector<16x32xf32>
    %c5_i32 = arith.constant 5 : i32
    %115 = vector.broadcast %c5_i32 : i32 to vector<16x1xi32>
    %116 = arith.cmpi eq, %68, %115 : vector<16x1xi32>
    %117 = vector.extract_strided_slice %73 {offsets = [0, 160], sizes = [16, 32], strides = [1, 1]} : vector<16x352xf32> to vector<16x32xf32>
    %cst_135 = arith.constant 0.000000e+00 : f32
    %118 = vector.shape_cast %116 : vector<16x1xi1> to vector<16x1xi1>
    %119 = vector.broadcast %118 : vector<16x1xi1> to vector<16x32xi1>
    %120 = vector.broadcast %cst_135 : f32 to vector<16x32xf32>
    %121 = arith.select %119, %117, %120 : vector<16x32xi1>, vector<16x32xf32>
    %122 = arith.addf %114, %121 : vector<16x32xf32>
    %c6_i32 = arith.constant 6 : i32
    %123 = vector.broadcast %c6_i32 : i32 to vector<16x1xi32>
    %124 = arith.cmpi eq, %68, %123 : vector<16x1xi32>
    %125 = vector.extract_strided_slice %73 {offsets = [0, 192], sizes = [16, 32], strides = [1, 1]} : vector<16x352xf32> to vector<16x32xf32>
    %cst_136 = arith.constant 0.000000e+00 : f32
    %126 = vector.shape_cast %124 : vector<16x1xi1> to vector<16x1xi1>
    %127 = vector.broadcast %126 : vector<16x1xi1> to vector<16x32xi1>
    %128 = vector.broadcast %cst_136 : f32 to vector<16x32xf32>
    %129 = arith.select %127, %125, %128 : vector<16x32xi1>, vector<16x32xf32>
    %130 = arith.addf %122, %129 : vector<16x32xf32>
    %c7_i32 = arith.constant 7 : i32
    %131 = vector.broadcast %c7_i32 : i32 to vector<16x1xi32>
    %132 = arith.cmpi eq, %68, %131 : vector<16x1xi32>
    %133 = vector.extract_strided_slice %73 {offsets = [0, 224], sizes = [16, 32], strides = [1, 1]} : vector<16x352xf32> to vector<16x32xf32>
    %cst_137 = arith.constant 0.000000e+00 : f32
    %134 = vector.shape_cast %132 : vector<16x1xi1> to vector<16x1xi1>
    %135 = vector.broadcast %134 : vector<16x1xi1> to vector<16x32xi1>
    %136 = vector.broadcast %cst_137 : f32 to vector<16x32xf32>
    %137 = arith.select %135, %133, %136 : vector<16x32xi1>, vector<16x32xf32>
    %138 = arith.addf %130, %137 : vector<16x32xf32>
    %c8_i32 = arith.constant 8 : i32
    %139 = vector.broadcast %c8_i32 : i32 to vector<16x1xi32>
    %140 = arith.cmpi eq, %68, %139 : vector<16x1xi32>
    %141 = vector.extract_strided_slice %73 {offsets = [0, 256], sizes = [16, 32], strides = [1, 1]} : vector<16x352xf32> to vector<16x32xf32>
    %cst_138 = arith.constant 0.000000e+00 : f32
    %142 = vector.shape_cast %140 : vector<16x1xi1> to vector<16x1xi1>
    %143 = vector.broadcast %142 : vector<16x1xi1> to vector<16x32xi1>
    %144 = vector.broadcast %cst_138 : f32 to vector<16x32xf32>
    %145 = arith.select %143, %141, %144 : vector<16x32xi1>, vector<16x32xf32>
    %146 = arith.addf %138, %145 : vector<16x32xf32>
    %c9_i32 = arith.constant 9 : i32
    %147 = vector.broadcast %c9_i32 : i32 to vector<16x1xi32>
    %148 = arith.cmpi eq, %68, %147 : vector<16x1xi32>
    %149 = vector.extract_strided_slice %73 {offsets = [0, 288], sizes = [16, 32], strides = [1, 1]} : vector<16x352xf32> to vector<16x32xf32>
    %cst_139 = arith.constant 0.000000e+00 : f32
    %150 = vector.shape_cast %148 : vector<16x1xi1> to vector<16x1xi1>
    %151 = vector.broadcast %150 : vector<16x1xi1> to vector<16x32xi1>
    %152 = vector.broadcast %cst_139 : f32 to vector<16x32xf32>
    %153 = arith.select %151, %149, %152 : vector<16x32xi1>, vector<16x32xf32>
    %154 = arith.addf %146, %153 : vector<16x32xf32>
    %c10_i32 = arith.constant 10 : i32
    %155 = vector.broadcast %c10_i32 : i32 to vector<16x1xi32>
    %156 = arith.cmpi eq, %68, %155 : vector<16x1xi32>
    %157 = vector.extract_strided_slice %73 {offsets = [0, 320], sizes = [16, 32], strides = [1, 1]} : vector<16x352xf32> to vector<16x32xf32>
    %cst_140 = arith.constant 0.000000e+00 : f32
    %158 = vector.shape_cast %156 : vector<16x1xi1> to vector<16x1xi1>
    %159 = vector.broadcast %158 : vector<16x1xi1> to vector<16x32xi1>
    %160 = vector.broadcast %cst_140 : f32 to vector<16x32xf32>
    %161 = arith.select %159, %157, %160 : vector<16x32xi1>, vector<16x32xf32>
    %162 = arith.addf %154, %161 : vector<16x32xf32>
    %cst_141 = arith.constant dense<0.000000e+00> : vector<16x12xf32>
    %163 = tpu.matmul %2, %60, %cst_141 {dimension_numbers = #tpu.dot_dimension_numbers<[1], [0], [0], [1], [0, 0, 1, 1], [], []>} : vector<16x16xf32>, vector<16x12xf32>, vector<16x12xf32> -> vector<16x12xf32>
    %cst_142 = arith.constant dense<0.000000e+00> : vector<16xf32>
    %164 = vector.multi_reduction <add>, %2, %cst_142 [1] : vector<16x16xf32> to vector<16xf32>
    %165 = vector.shape_cast %164 : vector<16xf32> to vector<16x1xf32>
    %cst_143 = arith.constant 1.000000e+01 : f32
    %166 = vector.broadcast %cst_143 : f32 to vector<16x1xf32>
    %167 = arith.minimumf %165, %166 : vector<16x1xf32>
    %168 = arith.fptosi %167 : vector<16x1xf32> to vector<16x1xi32>
    %cst_144 = arith.constant dense<0.000000e+00> : vector<16x352xf32>
    %169 = tpu.matmul %163, %22, %cst_144 {dimension_numbers = #tpu.dot_dimension_numbers<[1], [0], [0], [1], [0, 0, 1, 1], [], []>} : vector<16x12xf32>, vector<12x352xf32>, vector<16x352xf32> -> vector<16x352xf32>
    %cst_145 = arith.constant dense<0.000000e+00> : vector<16x352xf32>
    %170 = tpu.matmul %62, %23, %cst_145 {dimension_numbers = #tpu.dot_dimension_numbers<[1], [0], [0], [1], [0, 0, 1, 1], [], []>} : vector<16x12xf32>, vector<12x352xf32>, vector<16x352xf32> -> vector<16x352xf32>
    %171 = arith.addf %169, %170 : vector<16x352xf32>
    %172 = vector.broadcast %21 : vector<1x352xf32> to vector<16x352xf32>
    %173 = arith.addf %171, %172 : vector<16x352xf32>
    %cst_146 = arith.constant 0.000000e+00 : f32
    %174 = vector.broadcast %cst_146 : f32 to vector<16x32xf32>
    %c0_i32_147 = arith.constant 0 : i32
    %175 = vector.broadcast %c0_i32_147 : i32 to vector<16x1xi32>
    %176 = arith.cmpi eq, %168, %175 : vector<16x1xi32>
    %177 = vector.extract_strided_slice %173 {offsets = [0, 0], sizes = [16, 32], strides = [1, 1]} : vector<16x352xf32> to vector<16x32xf32>
    %cst_148 = arith.constant 0.000000e+00 : f32
    %178 = vector.shape_cast %176 : vector<16x1xi1> to vector<16x1xi1>
    %179 = vector.broadcast %178 : vector<16x1xi1> to vector<16x32xi1>
    %180 = vector.broadcast %cst_148 : f32 to vector<16x32xf32>
    %181 = arith.select %179, %177, %180 : vector<16x32xi1>, vector<16x32xf32>
    %182 = arith.addf %174, %181 : vector<16x32xf32>
    %c1_i32_149 = arith.constant 1 : i32
    %183 = vector.broadcast %c1_i32_149 : i32 to vector<16x1xi32>
    %184 = arith.cmpi eq, %168, %183 : vector<16x1xi32>
    %185 = vector.extract_strided_slice %173 {offsets = [0, 32], sizes = [16, 32], strides = [1, 1]} : vector<16x352xf32> to vector<16x32xf32>
    %cst_150 = arith.constant 0.000000e+00 : f32
    %186 = vector.shape_cast %184 : vector<16x1xi1> to vector<16x1xi1>
    %187 = vector.broadcast %186 : vector<16x1xi1> to vector<16x32xi1>
    %188 = vector.broadcast %cst_150 : f32 to vector<16x32xf32>
    %189 = arith.select %187, %185, %188 : vector<16x32xi1>, vector<16x32xf32>
    %190 = arith.addf %182, %189 : vector<16x32xf32>
    %c2_i32_151 = arith.constant 2 : i32
    %191 = vector.broadcast %c2_i32_151 : i32 to vector<16x1xi32>
    %192 = arith.cmpi eq, %168, %191 : vector<16x1xi32>
    %193 = vector.extract_strided_slice %173 {offsets = [0, 64], sizes = [16, 32], strides = [1, 1]} : vector<16x352xf32> to vector<16x32xf32>
    %cst_152 = arith.constant 0.000000e+00 : f32
    %194 = vector.shape_cast %192 : vector<16x1xi1> to vector<16x1xi1>
    %195 = vector.broadcast %194 : vector<16x1xi1> to vector<16x32xi1>
    %196 = vector.broadcast %cst_152 : f32 to vector<16x32xf32>
    %197 = arith.select %195, %193, %196 : vector<16x32xi1>, vector<16x32xf32>
    %198 = arith.addf %190, %197 : vector<16x32xf32>
    %c3_i32_153 = arith.constant 3 : i32
    %199 = vector.broadcast %c3_i32_153 : i32 to vector<16x1xi32>
    %200 = arith.cmpi eq, %168, %199 : vector<16x1xi32>
    %201 = vector.extract_strided_slice %173 {offsets = [0, 96], sizes = [16, 32], strides = [1, 1]} : vector<16x352xf32> to vector<16x32xf32>
    %cst_154 = arith.constant 0.000000e+00 : f32
    %202 = vector.shape_cast %200 : vector<16x1xi1> to vector<16x1xi1>
    %203 = vector.broadcast %202 : vector<16x1xi1> to vector<16x32xi1>
    %204 = vector.broadcast %cst_154 : f32 to vector<16x32xf32>
    %205 = arith.select %203, %201, %204 : vector<16x32xi1>, vector<16x32xf32>
    %206 = arith.addf %198, %205 : vector<16x32xf32>
    %c4_i32_155 = arith.constant 4 : i32
    %207 = vector.broadcast %c4_i32_155 : i32 to vector<16x1xi32>
    %208 = arith.cmpi eq, %168, %207 : vector<16x1xi32>
    %209 = vector.extract_strided_slice %173 {offsets = [0, 128], sizes = [16, 32], strides = [1, 1]} : vector<16x352xf32> to vector<16x32xf32>
    %cst_156 = arith.constant 0.000000e+00 : f32
    %210 = vector.shape_cast %208 : vector<16x1xi1> to vector<16x1xi1>
    %211 = vector.broadcast %210 : vector<16x1xi1> to vector<16x32xi1>
    %212 = vector.broadcast %cst_156 : f32 to vector<16x32xf32>
    %213 = arith.select %211, %209, %212 : vector<16x32xi1>, vector<16x32xf32>
    %214 = arith.addf %206, %213 : vector<16x32xf32>
    %c5_i32_157 = arith.constant 5 : i32
    %215 = vector.broadcast %c5_i32_157 : i32 to vector<16x1xi32>
    %216 = arith.cmpi eq, %168, %215 : vector<16x1xi32>
    %217 = vector.extract_strided_slice %173 {offsets = [0, 160], sizes = [16, 32], strides = [1, 1]} : vector<16x352xf32> to vector<16x32xf32>
    %cst_158 = arith.constant 0.000000e+00 : f32
    %218 = vector.shape_cast %216 : vector<16x1xi1> to vector<16x1xi1>
    %219 = vector.broadcast %218 : vector<16x1xi1> to vector<16x32xi1>
    %220 = vector.broadcast %cst_158 : f32 to vector<16x32xf32>
    %221 = arith.select %219, %217, %220 : vector<16x32xi1>, vector<16x32xf32>
    %222 = arith.addf %214, %221 : vector<16x32xf32>
    %c6_i32_159 = arith.constant 6 : i32
    %223 = vector.broadcast %c6_i32_159 : i32 to vector<16x1xi32>
    %224 = arith.cmpi eq, %168, %223 : vector<16x1xi32>
    %225 = vector.extract_strided_slice %173 {offsets = [0, 192], sizes = [16, 32], strides = [1, 1]} : vector<16x352xf32> to vector<16x32xf32>
    %cst_160 = arith.constant 0.000000e+00 : f32
    %226 = vector.shape_cast %224 : vector<16x1xi1> to vector<16x1xi1>
    %227 = vector.broadcast %226 : vector<16x1xi1> to vector<16x32xi1>
    %228 = vector.broadcast %cst_160 : f32 to vector<16x32xf32>
    %229 = arith.select %227, %225, %228 : vector<16x32xi1>, vector<16x32xf32>
    %230 = arith.addf %222, %229 : vector<16x32xf32>
    %c7_i32_161 = arith.constant 7 : i32
    %231 = vector.broadcast %c7_i32_161 : i32 to vector<16x1xi32>
    %232 = arith.cmpi eq, %168, %231 : vector<16x1xi32>
    %233 = vector.extract_strided_slice %173 {offsets = [0, 224], sizes = [16, 32], strides = [1, 1]} : vector<16x352xf32> to vector<16x32xf32>
    %cst_162 = arith.constant 0.000000e+00 : f32
    %234 = vector.shape_cast %232 : vector<16x1xi1> to vector<16x1xi1>
    %235 = vector.broadcast %234 : vector<16x1xi1> to vector<16x32xi1>
    %236 = vector.broadcast %cst_162 : f32 to vector<16x32xf32>
    %237 = arith.select %235, %233, %236 : vector<16x32xi1>, vector<16x32xf32>
    %238 = arith.addf %230, %237 : vector<16x32xf32>
    %c8_i32_163 = arith.constant 8 : i32
    %239 = vector.broadcast %c8_i32_163 : i32 to vector<16x1xi32>
    %240 = arith.cmpi eq, %168, %239 : vector<16x1xi32>
    %241 = vector.extract_strided_slice %173 {offsets = [0, 256], sizes = [16, 32], strides = [1, 1]} : vector<16x352xf32> to vector<16x32xf32>
    %cst_164 = arith.constant 0.000000e+00 : f32
    %242 = vector.shape_cast %240 : vector<16x1xi1> to vector<16x1xi1>
    %243 = vector.broadcast %242 : vector<16x1xi1> to vector<16x32xi1>
    %244 = vector.broadcast %cst_164 : f32 to vector<16x32xf32>
    %245 = arith.select %243, %241, %244 : vector<16x32xi1>, vector<16x32xf32>
    %246 = arith.addf %238, %245 : vector<16x32xf32>
    %c9_i32_165 = arith.constant 9 : i32
    %247 = vector.broadcast %c9_i32_165 : i32 to vector<16x1xi32>
    %248 = arith.cmpi eq, %168, %247 : vector<16x1xi32>
    %249 = vector.extract_strided_slice %173 {offsets = [0, 288], sizes = [16, 32], strides = [1, 1]} : vector<16x352xf32> to vector<16x32xf32>
    %cst_166 = arith.constant 0.000000e+00 : f32
    %250 = vector.shape_cast %248 : vector<16x1xi1> to vector<16x1xi1>
    %251 = vector.broadcast %250 : vector<16x1xi1> to vector<16x32xi1>
    %252 = vector.broadcast %cst_166 : f32 to vector<16x32xf32>
    %253 = arith.select %251, %249, %252 : vector<16x32xi1>, vector<16x32xf32>
    %254 = arith.addf %246, %253 : vector<16x32xf32>
    %c10_i32_167 = arith.constant 10 : i32
    %255 = vector.broadcast %c10_i32_167 : i32 to vector<16x1xi32>
    %256 = arith.cmpi eq, %168, %255 : vector<16x1xi32>
    %257 = vector.extract_strided_slice %173 {offsets = [0, 320], sizes = [16, 32], strides = [1, 1]} : vector<16x352xf32> to vector<16x32xf32>
    %cst_168 = arith.constant 0.000000e+00 : f32
    %258 = vector.shape_cast %256 : vector<16x1xi1> to vector<16x1xi1>
    %259 = vector.broadcast %258 : vector<16x1xi1> to vector<16x32xi1>
    %260 = vector.broadcast %cst_168 : f32 to vector<16x32xf32>
    %261 = arith.select %259, %257, %260 : vector<16x32xi1>, vector<16x32xf32>
    %262 = arith.addf %254, %261 : vector<16x32xf32>
    %263 = arith.addf %162, %262 : vector<16x32xf32>
    %cst_169 = arith.constant dense<0.000000e+00> : vector<16x12xf32>
    %264 = tpu.matmul %0, %60, %cst_169 {dimension_numbers = #tpu.dot_dimension_numbers<[1], [0], [0], [1], [0, 0, 1, 1], [], []>} : vector<16x16xf32>, vector<16x12xf32>, vector<16x12xf32> -> vector<16x12xf32>
    %cst_170 = arith.constant dense<0.000000e+00> : vector<16xf32>
    %265 = vector.multi_reduction <add>, %0, %cst_170 [1] : vector<16x16xf32> to vector<16xf32>
    %266 = vector.shape_cast %265 : vector<16xf32> to vector<16x1xf32>
    %cst_171 = arith.constant 1.000000e+01 : f32
    %267 = vector.broadcast %cst_171 : f32 to vector<16x1xf32>
    %268 = arith.minimumf %266, %267 : vector<16x1xf32>
    %269 = arith.fptosi %268 : vector<16x1xf32> to vector<16x1xi32>
    %cst_172 = arith.constant dense<0.000000e+00> : vector<16x352xf32>
    %270 = tpu.matmul %264, %19, %cst_172 {dimension_numbers = #tpu.dot_dimension_numbers<[1], [0], [0], [1], [0, 0, 1, 1], [], []>} : vector<16x12xf32>, vector<12x352xf32>, vector<16x352xf32> -> vector<16x352xf32>
    %cst_173 = arith.constant dense<0.000000e+00> : vector<16x352xf32>
    %271 = tpu.matmul %60, %20, %cst_173 {dimension_numbers = #tpu.dot_dimension_numbers<[1], [0], [0], [1], [0, 0, 1, 1], [], []>} : vector<16x12xf32>, vector<12x352xf32>, vector<16x352xf32> -> vector<16x352xf32>
    %272 = arith.addf %270, %271 : vector<16x352xf32>
    %273 = vector.broadcast %18 : vector<1x352xf32> to vector<16x352xf32>
    %274 = arith.addf %272, %273 : vector<16x352xf32>
    %cst_174 = arith.constant 0.000000e+00 : f32
    %275 = vector.broadcast %cst_174 : f32 to vector<16x32xf32>
    %c0_i32_175 = arith.constant 0 : i32
    %276 = vector.broadcast %c0_i32_175 : i32 to vector<16x1xi32>
    %277 = arith.cmpi eq, %269, %276 : vector<16x1xi32>
    %278 = vector.extract_strided_slice %274 {offsets = [0, 0], sizes = [16, 32], strides = [1, 1]} : vector<16x352xf32> to vector<16x32xf32>
    %cst_176 = arith.constant 0.000000e+00 : f32
    %279 = vector.shape_cast %277 : vector<16x1xi1> to vector<16x1xi1>
    %280 = vector.broadcast %279 : vector<16x1xi1> to vector<16x32xi1>
    %281 = vector.broadcast %cst_176 : f32 to vector<16x32xf32>
    %282 = arith.select %280, %278, %281 : vector<16x32xi1>, vector<16x32xf32>
    %283 = arith.addf %275, %282 : vector<16x32xf32>
    %c1_i32_177 = arith.constant 1 : i32
    %284 = vector.broadcast %c1_i32_177 : i32 to vector<16x1xi32>
    %285 = arith.cmpi eq, %269, %284 : vector<16x1xi32>
    %286 = vector.extract_strided_slice %274 {offsets = [0, 32], sizes = [16, 32], strides = [1, 1]} : vector<16x352xf32> to vector<16x32xf32>
    %cst_178 = arith.constant 0.000000e+00 : f32
    %287 = vector.shape_cast %285 : vector<16x1xi1> to vector<16x1xi1>
    %288 = vector.broadcast %287 : vector<16x1xi1> to vector<16x32xi1>
    %289 = vector.broadcast %cst_178 : f32 to vector<16x32xf32>
    %290 = arith.select %288, %286, %289 : vector<16x32xi1>, vector<16x32xf32>
    %291 = arith.addf %283, %290 : vector<16x32xf32>
    %c2_i32_179 = arith.constant 2 : i32
    %292 = vector.broadcast %c2_i32_179 : i32 to vector<16x1xi32>
    %293 = arith.cmpi eq, %269, %292 : vector<16x1xi32>
    %294 = vector.extract_strided_slice %274 {offsets = [0, 64], sizes = [16, 32], strides = [1, 1]} : vector<16x352xf32> to vector<16x32xf32>
    %cst_180 = arith.constant 0.000000e+00 : f32
    %295 = vector.shape_cast %293 : vector<16x1xi1> to vector<16x1xi1>
    %296 = vector.broadcast %295 : vector<16x1xi1> to vector<16x32xi1>
    %297 = vector.broadcast %cst_180 : f32 to vector<16x32xf32>
    %298 = arith.select %296, %294, %297 : vector<16x32xi1>, vector<16x32xf32>
    %299 = arith.addf %291, %298 : vector<16x32xf32>
    %c3_i32_181 = arith.constant 3 : i32
    %300 = vector.broadcast %c3_i32_181 : i32 to vector<16x1xi32>
    %301 = arith.cmpi eq, %269, %300 : vector<16x1xi32>
    %302 = vector.extract_strided_slice %274 {offsets = [0, 96], sizes = [16, 32], strides = [1, 1]} : vector<16x352xf32> to vector<16x32xf32>
    %cst_182 = arith.constant 0.000000e+00 : f32
    %303 = vector.shape_cast %301 : vector<16x1xi1> to vector<16x1xi1>
    %304 = vector.broadcast %303 : vector<16x1xi1> to vector<16x32xi1>
    %305 = vector.broadcast %cst_182 : f32 to vector<16x32xf32>
    %306 = arith.select %304, %302, %305 : vector<16x32xi1>, vector<16x32xf32>
    %307 = arith.addf %299, %306 : vector<16x32xf32>
    %c4_i32_183 = arith.constant 4 : i32
    %308 = vector.broadcast %c4_i32_183 : i32 to vector<16x1xi32>
    %309 = arith.cmpi eq, %269, %308 : vector<16x1xi32>
    %310 = vector.extract_strided_slice %274 {offsets = [0, 128], sizes = [16, 32], strides = [1, 1]} : vector<16x352xf32> to vector<16x32xf32>
    %cst_184 = arith.constant 0.000000e+00 : f32
    %311 = vector.shape_cast %309 : vector<16x1xi1> to vector<16x1xi1>
    %312 = vector.broadcast %311 : vector<16x1xi1> to vector<16x32xi1>
    %313 = vector.broadcast %cst_184 : f32 to vector<16x32xf32>
    %314 = arith.select %312, %310, %313 : vector<16x32xi1>, vector<16x32xf32>
    %315 = arith.addf %307, %314 : vector<16x32xf32>
    %c5_i32_185 = arith.constant 5 : i32
    %316 = vector.broadcast %c5_i32_185 : i32 to vector<16x1xi32>
    %317 = arith.cmpi eq, %269, %316 : vector<16x1xi32>
    %318 = vector.extract_strided_slice %274 {offsets = [0, 160], sizes = [16, 32], strides = [1, 1]} : vector<16x352xf32> to vector<16x32xf32>
    %cst_186 = arith.constant 0.000000e+00 : f32
    %319 = vector.shape_cast %317 : vector<16x1xi1> to vector<16x1xi1>
    %320 = vector.broadcast %319 : vector<16x1xi1> to vector<16x32xi1>
    %321 = vector.broadcast %cst_186 : f32 to vector<16x32xf32>
    %322 = arith.select %320, %318, %321 : vector<16x32xi1>, vector<16x32xf32>
    %323 = arith.addf %315, %322 : vector<16x32xf32>
    %c6_i32_187 = arith.constant 6 : i32
    %324 = vector.broadcast %c6_i32_187 : i32 to vector<16x1xi32>
    %325 = arith.cmpi eq, %269, %324 : vector<16x1xi32>
    %326 = vector.extract_strided_slice %274 {offsets = [0, 192], sizes = [16, 32], strides = [1, 1]} : vector<16x352xf32> to vector<16x32xf32>
    %cst_188 = arith.constant 0.000000e+00 : f32
    %327 = vector.shape_cast %325 : vector<16x1xi1> to vector<16x1xi1>
    %328 = vector.broadcast %327 : vector<16x1xi1> to vector<16x32xi1>
    %329 = vector.broadcast %cst_188 : f32 to vector<16x32xf32>
    %330 = arith.select %328, %326, %329 : vector<16x32xi1>, vector<16x32xf32>
    %331 = arith.addf %323, %330 : vector<16x32xf32>
    %c7_i32_189 = arith.constant 7 : i32
    %332 = vector.broadcast %c7_i32_189 : i32 to vector<16x1xi32>
    %333 = arith.cmpi eq, %269, %332 : vector<16x1xi32>
    %334 = vector.extract_strided_slice %274 {offsets = [0, 224], sizes = [16, 32], strides = [1, 1]} : vector<16x352xf32> to vector<16x32xf32>
    %cst_190 = arith.constant 0.000000e+00 : f32
    %335 = vector.shape_cast %333 : vector<16x1xi1> to vector<16x1xi1>
    %336 = vector.broadcast %335 : vector<16x1xi1> to vector<16x32xi1>
    %337 = vector.broadcast %cst_190 : f32 to vector<16x32xf32>
    %338 = arith.select %336, %334, %337 : vector<16x32xi1>, vector<16x32xf32>
    %339 = arith.addf %331, %338 : vector<16x32xf32>
    %c8_i32_191 = arith.constant 8 : i32
    %340 = vector.broadcast %c8_i32_191 : i32 to vector<16x1xi32>
    %341 = arith.cmpi eq, %269, %340 : vector<16x1xi32>
    %342 = vector.extract_strided_slice %274 {offsets = [0, 256], sizes = [16, 32], strides = [1, 1]} : vector<16x352xf32> to vector<16x32xf32>
    %cst_192 = arith.constant 0.000000e+00 : f32
    %343 = vector.shape_cast %341 : vector<16x1xi1> to vector<16x1xi1>
    %344 = vector.broadcast %343 : vector<16x1xi1> to vector<16x32xi1>
    %345 = vector.broadcast %cst_192 : f32 to vector<16x32xf32>
    %346 = arith.select %344, %342, %345 : vector<16x32xi1>, vector<16x32xf32>
    %347 = arith.addf %339, %346 : vector<16x32xf32>
    %c9_i32_193 = arith.constant 9 : i32
    %348 = vector.broadcast %c9_i32_193 : i32 to vector<16x1xi32>
    %349 = arith.cmpi eq, %269, %348 : vector<16x1xi32>
    %350 = vector.extract_strided_slice %274 {offsets = [0, 288], sizes = [16, 32], strides = [1, 1]} : vector<16x352xf32> to vector<16x32xf32>
    %cst_194 = arith.constant 0.000000e+00 : f32
    %351 = vector.shape_cast %349 : vector<16x1xi1> to vector<16x1xi1>
    %352 = vector.broadcast %351 : vector<16x1xi1> to vector<16x32xi1>
    %353 = vector.broadcast %cst_194 : f32 to vector<16x32xf32>
    %354 = arith.select %352, %350, %353 : vector<16x32xi1>, vector<16x32xf32>
    %355 = arith.addf %347, %354 : vector<16x32xf32>
    %c10_i32_195 = arith.constant 10 : i32
    %356 = vector.broadcast %c10_i32_195 : i32 to vector<16x1xi32>
    %357 = arith.cmpi eq, %269, %356 : vector<16x1xi32>
    %358 = vector.extract_strided_slice %274 {offsets = [0, 320], sizes = [16, 32], strides = [1, 1]} : vector<16x352xf32> to vector<16x32xf32>
    %cst_196 = arith.constant 0.000000e+00 : f32
    %359 = vector.shape_cast %357 : vector<16x1xi1> to vector<16x1xi1>
    %360 = vector.broadcast %359 : vector<16x1xi1> to vector<16x32xi1>
    %361 = vector.broadcast %cst_196 : f32 to vector<16x32xf32>
    %362 = arith.select %360, %358, %361 : vector<16x32xi1>, vector<16x32xf32>
    %363 = arith.addf %355, %362 : vector<16x32xf32>
    %cst_197 = arith.constant dense<0.000000e+00> : vector<16x12xf32>
    %364 = tpu.matmul %3, %62, %cst_197 {dimension_numbers = #tpu.dot_dimension_numbers<[1], [0], [0], [1], [0, 0, 1, 1], [], []>} : vector<16x16xf32>, vector<16x12xf32>, vector<16x12xf32> -> vector<16x12xf32>
    %cst_198 = arith.constant dense<0.000000e+00> : vector<16xf32>
    %365 = vector.multi_reduction <add>, %3, %cst_198 [1] : vector<16x16xf32> to vector<16xf32>
    %366 = vector.shape_cast %365 : vector<16xf32> to vector<16x1xf32>
    %cst_199 = arith.constant 1.000000e+01 : f32
    %367 = vector.broadcast %cst_199 : f32 to vector<16x1xf32>
    %368 = arith.minimumf %366, %367 : vector<16x1xf32>
    %369 = arith.fptosi %368 : vector<16x1xf32> to vector<16x1xi32>
    %cst_200 = arith.constant dense<0.000000e+00> : vector<16x352xf32>
    %370 = tpu.matmul %364, %25, %cst_200 {dimension_numbers = #tpu.dot_dimension_numbers<[1], [0], [0], [1], [0, 0, 1, 1], [], []>} : vector<16x12xf32>, vector<12x352xf32>, vector<16x352xf32> -> vector<16x352xf32>
    %cst_201 = arith.constant dense<0.000000e+00> : vector<16x352xf32>
    %371 = tpu.matmul %60, %26, %cst_201 {dimension_numbers = #tpu.dot_dimension_numbers<[1], [0], [0], [1], [0, 0, 1, 1], [], []>} : vector<16x12xf32>, vector<12x352xf32>, vector<16x352xf32> -> vector<16x352xf32>
    %372 = arith.addf %370, %371 : vector<16x352xf32>
    %373 = vector.broadcast %24 : vector<1x352xf32> to vector<16x352xf32>
    %374 = arith.addf %372, %373 : vector<16x352xf32>
    %cst_202 = arith.constant 0.000000e+00 : f32
    %375 = vector.broadcast %cst_202 : f32 to vector<16x32xf32>
    %c0_i32_203 = arith.constant 0 : i32
    %376 = vector.broadcast %c0_i32_203 : i32 to vector<16x1xi32>
    %377 = arith.cmpi eq, %369, %376 : vector<16x1xi32>
    %378 = vector.extract_strided_slice %374 {offsets = [0, 0], sizes = [16, 32], strides = [1, 1]} : vector<16x352xf32> to vector<16x32xf32>
    %cst_204 = arith.constant 0.000000e+00 : f32
    %379 = vector.shape_cast %377 : vector<16x1xi1> to vector<16x1xi1>
    %380 = vector.broadcast %379 : vector<16x1xi1> to vector<16x32xi1>
    %381 = vector.broadcast %cst_204 : f32 to vector<16x32xf32>
    %382 = arith.select %380, %378, %381 : vector<16x32xi1>, vector<16x32xf32>
    %383 = arith.addf %375, %382 : vector<16x32xf32>
    %c1_i32_205 = arith.constant 1 : i32
    %384 = vector.broadcast %c1_i32_205 : i32 to vector<16x1xi32>
    %385 = arith.cmpi eq, %369, %384 : vector<16x1xi32>
    %386 = vector.extract_strided_slice %374 {offsets = [0, 32], sizes = [16, 32], strides = [1, 1]} : vector<16x352xf32> to vector<16x32xf32>
    %cst_206 = arith.constant 0.000000e+00 : f32
    %387 = vector.shape_cast %385 : vector<16x1xi1> to vector<16x1xi1>
    %388 = vector.broadcast %387 : vector<16x1xi1> to vector<16x32xi1>
    %389 = vector.broadcast %cst_206 : f32 to vector<16x32xf32>
    %390 = arith.select %388, %386, %389 : vector<16x32xi1>, vector<16x32xf32>
    %391 = arith.addf %383, %390 : vector<16x32xf32>
    %c2_i32_207 = arith.constant 2 : i32
    %392 = vector.broadcast %c2_i32_207 : i32 to vector<16x1xi32>
    %393 = arith.cmpi eq, %369, %392 : vector<16x1xi32>
    %394 = vector.extract_strided_slice %374 {offsets = [0, 64], sizes = [16, 32], strides = [1, 1]} : vector<16x352xf32> to vector<16x32xf32>
    %cst_208 = arith.constant 0.000000e+00 : f32
    %395 = vector.shape_cast %393 : vector<16x1xi1> to vector<16x1xi1>
    %396 = vector.broadcast %395 : vector<16x1xi1> to vector<16x32xi1>
    %397 = vector.broadcast %cst_208 : f32 to vector<16x32xf32>
    %398 = arith.select %396, %394, %397 : vector<16x32xi1>, vector<16x32xf32>
    %399 = arith.addf %391, %398 : vector<16x32xf32>
    %c3_i32_209 = arith.constant 3 : i32
    %400 = vector.broadcast %c3_i32_209 : i32 to vector<16x1xi32>
    %401 = arith.cmpi eq, %369, %400 : vector<16x1xi32>
    %402 = vector.extract_strided_slice %374 {offsets = [0, 96], sizes = [16, 32], strides = [1, 1]} : vector<16x352xf32> to vector<16x32xf32>
    %cst_210 = arith.constant 0.000000e+00 : f32
    %403 = vector.shape_cast %401 : vector<16x1xi1> to vector<16x1xi1>
    %404 = vector.broadcast %403 : vector<16x1xi1> to vector<16x32xi1>
    %405 = vector.broadcast %cst_210 : f32 to vector<16x32xf32>
    %406 = arith.select %404, %402, %405 : vector<16x32xi1>, vector<16x32xf32>
    %407 = arith.addf %399, %406 : vector<16x32xf32>
    %c4_i32_211 = arith.constant 4 : i32
    %408 = vector.broadcast %c4_i32_211 : i32 to vector<16x1xi32>
    %409 = arith.cmpi eq, %369, %408 : vector<16x1xi32>
    %410 = vector.extract_strided_slice %374 {offsets = [0, 128], sizes = [16, 32], strides = [1, 1]} : vector<16x352xf32> to vector<16x32xf32>
    %cst_212 = arith.constant 0.000000e+00 : f32
    %411 = vector.shape_cast %409 : vector<16x1xi1> to vector<16x1xi1>
    %412 = vector.broadcast %411 : vector<16x1xi1> to vector<16x32xi1>
    %413 = vector.broadcast %cst_212 : f32 to vector<16x32xf32>
    %414 = arith.select %412, %410, %413 : vector<16x32xi1>, vector<16x32xf32>
    %415 = arith.addf %407, %414 : vector<16x32xf32>
    %c5_i32_213 = arith.constant 5 : i32
    %416 = vector.broadcast %c5_i32_213 : i32 to vector<16x1xi32>
    %417 = arith.cmpi eq, %369, %416 : vector<16x1xi32>
    %418 = vector.extract_strided_slice %374 {offsets = [0, 160], sizes = [16, 32], strides = [1, 1]} : vector<16x352xf32> to vector<16x32xf32>
    %cst_214 = arith.constant 0.000000e+00 : f32
    %419 = vector.shape_cast %417 : vector<16x1xi1> to vector<16x1xi1>
    %420 = vector.broadcast %419 : vector<16x1xi1> to vector<16x32xi1>
    %421 = vector.broadcast %cst_214 : f32 to vector<16x32xf32>
    %422 = arith.select %420, %418, %421 : vector<16x32xi1>, vector<16x32xf32>
    %423 = arith.addf %415, %422 : vector<16x32xf32>
    %c6_i32_215 = arith.constant 6 : i32
    %424 = vector.broadcast %c6_i32_215 : i32 to vector<16x1xi32>
    %425 = arith.cmpi eq, %369, %424 : vector<16x1xi32>
    %426 = vector.extract_strided_slice %374 {offsets = [0, 192], sizes = [16, 32], strides = [1, 1]} : vector<16x352xf32> to vector<16x32xf32>
    %cst_216 = arith.constant 0.000000e+00 : f32
    %427 = vector.shape_cast %425 : vector<16x1xi1> to vector<16x1xi1>
    %428 = vector.broadcast %427 : vector<16x1xi1> to vector<16x32xi1>
    %429 = vector.broadcast %cst_216 : f32 to vector<16x32xf32>
    %430 = arith.select %428, %426, %429 : vector<16x32xi1>, vector<16x32xf32>
    %431 = arith.addf %423, %430 : vector<16x32xf32>
    %c7_i32_217 = arith.constant 7 : i32
    %432 = vector.broadcast %c7_i32_217 : i32 to vector<16x1xi32>
    %433 = arith.cmpi eq, %369, %432 : vector<16x1xi32>
    %434 = vector.extract_strided_slice %374 {offsets = [0, 224], sizes = [16, 32], strides = [1, 1]} : vector<16x352xf32> to vector<16x32xf32>
    %cst_218 = arith.constant 0.000000e+00 : f32
    %435 = vector.shape_cast %433 : vector<16x1xi1> to vector<16x1xi1>
    %436 = vector.broadcast %435 : vector<16x1xi1> to vector<16x32xi1>
    %437 = vector.broadcast %cst_218 : f32 to vector<16x32xf32>
    %438 = arith.select %436, %434, %437 : vector<16x32xi1>, vector<16x32xf32>
    %439 = arith.addf %431, %438 : vector<16x32xf32>
    %c8_i32_219 = arith.constant 8 : i32
    %440 = vector.broadcast %c8_i32_219 : i32 to vector<16x1xi32>
    %441 = arith.cmpi eq, %369, %440 : vector<16x1xi32>
    %442 = vector.extract_strided_slice %374 {offsets = [0, 256], sizes = [16, 32], strides = [1, 1]} : vector<16x352xf32> to vector<16x32xf32>
    %cst_220 = arith.constant 0.000000e+00 : f32
    %443 = vector.shape_cast %441 : vector<16x1xi1> to vector<16x1xi1>
    %444 = vector.broadcast %443 : vector<16x1xi1> to vector<16x32xi1>
    %445 = vector.broadcast %cst_220 : f32 to vector<16x32xf32>
    %446 = arith.select %444, %442, %445 : vector<16x32xi1>, vector<16x32xf32>
    %447 = arith.addf %439, %446 : vector<16x32xf32>
    %c9_i32_221 = arith.constant 9 : i32
    %448 = vector.broadcast %c9_i32_221 : i32 to vector<16x1xi32>
    %449 = arith.cmpi eq, %369, %448 : vector<16x1xi32>
    %450 = vector.extract_strided_slice %374 {offsets = [0, 288], sizes = [16, 32], strides = [1, 1]} : vector<16x352xf32> to vector<16x32xf32>
    %cst_222 = arith.constant 0.000000e+00 : f32
    %451 = vector.shape_cast %449 : vector<16x1xi1> to vector<16x1xi1>
    %452 = vector.broadcast %451 : vector<16x1xi1> to vector<16x32xi1>
    %453 = vector.broadcast %cst_222 : f32 to vector<16x32xf32>
    %454 = arith.select %452, %450, %453 : vector<16x32xi1>, vector<16x32xf32>
    %455 = arith.addf %447, %454 : vector<16x32xf32>
    %c10_i32_223 = arith.constant 10 : i32
    %456 = vector.broadcast %c10_i32_223 : i32 to vector<16x1xi32>
    %457 = arith.cmpi eq, %369, %456 : vector<16x1xi32>
    %458 = vector.extract_strided_slice %374 {offsets = [0, 320], sizes = [16, 32], strides = [1, 1]} : vector<16x352xf32> to vector<16x32xf32>
    %cst_224 = arith.constant 0.000000e+00 : f32
    %459 = vector.shape_cast %457 : vector<16x1xi1> to vector<16x1xi1>
    %460 = vector.broadcast %459 : vector<16x1xi1> to vector<16x32xi1>
    %461 = vector.broadcast %cst_224 : f32 to vector<16x32xf32>
    %462 = arith.select %460, %458, %461 : vector<16x32xi1>, vector<16x32xf32>
    %463 = arith.addf %455, %462 : vector<16x32xf32>
    %464 = arith.addf %363, %463 : vector<16x32xf32>
    %cst_225 = arith.constant dense<0.000000e+00> : vector<4x96xf32>
    %465 = tpu.matmul %61, %35, %cst_225 {dimension_numbers = #tpu.dot_dimension_numbers<[1], [0], [0], [1], [0, 0, 1, 1], [], []>} : vector<4x6xf32>, vector<6x96xf32>, vector<4x96xf32> -> vector<4x96xf32>
    %466 = vector.broadcast %32 : vector<1x96xf32> to vector<4x96xf32>
    %467 = arith.addf %465, %466 : vector<4x96xf32>
    %cst_226 = arith.constant dense<0.000000e+00> : vector<16x64xf32>
    %468 = tpu.matmul %60, %33, %cst_226 {dimension_numbers = #tpu.dot_dimension_numbers<[1], [0], [0], [1], [0, 0, 1, 1], [], []>} : vector<16x12xf32>, vector<12x64xf32>, vector<16x64xf32> -> vector<16x64xf32>
    %469 = vector.broadcast %30 : vector<1x64xf32> to vector<16x64xf32>
    %470 = arith.addf %468, %469 : vector<16x64xf32>
    %cst_227 = arith.constant dense<0.000000e+00> : vector<16x64xf32>
    %471 = tpu.matmul %62, %34, %cst_227 {dimension_numbers = #tpu.dot_dimension_numbers<[1], [0], [0], [1], [0, 0, 1, 1], [], []>} : vector<16x12xf32>, vector<12x64xf32>, vector<16x64xf32> -> vector<16x64xf32>
    %472 = vector.broadcast %31 : vector<1x64xf32> to vector<16x64xf32>
    %473 = arith.addf %471, %472 : vector<16x64xf32>
    %474 = vector.extract_strided_slice %467 {offsets = [0, 0], sizes = [4, 32], strides = [1, 1]} : vector<4x96xf32> to vector<4x32xf32>
    %475 = vector.extract_strided_slice %470 {offsets = [0, 0], sizes = [16, 32], strides = [1, 1]} : vector<16x64xf32> to vector<16x32xf32>
    %476 = vector.extract_strided_slice %470 {offsets = [0, 32], sizes = [16, 32], strides = [1, 1]} : vector<16x64xf32> to vector<16x32xf32>
    %cst_228 = arith.constant dense<0.000000e+00> : vector<4x16xf32>
    %477 = tpu.matmul %474, %475, %cst_228 {dimension_numbers = #tpu.dot_dimension_numbers<[1], [1], [0], [0], [0, 0, 1, 0], [], []>} : vector<4x32xf32>, vector<16x32xf32>, vector<4x16xf32> -> vector<4x16xf32>
    %cst_229 = arith.constant dense<0.000000e+00> : vector<4xf32>
    %478 = vector.multi_reduction <add>, %1, %cst_229 [1] : vector<4x16xf32> to vector<4xf32>
    %479 = vector.shape_cast %478 : vector<4xf32> to vector<4x1xf32>
    %cst_230 = arith.constant 0.000000e+00 : f32
    %480 = vector.broadcast %cst_230 : f32 to vector<4x1xf32>
    %481 = arith.cmpf ogt, %479, %480 : vector<4x1xf32>
    %cst_231 = arith.constant 0.000000e+00 : f32
    %482 = vector.broadcast %cst_231 : f32 to vector<4x16xf32>
    %483 = arith.cmpf ogt, %1, %482 : vector<4x16xf32>
    %cst_232 = arith.constant -1.000000e+30 : f32
    %484 = vector.broadcast %cst_232 : f32 to vector<4x16xf32>
    %485 = arith.select %483, %477, %484 : vector<4x16xi1>, vector<4x16xf32>
    %cst_233 = arith.constant dense<0xFF800000> : vector<4xf32>
    %486 = vector.multi_reduction <maximumf>, %485, %cst_233 [1] : vector<4x16xf32> to vector<4xf32>
    %487 = vector.shape_cast %486 : vector<4xf32> to vector<4x1xf32>
    %cst_234 = arith.constant 0.000000e+00 : f32
    %488 = vector.broadcast %cst_234 : f32 to vector<4x1xf32>
    %489 = arith.select %481, %487, %488 : vector<4x1xi1>, vector<4x1xf32>
    %cst_235 = arith.constant 0.000000e+00 : f32
    %490 = vector.broadcast %cst_235 : f32 to vector<4x16xf32>
    %491 = arith.cmpf ogt, %1, %490 : vector<4x16xf32>
    %492 = vector.broadcast %489 : vector<4x1xf32> to vector<4x16xf32>
    %493 = arith.subf %485, %492 : vector<4x16xf32>
    %494 = math.exp %493 : vector<4x16xf32>
    %cst_236 = arith.constant 0.000000e+00 : f32
    %495 = vector.broadcast %cst_236 : f32 to vector<4x16xf32>
    %496 = arith.select %491, %494, %495 : vector<4x16xi1>, vector<4x16xf32>
    %cst_237 = arith.constant dense<0.000000e+00> : vector<4xf32>
    %497 = vector.multi_reduction <add>, %496, %cst_237 [1] : vector<4x16xf32> to vector<4xf32>
    %498 = vector.shape_cast %497 : vector<4xf32> to vector<4x1xf32>
    %cst_238 = arith.constant 1.000000e-16 : f32
    %499 = vector.broadcast %cst_238 : f32 to vector<4x1xf32>
    %500 = arith.addf %498, %499 : vector<4x1xf32>
    %501 = vector.broadcast %500 : vector<4x1xf32> to vector<4x16xf32>
    %502 = arith.divf %496, %501 : vector<4x16xf32>
    %cst_239 = arith.constant dense<0.000000e+00> : vector<4x32xf32>
    %503 = tpu.matmul %502, %476, %cst_239 {dimension_numbers = #tpu.dot_dimension_numbers<[1], [0], [0], [1], [0, 0, 1, 1], [], []>} : vector<4x16xf32>, vector<16x32xf32>, vector<4x32xf32> -> vector<4x32xf32>
    %504 = vector.extract_strided_slice %467 {offsets = [0, 32], sizes = [4, 32], strides = [1, 1]} : vector<4x96xf32> to vector<4x32xf32>
    %505 = vector.extract_strided_slice %473 {offsets = [0, 0], sizes = [16, 32], strides = [1, 1]} : vector<16x64xf32> to vector<16x32xf32>
    %506 = vector.extract_strided_slice %473 {offsets = [0, 32], sizes = [16, 32], strides = [1, 1]} : vector<16x64xf32> to vector<16x32xf32>
    %cst_240 = arith.constant dense<0.000000e+00> : vector<4x16xf32>
    %507 = tpu.matmul %504, %505, %cst_240 {dimension_numbers = #tpu.dot_dimension_numbers<[1], [1], [0], [0], [0, 0, 1, 0], [], []>} : vector<4x32xf32>, vector<16x32xf32>, vector<4x16xf32> -> vector<4x16xf32>
    %cst_241 = arith.constant dense<0.000000e+00> : vector<4xf32>
    %508 = vector.multi_reduction <add>, %4, %cst_241 [1] : vector<4x16xf32> to vector<4xf32>
    %509 = vector.shape_cast %508 : vector<4xf32> to vector<4x1xf32>
    %cst_242 = arith.constant 0.000000e+00 : f32
    %510 = vector.broadcast %cst_242 : f32 to vector<4x1xf32>
    %511 = arith.cmpf ogt, %509, %510 : vector<4x1xf32>
    %cst_243 = arith.constant 0.000000e+00 : f32
    %512 = vector.broadcast %cst_243 : f32 to vector<4x16xf32>
    %513 = arith.cmpf ogt, %4, %512 : vector<4x16xf32>
    %cst_244 = arith.constant -1.000000e+30 : f32
    %514 = vector.broadcast %cst_244 : f32 to vector<4x16xf32>
    %515 = arith.select %513, %507, %514 : vector<4x16xi1>, vector<4x16xf32>
    %cst_245 = arith.constant dense<0xFF800000> : vector<4xf32>
    %516 = vector.multi_reduction <maximumf>, %515, %cst_245 [1] : vector<4x16xf32> to vector<4xf32>
    %517 = vector.shape_cast %516 : vector<4xf32> to vector<4x1xf32>
    %cst_246 = arith.constant 0.000000e+00 : f32
    %518 = vector.broadcast %cst_246 : f32 to vector<4x1xf32>
    %519 = arith.select %511, %517, %518 : vector<4x1xi1>, vector<4x1xf32>
    %cst_247 = arith.constant 0.000000e+00 : f32
    %520 = vector.broadcast %cst_247 : f32 to vector<4x16xf32>
    %521 = arith.cmpf ogt, %4, %520 : vector<4x16xf32>
    %522 = vector.broadcast %519 : vector<4x1xf32> to vector<4x16xf32>
    %523 = arith.subf %515, %522 : vector<4x16xf32>
    %524 = math.exp %523 : vector<4x16xf32>
    %cst_248 = arith.constant 0.000000e+00 : f32
    %525 = vector.broadcast %cst_248 : f32 to vector<4x16xf32>
    %526 = arith.select %521, %524, %525 : vector<4x16xi1>, vector<4x16xf32>
    %cst_249 = arith.constant dense<0.000000e+00> : vector<4xf32>
    %527 = vector.multi_reduction <add>, %526, %cst_249 [1] : vector<4x16xf32> to vector<4xf32>
    %528 = vector.shape_cast %527 : vector<4xf32> to vector<4x1xf32>
    %cst_250 = arith.constant 1.000000e-16 : f32
    %529 = vector.broadcast %cst_250 : f32 to vector<4x1xf32>
    %530 = arith.addf %528, %529 : vector<4x1xf32>
    %531 = vector.broadcast %530 : vector<4x1xf32> to vector<4x16xf32>
    %532 = arith.divf %526, %531 : vector<4x16xf32>
    %cst_251 = arith.constant dense<0.000000e+00> : vector<4x32xf32>
    %533 = tpu.matmul %532, %506, %cst_251 {dimension_numbers = #tpu.dot_dimension_numbers<[1], [0], [0], [1], [0, 0, 1, 1], [], []>} : vector<4x16xf32>, vector<16x32xf32>, vector<4x32xf32> -> vector<4x32xf32>
    %534 = arith.addf %503, %533 : vector<4x32xf32>
    %535 = vector.extract_strided_slice %467 {offsets = [0, 64], sizes = [4, 32], strides = [1, 1]} : vector<4x96xf32> to vector<4x32xf32>
    %536 = arith.addf %534, %535 : vector<4x32xf32>
    %cst_252 = arith.constant dense<0.000000e+00> : vector<16x32xf32>
    %537 = tpu.matmul %263, %17, %cst_252 {dimension_numbers = #tpu.dot_dimension_numbers<[1], [0], [0], [1], [0, 0, 1, 1], [], []>} : vector<16x32xf32>, vector<32x32xf32>, vector<16x32xf32> -> vector<16x32xf32>
    %538 = vector.broadcast %16 : vector<1x32xf32> to vector<16x32xf32>
    %539 = arith.addf %537, %538 : vector<16x32xf32>
    %cst_253 = arith.constant dense<0.000000e+00> : vector<16x32xf32>
    %540 = tpu.matmul %464, %13, %cst_253 {dimension_numbers = #tpu.dot_dimension_numbers<[1], [0], [0], [1], [0, 0, 1, 1], [], []>} : vector<16x32xf32>, vector<32x32xf32>, vector<16x32xf32> -> vector<16x32xf32>
    %541 = vector.broadcast %12 : vector<1x32xf32> to vector<16x32xf32>
    %542 = arith.addf %540, %541 : vector<16x32xf32>
    %cst_254 = arith.constant dense<0.000000e+00> : vector<4x32xf32>
    %543 = tpu.matmul %536, %15, %cst_254 {dimension_numbers = #tpu.dot_dimension_numbers<[1], [0], [0], [1], [0, 0, 1, 1], [], []>} : vector<4x32xf32>, vector<32x32xf32>, vector<4x32xf32> -> vector<4x32xf32>
    %544 = vector.broadcast %14 : vector<1x32xf32> to vector<4x32xf32>
    %545 = arith.addf %543, %544 : vector<4x32xf32>
    %cst_255 = arith.constant dense<0.000000e+00> : vector<16x32xf32>
    %546 = tpu.matmul %5, %539, %cst_255 {dimension_numbers = #tpu.dot_dimension_numbers<[1], [0], [0], [1], [0, 0, 1, 1], [], []>} : vector<16x16xf32>, vector<16x32xf32>, vector<16x32xf32> -> vector<16x32xf32>
    %cst_256 = arith.constant dense<0.000000e+00> : vector<16xf32>
    %547 = vector.multi_reduction <add>, %5, %cst_256 [1] : vector<16x16xf32> to vector<16xf32>
    %548 = vector.shape_cast %547 : vector<16xf32> to vector<16x1xf32>
    %cst_257 = arith.constant 1.000000e+01 : f32
    %549 = vector.broadcast %cst_257 : f32 to vector<16x1xf32>
    %550 = arith.minimumf %548, %549 : vector<16x1xf32>
    %551 = arith.fptosi %550 : vector<16x1xf32> to vector<16x1xi32>
    %cst_258 = arith.constant dense<0.000000e+00> : vector<16x352xf32>
    %552 = tpu.matmul %546, %52, %cst_258 {dimension_numbers = #tpu.dot_dimension_numbers<[1], [0], [0], [1], [0, 0, 1, 1], [], []>} : vector<16x32xf32>, vector<32x352xf32>, vector<16x352xf32> -> vector<16x352xf32>
    %cst_259 = arith.constant dense<0.000000e+00> : vector<16x352xf32>
    %553 = tpu.matmul %539, %53, %cst_259 {dimension_numbers = #tpu.dot_dimension_numbers<[1], [0], [0], [1], [0, 0, 1, 1], [], []>} : vector<16x32xf32>, vector<32x352xf32>, vector<16x352xf32> -> vector<16x352xf32>
    %554 = arith.addf %552, %553 : vector<16x352xf32>
    %555 = vector.broadcast %51 : vector<1x352xf32> to vector<16x352xf32>
    %556 = arith.addf %554, %555 : vector<16x352xf32>
    %cst_260 = arith.constant 0.000000e+00 : f32
    %557 = vector.broadcast %cst_260 : f32 to vector<16x32xf32>
    %c0_i32_261 = arith.constant 0 : i32
    %558 = vector.broadcast %c0_i32_261 : i32 to vector<16x1xi32>
    %559 = arith.cmpi eq, %551, %558 : vector<16x1xi32>
    %560 = vector.extract_strided_slice %556 {offsets = [0, 0], sizes = [16, 32], strides = [1, 1]} : vector<16x352xf32> to vector<16x32xf32>
    %cst_262 = arith.constant 0.000000e+00 : f32
    %561 = vector.shape_cast %559 : vector<16x1xi1> to vector<16x1xi1>
    %562 = vector.broadcast %561 : vector<16x1xi1> to vector<16x32xi1>
    %563 = vector.broadcast %cst_262 : f32 to vector<16x32xf32>
    %564 = arith.select %562, %560, %563 : vector<16x32xi1>, vector<16x32xf32>
    %565 = arith.addf %557, %564 : vector<16x32xf32>
    %c1_i32_263 = arith.constant 1 : i32
    %566 = vector.broadcast %c1_i32_263 : i32 to vector<16x1xi32>
    %567 = arith.cmpi eq, %551, %566 : vector<16x1xi32>
    %568 = vector.extract_strided_slice %556 {offsets = [0, 32], sizes = [16, 32], strides = [1, 1]} : vector<16x352xf32> to vector<16x32xf32>
    %cst_264 = arith.constant 0.000000e+00 : f32
    %569 = vector.shape_cast %567 : vector<16x1xi1> to vector<16x1xi1>
    %570 = vector.broadcast %569 : vector<16x1xi1> to vector<16x32xi1>
    %571 = vector.broadcast %cst_264 : f32 to vector<16x32xf32>
    %572 = arith.select %570, %568, %571 : vector<16x32xi1>, vector<16x32xf32>
    %573 = arith.addf %565, %572 : vector<16x32xf32>
    %c2_i32_265 = arith.constant 2 : i32
    %574 = vector.broadcast %c2_i32_265 : i32 to vector<16x1xi32>
    %575 = arith.cmpi eq, %551, %574 : vector<16x1xi32>
    %576 = vector.extract_strided_slice %556 {offsets = [0, 64], sizes = [16, 32], strides = [1, 1]} : vector<16x352xf32> to vector<16x32xf32>
    %cst_266 = arith.constant 0.000000e+00 : f32
    %577 = vector.shape_cast %575 : vector<16x1xi1> to vector<16x1xi1>
    %578 = vector.broadcast %577 : vector<16x1xi1> to vector<16x32xi1>
    %579 = vector.broadcast %cst_266 : f32 to vector<16x32xf32>
    %580 = arith.select %578, %576, %579 : vector<16x32xi1>, vector<16x32xf32>
    %581 = arith.addf %573, %580 : vector<16x32xf32>
    %c3_i32_267 = arith.constant 3 : i32
    %582 = vector.broadcast %c3_i32_267 : i32 to vector<16x1xi32>
    %583 = arith.cmpi eq, %551, %582 : vector<16x1xi32>
    %584 = vector.extract_strided_slice %556 {offsets = [0, 96], sizes = [16, 32], strides = [1, 1]} : vector<16x352xf32> to vector<16x32xf32>
    %cst_268 = arith.constant 0.000000e+00 : f32
    %585 = vector.shape_cast %583 : vector<16x1xi1> to vector<16x1xi1>
    %586 = vector.broadcast %585 : vector<16x1xi1> to vector<16x32xi1>
    %587 = vector.broadcast %cst_268 : f32 to vector<16x32xf32>
    %588 = arith.select %586, %584, %587 : vector<16x32xi1>, vector<16x32xf32>
    %589 = arith.addf %581, %588 : vector<16x32xf32>
    %c4_i32_269 = arith.constant 4 : i32
    %590 = vector.broadcast %c4_i32_269 : i32 to vector<16x1xi32>
    %591 = arith.cmpi eq, %551, %590 : vector<16x1xi32>
    %592 = vector.extract_strided_slice %556 {offsets = [0, 128], sizes = [16, 32], strides = [1, 1]} : vector<16x352xf32> to vector<16x32xf32>
    %cst_270 = arith.constant 0.000000e+00 : f32
    %593 = vector.shape_cast %591 : vector<16x1xi1> to vector<16x1xi1>
    %594 = vector.broadcast %593 : vector<16x1xi1> to vector<16x32xi1>
    %595 = vector.broadcast %cst_270 : f32 to vector<16x32xf32>
    %596 = arith.select %594, %592, %595 : vector<16x32xi1>, vector<16x32xf32>
    %597 = arith.addf %589, %596 : vector<16x32xf32>
    %c5_i32_271 = arith.constant 5 : i32
    %598 = vector.broadcast %c5_i32_271 : i32 to vector<16x1xi32>
    %599 = arith.cmpi eq, %551, %598 : vector<16x1xi32>
    %600 = vector.extract_strided_slice %556 {offsets = [0, 160], sizes = [16, 32], strides = [1, 1]} : vector<16x352xf32> to vector<16x32xf32>
    %cst_272 = arith.constant 0.000000e+00 : f32
    %601 = vector.shape_cast %599 : vector<16x1xi1> to vector<16x1xi1>
    %602 = vector.broadcast %601 : vector<16x1xi1> to vector<16x32xi1>
    %603 = vector.broadcast %cst_272 : f32 to vector<16x32xf32>
    %604 = arith.select %602, %600, %603 : vector<16x32xi1>, vector<16x32xf32>
    %605 = arith.addf %597, %604 : vector<16x32xf32>
    %c6_i32_273 = arith.constant 6 : i32
    %606 = vector.broadcast %c6_i32_273 : i32 to vector<16x1xi32>
    %607 = arith.cmpi eq, %551, %606 : vector<16x1xi32>
    %608 = vector.extract_strided_slice %556 {offsets = [0, 192], sizes = [16, 32], strides = [1, 1]} : vector<16x352xf32> to vector<16x32xf32>
    %cst_274 = arith.constant 0.000000e+00 : f32
    %609 = vector.shape_cast %607 : vector<16x1xi1> to vector<16x1xi1>
    %610 = vector.broadcast %609 : vector<16x1xi1> to vector<16x32xi1>
    %611 = vector.broadcast %cst_274 : f32 to vector<16x32xf32>
    %612 = arith.select %610, %608, %611 : vector<16x32xi1>, vector<16x32xf32>
    %613 = arith.addf %605, %612 : vector<16x32xf32>
    %c7_i32_275 = arith.constant 7 : i32
    %614 = vector.broadcast %c7_i32_275 : i32 to vector<16x1xi32>
    %615 = arith.cmpi eq, %551, %614 : vector<16x1xi32>
    %616 = vector.extract_strided_slice %556 {offsets = [0, 224], sizes = [16, 32], strides = [1, 1]} : vector<16x352xf32> to vector<16x32xf32>
    %cst_276 = arith.constant 0.000000e+00 : f32
    %617 = vector.shape_cast %615 : vector<16x1xi1> to vector<16x1xi1>
    %618 = vector.broadcast %617 : vector<16x1xi1> to vector<16x32xi1>
    %619 = vector.broadcast %cst_276 : f32 to vector<16x32xf32>
    %620 = arith.select %618, %616, %619 : vector<16x32xi1>, vector<16x32xf32>
    %621 = arith.addf %613, %620 : vector<16x32xf32>
    %c8_i32_277 = arith.constant 8 : i32
    %622 = vector.broadcast %c8_i32_277 : i32 to vector<16x1xi32>
    %623 = arith.cmpi eq, %551, %622 : vector<16x1xi32>
    %624 = vector.extract_strided_slice %556 {offsets = [0, 256], sizes = [16, 32], strides = [1, 1]} : vector<16x352xf32> to vector<16x32xf32>
    %cst_278 = arith.constant 0.000000e+00 : f32
    %625 = vector.shape_cast %623 : vector<16x1xi1> to vector<16x1xi1>
    %626 = vector.broadcast %625 : vector<16x1xi1> to vector<16x32xi1>
    %627 = vector.broadcast %cst_278 : f32 to vector<16x32xf32>
    %628 = arith.select %626, %624, %627 : vector<16x32xi1>, vector<16x32xf32>
    %629 = arith.addf %621, %628 : vector<16x32xf32>
    %c9_i32_279 = arith.constant 9 : i32
    %630 = vector.broadcast %c9_i32_279 : i32 to vector<16x1xi32>
    %631 = arith.cmpi eq, %551, %630 : vector<16x1xi32>
    %632 = vector.extract_strided_slice %556 {offsets = [0, 288], sizes = [16, 32], strides = [1, 1]} : vector<16x352xf32> to vector<16x32xf32>
    %cst_280 = arith.constant 0.000000e+00 : f32
    %633 = vector.shape_cast %631 : vector<16x1xi1> to vector<16x1xi1>
    %634 = vector.broadcast %633 : vector<16x1xi1> to vector<16x32xi1>
    %635 = vector.broadcast %cst_280 : f32 to vector<16x32xf32>
    %636 = arith.select %634, %632, %635 : vector<16x32xi1>, vector<16x32xf32>
    %637 = arith.addf %629, %636 : vector<16x32xf32>
    %c10_i32_281 = arith.constant 10 : i32
    %638 = vector.broadcast %c10_i32_281 : i32 to vector<16x1xi32>
    %639 = arith.cmpi eq, %551, %638 : vector<16x1xi32>
    %640 = vector.extract_strided_slice %556 {offsets = [0, 320], sizes = [16, 32], strides = [1, 1]} : vector<16x352xf32> to vector<16x32xf32>
    %cst_282 = arith.constant 0.000000e+00 : f32
    %641 = vector.shape_cast %639 : vector<16x1xi1> to vector<16x1xi1>
    %642 = vector.broadcast %641 : vector<16x1xi1> to vector<16x32xi1>
    %643 = vector.broadcast %cst_282 : f32 to vector<16x32xf32>
    %644 = arith.select %642, %640, %643 : vector<16x32xi1>, vector<16x32xf32>
    %645 = arith.addf %637, %644 : vector<16x32xf32>
    %cst_283 = arith.constant dense<0.000000e+00> : vector<16x32xf32>
    %646 = tpu.matmul %2, %542, %cst_283 {dimension_numbers = #tpu.dot_dimension_numbers<[1], [0], [0], [1], [0, 0, 1, 1], [], []>} : vector<16x16xf32>, vector<16x32xf32>, vector<16x32xf32> -> vector<16x32xf32>
    %cst_284 = arith.constant dense<0.000000e+00> : vector<16xf32>
    %647 = vector.multi_reduction <add>, %2, %cst_284 [1] : vector<16x16xf32> to vector<16xf32>
    %648 = vector.shape_cast %647 : vector<16xf32> to vector<16x1xf32>
    %cst_285 = arith.constant 1.000000e+01 : f32
    %649 = vector.broadcast %cst_285 : f32 to vector<16x1xf32>
    %650 = arith.minimumf %648, %649 : vector<16x1xf32>
    %651 = arith.fptosi %650 : vector<16x1xf32> to vector<16x1xi32>
    %cst_286 = arith.constant dense<0.000000e+00> : vector<16x352xf32>
    %652 = tpu.matmul %646, %46, %cst_286 {dimension_numbers = #tpu.dot_dimension_numbers<[1], [0], [0], [1], [0, 0, 1, 1], [], []>} : vector<16x32xf32>, vector<32x352xf32>, vector<16x352xf32> -> vector<16x352xf32>
    %cst_287 = arith.constant dense<0.000000e+00> : vector<16x352xf32>
    %653 = tpu.matmul %539, %47, %cst_287 {dimension_numbers = #tpu.dot_dimension_numbers<[1], [0], [0], [1], [0, 0, 1, 1], [], []>} : vector<16x32xf32>, vector<32x352xf32>, vector<16x352xf32> -> vector<16x352xf32>
    %654 = arith.addf %652, %653 : vector<16x352xf32>
    %655 = vector.broadcast %45 : vector<1x352xf32> to vector<16x352xf32>
    %656 = arith.addf %654, %655 : vector<16x352xf32>
    %cst_288 = arith.constant 0.000000e+00 : f32
    %657 = vector.broadcast %cst_288 : f32 to vector<16x32xf32>
    %c0_i32_289 = arith.constant 0 : i32
    %658 = vector.broadcast %c0_i32_289 : i32 to vector<16x1xi32>
    %659 = arith.cmpi eq, %651, %658 : vector<16x1xi32>
    %660 = vector.extract_strided_slice %656 {offsets = [0, 0], sizes = [16, 32], strides = [1, 1]} : vector<16x352xf32> to vector<16x32xf32>
    %cst_290 = arith.constant 0.000000e+00 : f32
    %661 = vector.shape_cast %659 : vector<16x1xi1> to vector<16x1xi1>
    %662 = vector.broadcast %661 : vector<16x1xi1> to vector<16x32xi1>
    %663 = vector.broadcast %cst_290 : f32 to vector<16x32xf32>
    %664 = arith.select %662, %660, %663 : vector<16x32xi1>, vector<16x32xf32>
    %665 = arith.addf %657, %664 : vector<16x32xf32>
    %c1_i32_291 = arith.constant 1 : i32
    %666 = vector.broadcast %c1_i32_291 : i32 to vector<16x1xi32>
    %667 = arith.cmpi eq, %651, %666 : vector<16x1xi32>
    %668 = vector.extract_strided_slice %656 {offsets = [0, 32], sizes = [16, 32], strides = [1, 1]} : vector<16x352xf32> to vector<16x32xf32>
    %cst_292 = arith.constant 0.000000e+00 : f32
    %669 = vector.shape_cast %667 : vector<16x1xi1> to vector<16x1xi1>
    %670 = vector.broadcast %669 : vector<16x1xi1> to vector<16x32xi1>
    %671 = vector.broadcast %cst_292 : f32 to vector<16x32xf32>
    %672 = arith.select %670, %668, %671 : vector<16x32xi1>, vector<16x32xf32>
    %673 = arith.addf %665, %672 : vector<16x32xf32>
    %c2_i32_293 = arith.constant 2 : i32
    %674 = vector.broadcast %c2_i32_293 : i32 to vector<16x1xi32>
    %675 = arith.cmpi eq, %651, %674 : vector<16x1xi32>
    %676 = vector.extract_strided_slice %656 {offsets = [0, 64], sizes = [16, 32], strides = [1, 1]} : vector<16x352xf32> to vector<16x32xf32>
    %cst_294 = arith.constant 0.000000e+00 : f32
    %677 = vector.shape_cast %675 : vector<16x1xi1> to vector<16x1xi1>
    %678 = vector.broadcast %677 : vector<16x1xi1> to vector<16x32xi1>
    %679 = vector.broadcast %cst_294 : f32 to vector<16x32xf32>
    %680 = arith.select %678, %676, %679 : vector<16x32xi1>, vector<16x32xf32>
    %681 = arith.addf %673, %680 : vector<16x32xf32>
    %c3_i32_295 = arith.constant 3 : i32
    %682 = vector.broadcast %c3_i32_295 : i32 to vector<16x1xi32>
    %683 = arith.cmpi eq, %651, %682 : vector<16x1xi32>
    %684 = vector.extract_strided_slice %656 {offsets = [0, 96], sizes = [16, 32], strides = [1, 1]} : vector<16x352xf32> to vector<16x32xf32>
    %cst_296 = arith.constant 0.000000e+00 : f32
    %685 = vector.shape_cast %683 : vector<16x1xi1> to vector<16x1xi1>
    %686 = vector.broadcast %685 : vector<16x1xi1> to vector<16x32xi1>
    %687 = vector.broadcast %cst_296 : f32 to vector<16x32xf32>
    %688 = arith.select %686, %684, %687 : vector<16x32xi1>, vector<16x32xf32>
    %689 = arith.addf %681, %688 : vector<16x32xf32>
    %c4_i32_297 = arith.constant 4 : i32
    %690 = vector.broadcast %c4_i32_297 : i32 to vector<16x1xi32>
    %691 = arith.cmpi eq, %651, %690 : vector<16x1xi32>
    %692 = vector.extract_strided_slice %656 {offsets = [0, 128], sizes = [16, 32], strides = [1, 1]} : vector<16x352xf32> to vector<16x32xf32>
    %cst_298 = arith.constant 0.000000e+00 : f32
    %693 = vector.shape_cast %691 : vector<16x1xi1> to vector<16x1xi1>
    %694 = vector.broadcast %693 : vector<16x1xi1> to vector<16x32xi1>
    %695 = vector.broadcast %cst_298 : f32 to vector<16x32xf32>
    %696 = arith.select %694, %692, %695 : vector<16x32xi1>, vector<16x32xf32>
    %697 = arith.addf %689, %696 : vector<16x32xf32>
    %c5_i32_299 = arith.constant 5 : i32
    %698 = vector.broadcast %c5_i32_299 : i32 to vector<16x1xi32>
    %699 = arith.cmpi eq, %651, %698 : vector<16x1xi32>
    %700 = vector.extract_strided_slice %656 {offsets = [0, 160], sizes = [16, 32], strides = [1, 1]} : vector<16x352xf32> to vector<16x32xf32>
    %cst_300 = arith.constant 0.000000e+00 : f32
    %701 = vector.shape_cast %699 : vector<16x1xi1> to vector<16x1xi1>
    %702 = vector.broadcast %701 : vector<16x1xi1> to vector<16x32xi1>
    %703 = vector.broadcast %cst_300 : f32 to vector<16x32xf32>
    %704 = arith.select %702, %700, %703 : vector<16x32xi1>, vector<16x32xf32>
    %705 = arith.addf %697, %704 : vector<16x32xf32>
    %c6_i32_301 = arith.constant 6 : i32
    %706 = vector.broadcast %c6_i32_301 : i32 to vector<16x1xi32>
    %707 = arith.cmpi eq, %651, %706 : vector<16x1xi32>
    %708 = vector.extract_strided_slice %656 {offsets = [0, 192], sizes = [16, 32], strides = [1, 1]} : vector<16x352xf32> to vector<16x32xf32>
    %cst_302 = arith.constant 0.000000e+00 : f32
    %709 = vector.shape_cast %707 : vector<16x1xi1> to vector<16x1xi1>
    %710 = vector.broadcast %709 : vector<16x1xi1> to vector<16x32xi1>
    %711 = vector.broadcast %cst_302 : f32 to vector<16x32xf32>
    %712 = arith.select %710, %708, %711 : vector<16x32xi1>, vector<16x32xf32>
    %713 = arith.addf %705, %712 : vector<16x32xf32>
    %c7_i32_303 = arith.constant 7 : i32
    %714 = vector.broadcast %c7_i32_303 : i32 to vector<16x1xi32>
    %715 = arith.cmpi eq, %651, %714 : vector<16x1xi32>
    %716 = vector.extract_strided_slice %656 {offsets = [0, 224], sizes = [16, 32], strides = [1, 1]} : vector<16x352xf32> to vector<16x32xf32>
    %cst_304 = arith.constant 0.000000e+00 : f32
    %717 = vector.shape_cast %715 : vector<16x1xi1> to vector<16x1xi1>
    %718 = vector.broadcast %717 : vector<16x1xi1> to vector<16x32xi1>
    %719 = vector.broadcast %cst_304 : f32 to vector<16x32xf32>
    %720 = arith.select %718, %716, %719 : vector<16x32xi1>, vector<16x32xf32>
    %721 = arith.addf %713, %720 : vector<16x32xf32>
    %c8_i32_305 = arith.constant 8 : i32
    %722 = vector.broadcast %c8_i32_305 : i32 to vector<16x1xi32>
    %723 = arith.cmpi eq, %651, %722 : vector<16x1xi32>
    %724 = vector.extract_strided_slice %656 {offsets = [0, 256], sizes = [16, 32], strides = [1, 1]} : vector<16x352xf32> to vector<16x32xf32>
    %cst_306 = arith.constant 0.000000e+00 : f32
    %725 = vector.shape_cast %723 : vector<16x1xi1> to vector<16x1xi1>
    %726 = vector.broadcast %725 : vector<16x1xi1> to vector<16x32xi1>
    %727 = vector.broadcast %cst_306 : f32 to vector<16x32xf32>
    %728 = arith.select %726, %724, %727 : vector<16x32xi1>, vector<16x32xf32>
    %729 = arith.addf %721, %728 : vector<16x32xf32>
    %c9_i32_307 = arith.constant 9 : i32
    %730 = vector.broadcast %c9_i32_307 : i32 to vector<16x1xi32>
    %731 = arith.cmpi eq, %651, %730 : vector<16x1xi32>
    %732 = vector.extract_strided_slice %656 {offsets = [0, 288], sizes = [16, 32], strides = [1, 1]} : vector<16x352xf32> to vector<16x32xf32>
    %cst_308 = arith.constant 0.000000e+00 : f32
    %733 = vector.shape_cast %731 : vector<16x1xi1> to vector<16x1xi1>
    %734 = vector.broadcast %733 : vector<16x1xi1> to vector<16x32xi1>
    %735 = vector.broadcast %cst_308 : f32 to vector<16x32xf32>
    %736 = arith.select %734, %732, %735 : vector<16x32xi1>, vector<16x32xf32>
    %737 = arith.addf %729, %736 : vector<16x32xf32>
    %c10_i32_309 = arith.constant 10 : i32
    %738 = vector.broadcast %c10_i32_309 : i32 to vector<16x1xi32>
    %739 = arith.cmpi eq, %651, %738 : vector<16x1xi32>
    %740 = vector.extract_strided_slice %656 {offsets = [0, 320], sizes = [16, 32], strides = [1, 1]} : vector<16x352xf32> to vector<16x32xf32>
    %cst_310 = arith.constant 0.000000e+00 : f32
    %741 = vector.shape_cast %739 : vector<16x1xi1> to vector<16x1xi1>
    %742 = vector.broadcast %741 : vector<16x1xi1> to vector<16x32xi1>
    %743 = vector.broadcast %cst_310 : f32 to vector<16x32xf32>
    %744 = arith.select %742, %740, %743 : vector<16x32xi1>, vector<16x32xf32>
    %745 = arith.addf %737, %744 : vector<16x32xf32>
    %746 = arith.addf %645, %745 : vector<16x32xf32>
    %cst_311 = arith.constant dense<0.000000e+00> : vector<16x32xf32>
    %747 = tpu.matmul %0, %542, %cst_311 {dimension_numbers = #tpu.dot_dimension_numbers<[1], [0], [0], [1], [0, 0, 1, 1], [], []>} : vector<16x16xf32>, vector<16x32xf32>, vector<16x32xf32> -> vector<16x32xf32>
    %cst_312 = arith.constant dense<0.000000e+00> : vector<16xf32>
    %748 = vector.multi_reduction <add>, %0, %cst_312 [1] : vector<16x16xf32> to vector<16xf32>
    %749 = vector.shape_cast %748 : vector<16xf32> to vector<16x1xf32>
    %cst_313 = arith.constant 1.000000e+01 : f32
    %750 = vector.broadcast %cst_313 : f32 to vector<16x1xf32>
    %751 = arith.minimumf %749, %750 : vector<16x1xf32>
    %752 = arith.fptosi %751 : vector<16x1xf32> to vector<16x1xi32>
    %cst_314 = arith.constant dense<0.000000e+00> : vector<16x352xf32>
    %753 = tpu.matmul %747, %43, %cst_314 {dimension_numbers = #tpu.dot_dimension_numbers<[1], [0], [0], [1], [0, 0, 1, 1], [], []>} : vector<16x32xf32>, vector<32x352xf32>, vector<16x352xf32> -> vector<16x352xf32>
    %cst_315 = arith.constant dense<0.000000e+00> : vector<16x352xf32>
    %754 = tpu.matmul %542, %44, %cst_315 {dimension_numbers = #tpu.dot_dimension_numbers<[1], [0], [0], [1], [0, 0, 1, 1], [], []>} : vector<16x32xf32>, vector<32x352xf32>, vector<16x352xf32> -> vector<16x352xf32>
    %755 = arith.addf %753, %754 : vector<16x352xf32>
    %756 = vector.broadcast %42 : vector<1x352xf32> to vector<16x352xf32>
    %757 = arith.addf %755, %756 : vector<16x352xf32>
    %cst_316 = arith.constant 0.000000e+00 : f32
    %758 = vector.broadcast %cst_316 : f32 to vector<16x32xf32>
    %c0_i32_317 = arith.constant 0 : i32
    %759 = vector.broadcast %c0_i32_317 : i32 to vector<16x1xi32>
    %760 = arith.cmpi eq, %752, %759 : vector<16x1xi32>
    %761 = vector.extract_strided_slice %757 {offsets = [0, 0], sizes = [16, 32], strides = [1, 1]} : vector<16x352xf32> to vector<16x32xf32>
    %cst_318 = arith.constant 0.000000e+00 : f32
    %762 = vector.shape_cast %760 : vector<16x1xi1> to vector<16x1xi1>
    %763 = vector.broadcast %762 : vector<16x1xi1> to vector<16x32xi1>
    %764 = vector.broadcast %cst_318 : f32 to vector<16x32xf32>
    %765 = arith.select %763, %761, %764 : vector<16x32xi1>, vector<16x32xf32>
    %766 = arith.addf %758, %765 : vector<16x32xf32>
    %c1_i32_319 = arith.constant 1 : i32
    %767 = vector.broadcast %c1_i32_319 : i32 to vector<16x1xi32>
    %768 = arith.cmpi eq, %752, %767 : vector<16x1xi32>
    %769 = vector.extract_strided_slice %757 {offsets = [0, 32], sizes = [16, 32], strides = [1, 1]} : vector<16x352xf32> to vector<16x32xf32>
    %cst_320 = arith.constant 0.000000e+00 : f32
    %770 = vector.shape_cast %768 : vector<16x1xi1> to vector<16x1xi1>
    %771 = vector.broadcast %770 : vector<16x1xi1> to vector<16x32xi1>
    %772 = vector.broadcast %cst_320 : f32 to vector<16x32xf32>
    %773 = arith.select %771, %769, %772 : vector<16x32xi1>, vector<16x32xf32>
    %774 = arith.addf %766, %773 : vector<16x32xf32>
    %c2_i32_321 = arith.constant 2 : i32
    %775 = vector.broadcast %c2_i32_321 : i32 to vector<16x1xi32>
    %776 = arith.cmpi eq, %752, %775 : vector<16x1xi32>
    %777 = vector.extract_strided_slice %757 {offsets = [0, 64], sizes = [16, 32], strides = [1, 1]} : vector<16x352xf32> to vector<16x32xf32>
    %cst_322 = arith.constant 0.000000e+00 : f32
    %778 = vector.shape_cast %776 : vector<16x1xi1> to vector<16x1xi1>
    %779 = vector.broadcast %778 : vector<16x1xi1> to vector<16x32xi1>
    %780 = vector.broadcast %cst_322 : f32 to vector<16x32xf32>
    %781 = arith.select %779, %777, %780 : vector<16x32xi1>, vector<16x32xf32>
    %782 = arith.addf %774, %781 : vector<16x32xf32>
    %c3_i32_323 = arith.constant 3 : i32
    %783 = vector.broadcast %c3_i32_323 : i32 to vector<16x1xi32>
    %784 = arith.cmpi eq, %752, %783 : vector<16x1xi32>
    %785 = vector.extract_strided_slice %757 {offsets = [0, 96], sizes = [16, 32], strides = [1, 1]} : vector<16x352xf32> to vector<16x32xf32>
    %cst_324 = arith.constant 0.000000e+00 : f32
    %786 = vector.shape_cast %784 : vector<16x1xi1> to vector<16x1xi1>
    %787 = vector.broadcast %786 : vector<16x1xi1> to vector<16x32xi1>
    %788 = vector.broadcast %cst_324 : f32 to vector<16x32xf32>
    %789 = arith.select %787, %785, %788 : vector<16x32xi1>, vector<16x32xf32>
    %790 = arith.addf %782, %789 : vector<16x32xf32>
    %c4_i32_325 = arith.constant 4 : i32
    %791 = vector.broadcast %c4_i32_325 : i32 to vector<16x1xi32>
    %792 = arith.cmpi eq, %752, %791 : vector<16x1xi32>
    %793 = vector.extract_strided_slice %757 {offsets = [0, 128], sizes = [16, 32], strides = [1, 1]} : vector<16x352xf32> to vector<16x32xf32>
    %cst_326 = arith.constant 0.000000e+00 : f32
    %794 = vector.shape_cast %792 : vector<16x1xi1> to vector<16x1xi1>
    %795 = vector.broadcast %794 : vector<16x1xi1> to vector<16x32xi1>
    %796 = vector.broadcast %cst_326 : f32 to vector<16x32xf32>
    %797 = arith.select %795, %793, %796 : vector<16x32xi1>, vector<16x32xf32>
    %798 = arith.addf %790, %797 : vector<16x32xf32>
    %c5_i32_327 = arith.constant 5 : i32
    %799 = vector.broadcast %c5_i32_327 : i32 to vector<16x1xi32>
    %800 = arith.cmpi eq, %752, %799 : vector<16x1xi32>
    %801 = vector.extract_strided_slice %757 {offsets = [0, 160], sizes = [16, 32], strides = [1, 1]} : vector<16x352xf32> to vector<16x32xf32>
    %cst_328 = arith.constant 0.000000e+00 : f32
    %802 = vector.shape_cast %800 : vector<16x1xi1> to vector<16x1xi1>
    %803 = vector.broadcast %802 : vector<16x1xi1> to vector<16x32xi1>
    %804 = vector.broadcast %cst_328 : f32 to vector<16x32xf32>
    %805 = arith.select %803, %801, %804 : vector<16x32xi1>, vector<16x32xf32>
    %806 = arith.addf %798, %805 : vector<16x32xf32>
    %c6_i32_329 = arith.constant 6 : i32
    %807 = vector.broadcast %c6_i32_329 : i32 to vector<16x1xi32>
    %808 = arith.cmpi eq, %752, %807 : vector<16x1xi32>
    %809 = vector.extract_strided_slice %757 {offsets = [0, 192], sizes = [16, 32], strides = [1, 1]} : vector<16x352xf32> to vector<16x32xf32>
    %cst_330 = arith.constant 0.000000e+00 : f32
    %810 = vector.shape_cast %808 : vector<16x1xi1> to vector<16x1xi1>
    %811 = vector.broadcast %810 : vector<16x1xi1> to vector<16x32xi1>
    %812 = vector.broadcast %cst_330 : f32 to vector<16x32xf32>
    %813 = arith.select %811, %809, %812 : vector<16x32xi1>, vector<16x32xf32>
    %814 = arith.addf %806, %813 : vector<16x32xf32>
    %c7_i32_331 = arith.constant 7 : i32
    %815 = vector.broadcast %c7_i32_331 : i32 to vector<16x1xi32>
    %816 = arith.cmpi eq, %752, %815 : vector<16x1xi32>
    %817 = vector.extract_strided_slice %757 {offsets = [0, 224], sizes = [16, 32], strides = [1, 1]} : vector<16x352xf32> to vector<16x32xf32>
    %cst_332 = arith.constant 0.000000e+00 : f32
    %818 = vector.shape_cast %816 : vector<16x1xi1> to vector<16x1xi1>
    %819 = vector.broadcast %818 : vector<16x1xi1> to vector<16x32xi1>
    %820 = vector.broadcast %cst_332 : f32 to vector<16x32xf32>
    %821 = arith.select %819, %817, %820 : vector<16x32xi1>, vector<16x32xf32>
    %822 = arith.addf %814, %821 : vector<16x32xf32>
    %c8_i32_333 = arith.constant 8 : i32
    %823 = vector.broadcast %c8_i32_333 : i32 to vector<16x1xi32>
    %824 = arith.cmpi eq, %752, %823 : vector<16x1xi32>
    %825 = vector.extract_strided_slice %757 {offsets = [0, 256], sizes = [16, 32], strides = [1, 1]} : vector<16x352xf32> to vector<16x32xf32>
    %cst_334 = arith.constant 0.000000e+00 : f32
    %826 = vector.shape_cast %824 : vector<16x1xi1> to vector<16x1xi1>
    %827 = vector.broadcast %826 : vector<16x1xi1> to vector<16x32xi1>
    %828 = vector.broadcast %cst_334 : f32 to vector<16x32xf32>
    %829 = arith.select %827, %825, %828 : vector<16x32xi1>, vector<16x32xf32>
    %830 = arith.addf %822, %829 : vector<16x32xf32>
    %c9_i32_335 = arith.constant 9 : i32
    %831 = vector.broadcast %c9_i32_335 : i32 to vector<16x1xi32>
    %832 = arith.cmpi eq, %752, %831 : vector<16x1xi32>
    %833 = vector.extract_strided_slice %757 {offsets = [0, 288], sizes = [16, 32], strides = [1, 1]} : vector<16x352xf32> to vector<16x32xf32>
    %cst_336 = arith.constant 0.000000e+00 : f32
    %834 = vector.shape_cast %832 : vector<16x1xi1> to vector<16x1xi1>
    %835 = vector.broadcast %834 : vector<16x1xi1> to vector<16x32xi1>
    %836 = vector.broadcast %cst_336 : f32 to vector<16x32xf32>
    %837 = arith.select %835, %833, %836 : vector<16x32xi1>, vector<16x32xf32>
    %838 = arith.addf %830, %837 : vector<16x32xf32>
    %c10_i32_337 = arith.constant 10 : i32
    %839 = vector.broadcast %c10_i32_337 : i32 to vector<16x1xi32>
    %840 = arith.cmpi eq, %752, %839 : vector<16x1xi32>
    %841 = vector.extract_strided_slice %757 {offsets = [0, 320], sizes = [16, 32], strides = [1, 1]} : vector<16x352xf32> to vector<16x32xf32>
    %cst_338 = arith.constant 0.000000e+00 : f32
    %842 = vector.shape_cast %840 : vector<16x1xi1> to vector<16x1xi1>
    %843 = vector.broadcast %842 : vector<16x1xi1> to vector<16x32xi1>
    %844 = vector.broadcast %cst_338 : f32 to vector<16x32xf32>
    %845 = arith.select %843, %841, %844 : vector<16x32xi1>, vector<16x32xf32>
    %846 = arith.addf %838, %845 : vector<16x32xf32>
    %cst_339 = arith.constant dense<0.000000e+00> : vector<16x32xf32>
    %847 = tpu.matmul %3, %539, %cst_339 {dimension_numbers = #tpu.dot_dimension_numbers<[1], [0], [0], [1], [0, 0, 1, 1], [], []>} : vector<16x16xf32>, vector<16x32xf32>, vector<16x32xf32> -> vector<16x32xf32>
    %cst_340 = arith.constant dense<0.000000e+00> : vector<16xf32>
    %848 = vector.multi_reduction <add>, %3, %cst_340 [1] : vector<16x16xf32> to vector<16xf32>
    %849 = vector.shape_cast %848 : vector<16xf32> to vector<16x1xf32>
    %cst_341 = arith.constant 1.000000e+01 : f32
    %850 = vector.broadcast %cst_341 : f32 to vector<16x1xf32>
    %851 = arith.minimumf %849, %850 : vector<16x1xf32>
    %852 = arith.fptosi %851 : vector<16x1xf32> to vector<16x1xi32>
    %cst_342 = arith.constant dense<0.000000e+00> : vector<16x352xf32>
    %853 = tpu.matmul %847, %49, %cst_342 {dimension_numbers = #tpu.dot_dimension_numbers<[1], [0], [0], [1], [0, 0, 1, 1], [], []>} : vector<16x32xf32>, vector<32x352xf32>, vector<16x352xf32> -> vector<16x352xf32>
    %cst_343 = arith.constant dense<0.000000e+00> : vector<16x352xf32>
    %854 = tpu.matmul %542, %50, %cst_343 {dimension_numbers = #tpu.dot_dimension_numbers<[1], [0], [0], [1], [0, 0, 1, 1], [], []>} : vector<16x32xf32>, vector<32x352xf32>, vector<16x352xf32> -> vector<16x352xf32>
    %855 = arith.addf %853, %854 : vector<16x352xf32>
    %856 = vector.broadcast %48 : vector<1x352xf32> to vector<16x352xf32>
    %857 = arith.addf %855, %856 : vector<16x352xf32>
    %cst_344 = arith.constant 0.000000e+00 : f32
    %858 = vector.broadcast %cst_344 : f32 to vector<16x32xf32>
    %c0_i32_345 = arith.constant 0 : i32
    %859 = vector.broadcast %c0_i32_345 : i32 to vector<16x1xi32>
    %860 = arith.cmpi eq, %852, %859 : vector<16x1xi32>
    %861 = vector.extract_strided_slice %857 {offsets = [0, 0], sizes = [16, 32], strides = [1, 1]} : vector<16x352xf32> to vector<16x32xf32>
    %cst_346 = arith.constant 0.000000e+00 : f32
    %862 = vector.shape_cast %860 : vector<16x1xi1> to vector<16x1xi1>
    %863 = vector.broadcast %862 : vector<16x1xi1> to vector<16x32xi1>
    %864 = vector.broadcast %cst_346 : f32 to vector<16x32xf32>
    %865 = arith.select %863, %861, %864 : vector<16x32xi1>, vector<16x32xf32>
    %866 = arith.addf %858, %865 : vector<16x32xf32>
    %c1_i32_347 = arith.constant 1 : i32
    %867 = vector.broadcast %c1_i32_347 : i32 to vector<16x1xi32>
    %868 = arith.cmpi eq, %852, %867 : vector<16x1xi32>
    %869 = vector.extract_strided_slice %857 {offsets = [0, 32], sizes = [16, 32], strides = [1, 1]} : vector<16x352xf32> to vector<16x32xf32>
    %cst_348 = arith.constant 0.000000e+00 : f32
    %870 = vector.shape_cast %868 : vector<16x1xi1> to vector<16x1xi1>
    %871 = vector.broadcast %870 : vector<16x1xi1> to vector<16x32xi1>
    %872 = vector.broadcast %cst_348 : f32 to vector<16x32xf32>
    %873 = arith.select %871, %869, %872 : vector<16x32xi1>, vector<16x32xf32>
    %874 = arith.addf %866, %873 : vector<16x32xf32>
    %c2_i32_349 = arith.constant 2 : i32
    %875 = vector.broadcast %c2_i32_349 : i32 to vector<16x1xi32>
    %876 = arith.cmpi eq, %852, %875 : vector<16x1xi32>
    %877 = vector.extract_strided_slice %857 {offsets = [0, 64], sizes = [16, 32], strides = [1, 1]} : vector<16x352xf32> to vector<16x32xf32>
    %cst_350 = arith.constant 0.000000e+00 : f32
    %878 = vector.shape_cast %876 : vector<16x1xi1> to vector<16x1xi1>
    %879 = vector.broadcast %878 : vector<16x1xi1> to vector<16x32xi1>
    %880 = vector.broadcast %cst_350 : f32 to vector<16x32xf32>
    %881 = arith.select %879, %877, %880 : vector<16x32xi1>, vector<16x32xf32>
    %882 = arith.addf %874, %881 : vector<16x32xf32>
    %c3_i32_351 = arith.constant 3 : i32
    %883 = vector.broadcast %c3_i32_351 : i32 to vector<16x1xi32>
    %884 = arith.cmpi eq, %852, %883 : vector<16x1xi32>
    %885 = vector.extract_strided_slice %857 {offsets = [0, 96], sizes = [16, 32], strides = [1, 1]} : vector<16x352xf32> to vector<16x32xf32>
    %cst_352 = arith.constant 0.000000e+00 : f32
    %886 = vector.shape_cast %884 : vector<16x1xi1> to vector<16x1xi1>
    %887 = vector.broadcast %886 : vector<16x1xi1> to vector<16x32xi1>
    %888 = vector.broadcast %cst_352 : f32 to vector<16x32xf32>
    %889 = arith.select %887, %885, %888 : vector<16x32xi1>, vector<16x32xf32>
    %890 = arith.addf %882, %889 : vector<16x32xf32>
    %c4_i32_353 = arith.constant 4 : i32
    %891 = vector.broadcast %c4_i32_353 : i32 to vector<16x1xi32>
    %892 = arith.cmpi eq, %852, %891 : vector<16x1xi32>
    %893 = vector.extract_strided_slice %857 {offsets = [0, 128], sizes = [16, 32], strides = [1, 1]} : vector<16x352xf32> to vector<16x32xf32>
    %cst_354 = arith.constant 0.000000e+00 : f32
    %894 = vector.shape_cast %892 : vector<16x1xi1> to vector<16x1xi1>
    %895 = vector.broadcast %894 : vector<16x1xi1> to vector<16x32xi1>
    %896 = vector.broadcast %cst_354 : f32 to vector<16x32xf32>
    %897 = arith.select %895, %893, %896 : vector<16x32xi1>, vector<16x32xf32>
    %898 = arith.addf %890, %897 : vector<16x32xf32>
    %c5_i32_355 = arith.constant 5 : i32
    %899 = vector.broadcast %c5_i32_355 : i32 to vector<16x1xi32>
    %900 = arith.cmpi eq, %852, %899 : vector<16x1xi32>
    %901 = vector.extract_strided_slice %857 {offsets = [0, 160], sizes = [16, 32], strides = [1, 1]} : vector<16x352xf32> to vector<16x32xf32>
    %cst_356 = arith.constant 0.000000e+00 : f32
    %902 = vector.shape_cast %900 : vector<16x1xi1> to vector<16x1xi1>
    %903 = vector.broadcast %902 : vector<16x1xi1> to vector<16x32xi1>
    %904 = vector.broadcast %cst_356 : f32 to vector<16x32xf32>
    %905 = arith.select %903, %901, %904 : vector<16x32xi1>, vector<16x32xf32>
    %906 = arith.addf %898, %905 : vector<16x32xf32>
    %c6_i32_357 = arith.constant 6 : i32
    %907 = vector.broadcast %c6_i32_357 : i32 to vector<16x1xi32>
    %908 = arith.cmpi eq, %852, %907 : vector<16x1xi32>
    %909 = vector.extract_strided_slice %857 {offsets = [0, 192], sizes = [16, 32], strides = [1, 1]} : vector<16x352xf32> to vector<16x32xf32>
    %cst_358 = arith.constant 0.000000e+00 : f32
    %910 = vector.shape_cast %908 : vector<16x1xi1> to vector<16x1xi1>
    %911 = vector.broadcast %910 : vector<16x1xi1> to vector<16x32xi1>
    %912 = vector.broadcast %cst_358 : f32 to vector<16x32xf32>
    %913 = arith.select %911, %909, %912 : vector<16x32xi1>, vector<16x32xf32>
    %914 = arith.addf %906, %913 : vector<16x32xf32>
    %c7_i32_359 = arith.constant 7 : i32
    %915 = vector.broadcast %c7_i32_359 : i32 to vector<16x1xi32>
    %916 = arith.cmpi eq, %852, %915 : vector<16x1xi32>
    %917 = vector.extract_strided_slice %857 {offsets = [0, 224], sizes = [16, 32], strides = [1, 1]} : vector<16x352xf32> to vector<16x32xf32>
    %cst_360 = arith.constant 0.000000e+00 : f32
    %918 = vector.shape_cast %916 : vector<16x1xi1> to vector<16x1xi1>
    %919 = vector.broadcast %918 : vector<16x1xi1> to vector<16x32xi1>
    %920 = vector.broadcast %cst_360 : f32 to vector<16x32xf32>
    %921 = arith.select %919, %917, %920 : vector<16x32xi1>, vector<16x32xf32>
    %922 = arith.addf %914, %921 : vector<16x32xf32>
    %c8_i32_361 = arith.constant 8 : i32
    %923 = vector.broadcast %c8_i32_361 : i32 to vector<16x1xi32>
    %924 = arith.cmpi eq, %852, %923 : vector<16x1xi32>
    %925 = vector.extract_strided_slice %857 {offsets = [0, 256], sizes = [16, 32], strides = [1, 1]} : vector<16x352xf32> to vector<16x32xf32>
    %cst_362 = arith.constant 0.000000e+00 : f32
    %926 = vector.shape_cast %924 : vector<16x1xi1> to vector<16x1xi1>
    %927 = vector.broadcast %926 : vector<16x1xi1> to vector<16x32xi1>
    %928 = vector.broadcast %cst_362 : f32 to vector<16x32xf32>
    %929 = arith.select %927, %925, %928 : vector<16x32xi1>, vector<16x32xf32>
    %930 = arith.addf %922, %929 : vector<16x32xf32>
    %c9_i32_363 = arith.constant 9 : i32
    %931 = vector.broadcast %c9_i32_363 : i32 to vector<16x1xi32>
    %932 = arith.cmpi eq, %852, %931 : vector<16x1xi32>
    %933 = vector.extract_strided_slice %857 {offsets = [0, 288], sizes = [16, 32], strides = [1, 1]} : vector<16x352xf32> to vector<16x32xf32>
    %cst_364 = arith.constant 0.000000e+00 : f32
    %934 = vector.shape_cast %932 : vector<16x1xi1> to vector<16x1xi1>
    %935 = vector.broadcast %934 : vector<16x1xi1> to vector<16x32xi1>
    %936 = vector.broadcast %cst_364 : f32 to vector<16x32xf32>
    %937 = arith.select %935, %933, %936 : vector<16x32xi1>, vector<16x32xf32>
    %938 = arith.addf %930, %937 : vector<16x32xf32>
    %c10_i32_365 = arith.constant 10 : i32
    %939 = vector.broadcast %c10_i32_365 : i32 to vector<16x1xi32>
    %940 = arith.cmpi eq, %852, %939 : vector<16x1xi32>
    %941 = vector.extract_strided_slice %857 {offsets = [0, 320], sizes = [16, 32], strides = [1, 1]} : vector<16x352xf32> to vector<16x32xf32>
    %cst_366 = arith.constant 0.000000e+00 : f32
    %942 = vector.shape_cast %940 : vector<16x1xi1> to vector<16x1xi1>
    %943 = vector.broadcast %942 : vector<16x1xi1> to vector<16x32xi1>
    %944 = vector.broadcast %cst_366 : f32 to vector<16x32xf32>
    %945 = arith.select %943, %941, %944 : vector<16x32xi1>, vector<16x32xf32>
    %946 = arith.addf %938, %945 : vector<16x32xf32>
    %947 = arith.addf %846, %946 : vector<16x32xf32>
    %cst_367 = arith.constant dense<0.000000e+00> : vector<4x96xf32>
    %948 = tpu.matmul %545, %59, %cst_367 {dimension_numbers = #tpu.dot_dimension_numbers<[1], [0], [0], [1], [0, 0, 1, 1], [], []>} : vector<4x32xf32>, vector<32x96xf32>, vector<4x96xf32> -> vector<4x96xf32>
    %949 = vector.broadcast %56 : vector<1x96xf32> to vector<4x96xf32>
    %950 = arith.addf %948, %949 : vector<4x96xf32>
    %cst_368 = arith.constant dense<0.000000e+00> : vector<16x64xf32>
    %951 = tpu.matmul %542, %57, %cst_368 {dimension_numbers = #tpu.dot_dimension_numbers<[1], [0], [0], [1], [0, 0, 1, 1], [], []>} : vector<16x32xf32>, vector<32x64xf32>, vector<16x64xf32> -> vector<16x64xf32>
    %952 = vector.broadcast %54 : vector<1x64xf32> to vector<16x64xf32>
    %953 = arith.addf %951, %952 : vector<16x64xf32>
    %cst_369 = arith.constant dense<0.000000e+00> : vector<16x64xf32>
    %954 = tpu.matmul %539, %58, %cst_369 {dimension_numbers = #tpu.dot_dimension_numbers<[1], [0], [0], [1], [0, 0, 1, 1], [], []>} : vector<16x32xf32>, vector<32x64xf32>, vector<16x64xf32> -> vector<16x64xf32>
    %955 = vector.broadcast %55 : vector<1x64xf32> to vector<16x64xf32>
    %956 = arith.addf %954, %955 : vector<16x64xf32>
    %957 = vector.extract_strided_slice %950 {offsets = [0, 0], sizes = [4, 32], strides = [1, 1]} : vector<4x96xf32> to vector<4x32xf32>
    %958 = vector.extract_strided_slice %953 {offsets = [0, 0], sizes = [16, 32], strides = [1, 1]} : vector<16x64xf32> to vector<16x32xf32>
    %959 = vector.extract_strided_slice %953 {offsets = [0, 32], sizes = [16, 32], strides = [1, 1]} : vector<16x64xf32> to vector<16x32xf32>
    %cst_370 = arith.constant dense<0.000000e+00> : vector<4x16xf32>
    %960 = tpu.matmul %957, %958, %cst_370 {dimension_numbers = #tpu.dot_dimension_numbers<[1], [1], [0], [0], [0, 0, 1, 0], [], []>} : vector<4x32xf32>, vector<16x32xf32>, vector<4x16xf32> -> vector<4x16xf32>
    %cst_371 = arith.constant dense<0.000000e+00> : vector<4xf32>
    %961 = vector.multi_reduction <add>, %1, %cst_371 [1] : vector<4x16xf32> to vector<4xf32>
    %962 = vector.shape_cast %961 : vector<4xf32> to vector<4x1xf32>
    %cst_372 = arith.constant 0.000000e+00 : f32
    %963 = vector.broadcast %cst_372 : f32 to vector<4x1xf32>
    %964 = arith.cmpf ogt, %962, %963 : vector<4x1xf32>
    %cst_373 = arith.constant 0.000000e+00 : f32
    %965 = vector.broadcast %cst_373 : f32 to vector<4x16xf32>
    %966 = arith.cmpf ogt, %1, %965 : vector<4x16xf32>
    %cst_374 = arith.constant -1.000000e+30 : f32
    %967 = vector.broadcast %cst_374 : f32 to vector<4x16xf32>
    %968 = arith.select %966, %960, %967 : vector<4x16xi1>, vector<4x16xf32>
    %cst_375 = arith.constant dense<0xFF800000> : vector<4xf32>
    %969 = vector.multi_reduction <maximumf>, %968, %cst_375 [1] : vector<4x16xf32> to vector<4xf32>
    %970 = vector.shape_cast %969 : vector<4xf32> to vector<4x1xf32>
    %cst_376 = arith.constant 0.000000e+00 : f32
    %971 = vector.broadcast %cst_376 : f32 to vector<4x1xf32>
    %972 = arith.select %964, %970, %971 : vector<4x1xi1>, vector<4x1xf32>
    %cst_377 = arith.constant 0.000000e+00 : f32
    %973 = vector.broadcast %cst_377 : f32 to vector<4x16xf32>
    %974 = arith.cmpf ogt, %1, %973 : vector<4x16xf32>
    %975 = vector.broadcast %972 : vector<4x1xf32> to vector<4x16xf32>
    %976 = arith.subf %968, %975 : vector<4x16xf32>
    %977 = math.exp %976 : vector<4x16xf32>
    %cst_378 = arith.constant 0.000000e+00 : f32
    %978 = vector.broadcast %cst_378 : f32 to vector<4x16xf32>
    %979 = arith.select %974, %977, %978 : vector<4x16xi1>, vector<4x16xf32>
    %cst_379 = arith.constant dense<0.000000e+00> : vector<4xf32>
    %980 = vector.multi_reduction <add>, %979, %cst_379 [1] : vector<4x16xf32> to vector<4xf32>
    %981 = vector.shape_cast %980 : vector<4xf32> to vector<4x1xf32>
    %cst_380 = arith.constant 1.000000e-16 : f32
    %982 = vector.broadcast %cst_380 : f32 to vector<4x1xf32>
    %983 = arith.addf %981, %982 : vector<4x1xf32>
    %984 = vector.broadcast %983 : vector<4x1xf32> to vector<4x16xf32>
    %985 = arith.divf %979, %984 : vector<4x16xf32>
    %cst_381 = arith.constant dense<0.000000e+00> : vector<4x32xf32>
    %986 = tpu.matmul %985, %959, %cst_381 {dimension_numbers = #tpu.dot_dimension_numbers<[1], [0], [0], [1], [0, 0, 1, 1], [], []>} : vector<4x16xf32>, vector<16x32xf32>, vector<4x32xf32> -> vector<4x32xf32>
    %987 = vector.extract_strided_slice %950 {offsets = [0, 32], sizes = [4, 32], strides = [1, 1]} : vector<4x96xf32> to vector<4x32xf32>
    %988 = vector.extract_strided_slice %956 {offsets = [0, 0], sizes = [16, 32], strides = [1, 1]} : vector<16x64xf32> to vector<16x32xf32>
    %989 = vector.extract_strided_slice %956 {offsets = [0, 32], sizes = [16, 32], strides = [1, 1]} : vector<16x64xf32> to vector<16x32xf32>
    %cst_382 = arith.constant dense<0.000000e+00> : vector<4x16xf32>
    %990 = tpu.matmul %987, %988, %cst_382 {dimension_numbers = #tpu.dot_dimension_numbers<[1], [1], [0], [0], [0, 0, 1, 0], [], []>} : vector<4x32xf32>, vector<16x32xf32>, vector<4x16xf32> -> vector<4x16xf32>
    %cst_383 = arith.constant dense<0.000000e+00> : vector<4xf32>
    %991 = vector.multi_reduction <add>, %4, %cst_383 [1] : vector<4x16xf32> to vector<4xf32>
    %992 = vector.shape_cast %991 : vector<4xf32> to vector<4x1xf32>
    %cst_384 = arith.constant 0.000000e+00 : f32
    %993 = vector.broadcast %cst_384 : f32 to vector<4x1xf32>
    %994 = arith.cmpf ogt, %992, %993 : vector<4x1xf32>
    %cst_385 = arith.constant 0.000000e+00 : f32
    %995 = vector.broadcast %cst_385 : f32 to vector<4x16xf32>
    %996 = arith.cmpf ogt, %4, %995 : vector<4x16xf32>
    %cst_386 = arith.constant -1.000000e+30 : f32
    %997 = vector.broadcast %cst_386 : f32 to vector<4x16xf32>
    %998 = arith.select %996, %990, %997 : vector<4x16xi1>, vector<4x16xf32>
    %cst_387 = arith.constant dense<0xFF800000> : vector<4xf32>
    %999 = vector.multi_reduction <maximumf>, %998, %cst_387 [1] : vector<4x16xf32> to vector<4xf32>
    %1000 = vector.shape_cast %999 : vector<4xf32> to vector<4x1xf32>
    %cst_388 = arith.constant 0.000000e+00 : f32
    %1001 = vector.broadcast %cst_388 : f32 to vector<4x1xf32>
    %1002 = arith.select %994, %1000, %1001 : vector<4x1xi1>, vector<4x1xf32>
    %cst_389 = arith.constant 0.000000e+00 : f32
    %1003 = vector.broadcast %cst_389 : f32 to vector<4x16xf32>
    %1004 = arith.cmpf ogt, %4, %1003 : vector<4x16xf32>
    %1005 = vector.broadcast %1002 : vector<4x1xf32> to vector<4x16xf32>
    %1006 = arith.subf %998, %1005 : vector<4x16xf32>
    %1007 = math.exp %1006 : vector<4x16xf32>
    %cst_390 = arith.constant 0.000000e+00 : f32
    %1008 = vector.broadcast %cst_390 : f32 to vector<4x16xf32>
    %1009 = arith.select %1004, %1007, %1008 : vector<4x16xi1>, vector<4x16xf32>
    %cst_391 = arith.constant dense<0.000000e+00> : vector<4xf32>
    %1010 = vector.multi_reduction <add>, %1009, %cst_391 [1] : vector<4x16xf32> to vector<4xf32>
    %1011 = vector.shape_cast %1010 : vector<4xf32> to vector<4x1xf32>
    %cst_392 = arith.constant 1.000000e-16 : f32
    %1012 = vector.broadcast %cst_392 : f32 to vector<4x1xf32>
    %1013 = arith.addf %1011, %1012 : vector<4x1xf32>
    %1014 = vector.broadcast %1013 : vector<4x1xf32> to vector<4x16xf32>
    %1015 = arith.divf %1009, %1014 : vector<4x16xf32>
    %cst_393 = arith.constant dense<0.000000e+00> : vector<4x32xf32>
    %1016 = tpu.matmul %1015, %989, %cst_393 {dimension_numbers = #tpu.dot_dimension_numbers<[1], [0], [0], [1], [0, 0, 1, 1], [], []>} : vector<4x16xf32>, vector<16x32xf32>, vector<4x32xf32> -> vector<4x32xf32>
    %1017 = arith.addf %986, %1016 : vector<4x32xf32>
    %1018 = vector.extract_strided_slice %950 {offsets = [0, 64], sizes = [4, 32], strides = [1, 1]} : vector<4x96xf32> to vector<4x32xf32>
    %1019 = arith.addf %1017, %1018 : vector<4x32xf32>
    %cst_394 = arith.constant dense<0.000000e+00> : vector<16x32xf32>
    %1020 = tpu.matmul %746, %41, %cst_394 {dimension_numbers = #tpu.dot_dimension_numbers<[1], [0], [0], [1], [0, 0, 1, 1], [], []>} : vector<16x32xf32>, vector<32x32xf32>, vector<16x32xf32> -> vector<16x32xf32>
    %1021 = vector.broadcast %40 : vector<1x32xf32> to vector<16x32xf32>
    %1022 = arith.addf %1020, %1021 : vector<16x32xf32>
    %cst_395 = arith.constant dense<0.000000e+00> : vector<16x32xf32>
    %1023 = tpu.matmul %947, %37, %cst_395 {dimension_numbers = #tpu.dot_dimension_numbers<[1], [0], [0], [1], [0, 0, 1, 1], [], []>} : vector<16x32xf32>, vector<32x32xf32>, vector<16x32xf32> -> vector<16x32xf32>
    %1024 = vector.broadcast %36 : vector<1x32xf32> to vector<16x32xf32>
    %1025 = arith.addf %1023, %1024 : vector<16x32xf32>
    %cst_396 = arith.constant dense<0.000000e+00> : vector<4x32xf32>
    %1026 = tpu.matmul %1019, %39, %cst_396 {dimension_numbers = #tpu.dot_dimension_numbers<[1], [0], [0], [1], [0, 0, 1, 1], [], []>} : vector<4x32xf32>, vector<32x32xf32>, vector<4x32xf32> -> vector<4x32xf32>
    %1027 = vector.broadcast %38 : vector<1x32xf32> to vector<4x32xf32>
    %1028 = arith.addf %1026, %1027 : vector<4x32xf32>
    %cst_397 = arith.constant dense<0.000000e+00> : vector<16x8xf32>
    %1029 = tpu.matmul %1022, %11, %cst_397 {dimension_numbers = #tpu.dot_dimension_numbers<[1], [0], [0], [1], [0, 0, 1, 1], [], []>} : vector<16x32xf32>, vector<32x8xf32>, vector<16x8xf32> -> vector<16x8xf32>
    %1030 = vector.broadcast %10 : vector<1x8xf32> to vector<16x8xf32>
    %1031 = arith.addf %1029, %1030 : vector<16x8xf32>
    %1032 = math.tanh %1031 : vector<16x8xf32>
    %c0_398 = arith.constant 0 : index
    %c0_399 = arith.constant 0 : index
    %1033 = vector.load %arg64[%c0_398, %c0_399] : memref<16x8xf32, #tpu.memory_space<vmem>>, vector<16x8xf32>
    tpu.vector_store %arg64[%c0_398, %c0_399], %1032 {strides = array<i32>} : memref<16x8xf32, #tpu.memory_space<vmem>>, vector<16x8xf32>,
    %cst_400 = arith.constant dense<0.000000e+00> : vector<16x8xf32>
    %1034 = tpu.matmul %1025, %7, %cst_400 {dimension_numbers = #tpu.dot_dimension_numbers<[1], [0], [0], [1], [0, 0, 1, 1], [], []>} : vector<16x32xf32>, vector<32x8xf32>, vector<16x8xf32> -> vector<16x8xf32>
    %1035 = vector.broadcast %6 : vector<1x8xf32> to vector<16x8xf32>
    %1036 = arith.addf %1034, %1035 : vector<16x8xf32>
    %1037 = math.tanh %1036 : vector<16x8xf32>
    %c0_401 = arith.constant 0 : index
    %c0_402 = arith.constant 0 : index
    %1038 = vector.load %arg65[%c0_401, %c0_402] : memref<16x8xf32, #tpu.memory_space<vmem>>, vector<16x8xf32>
    tpu.vector_store %arg65[%c0_401, %c0_402], %1037 {strides = array<i32>} : memref<16x8xf32, #tpu.memory_space<vmem>>, vector<16x8xf32>,
    %cst_403 = arith.constant dense<0.000000e+00> : vector<4x8xf32>
    %1039 = tpu.matmul %1028, %9, %cst_403 {dimension_numbers = #tpu.dot_dimension_numbers<[1], [0], [0], [1], [0, 0, 1, 1], [], []>} : vector<4x32xf32>, vector<32x8xf32>, vector<4x8xf32> -> vector<4x8xf32>
    %1040 = vector.broadcast %8 : vector<1x8xf32> to vector<4x8xf32>
    %1041 = arith.addf %1039, %1040 : vector<4x8xf32>
    %1042 = math.tanh %1041 : vector<4x8xf32>
    %c0_404 = arith.constant 0 : index
    %c0_405 = arith.constant 0 : index
    %1043 = vector.load %arg66[%c0_404, %c0_405] : memref<4x8xf32, #tpu.memory_space<vmem>>, vector<4x8xf32>
    tpu.vector_store %arg66[%c0_404, %c0_405], %1042 {strides = array<i32>} : memref<4x8xf32, #tpu.memory_space<vmem>>, vector<4x8xf32>,
    return
  }
  func.func @transform_0(%arg0: i32) -> (i32, i32) {
    %c0_i32 = arith.constant 0 : i32
    %c0_i32_0 = arith.constant 0 : i32
    %c0_i32_1 = arith.constant 0 : i32
    return %c0_i32, %c0_i32_0 : i32, i32
  }
  func.func @transform_1(%arg0: i32) -> (i32, i32) {
    %c0_i32 = arith.constant 0 : i32
    %c0_i32_0 = arith.constant 0 : i32
    %c0_i32_1 = arith.constant 0 : i32
    return %c0_i32, %c0_i32_0 : i32, i32
  }
  func.func @transform_2(%arg0: i32) -> (i32, i32) {
    %c0_i32 = arith.constant 0 : i32
    %c0_i32_0 = arith.constant 0 : i32
    %c0_i32_1 = arith.constant 0 : i32
    return %c0_i32, %c0_i32_0 : i32, i32
  }
  func.func @transform_3(%arg0: i32) -> (i32, i32) {
    %c0_i32 = arith.constant 0 : i32
    %c0_i32_0 = arith.constant 0 : i32
    %c0_i32_1 = arith.constant 0 : i32
    return %c0_i32, %c0_i32_0 : i32, i32
  }
  func.func @transform_4(%arg0: i32) -> (i32, i32) {
    %c0_i32 = arith.constant 0 : i32
    %c0_i32_0 = arith.constant 0 : i32
    %c0_i32_1 = arith.constant 0 : i32
    return %c0_i32, %c0_i32_0 : i32, i32
  }
  func.func @transform_5(%arg0: i32) -> (i32, i32) {
    %c0_i32 = arith.constant 0 : i32
    %c0_i32_0 = arith.constant 0 : i32
    %c0_i32_1 = arith.constant 0 : i32
    return %c0_i32, %c0_i32_0 : i32, i32
  }
  func.func @transform_6(%arg0: i32) -> (i32, i32) {
    %c0_i32 = arith.constant 0 : i32
    %c0_i32_0 = arith.constant 0 : i32
    %c0_i32_1 = arith.constant 0 : i32
    return %c0_i32, %c0_i32_0 : i32, i32
  }
  func.func @transform_7(%arg0: i32) -> (i32, i32) {
    %c0_i32 = arith.constant 0 : i32
    %c0_i32_0 = arith.constant 0 : i32
    %c0_i32_1 = arith.constant 0 : i32
    return %c0_i32, %c0_i32_0 : i32, i32
  }
  func.func @transform_8(%arg0: i32) -> (i32, i32) {
    %c0_i32 = arith.constant 0 : i32
    %c0_i32_0 = arith.constant 0 : i32
    %c0_i32_1 = arith.constant 0 : i32
    return %c0_i32, %c0_i32_0 : i32, i32
  }
  func.func @transform_9(%arg0: i32) -> (i32, i32) {
    %c0_i32 = arith.constant 0 : i32
    %c0_i32_0 = arith.constant 0 : i32
    %c0_i32_1 = arith.constant 0 : i32
    return %c0_i32, %c0_i32_0 : i32, i32
  }
  func.func @transform_10(%arg0: i32) -> (i32, i32) {
    %c0_i32 = arith.constant 0 : i32
    %c0_i32_0 = arith.constant 0 : i32
    %c0_i32_1 = arith.constant 0 : i32
    return %c0_i32, %c0_i32_0 : i32, i32
  }
  func.func @transform_11(%arg0: i32) -> (i32, i32) {
    %c0_i32 = arith.constant 0 : i32
    %c0_i32_0 = arith.constant 0 : i32
    %c0_i32_1 = arith.constant 0 : i32
    return %c0_i32, %c0_i32_0 : i32, i32
  }
  func.func @transform_12(%arg0: i32) -> (i32, i32) {
    %c0_i32 = arith.constant 0 : i32
    %c0_i32_0 = arith.constant 0 : i32
    %c0_i32_1 = arith.constant 0 : i32
    return %c0_i32, %c0_i32_0 : i32, i32
  }
  func.func @transform_13(%arg0: i32) -> (i32, i32) {
    %c0_i32 = arith.constant 0 : i32
    %c0_i32_0 = arith.constant 0 : i32
    %c0_i32_1 = arith.constant 0 : i32
    return %c0_i32, %c0_i32_0 : i32, i32
  }
  func.func @transform_14(%arg0: i32) -> (i32, i32) {
    %c0_i32 = arith.constant 0 : i32
    %c0_i32_0 = arith.constant 0 : i32
    %c0_i32_1 = arith.constant 0 : i32
    return %c0_i32, %c0_i32_0 : i32, i32
  }
  func.func @transform_15(%arg0: i32) -> (i32, i32) {
    %c0_i32 = arith.constant 0 : i32
    %c0_i32_0 = arith.constant 0 : i32
    %c0_i32_1 = arith.constant 0 : i32
    return %c0_i32, %c0_i32_0 : i32, i32
  }
  func.func @transform_16(%arg0: i32) -> (i32, i32) {
    %c0_i32 = arith.constant 0 : i32
    %c0_i32_0 = arith.constant 0 : i32
    %c0_i32_1 = arith.constant 0 : i32
    return %c0_i32, %c0_i32_0 : i32, i32
  }
  func.func @transform_17(%arg0: i32) -> (i32, i32) {
    %c0_i32 = arith.constant 0 : i32
    %c0_i32_0 = arith.constant 0 : i32
    %c0_i32_1 = arith.constant 0 : i32
    return %c0_i32, %c0_i32_0 : i32, i32
  }
  func.func @transform_18(%arg0: i32) -> (i32, i32) {
    %c0_i32 = arith.constant 0 : i32
    %c0_i32_0 = arith.constant 0 : i32
    %c0_i32_1 = arith.constant 0 : i32
    return %c0_i32, %c0_i32_0 : i32, i32
  }
  func.func @transform_19(%arg0: i32) -> (i32, i32) {
    %c0_i32 = arith.constant 0 : i32
    %c0_i32_0 = arith.constant 0 : i32
    %c0_i32_1 = arith.constant 0 : i32
    return %c0_i32, %c0_i32_0 : i32, i32
  }
  func.func @transform_20(%arg0: i32) -> (i32, i32) {
    %c0_i32 = arith.constant 0 : i32
    %c0_i32_0 = arith.constant 0 : i32
    %c0_i32_1 = arith.constant 0 : i32
    return %c0_i32, %c0_i32_0 : i32, i32
  }
  func.func @transform_21(%arg0: i32) -> (i32, i32) {
    %c0_i32 = arith.constant 0 : i32
    %c0_i32_0 = arith.constant 0 : i32
    %c0_i32_1 = arith.constant 0 : i32
    return %c0_i32, %c0_i32_0 : i32, i32
  }
  func.func @transform_22(%arg0: i32) -> (i32, i32) {
    %c0_i32 = arith.constant 0 : i32
    %c0_i32_0 = arith.constant 0 : i32
    %c0_i32_1 = arith.constant 0 : i32
    return %c0_i32, %c0_i32_0 : i32, i32
  }
  func.func @transform_23(%arg0: i32) -> (i32, i32) {
    %c0_i32 = arith.constant 0 : i32
    %c0_i32_0 = arith.constant 0 : i32
    %c0_i32_1 = arith.constant 0 : i32
    return %c0_i32, %c0_i32_0 : i32, i32
  }
  func.func @transform_24(%arg0: i32) -> (i32, i32) {
    %c0_i32 = arith.constant 0 : i32
    %c0_i32_0 = arith.constant 0 : i32
    %c0_i32_1 = arith.constant 0 : i32
    return %c0_i32, %c0_i32_0 : i32, i32
  }
  func.func @transform_25(%arg0: i32) -> (i32, i32) {
    %c0_i32 = arith.constant 0 : i32
    %c0_i32_0 = arith.constant 0 : i32
    %c0_i32_1 = arith.constant 0 : i32
    return %c0_i32, %c0_i32_0 : i32, i32
  }
  func.func @transform_26(%arg0: i32) -> (i32, i32) {
    %c0_i32 = arith.constant 0 : i32
    %c0_i32_0 = arith.constant 0 : i32
    %c0_i32_1 = arith.constant 0 : i32
    return %c0_i32, %c0_i32_0 : i32, i32
  }
  func.func @transform_27(%arg0: i32) -> (i32, i32) {
    %c0_i32 = arith.constant 0 : i32
    %c0_i32_0 = arith.constant 0 : i32
    %c0_i32_1 = arith.constant 0 : i32
    return %c0_i32, %c0_i32_0 : i32, i32
  }
  func.func @transform_28(%arg0: i32) -> (i32, i32) {
    %c0_i32 = arith.constant 0 : i32
    %c0_i32_0 = arith.constant 0 : i32
    %c0_i32_1 = arith.constant 0 : i32
    return %c0_i32, %c0_i32_0 : i32, i32
  }
  func.func @transform_29(%arg0: i32) -> (i32, i32) {
    %c0_i32 = arith.constant 0 : i32
    %c0_i32_0 = arith.constant 0 : i32
    %c0_i32_1 = arith.constant 0 : i32
    return %c0_i32, %c0_i32_0 : i32, i32
  }
  func.func @transform_30(%arg0: i32) -> (i32, i32) {
    %c0_i32 = arith.constant 0 : i32
    %c0_i32_0 = arith.constant 0 : i32
    %c0_i32_1 = arith.constant 0 : i32
    return %c0_i32, %c0_i32_0 : i32, i32
  }
  func.func @transform_31(%arg0: i32) -> (i32, i32) {
    %c0_i32 = arith.constant 0 : i32
    %c0_i32_0 = arith.constant 0 : i32
    %c0_i32_1 = arith.constant 0 : i32
    return %c0_i32, %c0_i32_0 : i32, i32
  }
  func.func @transform_32(%arg0: i32) -> (i32, i32) {
    %c0_i32 = arith.constant 0 : i32
    %c0_i32_0 = arith.constant 0 : i32
    %c0_i32_1 = arith.constant 0 : i32
    return %c0_i32, %c0_i32_0 : i32, i32
  }
  func.func @transform_33(%arg0: i32) -> (i32, i32) {
    %c0_i32 = arith.constant 0 : i32
    %c0_i32_0 = arith.constant 0 : i32
    %c0_i32_1 = arith.constant 0 : i32
    return %c0_i32, %c0_i32_0 : i32, i32
  }
  func.func @transform_34(%arg0: i32) -> (i32, i32) {
    %c0_i32 = arith.constant 0 : i32
    %c0_i32_0 = arith.constant 0 : i32
    %c0_i32_1 = arith.constant 0 : i32
    return %c0_i32, %c0_i32_0 : i32, i32
  }
  func.func @transform_35(%arg0: i32) -> (i32, i32) {
    %c0_i32 = arith.constant 0 : i32
    %c0_i32_0 = arith.constant 0 : i32
    %c0_i32_1 = arith.constant 0 : i32
    return %c0_i32, %c0_i32_0 : i32, i32
  }
  func.func @transform_36(%arg0: i32) -> (i32, i32) {
    %c0_i32 = arith.constant 0 : i32
    %c0_i32_0 = arith.constant 0 : i32
    %c0_i32_1 = arith.constant 0 : i32
    return %c0_i32, %c0_i32_0 : i32, i32
  }
  func.func @transform_37(%arg0: i32) -> (i32, i32) {
    %c0_i32 = arith.constant 0 : i32
    %c0_i32_0 = arith.constant 0 : i32
    %c0_i32_1 = arith.constant 0 : i32
    return %c0_i32, %c0_i32_0 : i32, i32
  }
  func.func @transform_38(%arg0: i32) -> (i32, i32) {
    %c0_i32 = arith.constant 0 : i32
    %c0_i32_0 = arith.constant 0 : i32
    %c0_i32_1 = arith.constant 0 : i32
    return %c0_i32, %c0_i32_0 : i32, i32
  }
  func.func @transform_39(%arg0: i32) -> (i32, i32) {
    %c0_i32 = arith.constant 0 : i32
    %c0_i32_0 = arith.constant 0 : i32
    %c0_i32_1 = arith.constant 0 : i32
    return %c0_i32, %c0_i32_0 : i32, i32
  }
  func.func @transform_40(%arg0: i32) -> (i32, i32) {
    %c0_i32 = arith.constant 0 : i32
    %c0_i32_0 = arith.constant 0 : i32
    %c0_i32_1 = arith.constant 0 : i32
    return %c0_i32, %c0_i32_0 : i32, i32
  }
  func.func @transform_41(%arg0: i32) -> (i32, i32) {
    %c0_i32 = arith.constant 0 : i32
    %c0_i32_0 = arith.constant 0 : i32
    %c0_i32_1 = arith.constant 0 : i32
    return %c0_i32, %c0_i32_0 : i32, i32
  }
  func.func @transform_42(%arg0: i32) -> (i32, i32) {
    %c0_i32 = arith.constant 0 : i32
    %c0_i32_0 = arith.constant 0 : i32
    %c0_i32_1 = arith.constant 0 : i32
    return %c0_i32, %c0_i32_0 : i32, i32
  }
  func.func @transform_43(%arg0: i32) -> (i32, i32) {
    %c0_i32 = arith.constant 0 : i32
    %c0_i32_0 = arith.constant 0 : i32
    %c0_i32_1 = arith.constant 0 : i32
    return %c0_i32, %c0_i32_0 : i32, i32
  }
  func.func @transform_44(%arg0: i32) -> (i32, i32) {
    %c0_i32 = arith.constant 0 : i32
    %c0_i32_0 = arith.constant 0 : i32
    %c0_i32_1 = arith.constant 0 : i32
    return %c0_i32, %c0_i32_0 : i32, i32
  }
  func.func @transform_45(%arg0: i32) -> (i32, i32) {
    %c0_i32 = arith.constant 0 : i32
    %c0_i32_0 = arith.constant 0 : i32
    %c0_i32_1 = arith.constant 0 : i32
    return %c0_i32, %c0_i32_0 : i32, i32
  }
  func.func @transform_46(%arg0: i32) -> (i32, i32) {
    %c0_i32 = arith.constant 0 : i32
    %c0_i32_0 = arith.constant 0 : i32
    %c0_i32_1 = arith.constant 0 : i32
    return %c0_i32, %c0_i32_0 : i32, i32
  }
  func.func @transform_47(%arg0: i32) -> (i32, i32) {
    %c0_i32 = arith.constant 0 : i32
    %c0_i32_0 = arith.constant 0 : i32
    %c0_i32_1 = arith.constant 0 : i32
    return %c0_i32, %c0_i32_0 : i32, i32
  }
  func.func @transform_48(%arg0: i32) -> (i32, i32) {
    %c0_i32 = arith.constant 0 : i32
    %c0_i32_0 = arith.constant 0 : i32
    %c0_i32_1 = arith.constant 0 : i32
    return %c0_i32, %c0_i32_0 : i32, i32
  }
  func.func @transform_49(%arg0: i32) -> (i32, i32) {
    %c0_i32 = arith.constant 0 : i32
    %c0_i32_0 = arith.constant 0 : i32
    %c0_i32_1 = arith.constant 0 : i32
    return %c0_i32, %c0_i32_0 : i32, i32
  }
  func.func @transform_50(%arg0: i32) -> (i32, i32) {
    %c0_i32 = arith.constant 0 : i32
    %c0_i32_0 = arith.constant 0 : i32
    %c0_i32_1 = arith.constant 0 : i32
    return %c0_i32, %c0_i32_0 : i32, i32
  }
  func.func @transform_51(%arg0: i32) -> (i32, i32) {
    %c0_i32 = arith.constant 0 : i32
    %c0_i32_0 = arith.constant 0 : i32
    %c0_i32_1 = arith.constant 0 : i32
    return %c0_i32, %c0_i32_0 : i32, i32
  }
  func.func @transform_52(%arg0: i32) -> (i32, i32) {
    %c0_i32 = arith.constant 0 : i32
    %c0_i32_0 = arith.constant 0 : i32
    %c0_i32_1 = arith.constant 0 : i32
    return %c0_i32, %c0_i32_0 : i32, i32
  }
  func.func @transform_53(%arg0: i32) -> (i32, i32) {
    %c0_i32 = arith.constant 0 : i32
    %c0_i32_0 = arith.constant 0 : i32
    %c0_i32_1 = arith.constant 0 : i32
    return %c0_i32, %c0_i32_0 : i32, i32
  }
  func.func @transform_54(%arg0: i32) -> (i32, i32) {
    %c0_i32 = arith.constant 0 : i32
    %c0_i32_0 = arith.constant 0 : i32
    %c0_i32_1 = arith.constant 0 : i32
    return %c0_i32, %c0_i32_0 : i32, i32
  }
  func.func @transform_55(%arg0: i32) -> (i32, i32) {
    %c0_i32 = arith.constant 0 : i32
    %c0_i32_0 = arith.constant 0 : i32
    %c0_i32_1 = arith.constant 0 : i32
    return %c0_i32, %c0_i32_0 : i32, i32
  }
  func.func @transform_56(%arg0: i32) -> (i32, i32) {
    %c0_i32 = arith.constant 0 : i32
    %c0_i32_0 = arith.constant 0 : i32
    %c0_i32_1 = arith.constant 0 : i32
    return %c0_i32, %c0_i32_0 : i32, i32
  }
  func.func @transform_57(%arg0: i32) -> (i32, i32) {
    %c0_i32 = arith.constant 0 : i32
    %c0_i32_0 = arith.constant 0 : i32
    %c0_i32_1 = arith.constant 0 : i32
    return %c0_i32, %c0_i32_0 : i32, i32
  }
  func.func @transform_58(%arg0: i32) -> (i32, i32) {
    %c0_i32 = arith.constant 0 : i32
    %c0_i32_0 = arith.constant 0 : i32
    %c0_i32_1 = arith.constant 0 : i32
    return %c0_i32, %c0_i32_0 : i32, i32
  }
  func.func @transform_59(%arg0: i32) -> (i32, i32) {
    %c0_i32 = arith.constant 0 : i32
    %c0_i32_0 = arith.constant 0 : i32
    %c0_i32_1 = arith.constant 0 : i32
    return %c0_i32, %c0_i32_0 : i32, i32
  }
  func.func @transform_60(%arg0: i32) -> (i32, i32) {
    %c0_i32 = arith.constant 0 : i32
    %c0_i32_0 = arith.constant 0 : i32
    %c0_i32_1 = arith.constant 0 : i32
    return %c0_i32, %c0_i32_0 : i32, i32
  }
  func.func @transform_61(%arg0: i32) -> (i32, i32) {
    %c0_i32 = arith.constant 0 : i32
    %c0_i32_0 = arith.constant 0 : i32
    %c0_i32_1 = arith.constant 0 : i32
    return %c0_i32, %c0_i32_0 : i32, i32
  }
  func.func @transform_62(%arg0: i32) -> (i32, i32) {
    %c0_i32 = arith.constant 0 : i32
    %c0_i32_0 = arith.constant 0 : i32
    %c0_i32_1 = arith.constant 0 : i32
    return %c0_i32, %c0_i32_0 : i32, i32
  }
  func.func @transform_63(%arg0: i32) -> (i32, i32) {
    %c0_i32 = arith.constant 0 : i32
    %c0_i32_0 = arith.constant 0 : i32
    %c0_i32_1 = arith.constant 0 : i32
    return %c0_i32, %c0_i32_0 : i32, i32
  }
  func.func @transform_64(%arg0: i32) -> (i32, i32) {
    %c0_i32 = arith.constant 0 : i32
    %c0_i32_0 = arith.constant 0 : i32
    %c0_i32_1 = arith.constant 0 : i32
    return %c0_i32, %c0_i32_0 : i32, i32
  }
  func.func @transform_65(%arg0: i32) -> (i32, i32) {
    %c0_i32 = arith.constant 0 : i32
    %c0_i32_0 = arith.constant 0 : i32
    %c0_i32_1 = arith.constant 0 : i32
    return %c0_i32, %c0_i32_0 : i32, i32
  }
}

</mosaic_0001>

<llo_original>
// kernel: tpu_custom_call.1
$region0: #{tpu_custom_call.1}
  #allocation0 [shape = 'u32[]', space=smem, size = 0x4, offset = 0x4, fixed_abs, tag = 'smem constant byte address 0x4 - core index']
  #allocation1 [shape = 'u32[144,128]{1,0:T(1,128)}', space=vmem, size = 0x12000, scoped, tag = 'internal scratch']
  %s0 = inlined_call_operand.smem [shape: u32[66], index: -1, kind: input, shape index: {}]
  %s1 = sld [smem:[%s0]]
  %s2 = scalar_lea.smem %s0, 1
  %s3 = sld [smem:[%s2]]
  %s4 = scalar_lea.smem %s0, 2
  %s5 = sld [smem:[%s4]]
  %s6 = scalar_lea.smem %s0, 3
  %s7 = sld [smem:[%s6]]
  %s8 = scalar_lea.smem %s0, 4
  %s9 = sld [smem:[%s8]]
  %s10 = scalar_lea.smem %s0, 5
  %s11 = sld [smem:[%s10]]
  %s12 = scalar_lea.smem %s0, 6
  %s13 = sld [smem:[%s12]]
  %s14 = scalar_lea.smem %s0, 7
  %s15 = sld [smem:[%s14]]
  %s16 = scalar_lea.smem %s0, 8
  %s17 = sld [smem:[%s16]]
  %s18 = scalar_lea.smem %s0, 9
  %s19 = sld [smem:[%s18]]
  %s20 = scalar_lea.smem %s0, 10
  %s21 = sld [smem:[%s20]]
  %s22 = scalar_lea.smem %s0, 11
  %s23 = sld [smem:[%s22]]
  %s24 = scalar_lea.smem %s0, 12
  %s25 = sld [smem:[%s24]]
  %s26 = scalar_lea.smem %s0, 13
  %s27 = sld [smem:[%s26]]
  %s28 = scalar_lea.smem %s0, 14
  %s29 = sld [smem:[%s28]]
  %s30 = scalar_lea.smem %s0, 15
  %s31 = sld [smem:[%s30]]
  %s32 = scalar_lea.smem %s0, 16
  %s33 = sld [smem:[%s32]]
  %s34 = scalar_lea.smem %s0, 17
  %s35 = sld [smem:[%s34]]
  %s36 = scalar_lea.smem %s0, 18
  %s37 = sld [smem:[%s36]]
  %s38 = scalar_lea.smem %s0, 19
  %s39 = sld [smem:[%s38]]
  %s40 = scalar_lea.smem %s0, 20
  %s41 = sld [smem:[%s40]]
  %s42 = scalar_lea.smem %s0, 21
  %s43 = sld [smem:[%s42]]
  %s44 = scalar_lea.smem %s0, 22
  %s45 = sld [smem:[%s44]]
  %s46 = scalar_lea.smem %s0, 23
  %s47 = sld [smem:[%s46]]
  %s48 = scalar_lea.smem %s0, 24
  %s49 = sld [smem:[%s48]]
  %s50 = scalar_lea.smem %s0, 25
  %s51 = sld [smem:[%s50]]
  %s52 = scalar_lea.smem %s0, 26
  %s53 = sld [smem:[%s52]]
  %s54 = scalar_lea.smem %s0, 27
  %s55 = sld [smem:[%s54]]
  %s56 = scalar_lea.smem %s0, 28
  %s57 = sld [smem:[%s56]]
  %s58 = scalar_lea.smem %s0, 29
  %s59 = sld [smem:[%s58]]
  %s60 = scalar_lea.smem %s0, 30
  %s61 = sld [smem:[%s60]]
  %s62 = scalar_lea.smem %s0, 31
  %s63 = sld [smem:[%s62]]
  %s64 = scalar_lea.smem %s0, 32
  %s65 = sld [smem:[%s64]]
  %s66 = scalar_lea.smem %s0, 33
  %s67 = sld [smem:[%s66]]
  %s68 = scalar_lea.smem %s0, 34
  %s69 = sld [smem:[%s68]]
  %s70 = scalar_lea.smem %s0, 35
  %s71 = sld [smem:[%s70]]
  %s72 = scalar_lea.smem %s0, 36
  %s73 = sld [smem:[%s72]]
  %s74 = scalar_lea.smem %s0, 37
  %s75 = sld [smem:[%s74]]
  %s76 = scalar_lea.smem %s0, 38
  %s77 = sld [smem:[%s76]]
  %s78 = scalar_lea.smem %s0, 39
  %s79 = sld [smem:[%s78]]
  %s80 = scalar_lea.smem %s0, 40
  %s81 = sld [smem:[%s80]]
  %s82 = scalar_lea.smem %s0, 41
  %s83 = sld [smem:[%s82]]
  %s84 = scalar_lea.smem %s0, 42
  %s85 = sld [smem:[%s84]]
  %s86 = scalar_lea.smem %s0, 43
  %s87 = sld [smem:[%s86]]
  %s88 = scalar_lea.smem %s0, 44
  %s89 = sld [smem:[%s88]]
  %s90 = scalar_lea.smem %s0, 45
  %s91 = sld [smem:[%s90]]
  %s92 = scalar_lea.smem %s0, 46
  %s93 = sld [smem:[%s92]]
  %s94 = scalar_lea.smem %s0, 47
  %s95 = sld [smem:[%s94]]
  %s96 = scalar_lea.smem %s0, 48
  %s97 = sld [smem:[%s96]]
  %s98 = scalar_lea.smem %s0, 49
  %s99 = sld [smem:[%s98]]
  %s100 = scalar_lea.smem %s0, 50
  %s101 = sld [smem:[%s100]]
  %s102 = scalar_lea.smem %s0, 51
  %s103 = sld [smem:[%s102]]
  %s104 = scalar_lea.smem %s0, 52
  %s105 = sld [smem:[%s104]]
  %s106 = scalar_lea.smem %s0, 53
  %s107 = sld [smem:[%s106]]
  %s108 = scalar_lea.smem %s0, 54
  %s109 = sld [smem:[%s108]]
  %s110 = scalar_lea.smem %s0, 55
  %s111 = sld [smem:[%s110]]
  %s112 = scalar_lea.smem %s0, 56
  %s113 = sld [smem:[%s112]]
  %s114 = scalar_lea.smem %s0, 57
  %s115 = sld [smem:[%s114]]
  %s116 = scalar_lea.smem %s0, 58
  %s117 = sld [smem:[%s116]]
  %s118 = scalar_lea.smem %s0, 59
  %s119 = sld [smem:[%s118]]
  %s120 = scalar_lea.smem %s0, 60
  %s121 = sld [smem:[%s120]]
  %s122 = scalar_lea.smem %s0, 61
  %s123 = sld [smem:[%s122]]
  %s124 = scalar_lea.smem %s0, 62
  %s125 = sld [smem:[%s124]]
  %s126 = scalar_lea.smem %s0, 63
  %s127 = sld [smem:[%s126]]
  %s128 = scalar_lea.smem %s0, 64
  %s129 = sld [smem:[%s128]]
  %s130 = scalar_lea.smem %s0, 65
  %s131 = sld [smem:[%s130]]
  %132 = xla_tuple %s127, %s129, %s131
  %s133 = sld [smem:[#allocation0]]
  $region498: #{tpu_custom_call.1} parent=0
    _
  %s135 = ssub.s32 1, %s133
  %s136 = scalar_select 0, %s135, %s133
  $region1: #{tpu_custom_call.1} parent=0
    #allocation2 [shape = 'u8[8192]{0}', space=vmem, size = 0x2000, scoped, tag = 'input window, operand 0, single buffered']
    #allocation3 [shape = 's32[1]{0}', space=sflag, size = 0x4, scoped, tag = 'scoped memory for tpu_custom_call.1']
    #allocation4 [shape = 's32[1]{0}', space=sflag, size = 0x4, scoped, tag = 'scoped memory for tpu_custom_call.1']
    #allocation5 [shape = 'u8[2048]{0}', space=vmem, size = 0x800, scoped, tag = 'input window, operand 1, single buffered']
    #allocation6 [shape = 's32[1]{0}', space=sflag, size = 0x4, scoped, tag = 'scoped memory for tpu_custom_call.1']
    #allocation7 [shape = 'u8[8192]{0}', space=vmem, size = 0x2000, scoped, tag = 'input window, operand 2, single buffered']
    #allocation8 [shape = 'u8[8192]{0}', space=vmem, size = 0x2000, scoped, tag = 'input window, operand 3, single buffered']
    #allocation9 [shape = 's32[1]{0}', space=sflag, size = 0x4, scoped, tag = 'scoped memory for tpu_custom_call.1']
    #allocation10 [shape = 'u8[2048]{0}', space=vmem, size = 0x800, scoped, tag = 'input window, operand 4, single buffered']
    #allocation11 [shape = 'u8[8192]{0}', space=vmem, size = 0x2000, scoped, tag = 'input window, operand 5, single buffered']
    #allocation12 [shape = 's32[1]{0}', space=sflag, size = 0x4, scoped, tag = 'scoped memory for tpu_custom_call.1']
    #allocation13 [shape = 'u8[512]{0}', space=vmem, size = 0x400, scoped, tag = 'input window, operand 8, single buffered']
    #allocation14 [shape = 'u8[512]{0}', space=vmem, size = 0x400, scoped, tag = 'input window, operand 10, single buffered']
    #allocation15 [shape = 's32[1]{0}', space=sflag, size = 0x4, scoped, tag = 'scoped memory for tpu_custom_call.1']
    #allocation16 [shape = 'u8[512]{0}', space=vmem, size = 0x400, scoped, tag = 'input window, operand 12, single buffered']
    #allocation17 [shape = 'u8[16384]{0}', space=vmem, size = 0x4000, scoped, tag = 'input window, operand 13, single buffered']
    #allocation18 [shape = 's32[1]{0}', space=sflag, size = 0x4, scoped, tag = 'scoped memory for tpu_custom_call.1']
    #allocation19 [shape = 'u8[512]{0}', space=vmem, size = 0x400, scoped, tag = 'input window, operand 14, single buffered']
    #allocation20 [shape = 'u8[16384]{0}', space=vmem, size = 0x4000, scoped, tag = 'input window, operand 15, single buffered']
    #allocation21 [shape = 's32[1]{0}', space=sflag, size = 0x4, scoped, tag = 'scoped memory for tpu_custom_call.1']
    #allocation22 [shape = 'u8[512]{0}', space=vmem, size = 0x400, scoped, tag = 'input window, operand 16, single buffered']
    #allocation23 [shape = 'u8[16384]{0}', space=vmem, size = 0x4000, scoped, tag = 'input window, operand 17, single buffered']
    #allocation24 [shape = 's32[1]{0}', space=sflag, size = 0x4, scoped, tag = 'scoped memory for tpu_custom_call.1']
    #allocation25 [shape = 'u8[1536]{0}', space=vmem, size = 0x800, scoped, tag = 'input window, operand 18, single buffered']
    #allocation26 [shape = 'u8[24576]{0}', space=vmem, size = 0x6000, scoped, tag = 'input window, operand 19, single buffered']
    #allocation27 [shape = 's32[1]{0}', space=sflag, size = 0x4, scoped, tag = 'scoped memory for tpu_custom_call.1']
    #allocation28 [shape = 'u8[24576]{0}', space=vmem, size = 0x6000, scoped, tag = 'input window, operand 20, single buffered']
    #allocation29 [shape = 'u8[1536]{0}', space=vmem, size = 0x800, scoped, tag = 'input window, operand 21, single buffered']
    #allocation30 [shape = 's32[1]{0}', space=sflag, size = 0x4, scoped, tag = 'scoped memory for tpu_custom_call.1']
    #allocation31 [shape = 'u8[24576]{0}', space=vmem, size = 0x6000, scoped, tag = 'input window, operand 22, single buffered']
    #allocation32 [shape = 'u8[24576]{0}', space=vmem, size = 0x6000, scoped, tag = 'input window, operand 23, single buffered']
    #allocation33 [shape = 's32[1]{0}', space=sflag, size = 0x4, scoped, tag = 'scoped memory for tpu_custom_call.1']
    #allocation34 [shape = 'u8[1536]{0}', space=vmem, size = 0x800, scoped, tag = 'input window, operand 24, single buffered']
    #allocation35 [shape = 'u8[24576]{0}', space=vmem, size = 0x6000, scoped, tag = 'input window, operand 25, single buffered']
    #allocation36 [shape = 's32[1]{0}', space=sflag, size = 0x4, scoped, tag = 'scoped memory for tpu_custom_call.1']
    #allocation37 [shape = 'u8[24576]{0}', space=vmem, size = 0x6000, scoped, tag = 'input window, operand 26, single buffered']
    #allocation38 [shape = 'u8[1536]{0}', space=vmem, size = 0x800, scoped, tag = 'input window, operand 27, single buffered']
    #allocation39 [shape = 's32[1]{0}', space=sflag, size = 0x4, scoped, tag = 'scoped memory for tpu_custom_call.1']
    #allocation40 [shape = 'u8[24576]{0}', space=vmem, size = 0x6000, scoped, tag = 'input window, operand 28, single buffered']
    #allocation41 [shape = 'u8[24576]{0}', space=vmem, size = 0x6000, scoped, tag = 'input window, operand 29, single buffered']
    #allocation42 [shape = 's32[1]{0}', space=sflag, size = 0x4, scoped, tag = 'scoped memory for tpu_custom_call.1']
    #allocation43 [shape = 'u8[512]{0}', space=vmem, size = 0x400, scoped, tag = 'input window, operand 30, single buffered']
    #allocation44 [shape = 'u8[512]{0}', space=vmem, size = 0x400, scoped, tag = 'input window, operand 31, single buffered']
    #allocation45 [shape = 's32[1]{0}', space=sflag, size = 0x4, scoped, tag = 'scoped memory for tpu_custom_call.1']
    #allocation46 [shape = 'u8[512]{0}', space=vmem, size = 0x400, scoped, tag = 'input window, operand 32, single buffered']
    #allocation47 [shape = 'u8[8192]{0}', space=vmem, size = 0x2000, scoped, tag = 'input window, operand 33, single buffered']
    #allocation48 [shape = 's32[1]{0}', space=sflag, size = 0x4, scoped, tag = 'scoped memory for tpu_custom_call.1']
    #allocation49 [shape = 'u8[8192]{0}', space=vmem, size = 0x2000, scoped, tag = 'input window, operand 34, single buffered']
    #allocation50 [shape = 'u8[4096]{0}', space=vmem, size = 0x1000, scoped, tag = 'input window, operand 35, single buffered']
    #allocation51 [shape = 's32[1]{0}', space=sflag, size = 0x4, scoped, tag = 'scoped memory for tpu_custom_call.1']
    #allocation52 [shape = 'u8[512]{0}', space=vmem, size = 0x400, scoped, tag = 'input window, operand 36, single buffered']
    #allocation53 [shape = 'u8[16384]{0}', space=vmem, size = 0x4000, scoped, tag = 'input window, operand 37, single buffered']
    #allocation54 [shape = 's32[1]{0}', space=sflag, size = 0x4, scoped, tag = 'scoped memory for tpu_custom_call.1']
    #allocation55 [shape = 'u8[512]{0}', space=vmem, size = 0x400, scoped, tag = 'input window, operand 38, single buffered']
    #allocation56 [shape = 'u8[16384]{0}', space=vmem, size = 0x4000, scoped, tag = 'input window, operand 39, single buffered']
    #allocation57 [shape = 's32[1]{0}', space=sflag, size = 0x4, scoped, tag = 'scoped memory for tpu_custom_call.1']
    #allocation58 [shape = 'u8[512]{0}', space=vmem, size = 0x400, scoped, tag = 'input window, operand 40, single buffered']
    #allocation59 [shape = 'u8[16384]{0}', space=vmem, size = 0x4000, scoped, tag = 'input window, operand 41, single buffered']
    #allocation60 [shape = 's32[1]{0}', space=sflag, size = 0x4, scoped, tag = 'scoped memory for tpu_custom_call.1']
    #allocation61 [shape = 'u8[1536]{0}', space=vmem, size = 0x800, scoped, tag = 'input window, operand 42, single buffered']
    #allocation62 [shape = 'u8[1536]{0}', space=vmem, size = 0x800, scoped, tag = 'input window, operand 45, single buffered']
    #allocation63 [shape = 's32[1]{0}', space=sflag, size = 0x4, scoped, tag = 'scoped memory for tpu_custom_call.1']
    #allocation64 [shape = 'u8[49152]{0}', space=vmem, size = 0xc000, scoped, tag = 'input window, operand 46, single buffered']
    #allocation65 [shape = 'u8[49152]{0}', space=vmem, size = 0xc000, scoped, tag = 'input window, operand 47, single buffered']
    #allocation66 [shape = 's32[1]{0}', space=sflag, size = 0x4, scoped, tag = 'scoped memory for tpu_custom_call.1']
    #allocation67 [shape = 'u8[1536]{0}', space=vmem, size = 0x800, scoped, tag = 'input window, operand 48, single buffered']
    #allocation68 [shape = 'u8[49152]{0}', space=vmem, size = 0xc000, scoped, tag = 'input window, operand 49, single buffered']
    #allocation69 [shape = 's32[1]{0}', space=sflag, size = 0x4, scoped, tag = 'scoped memory for tpu_custom_call.1']
    #allocation70 [shape = 'u8[49152]{0}', space=vmem, size = 0xc000, scoped, tag = 'input window, operand 50, single buffered']
    #allocation71 [shape = 'u8[1536]{0}', space=vmem, size = 0x800, scoped, tag = 'input window, operand 51, single buffered']
    #allocation72 [shape = 's32[1]{0}', space=sflag, size = 0x4, scoped, tag = 'scoped memory for tpu_custom_call.1']
    #allocation73 [shape = 'u8[49152]{0}', space=vmem, size = 0xc000, scoped, tag = 'input window, operand 52, single buffered']
    #allocation74 [shape = 'u8[49152]{0}', space=vmem, size = 0xc000, scoped, tag = 'input window, operand 53, single buffered']
    #allocation75 [shape = 's32[1]{0}', space=sflag, size = 0x4, scoped, tag = 'scoped memory for tpu_custom_call.1']
    #allocation76 [shape = 'u8[512]{0}', space=vmem, size = 0x400, scoped, tag = 'input window, operand 54, single buffered']
    #allocation77 [shape = 'u8[512]{0}', space=vmem, size = 0x400, scoped, tag = 'input window, operand 55, single buffered']
    #allocation78 [shape = 's32[1]{0}', space=sflag, size = 0x4, scoped, tag = 'scoped memory for tpu_custom_call.1']
    #allocation79 [shape = 'u8[512]{0}', space=vmem, size = 0x400, scoped, tag = 'input window, operand 56, single buffered']
    #allocation80 [shape = 'u8[16384]{0}', space=vmem, size = 0x4000, scoped, tag = 'input window, operand 57, single buffered']
    #allocation81 [shape = 's32[1]{0}', space=sflag, size = 0x4, scoped, tag = 'scoped memory for tpu_custom_call.1']
    #allocation82 [shape = 'u8[16384]{0}', space=vmem, size = 0x4000, scoped, tag = 'input window, operand 59, single buffered']
    #allocation83 [shape = 'u8[8192]{0}', space=vmem, size = 0x2000, scoped, tag = 'input window, operand 60, single buffered']
    #allocation84 [shape = 's32[1]{0}', space=sflag, size = 0x4, scoped, tag = 'scoped memory for tpu_custom_call.1']
    #allocation85 [shape = 'u8[8192]{0}', space=vmem, size = 0x2000, scoped, tag = 'input window, operand 62, single buffered']
    #allocation86 [shape = 'u8[2048]{0}', space=vmem, size = 0x800, scoped, tag = 'output window, operand 2, single buffered']
    %137 = vsyncpa [#allocation3], 0
    %138 = vsyncpa [#allocation6], 0
    %139 = vsyncpa [#allocation9], 0
    %140 = vsyncpa [#allocation12], 0
    %141 = vsyncpa [#allocation15], 0
    %142 = vsyncpa [#allocation18], 0
    %143 = vsyncpa [#allocation21], 0
    %144 = vsyncpa [#allocation24], 0
    %145 = vsyncpa [#allocation27], 0
    %146 = vsyncpa [#allocation30], 0
    %147 = vsyncpa [#allocation33], 0
    %148 = vsyncpa [#allocation36], 0
    %149 = vsyncpa [#allocation39], 0
    %150 = vsyncpa [#allocation42], 0
    %151 = vsyncpa [#allocation45], 0
    %152 = vsyncpa [#allocation48], 0
    %153 = vsyncpa [#allocation51], 0
    %154 = vsyncpa [#allocation54], 0
    %155 = vsyncpa [#allocation57], 0
    %156 = vsyncpa [#allocation60], 0
    %157 = vsyncpa [#allocation63], 0
    %158 = vsyncpa [#allocation66], 0
    %159 = vsyncpa [#allocation69], 0
    %160 = vsyncpa [#allocation72], 0
    %161 = vsyncpa [#allocation75], 0
    %162 = vsyncpa [#allocation78], 0
    %163 = vsyncpa [#allocation81], 0
    %164 = vsyncpa [#allocation84], 0
    %165 = vsyncpa [#allocation4], 0
    // Predicated region
    $region2: #{tpu_custom_call.1} parent=1 // pred_check
      _
    $region3: #{tpu_custom_call.1} parent=1 // pred_check_branch
      %167 = sbr.rel (0) target = $region5
    $region4: #{tpu_custom_call.1} parent=1 // pred_region
      %s169 = ssub.s32 256, 256
      %170 = vsyncadd [#allocation3], %s169
      %s171 = sshll.u32 [#allocation2], 4
      %s172 = int_to_ptr.vmem [resolvable:$true] %s171
      %177 = dma.hbm_to_vmem [thread:$0]  %s1, 256, %s172, [#allocation3], 128, 128, 8
    $region5: #{tpu_custom_call.1} parent=1 // pred_fallthru
      _
    // Predicated region
    $region6: #{tpu_custom_call.1} parent=1 // pred_check
      _
    $region7: #{tpu_custom_call.1} parent=1 // pred_check_branch
      %179 = sbr.rel (0) target = $region9
    $region8: #{tpu_custom_call.1} parent=1 // pred_region
      %s181 = ssub.s32 64, 64
      %182 = vsyncadd [#allocation6], %s181
      %s184 = sshll.u32 [#allocation5], 4
      %s185 = int_to_ptr.vmem [resolvable:$true] %s184
      %187 = dma.hbm_to_vmem [thread:$0]  %s3, 64, %s185, [#allocation6]
    $region9: #{tpu_custom_call.1} parent=1 // pred_fallthru
      _
    // Predicated region
    $region10: #{tpu_custom_call.1} parent=1 // pred_check
      _
    $region11: #{tpu_custom_call.1} parent=1 // pred_check_branch
      %189 = sbr.rel (0) target = $region13
    $region12: #{tpu_custom_call.1} parent=1 // pred_region
      %s191 = ssub.s32 256, 256
      %192 = vsyncadd [#allocation6], %s191
      %s193 = sshll.u32 [#allocation7], 4
      %s194 = int_to_ptr.vmem [resolvable:$true] %s193
      %199 = dma.hbm_to_vmem [thread:$0]  %s5, 256, %s194, [#allocation6], 128, 128, 8
    $region13: #{tpu_custom_call.1} parent=1 // pred_fallthru
      _
    // Predicated region
    $region14: #{tpu_custom_call.1} parent=1 // pred_check
      _
    $region15: #{tpu_custom_call.1} parent=1 // pred_check_branch
      %201 = sbr.rel (0) target = $region17
    $region16: #{tpu_custom_call.1} parent=1 // pred_region
      %s203 = ssub.s32 256, 256
      %204 = vsyncadd [#allocation9], %s203
      %s205 = sshll.u32 [#allocation8], 4
      %s206 = int_to_ptr.vmem [resolvable:$true] %s205
      %211 = dma.hbm_to_vmem [thread:$0]  %s7, 256, %s206, [#allocation9], 128, 128, 8
    $region17: #{tpu_custom_call.1} parent=1 // pred_fallthru
      _
    // Predicated region
    $region18: #{tpu_custom_call.1} parent=1 // pred_check
      _
    $region19: #{tpu_custom_call.1} parent=1 // pred_check_branch
      %213 = sbr.rel (0) target = $region21
    $region20: #{tpu_custom_call.1} parent=1 // pred_region
      %s215 = ssub.s32 64, 64
      %216 = vsyncadd [#allocation9], %s215
      %s218 = sshll.u32 [#allocation10], 4
      %s219 = int_to_ptr.vmem [resolvable:$true] %s218
      %221 = dma.hbm_to_vmem [thread:$0]  %s9, 64, %s219, [#allocation9]
    $region21: #{tpu_custom_call.1} parent=1 // pred_fallthru
      _
    // Predicated region
    $region22: #{tpu_custom_call.1} parent=1 // pred_check
      _
    $region23: #{tpu_custom_call.1} parent=1 // pred_check_branch
      %223 = sbr.rel (0) target = $region25
    $region24: #{tpu_custom_call.1} parent=1 // pred_region
      %s225 = ssub.s32 256, 256
      %226 = vsyncadd [#allocation12], %s225
      %s227 = sshll.u32 [#allocation11], 4
      %s228 = int_to_ptr.vmem [resolvable:$true] %s227
      %233 = dma.hbm_to_vmem [thread:$0]  %s11, 256, %s228, [#allocation12], 128, 128, 8
    $region25: #{tpu_custom_call.1} parent=1 // pred_fallthru
      _
    // Predicated region
    $region26: #{tpu_custom_call.1} parent=1 // pred_check
      _
    $region27: #{tpu_custom_call.1} parent=1 // pred_check_branch
      %235 = sbr.rel (0) target = $region29
    $region28: #{tpu_custom_call.1} parent=1 // pred_region
      _
    $region29: #{tpu_custom_call.1} parent=1 // pred_fallthru
      _
    // Predicated region
    $region30: #{tpu_custom_call.1} parent=1 // pred_check
      _
    $region31: #{tpu_custom_call.1} parent=1 // pred_check_branch
      %237 = sbr.rel (0) target = $region33
    $region32: #{tpu_custom_call.1} parent=1 // pred_region
      _
    $region33: #{tpu_custom_call.1} parent=1 // pred_fallthru
      _
    // Predicated region
    $region34: #{tpu_custom_call.1} parent=1 // pred_check
      _
    $region35: #{tpu_custom_call.1} parent=1 // pred_check_branch
      %239 = sbr.rel (0) target = $region37
    $region36: #{tpu_custom_call.1} parent=1 // pred_region
      %s241 = ssub.s32 16, 16
      %242 = vsyncadd [#allocation12], %s241
      %s244 = sshll.u32 [#allocation13], 4
      %s245 = int_to_ptr.vmem [resolvable:$true] %s244
      %247 = dma.hbm_to_vmem [thread:$0]  %s17, 16, %s245, [#allocation12]
    $region37: #{tpu_custom_call.1} parent=1 // pred_fallthru
      _
    // Predicated region
    $region38: #{tpu_custom_call.1} parent=1 // pred_check
      _
    $region39: #{tpu_custom_call.1} parent=1 // pred_check_branch
      %249 = sbr.rel (0) target = $region41
    $region40: #{tpu_custom_call.1} parent=1 // pred_region
      _
    $region41: #{tpu_custom_call.1} parent=1 // pred_fallthru
      _
    // Predicated region
    $region42: #{tpu_custom_call.1} parent=1 // pred_check
      _
    $region43: #{tpu_custom_call.1} parent=1 // pred_check_branch
      %251 = sbr.rel (0) target = $region45
    $region44: #{tpu_custom_call.1} parent=1 // pred_region
      %s253 = ssub.s32 16, 16
      %254 = vsyncadd [#allocation15], %s253
      %s256 = sshll.u32 [#allocation14], 4
      %s257 = int_to_ptr.vmem [resolvable:$true] %s256
      %259 = dma.hbm_to_vmem [thread:$0]  %s21, 16, %s257, [#allocation15]
    $region45: #{tpu_custom_call.1} parent=1 // pred_fallthru
      _
    // Predicated region
    $region46: #{tpu_custom_call.1} parent=1 // pred_check
      _
    $region47: #{tpu_custom_call.1} parent=1 // pred_check_branch
      %261 = sbr.rel (0) target = $region49
    $region48: #{tpu_custom_call.1} parent=1 // pred_region
      _
    $region49: #{tpu_custom_call.1} parent=1 // pred_fallthru
      _
    // Predicated region
    $region50: #{tpu_custom_call.1} parent=1 // pred_check
      _
    $region51: #{tpu_custom_call.1} parent=1 // pred_check_branch
      %263 = sbr.rel (0) target = $region53
    $region52: #{tpu_custom_call.1} parent=1 // pred_region
      %s265 = ssub.s32 16, 16
      %266 = vsyncadd [#allocation15], %s265
      %s268 = sshll.u32 [#allocation16], 4
      %s269 = int_to_ptr.vmem [resolvable:$true] %s268
      %271 = dma.hbm_to_vmem [thread:$0]  %s25, 16, %s269, [#allocation15]
    $region53: #{tpu_custom_call.1} parent=1 // pred_fallthru
      _
    // Predicated region
    $region54: #{tpu_custom_call.1} parent=1 // pred_check
      _
    $region55: #{tpu_custom_call.1} parent=1 // pred_check_branch
      %273 = sbr.rel (0) target = $region57
    $region56: #{tpu_custom_call.1} parent=1 // pred_region
      %s275 = ssub.s32 512, 512
      %276 = vsyncadd [#allocation18], %s275
      %s277 = sshll.u32 [#allocation17], 4
      %s278 = int_to_ptr.vmem [resolvable:$true] %s277
      %283 = dma.hbm_to_vmem [thread:$0]  %s27, 512, %s278, [#allocation18], 128, 128, 8
    $region57: #{tpu_custom_call.1} parent=1 // pred_fallthru
      _
    // Predicated region
    $region58: #{tpu_custom_call.1} parent=1 // pred_check
      _
    $region59: #{tpu_custom_call.1} parent=1 // pred_check_branch
      %285 = sbr.rel (0) target = $region61
    $region60: #{tpu_custom_call.1} parent=1 // pred_region
      %s287 = ssub.s32 16, 16
      %288 = vsyncadd [#allocation18], %s287
      %s290 = sshll.u32 [#allocation19], 4
      %s291 = int_to_ptr.vmem [resolvable:$true] %s290
      %293 = dma.hbm_to_vmem [thread:$0]  %s29, 16, %s291, [#allocation18]
    $region61: #{tpu_custom_call.1} parent=1 // pred_fallthru
      _
    // Predicated region
    $region62: #{tpu_custom_call.1} parent=1 // pred_check
      _
    $region63: #{tpu_custom_call.1} parent=1 // pred_check_branch
      %295 = sbr.rel (0) target = $region65
    $region64: #{tpu_custom_call.1} parent=1 // pred_region
      %s297 = ssub.s32 512, 512
      %298 = vsyncadd [#allocation21], %s297
      %s299 = sshll.u32 [#allocation20], 4
      %s300 = int_to_ptr.vmem [resolvable:$true] %s299
      %305 = dma.hbm_to_vmem [thread:$0]  %s31, 512, %s300, [#allocation21], 128, 128, 8
    $region65: #{tpu_custom_call.1} parent=1 // pred_fallthru
      _
    // Predicated region
    $region66: #{tpu_custom_call.1} parent=1 // pred_check
      _
    $region67: #{tpu_custom_call.1} parent=1 // pred_check_branch
      %307 = sbr.rel (0) target = $region69
    $region68: #{tpu_custom_call.1} parent=1 // pred_region
      %s309 = ssub.s32 16, 16
      %310 = vsyncadd [#allocation21], %s309
      %s312 = sshll.u32 [#allocation22], 4
      %s313 = int_to_ptr.vmem [resolvable:$true] %s312
      %315 = dma.hbm_to_vmem [thread:$0]  %s33, 16, %s313, [#allocation21]
    $region69: #{tpu_custom_call.1} parent=1 // pred_fallthru
      _
    // Predicated region
    $region70: #{tpu_custom_call.1} parent=1 // pred_check
      _
    $region71: #{tpu_custom_call.1} parent=1 // pred_check_branch
      %317 = sbr.rel (0) target = $region73
    $region72: #{tpu_custom_call.1} parent=1 // pred_region
      %s319 = ssub.s32 512, 512
      %320 = vsyncadd [#allocation24], %s319
      %s321 = sshll.u32 [#allocation23], 4
      %s322 = int_to_ptr.vmem [resolvable:$true] %s321
      %327 = dma.hbm_to_vmem [thread:$0]  %s35, 512, %s322, [#allocation24], 128, 128, 8
    $region73: #{tpu_custom_call.1} parent=1 // pred_fallthru
      _
    // Predicated region
    $region74: #{tpu_custom_call.1} parent=1 // pred_check
      _
    $region75: #{tpu_custom_call.1} parent=1 // pred_check_branch
      %329 = sbr.rel (0) target = $region77
    $region76: #{tpu_custom_call.1} parent=1 // pred_region
      %s331 = ssub.s32 48, 48
      %332 = vsyncadd [#allocation24], %s331
      %s334 = sshll.u32 [#allocation25], 4
      %s335 = int_to_ptr.vmem [resolvable:$true] %s334
      %337 = dma.hbm_to_vmem [thread:$0]  %s37, 48, %s335, [#allocation24]
    $region77: #{tpu_custom_call.1} parent=1 // pred_fallthru
      _
    // Predicated region
    $region78: #{tpu_custom_call.1} parent=1 // pred_check
      _
    $region79: #{tpu_custom_call.1} parent=1 // pred_check_branch
      %339 = sbr.rel (0) target = $region81
    $region80: #{tpu_custom_call.1} parent=1 // pred_region
      %s341 = ssub.s32 768, 768
      %342 = vsyncadd [#allocation27], %s341
      %s343 = sshll.u32 [#allocation26], 4
      %s344 = int_to_ptr.vmem [resolvable:$true] %s343
      %349 = dma.hbm_to_vmem [thread:$0]  %s39, 768, %s344, [#allocation27], 384, 384, 24
    $region81: #{tpu_custom_call.1} parent=1 // pred_fallthru
      _
    // Predicated region
    $region82: #{tpu_custom_call.1} parent=1 // pred_check
      _
    $region83: #{tpu_custom_call.1} parent=1 // pred_check_branch
      %351 = sbr.rel (0) target = $region85
    $region84: #{tpu_custom_call.1} parent=1 // pred_region
      %s353 = ssub.s32 768, 768
      %354 = vsyncadd [#allocation27], %s353
      %s355 = sshll.u32 [#allocation28], 4
      %s356 = int_to_ptr.vmem [resolvable:$true] %s355
      %361 = dma.hbm_to_vmem [thread:$0]  %s41, 768, %s356, [#allocation27], 384, 384, 24
    $region85: #{tpu_custom_call.1} parent=1 // pred_fallthru
      _
    // Predicated region
    $region86: #{tpu_custom_call.1} parent=1 // pred_check
      _
    $region87: #{tpu_custom_call.1} parent=1 // pred_check_branch
      %363 = sbr.rel (0) target = $region89
    $region88: #{tpu_custom_call.1} parent=1 // pred_region
      %s365 = ssub.s32 48, 48
      %366 = vsyncadd [#allocation30], %s365
      %s368 = sshll.u32 [#allocation29], 4
      %s369 = int_to_ptr.vmem [resolvable:$true] %s368
      %371 = dma.hbm_to_vmem [thread:$0]  %s43, 48, %s369, [#allocation30]
    $region89: #{tpu_custom_call.1} parent=1 // pred_fallthru
      _
    // Predicated region
    $region90: #{tpu_custom_call.1} parent=1 // pred_check
      _
    $region91: #{tpu_custom_call.1} parent=1 // pred_check_branch
      %373 = sbr.rel (0) target = $region93
    $region92: #{tpu_custom_call.1} parent=1 // pred_region
      %s375 = ssub.s32 768, 768
      %376 = vsyncadd [#allocation30], %s375
      %s377 = sshll.u32 [#allocation31], 4
      %s378 = int_to_ptr.vmem [resolvable:$true] %s377
      %383 = dma.hbm_to_vmem [thread:$0]  %s45, 768, %s378, [#allocation30], 384, 384, 24
    $region93: #{tpu_custom_call.1} parent=1 // pred_fallthru
      _
    // Predicated region
    $region94: #{tpu_custom_call.1} parent=1 // pred_check
      _
    $region95: #{tpu_custom_call.1} parent=1 // pred_check_branch
      %385 = sbr.rel (0) target = $region97
    $region96: #{tpu_custom_call.1} parent=1 // pred_region
      %s387 = ssub.s32 768, 768
      %388 = vsyncadd [#allocation33], %s387
      %s389 = sshll.u32 [#allocation32], 4
      %s390 = int_to_ptr.vmem [resolvable:$true] %s389
      %395 = dma.hbm_to_vmem [thread:$0]  %s47, 768, %s390, [#allocation33], 384, 384, 24
    $region97: #{tpu_custom_call.1} parent=1 // pred_fallthru
      _
    // Predicated region
    $region98: #{tpu_custom_call.1} parent=1 // pred_check
      _
    $region99: #{tpu_custom_call.1} parent=1 // pred_check_branch
      %397 = sbr.rel (0) target = $region101
    $region100: #{tpu_custom_call.1} parent=1 // pred_region
      %s399 = ssub.s32 48, 48
      %400 = vsyncadd [#allocation33], %s399
      %s402 = sshll.u32 [#allocation34], 4
      %s403 = int_to_ptr.vmem [resolvable:$true] %s402
      %405 = dma.hbm_to_vmem [thread:$0]  %s49, 48, %s403, [#allocation33]
    $region101: #{tpu_custom_call.1} parent=1 // pred_fallthru
      _
    // Predicated region
    $region102: #{tpu_custom_call.1} parent=1 // pred_check
      _
    $region103: #{tpu_custom_call.1} parent=1 // pred_check_branch
      %407 = sbr.rel (0) target = $region105
    $region104: #{tpu_custom_call.1} parent=1 // pred_region
      %s409 = ssub.s32 768, 768
      %410 = vsyncadd [#allocation36], %s409
      %s411 = sshll.u32 [#allocation35], 4
      %s412 = int_to_ptr.vmem [resolvable:$true] %s411
      %417 = dma.hbm_to_vmem [thread:$0]  %s51, 768, %s412, [#allocation36], 384, 384, 24
    $region105: #{tpu_custom_call.1} parent=1 // pred_fallthru
      _
    // Predicated region
    $region106: #{tpu_custom_call.1} parent=1 // pred_check
      _
    $region107: #{tpu_custom_call.1} parent=1 // pred_check_branch
      %419 = sbr.rel (0) target = $region109
    $region108: #{tpu_custom_call.1} parent=1 // pred_region
      %s421 = ssub.s32 768, 768
      %422 = vsyncadd [#allocation36], %s421
      %s423 = sshll.u32 [#allocation37], 4
      %s424 = int_to_ptr.vmem [resolvable:$true] %s423
      %429 = dma.hbm_to_vmem [thread:$0]  %s53, 768, %s424, [#allocation36], 384, 384, 24
    $region109: #{tpu_custom_call.1} parent=1 // pred_fallthru
      _
    // Predicated region
    $region110: #{tpu_custom_call.1} parent=1 // pred_check
      _
    $region111: #{tpu_custom_call.1} parent=1 // pred_check_branch
      %431 = sbr.rel (0) target = $region113
    $region112: #{tpu_custom_call.1} parent=1 // pred_region
      %s433 = ssub.s32 48, 48
      %434 = vsyncadd [#allocation39], %s433
      %s436 = sshll.u32 [#allocation38], 4
      %s437 = int_to_ptr.vmem [resolvable:$true] %s436
      %439 = dma.hbm_to_vmem [thread:$0]  %s55, 48, %s437, [#allocation39]
    $region113: #{tpu_custom_call.1} parent=1 // pred_fallthru
      _
    // Predicated region
    $region114: #{tpu_custom_call.1} parent=1 // pred_check
      _
    $region115: #{tpu_custom_call.1} parent=1 // pred_check_branch
      %441 = sbr.rel (0) target = $region117
    $region116: #{tpu_custom_call.1} parent=1 // pred_region
      %s443 = ssub.s32 768, 768
      %444 = vsyncadd [#allocation39], %s443
      %s445 = sshll.u32 [#allocation40], 4
      %s446 = int_to_ptr.vmem [resolvable:$true] %s445
      %451 = dma.hbm_to_vmem [thread:$0]  %s57, 768, %s446, [#allocation39], 384, 384, 24
    $region117: #{tpu_custom_call.1} parent=1 // pred_fallthru
      _
    // Predicated region
    $region118: #{tpu_custom_call.1} parent=1 // pred_check
      _
    $region119: #{tpu_custom_call.1} parent=1 // pred_check_branch
      %453 = sbr.rel (0) target = $region121
    $region120: #{tpu_custom_call.1} parent=1 // pred_region
      %s455 = ssub.s32 768, 768
      %456 = vsyncadd [#allocation42], %s455
      %s457 = sshll.u32 [#allocation41], 4
      %s458 = int_to_ptr.vmem [resolvable:$true] %s457
      %463 = dma.hbm_to_vmem [thread:$0]  %s59, 768, %s458, [#allocation42], 384, 384, 24
    $region121: #{tpu_custom_call.1} parent=1 // pred_fallthru
      _
    // Predicated region
    $region122: #{tpu_custom_call.1} parent=1 // pred_check
      _
    $region123: #{tpu_custom_call.1} parent=1 // pred_check_branch
      %465 = sbr.rel (0) target = $region125
    $region124: #{tpu_custom_call.1} parent=1 // pred_region
      %s467 = ssub.s32 16, 16
      %468 = vsyncadd [#allocation42], %s467
      %s470 = sshll.u32 [#allocation43], 4
      %s471 = int_to_ptr.vmem [resolvable:$true] %s470
      %473 = dma.hbm_to_vmem [thread:$0]  %s61, 16, %s471, [#allocation42]
    $region125: #{tpu_custom_call.1} parent=1 // pred_fallthru
      _
    // Predicated region
    $region126: #{tpu_custom_call.1} parent=1 // pred_check
      _
    $region127: #{tpu_custom_call.1} parent=1 // pred_check_branch
      %475 = sbr.rel (0) target = $region129
    $region128: #{tpu_custom_call.1} parent=1 // pred_region
      %s477 = ssub.s32 16, 16
      %478 = vsyncadd [#allocation45], %s477
      %s480 = sshll.u32 [#allocation44], 4
      %s481 = int_to_ptr.vmem [resolvable:$true] %s480
      %483 = dma.hbm_to_vmem [thread:$0]  %s63, 16, %s481, [#allocation45]
    $region129: #{tpu_custom_call.1} parent=1 // pred_fallthru
      _
    // Predicated region
    $region130: #{tpu_custom_call.1} parent=1 // pred_check
      _
    $region131: #{tpu_custom_call.1} parent=1 // pred_check_branch
      %485 = sbr.rel (0) target = $region133
    $region132: #{tpu_custom_call.1} parent=1 // pred_region
      %s487 = ssub.s32 16, 16
      %488 = vsyncadd [#allocation45], %s487
      %s490 = sshll.u32 [#allocation46], 4
      %s491 = int_to_ptr.vmem [resolvable:$true] %s490
      %493 = dma.hbm_to_vmem [thread:$0]  %s65, 16, %s491, [#allocation45]
    $region133: #{tpu_custom_call.1} parent=1 // pred_fallthru
      _
    // Predicated region
    $region134: #{tpu_custom_call.1} parent=1 // pred_check
      _
    $region135: #{tpu_custom_call.1} parent=1 // pred_check_branch
      %495 = sbr.rel (0) target = $region137
    $region136: #{tpu_custom_call.1} parent=1 // pred_region
      %s497 = ssub.s32 256, 256
      %498 = vsyncadd [#allocation48], %s497
      %s499 = sshll.u32 [#allocation47], 4
      %s500 = int_to_ptr.vmem [resolvable:$true] %s499
      %505 = dma.hbm_to_vmem [thread:$0]  %s67, 256, %s500, [#allocation48], 128, 128, 8
    $region137: #{tpu_custom_call.1} parent=1 // pred_fallthru
      _
    // Predicated region
    $region138: #{tpu_custom_call.1} parent=1 // pred_check
      _
    $region139: #{tpu_custom_call.1} parent=1 // pred_check_branch
      %507 = sbr.rel (0) target = $region141
    $region140: #{tpu_custom_call.1} parent=1 // pred_region
      %s509 = ssub.s32 256, 256
      %510 = vsyncadd [#allocation48], %s509
      %s511 = sshll.u32 [#allocation49], 4
      %s512 = int_to_ptr.vmem [resolvable:$true] %s511
      %517 = dma.hbm_to_vmem [thread:$0]  %s69, 256, %s512, [#allocation48], 128, 128, 8
    $region141: #{tpu_custom_call.1} parent=1 // pred_fallthru
      _
    // Predicated region
    $region142: #{tpu_custom_call.1} parent=1 // pred_check
      _
    $region143: #{tpu_custom_call.1} parent=1 // pred_check_branch
      %519 = sbr.rel (0) target = $region145
    $region144: #{tpu_custom_call.1} parent=1 // pred_region
      %s521 = ssub.s32 128, 128
      %522 = vsyncadd [#allocation51], %s521
      %s524 = sshll.u32 [#allocation50], 4
      %s525 = int_to_ptr.vmem [resolvable:$true] %s524
      %527 = dma.hbm_to_vmem [thread:$0]  %s71, 128, %s525, [#allocation51]
    $region145: #{tpu_custom_call.1} parent=1 // pred_fallthru
      _
    // Predicated region
    $region146: #{tpu_custom_call.1} parent=1 // pred_check
      _
    $region147: #{tpu_custom_call.1} parent=1 // pred_check_branch
      %529 = sbr.rel (0) target = $region149
    $region148: #{tpu_custom_call.1} parent=1 // pred_region
      %s531 = ssub.s32 16, 16
      %532 = vsyncadd [#allocation51], %s531
      %s534 = sshll.u32 [#allocation52], 4
      %s535 = int_to_ptr.vmem [resolvable:$true] %s534
      %537 = dma.hbm_to_vmem [thread:$0]  %s73, 16, %s535, [#allocation51]
    $region149: #{tpu_custom_call.1} parent=1 // pred_fallthru
      _
    // Predicated region
    $region150: #{tpu_custom_call.1} parent=1 // pred_check
      _
    $region151: #{tpu_custom_call.1} parent=1 // pred_check_branch
      %539 = sbr.rel (0) target = $region153
    $region152: #{tpu_custom_call.1} parent=1 // pred_region
      %s541 = ssub.s32 512, 512
      %542 = vsyncadd [#allocation54], %s541
      %s543 = sshll.u32 [#allocation53], 4
      %s544 = int_to_ptr.vmem [resolvable:$true] %s543
      %549 = dma.hbm_to_vmem [thread:$0]  %s75, 512, %s544, [#allocation54], 128, 128, 8
    $region153: #{tpu_custom_call.1} parent=1 // pred_fallthru
      _
    // Predicated region
    $region154: #{tpu_custom_call.1} parent=1 // pred_check
      _
    $region155: #{tpu_custom_call.1} parent=1 // pred_check_branch
      %551 = sbr.rel (0) target = $region157
    $region156: #{tpu_custom_call.1} parent=1 // pred_region
      %s553 = ssub.s32 16, 16
      %554 = vsyncadd [#allocation54], %s553
      %s556 = sshll.u32 [#allocation55], 4
      %s557 = int_to_ptr.vmem [resolvable:$true] %s556
      %559 = dma.hbm_to_vmem [thread:$0]  %s77, 16, %s557, [#allocation54]
    $region157: #{tpu_custom_call.1} parent=1 // pred_fallthru
      _
    // Predicated region
    $region158: #{tpu_custom_call.1} parent=1 // pred_check
      _
    $region159: #{tpu_custom_call.1} parent=1 // pred_check_branch
      %561 = sbr.rel (0) target = $region161
    $region160: #{tpu_custom_call.1} parent=1 // pred_region
      %s563 = ssub.s32 512, 512
      %564 = vsyncadd [#allocation57], %s563
      %s565 = sshll.u32 [#allocation56], 4
      %s566 = int_to_ptr.vmem [resolvable:$true] %s565
      %571 = dma.hbm_to_vmem [thread:$0]  %s79, 512, %s566, [#allocation57], 128, 128, 8
    $region161: #{tpu_custom_call.1} parent=1 // pred_fallthru
      _
    // Predicated region
    $region162: #{tpu_custom_call.1} parent=1 // pred_check
      _
    $region163: #{tpu_custom_call.1} parent=1 // pred_check_branch
      %573 = sbr.rel (0) target = $region165
    $region164: #{tpu_custom_call.1} parent=1 // pred_region
      %s575 = ssub.s32 16, 16
      %576 = vsyncadd [#allocation57], %s575
      %s578 = sshll.u32 [#allocation58], 4
      %s579 = int_to_ptr.vmem [resolvable:$true] %s578
      %581 = dma.hbm_to_vmem [thread:$0]  %s81, 16, %s579, [#allocation57]
    $region165: #{tpu_custom_call.1} parent=1 // pred_fallthru
      _
    // Predicated region
    $region166: #{tpu_custom_call.1} parent=1 // pred_check
      _
    $region167: #{tpu_custom_call.1} parent=1 // pred_check_branch
      %583 = sbr.rel (0) target = $region169
    $region168: #{tpu_custom_call.1} parent=1 // pred_region
      %s585 = ssub.s32 512, 512
      %586 = vsyncadd [#allocation60], %s585
      %s587 = sshll.u32 [#allocation59], 4
      %s588 = int_to_ptr.vmem [resolvable:$true] %s587
      %593 = dma.hbm_to_vmem [thread:$0]  %s83, 512, %s588, [#allocation60], 128, 128, 8
    $region169: #{tpu_custom_call.1} parent=1 // pred_fallthru
      _
    // Predicated region
    $region170: #{tpu_custom_call.1} parent=1 // pred_check
      _
    $region171: #{tpu_custom_call.1} parent=1 // pred_check_branch
      %595 = sbr.rel (0) target = $region173
    $region172: #{tpu_custom_call.1} parent=1 // pred_region
      %s597 = ssub.s32 48, 48
      %598 = vsyncadd [#allocation60], %s597
      %s600 = sshll.u32 [#allocation61], 4
      %s601 = int_to_ptr.vmem [resolvable:$true] %s600
      %603 = dma.hbm_to_vmem [thread:$0]  %s85, 48, %s601, [#allocation60]
    $region173: #{tpu_custom_call.1} parent=1 // pred_fallthru
      _
    // Predicated region
    $region174: #{tpu_custom_call.1} parent=1 // pred_check
      _
    $region175: #{tpu_custom_call.1} parent=1 // pred_check_branch
      %605 = sbr.rel (0) target = $region177
    $region176: #{tpu_custom_call.1} parent=1 // pred_region
      _
    $region177: #{tpu_custom_call.1} parent=1 // pred_fallthru
      _
    // Predicated region
    $region178: #{tpu_custom_call.1} parent=1 // pred_check
      _
    $region179: #{tpu_custom_call.1} parent=1 // pred_check_branch
      %607 = sbr.rel (0) target = $region181
    $region180: #{tpu_custom_call.1} parent=1 // pred_region
      _
    $region181: #{tpu_custom_call.1} parent=1 // pred_fallthru
      _
    // Predicated region
    $region182: #{tpu_custom_call.1} parent=1 // pred_check
      _
    $region183: #{tpu_custom_call.1} parent=1 // pred_check_branch
      %609 = sbr.rel (0) target = $region185
    $region184: #{tpu_custom_call.1} parent=1 // pred_region
      %s611 = ssub.s32 48, 48
      %612 = vsyncadd [#allocation63], %s611
      %s614 = sshll.u32 [#allocation62], 4
      %s615 = int_to_ptr.vmem [resolvable:$true] %s614
      %617 = dma.hbm_to_vmem [thread:$0]  %s91, 48, %s615, [#allocation63]
    $region185: #{tpu_custom_call.1} parent=1 // pred_fallthru
      _
    // Predicated region
    $region186: #{tpu_custom_call.1} parent=1 // pred_check
      _
    $region187: #{tpu_custom_call.1} parent=1 // pred_check_branch
      %619 = sbr.rel (0) target = $region189
    $region188: #{tpu_custom_call.1} parent=1 // pred_region
      %s621 = ssub.s32 1536, 1536
      %622 = vsyncadd [#allocation63], %s621
      %s623 = sshll.u32 [#allocation64], 4
      %s624 = int_to_ptr.vmem [resolvable:$true] %s623
      %629 = dma.hbm_to_vmem [thread:$0]  %s93, 1536, %s624, [#allocation63], 384, 384, 24
    $region189: #{tpu_custom_call.1} parent=1 // pred_fallthru
      _
    // Predicated region
    $region190: #{tpu_custom_call.1} parent=1 // pred_check
      _
    $region191: #{tpu_custom_call.1} parent=1 // pred_check_branch
      %631 = sbr.rel (0) target = $region193
    $region192: #{tpu_custom_call.1} parent=1 // pred_region
      %s633 = ssub.s32 1536, 1536
      %634 = vsyncadd [#allocation66], %s633
      %s635 = sshll.u32 [#allocation65], 4
      %s636 = int_to_ptr.vmem [resolvable:$true] %s635
      %641 = dma.hbm_to_vmem [thread:$0]  %s95, 1536, %s636, [#allocation66], 384, 384, 24
    $region193: #{tpu_custom_call.1} parent=1 // pred_fallthru
      _
    // Predicated region
    $region194: #{tpu_custom_call.1} parent=1 // pred_check
      _
    $region195: #{tpu_custom_call.1} parent=1 // pred_check_branch
      %643 = sbr.rel (0) target = $region197
    $region196: #{tpu_custom_call.1} parent=1 // pred_region
      %s645 = ssub.s32 48, 48
      %646 = vsyncadd [#allocation66], %s645
      %s648 = sshll.u32 [#allocation67], 4
      %s649 = int_to_ptr.vmem [resolvable:$true] %s648
      %651 = dma.hbm_to_vmem [thread:$0]  %s97, 48, %s649, [#allocation66]
    $region197: #{tpu_custom_call.1} parent=1 // pred_fallthru
      _
    // Predicated region
    $region198: #{tpu_custom_call.1} parent=1 // pred_check
      _
    $region199: #{tpu_custom_call.1} parent=1 // pred_check_branch
      %653 = sbr.rel (0) target = $region201
    $region200: #{tpu_custom_call.1} parent=1 // pred_region
      %s655 = ssub.s32 1536, 1536
      %656 = vsyncadd [#allocation69], %s655
      %s657 = sshll.u32 [#allocation68], 4
      %s658 = int_to_ptr.vmem [resolvable:$true] %s657
      %663 = dma.hbm_to_vmem [thread:$0]  %s99, 1536, %s658, [#allocation69], 384, 384, 24
    $region201: #{tpu_custom_call.1} parent=1 // pred_fallthru
      _
    // Predicated region
    $region202: #{tpu_custom_call.1} parent=1 // pred_check
      _
    $region203: #{tpu_custom_call.1} parent=1 // pred_check_branch
      %665 = sbr.rel (0) target = $region205
    $region204: #{tpu_custom_call.1} parent=1 // pred_region
      %s667 = ssub.s32 1536, 1536
      %668 = vsyncadd [#allocation69], %s667
      %s669 = sshll.u32 [#allocation70], 4
      %s670 = int_to_ptr.vmem [resolvable:$true] %s669
      %675 = dma.hbm_to_vmem [thread:$0]  %s101, 1536, %s670, [#allocation69], 384, 384, 24
    $region205: #{tpu_custom_call.1} parent=1 // pred_fallthru
      _
    // Predicated region
    $region206: #{tpu_custom_call.1} parent=1 // pred_check
      _
    $region207: #{tpu_custom_call.1} parent=1 // pred_check_branch
      %677 = sbr.rel (0) target = $region209
    $region208: #{tpu_custom_call.1} parent=1 // pred_region
      %s679 = ssub.s32 48, 48
      %680 = vsyncadd [#allocation72], %s679
      %s682 = sshll.u32 [#allocation71], 4
      %s683 = int_to_ptr.vmem [resolvable:$true] %s682
      %685 = dma.hbm_to_vmem [thread:$0]  %s103, 48, %s683, [#allocation72]
    $region209: #{tpu_custom_call.1} parent=1 // pred_fallthru
      _
    // Predicated region
    $region210: #{tpu_custom_call.1} parent=1 // pred_check
      _
    $region211: #{tpu_custom_call.1} parent=1 // pred_check_branch
      %687 = sbr.rel (0) target = $region213
    $region212: #{tpu_custom_call.1} parent=1 // pred_region
      %s689 = ssub.s32 1536, 1536
      %690 = vsyncadd [#allocation72], %s689
      %s691 = sshll.u32 [#allocation73], 4
      %s692 = int_to_ptr.vmem [resolvable:$true] %s691
      %697 = dma.hbm_to_vmem [thread:$0]  %s105, 1536, %s692, [#allocation72], 384, 384, 24
    $region213: #{tpu_custom_call.1} parent=1 // pred_fallthru
      _
    // Predicated region
    $region214: #{tpu_custom_call.1} parent=1 // pred_check
      _
    $region215: #{tpu_custom_call.1} parent=1 // pred_check_branch
      %699 = sbr.rel (0) target = $region217
    $region216: #{tpu_custom_call.1} parent=1 // pred_region
      %s701 = ssub.s32 1536, 1536
      %702 = vsyncadd [#allocation75], %s701
      %s703 = sshll.u32 [#allocation74], 4
      %s704 = int_to_ptr.vmem [resolvable:$true] %s703
      %709 = dma.hbm_to_vmem [thread:$0]  %s107, 1536, %s704, [#allocation75], 384, 384, 24
    $region217: #{tpu_custom_call.1} parent=1 // pred_fallthru
      _
    // Predicated region
    $region218: #{tpu_custom_call.1} parent=1 // pred_check
      _
    $region219: #{tpu_custom_call.1} parent=1 // pred_check_branch
      %711 = sbr.rel (0) target = $region221
    $region220: #{tpu_custom_call.1} parent=1 // pred_region
      %s713 = ssub.s32 16, 16
      %714 = vsyncadd [#allocation75], %s713
      %s716 = sshll.u32 [#allocation76], 4
      %s717 = int_to_ptr.vmem [resolvable:$true] %s716
      %719 = dma.hbm_to_vmem [thread:$0]  %s109, 16, %s717, [#allocation75]
    $region221: #{tpu_custom_call.1} parent=1 // pred_fallthru
      _
    // Predicated region
    $region222: #{tpu_custom_call.1} parent=1 // pred_check
      _
    $region223: #{tpu_custom_call.1} parent=1 // pred_check_branch
      %721 = sbr.rel (0) target = $region225
    $region224: #{tpu_custom_call.1} parent=1 // pred_region
      %s723 = ssub.s32 16, 16
      %724 = vsyncadd [#allocation78], %s723
      %s726 = sshll.u32 [#allocation77], 4
      %s727 = int_to_ptr.vmem [resolvable:$true] %s726
      %729 = dma.hbm_to_vmem [thread:$0]  %s111, 16, %s727, [#allocation78]
    $region225: #{tpu_custom_call.1} parent=1 // pred_fallthru
      _
    // Predicated region
    $region226: #{tpu_custom_call.1} parent=1 // pred_check
      _
    $region227: #{tpu_custom_call.1} parent=1 // pred_check_branch
      %731 = sbr.rel (0) target = $region229
    $region228: #{tpu_custom_call.1} parent=1 // pred_region
      %s733 = ssub.s32 16, 16
      %734 = vsyncadd [#allocation78], %s733
      %s736 = sshll.u32 [#allocation79], 4
      %s737 = int_to_ptr.vmem [resolvable:$true] %s736
      %739 = dma.hbm_to_vmem [thread:$0]  %s113, 16, %s737, [#allocation78]
    $region229: #{tpu_custom_call.1} parent=1 // pred_fallthru
      _
    // Predicated region
    $region230: #{tpu_custom_call.1} parent=1 // pred_check
      _
    $region231: #{tpu_custom_call.1} parent=1 // pred_check_branch
      %741 = sbr.rel (0) target = $region233
    $region232: #{tpu_custom_call.1} parent=1 // pred_region
      %s743 = ssub.s32 512, 512
      %744 = vsyncadd [#allocation81], %s743
      %s745 = sshll.u32 [#allocation80], 4
      %s746 = int_to_ptr.vmem [resolvable:$true] %s745
      %751 = dma.hbm_to_vmem [thread:$0]  %s115, 512, %s746, [#allocation81], 128, 128, 8
    $region233: #{tpu_custom_call.1} parent=1 // pred_fallthru
      _
    // Predicated region
    $region234: #{tpu_custom_call.1} parent=1 // pred_check
      _
    $region235: #{tpu_custom_call.1} parent=1 // pred_check_branch
      %753 = sbr.rel (0) target = $region237
    $region236: #{tpu_custom_call.1} parent=1 // pred_region
      _
    $region237: #{tpu_custom_call.1} parent=1 // pred_fallthru
      _
    // Predicated region
    $region238: #{tpu_custom_call.1} parent=1 // pred_check
      _
    $region239: #{tpu_custom_call.1} parent=1 // pred_check_branch
      %755 = sbr.rel (0) target = $region241
    $region240: #{tpu_custom_call.1} parent=1 // pred_region
      %s757 = ssub.s32 512, 512
      %758 = vsyncadd [#allocation81], %s757
      %s759 = sshll.u32 [#allocation82], 4
      %s760 = int_to_ptr.vmem [resolvable:$true] %s759
      %765 = dma.hbm_to_vmem [thread:$0]  %s119, 512, %s760, [#allocation81], 128, 128, 8
    $region241: #{tpu_custom_call.1} parent=1 // pred_fallthru
      _
    // Predicated region
    $region242: #{tpu_custom_call.1} parent=1 // pred_check
      _
    $region243: #{tpu_custom_call.1} parent=1 // pred_check_branch
      %767 = sbr.rel (0) target = $region245
    $region244: #{tpu_custom_call.1} parent=1 // pred_region
      %s769 = ssub.s32 256, 256
      %770 = vsyncadd [#allocation84], %s769
      %s771 = sshll.u32 [#allocation83], 4
      %s772 = int_to_ptr.vmem [resolvable:$true] %s771
      %777 = dma.hbm_to_vmem [thread:$0]  %s121, 256, %s772, [#allocation84], 128, 128, 8
    $region245: #{tpu_custom_call.1} parent=1 // pred_fallthru
      _
    // Predicated region
    $region246: #{tpu_custom_call.1} parent=1 // pred_check
      _
    $region247: #{tpu_custom_call.1} parent=1 // pred_check_branch
      %779 = sbr.rel (0) target = $region249
    $region248: #{tpu_custom_call.1} parent=1 // pred_region
      _
    $region249: #{tpu_custom_call.1} parent=1 // pred_fallthru
      _
    // Predicated region
    $region250: #{tpu_custom_call.1} parent=1 // pred_check
      _
    $region251: #{tpu_custom_call.1} parent=1 // pred_check_branch
      %781 = sbr.rel (0) target = $region253
    $region252: #{tpu_custom_call.1} parent=1 // pred_region
      %s783 = ssub.s32 256, 256
      %784 = vsyncadd [#allocation84], %s783
      %s785 = sshll.u32 [#allocation85], 4
      %s786 = int_to_ptr.vmem [resolvable:$true] %s785
      %791 = dma.hbm_to_vmem [thread:$0]  %s125, 256, %s786, [#allocation84], 128, 128, 8
    $region253: #{tpu_custom_call.1} parent=1 // pred_fallthru
      _
    // Predicated region
    $region254: #{tpu_custom_call.1} parent=1 // pred_check
      _
    $region255: #{tpu_custom_call.1} parent=1 // pred_check_branch
      %793 = sbr.rel (0) target = $region257
    $region256: #{tpu_custom_call.1} parent=1 // pred_region
      %794 = dma.done [#allocation3], 256
    $region257: #{tpu_custom_call.1} parent=1 // pred_fallthru
      _
    // Predicated region
    $region258: #{tpu_custom_call.1} parent=1 // pred_check
      _
    $region259: #{tpu_custom_call.1} parent=1 // pred_check_branch
      %796 = sbr.rel (0) target = $region261
    $region260: #{tpu_custom_call.1} parent=1 // pred_region
      %797 = dma.done [#allocation6], 64
    $region261: #{tpu_custom_call.1} parent=1 // pred_fallthru
      _
    // Predicated region
    $region262: #{tpu_custom_call.1} parent=1 // pred_check
      _
    $region263: #{tpu_custom_call.1} parent=1 // pred_check_branch
      %799 = sbr.rel (0) target = $region265
    $region264: #{tpu_custom_call.1} parent=1 // pred_region
      %800 = dma.done [#allocation6], 256
    $region265: #{tpu_custom_call.1} parent=1 // pred_fallthru
      _
    // Predicated region
    $region266: #{tpu_custom_call.1} parent=1 // pred_check
      _
    $region267: #{tpu_custom_call.1} parent=1 // pred_check_branch
      %802 = sbr.rel (0) target = $region269
    $region268: #{tpu_custom_call.1} parent=1 // pred_region
      %803 = dma.done [#allocation9], 256
    $region269: #{tpu_custom_call.1} parent=1 // pred_fallthru
      _
    // Predicated region
    $region270: #{tpu_custom_call.1} parent=1 // pred_check
      _
    $region271: #{tpu_custom_call.1} parent=1 // pred_check_branch
      %805 = sbr.rel (0) target = $region273
    $region272: #{tpu_custom_call.1} parent=1 // pred_region
      %806 = dma.done [#allocation9], 64
    $region273: #{tpu_custom_call.1} parent=1 // pred_fallthru
      _
    // Predicated region
    $region274: #{tpu_custom_call.1} parent=1 // pred_check
      _
    $region275: #{tpu_custom_call.1} parent=1 // pred_check_branch
      %808 = sbr.rel (0) target = $region277
    $region276: #{tpu_custom_call.1} parent=1 // pred_region
      %809 = dma.done [#allocation12], 256
    $region277: #{tpu_custom_call.1} parent=1 // pred_fallthru
      _
    // Predicated region
    $region278: #{tpu_custom_call.1} parent=1 // pred_check
      _
    $region279: #{tpu_custom_call.1} parent=1 // pred_check_branch
      %811 = sbr.rel (0) target = $region281
    $region280: #{tpu_custom_call.1} parent=1 // pred_region
      %812 = dma.done [#allocation12], 16
    $region281: #{tpu_custom_call.1} parent=1 // pred_fallthru
      _
    // Predicated region
    $region282: #{tpu_custom_call.1} parent=1 // pred_check
      _
    $region283: #{tpu_custom_call.1} parent=1 // pred_check_branch
      %814 = sbr.rel (0) target = $region285
    $region284: #{tpu_custom_call.1} parent=1 // pred_region
      %815 = dma.done [#allocation15], 16
    $region285: #{tpu_custom_call.1} parent=1 // pred_fallthru
      _
    // Predicated region
    $region286: #{tpu_custom_call.1} parent=1 // pred_check
      _
    $region287: #{tpu_custom_call.1} parent=1 // pred_check_branch
      %817 = sbr.rel (0) target = $region289
    $region288: #{tpu_custom_call.1} parent=1 // pred_region
      %818 = dma.done [#allocation15], 16
    $region289: #{tpu_custom_call.1} parent=1 // pred_fallthru
      _
    // Predicated region
    $region290: #{tpu_custom_call.1} parent=1 // pred_check
      _
    $region291: #{tpu_custom_call.1} parent=1 // pred_check_branch
      %820 = sbr.rel (0) target = $region293
    $region292: #{tpu_custom_call.1} parent=1 // pred_region
      %821 = dma.done [#allocation18], 512
    $region293: #{tpu_custom_call.1} parent=1 // pred_fallthru
      _
    // Predicated region
    $region294: #{tpu_custom_call.1} parent=1 // pred_check
      _
    $region295: #{tpu_custom_call.1} parent=1 // pred_check_branch
      %823 = sbr.rel (0) target = $region297
    $region296: #{tpu_custom_call.1} parent=1 // pred_region
      %824 = dma.done [#allocation18], 16
    $region297: #{tpu_custom_call.1} parent=1 // pred_fallthru
      _
    // Predicated region
    $region298: #{tpu_custom_call.1} parent=1 // pred_check
      _
    $region299: #{tpu_custom_call.1} parent=1 // pred_check_branch
      %826 = sbr.rel (0) target = $region301
    $region300: #{tpu_custom_call.1} parent=1 // pred_region
      %827 = dma.done [#allocation21], 512
    $region301: #{tpu_custom_call.1} parent=1 // pred_fallthru
      _
    // Predicated region
    $region302: #{tpu_custom_call.1} parent=1 // pred_check
      _
    $region303: #{tpu_custom_call.1} parent=1 // pred_check_branch
      %829 = sbr.rel (0) target = $region305
    $region304: #{tpu_custom_call.1} parent=1 // pred_region
      %830 = dma.done [#allocation21], 16
    $region305: #{tpu_custom_call.1} parent=1 // pred_fallthru
      _
    // Predicated region
    $region306: #{tpu_custom_call.1} parent=1 // pred_check
      _
    $region307: #{tpu_custom_call.1} parent=1 // pred_check_branch
      %832 = sbr.rel (0) target = $region309
    $region308: #{tpu_custom_call.1} parent=1 // pred_region
      %833 = dma.done [#allocation24], 512
    $region309: #{tpu_custom_call.1} parent=1 // pred_fallthru
      _
    // Predicated region
    $region310: #{tpu_custom_call.1} parent=1 // pred_check
      _
    $region311: #{tpu_custom_call.1} parent=1 // pred_check_branch
      %835 = sbr.rel (0) target = $region313
    $region312: #{tpu_custom_call.1} parent=1 // pred_region
      %836 = dma.done [#allocation24], 48
    $region313: #{tpu_custom_call.1} parent=1 // pred_fallthru
      _
    // Predicated region
    $region314: #{tpu_custom_call.1} parent=1 // pred_check
      _
    $region315: #{tpu_custom_call.1} parent=1 // pred_check_branch
      %838 = sbr.rel (0) target = $region317
    $region316: #{tpu_custom_call.1} parent=1 // pred_region
      %839 = dma.done [#allocation27], 768
    $region317: #{tpu_custom_call.1} parent=1 // pred_fallthru
      _
    // Predicated region
    $region318: #{tpu_custom_call.1} parent=1 // pred_check
      _
    $region319: #{tpu_custom_call.1} parent=1 // pred_check_branch
      %841 = sbr.rel (0) target = $region321
    $region320: #{tpu_custom_call.1} parent=1 // pred_region
      %842 = dma.done [#allocation27], 768
    $region321: #{tpu_custom_call.1} parent=1 // pred_fallthru
      _
    // Predicated region
    $region322: #{tpu_custom_call.1} parent=1 // pred_check
      _
    $region323: #{tpu_custom_call.1} parent=1 // pred_check_branch
      %844 = sbr.rel (0) target = $region325
    $region324: #{tpu_custom_call.1} parent=1 // pred_region
      %845 = dma.done [#allocation30], 48
    $region325: #{tpu_custom_call.1} parent=1 // pred_fallthru
      _
    // Predicated region
    $region326: #{tpu_custom_call.1} parent=1 // pred_check
      _
    $region327: #{tpu_custom_call.1} parent=1 // pred_check_branch
      %847 = sbr.rel (0) target = $region329
    $region328: #{tpu_custom_call.1} parent=1 // pred_region
      %848 = dma.done [#allocation30], 768
    $region329: #{tpu_custom_call.1} parent=1 // pred_fallthru
      _
    // Predicated region
    $region330: #{tpu_custom_call.1} parent=1 // pred_check
      _
    $region331: #{tpu_custom_call.1} parent=1 // pred_check_branch
      %850 = sbr.rel (0) target = $region333
    $region332: #{tpu_custom_call.1} parent=1 // pred_region
      %851 = dma.done [#allocation33], 768
    $region333: #{tpu_custom_call.1} parent=1 // pred_fallthru
      _
    // Predicated region
    $region334: #{tpu_custom_call.1} parent=1 // pred_check
      _
    $region335: #{tpu_custom_call.1} parent=1 // pred_check_branch
      %853 = sbr.rel (0) target = $region337
    $region336: #{tpu_custom_call.1} parent=1 // pred_region
      %854 = dma.done [#allocation33], 48
    $region337: #{tpu_custom_call.1} parent=1 // pred_fallthru
      _
    // Predicated region
    $region338: #{tpu_custom_call.1} parent=1 // pred_check
      _
    $region339: #{tpu_custom_call.1} parent=1 // pred_check_branch
      %856 = sbr.rel (0) target = $region341
    $region340: #{tpu_custom_call.1} parent=1 // pred_region
      %857 = dma.done [#allocation36], 768
    $region341: #{tpu_custom_call.1} parent=1 // pred_fallthru
      _
    // Predicated region
    $region342: #{tpu_custom_call.1} parent=1 // pred_check
      _
    $region343: #{tpu_custom_call.1} parent=1 // pred_check_branch
      %859 = sbr.rel (0) target = $region345
    $region344: #{tpu_custom_call.1} parent=1 // pred_region
      %860 = dma.done [#allocation36], 768
    $region345: #{tpu_custom_call.1} parent=1 // pred_fallthru
      _
    // Predicated region
    $region346: #{tpu_custom_call.1} parent=1 // pred_check
      _
    $region347: #{tpu_custom_call.1} parent=1 // pred_check_branch
      %862 = sbr.rel (0) target = $region349
    $region348: #{tpu_custom_call.1} parent=1 // pred_region
      %863 = dma.done [#allocation39], 48
    $region349: #{tpu_custom_call.1} parent=1 // pred_fallthru
      _
    // Predicated region
    $region350: #{tpu_custom_call.1} parent=1 // pred_check
      _
    $region351: #{tpu_custom_call.1} parent=1 // pred_check_branch
      %865 = sbr.rel (0) target = $region353
    $region352: #{tpu_custom_call.1} parent=1 // pred_region
      %866 = dma.done [#allocation39], 768
    $region353: #{tpu_custom_call.1} parent=1 // pred_fallthru
      _
    // Predicated region
    $region354: #{tpu_custom_call.1} parent=1 // pred_check
      _
    $region355: #{tpu_custom_call.1} parent=1 // pred_check_branch
      %868 = sbr.rel (0) target = $region357
    $region356: #{tpu_custom_call.1} parent=1 // pred_region
      %869 = dma.done [#allocation42], 768
    $region357: #{tpu_custom_call.1} parent=1 // pred_fallthru
      _
    // Predicated region
    $region358: #{tpu_custom_call.1} parent=1 // pred_check
      _
    $region359: #{tpu_custom_call.1} parent=1 // pred_check_branch
      %871 = sbr.rel (0) target = $region361
    $region360: #{tpu_custom_call.1} parent=1 // pred_region
      %872 = dma.done [#allocation42], 16
    $region361: #{tpu_custom_call.1} parent=1 // pred_fallthru
      _
    // Predicated region
    $region362: #{tpu_custom_call.1} parent=1 // pred_check
      _
    $region363: #{tpu_custom_call.1} parent=1 // pred_check_branch
      %874 = sbr.rel (0) target = $region365
    $region364: #{tpu_custom_call.1} parent=1 // pred_region
      %875 = dma.done [#allocation45], 16
    $region365: #{tpu_custom_call.1} parent=1 // pred_fallthru
      _
    // Predicated region
    $region366: #{tpu_custom_call.1} parent=1 // pred_check
      _
    $region367: #{tpu_custom_call.1} parent=1 // pred_check_branch
      %877 = sbr.rel (0) target = $region369
    $region368: #{tpu_custom_call.1} parent=1 // pred_region
      %878 = dma.done [#allocation45], 16
    $region369: #{tpu_custom_call.1} parent=1 // pred_fallthru
      _
    // Predicated region
    $region370: #{tpu_custom_call.1} parent=1 // pred_check
      _
    $region371: #{tpu_custom_call.1} parent=1 // pred_check_branch
      %880 = sbr.rel (0) target = $region373
    $region372: #{tpu_custom_call.1} parent=1 // pred_region
      %881 = dma.done [#allocation48], 256
    $region373: #{tpu_custom_call.1} parent=1 // pred_fallthru
      _
    // Predicated region
    $region374: #{tpu_custom_call.1} parent=1 // pred_check
      _
    $region375: #{tpu_custom_call.1} parent=1 // pred_check_branch
      %883 = sbr.rel (0) target = $region377
    $region376: #{tpu_custom_call.1} parent=1 // pred_region
      %884 = dma.done [#allocation48], 256
    $region377: #{tpu_custom_call.1} parent=1 // pred_fallthru
      _
    // Predicated region
    $region378: #{tpu_custom_call.1} parent=1 // pred_check
      _
    $region379: #{tpu_custom_call.1} parent=1 // pred_check_branch
      %886 = sbr.rel (0) target = $region381
    $region380: #{tpu_custom_call.1} parent=1 // pred_region
      %887 = dma.done [#allocation51], 128
    $region381: #{tpu_custom_call.1} parent=1 // pred_fallthru
      _
    // Predicated region
    $region382: #{tpu_custom_call.1} parent=1 // pred_check
      _
    $region383: #{tpu_custom_call.1} parent=1 // pred_check_branch
      %889 = sbr.rel (0) target = $region385
    $region384: #{tpu_custom_call.1} parent=1 // pred_region
      %890 = dma.done [#allocation51], 16
    $region385: #{tpu_custom_call.1} parent=1 // pred_fallthru
      _
    // Predicated region
    $region386: #{tpu_custom_call.1} parent=1 // pred_check
      _
    $region387: #{tpu_custom_call.1} parent=1 // pred_check_branch
      %892 = sbr.rel (0) target = $region389
    $region388: #{tpu_custom_call.1} parent=1 // pred_region
      %893 = dma.done [#allocation54], 512
    $region389: #{tpu_custom_call.1} parent=1 // pred_fallthru
      _
    // Predicated region
    $region390: #{tpu_custom_call.1} parent=1 // pred_check
      _
    $region391: #{tpu_custom_call.1} parent=1 // pred_check_branch
      %895 = sbr.rel (0) target = $region393
    $region392: #{tpu_custom_call.1} parent=1 // pred_region
      %896 = dma.done [#allocation54], 16
    $region393: #{tpu_custom_call.1} parent=1 // pred_fallthru
      _
    // Predicated region
    $region394: #{tpu_custom_call.1} parent=1 // pred_check
      _
    $region395: #{tpu_custom_call.1} parent=1 // pred_check_branch
      %898 = sbr.rel (0) target = $region397
    $region396: #{tpu_custom_call.1} parent=1 // pred_region
      %899 = dma.done [#allocation57], 512
    $region397: #{tpu_custom_call.1} parent=1 // pred_fallthru
      _
    // Predicated region
    $region398: #{tpu_custom_call.1} parent=1 // pred_check
      _
    $region399: #{tpu_custom_call.1} parent=1 // pred_check_branch
      %901 = sbr.rel (0) target = $region401
    $region400: #{tpu_custom_call.1} parent=1 // pred_region
      %902 = dma.done [#allocation57], 16
    $region401: #{tpu_custom_call.1} parent=1 // pred_fallthru
      _
    // Predicated region
    $region402: #{tpu_custom_call.1} parent=1 // pred_check
      _
    $region403: #{tpu_custom_call.1} parent=1 // pred_check_branch
      %904 = sbr.rel (0) target = $region405
    $region404: #{tpu_custom_call.1} parent=1 // pred_region
      %905 = dma.done [#allocation60], 512
    $region405: #{tpu_custom_call.1} parent=1 // pred_fallthru
      _
    // Predicated region
    $region406: #{tpu_custom_call.1} parent=1 // pred_check
      _
    $region407: #{tpu_custom_call.1} parent=1 // pred_check_branch
      %907 = sbr.rel (0) target = $region409
    $region408: #{tpu_custom_call.1} parent=1 // pred_region
      %908 = dma.done [#allocation60], 48
    $region409: #{tpu_custom_call.1} parent=1 // pred_fallthru
      _
    // Predicated region
    $region410: #{tpu_custom_call.1} parent=1 // pred_check
      _
    $region411: #{tpu_custom_call.1} parent=1 // pred_check_branch
      %910 = sbr.rel (0) target = $region413
    $region412: #{tpu_custom_call.1} parent=1 // pred_region
      %911 = dma.done [#allocation63], 48
    $region413: #{tpu_custom_call.1} parent=1 // pred_fallthru
      _
    // Predicated region
    $region414: #{tpu_custom_call.1} parent=1 // pred_check
      _
    $region415: #{tpu_custom_call.1} parent=1 // pred_check_branch
      %913 = sbr.rel (0) target = $region417
    $region416: #{tpu_custom_call.1} parent=1 // pred_region
      %914 = dma.done [#allocation63], 1536
    $region417: #{tpu_custom_call.1} parent=1 // pred_fallthru
      _
    // Predicated region
    $region418: #{tpu_custom_call.1} parent=1 // pred_check
      _
    $region419: #{tpu_custom_call.1} parent=1 // pred_check_branch
      %916 = sbr.rel (0) target = $region421
    $region420: #{tpu_custom_call.1} parent=1 // pred_region
      %917 = dma.done [#allocation66], 1536
    $region421: #{tpu_custom_call.1} parent=1 // pred_fallthru
      _
    // Predicated region
    $region422: #{tpu_custom_call.1} parent=1 // pred_check
      _
    $region423: #{tpu_custom_call.1} parent=1 // pred_check_branch
      %919 = sbr.rel (0) target = $region425
    $region424: #{tpu_custom_call.1} parent=1 // pred_region
      %920 = dma.done [#allocation66], 48
    $region425: #{tpu_custom_call.1} parent=1 // pred_fallthru
      _
    // Predicated region
    $region426: #{tpu_custom_call.1} parent=1 // pred_check
      _
    $region427: #{tpu_custom_call.1} parent=1 // pred_check_branch
      %922 = sbr.rel (0) target = $region429
    $region428: #{tpu_custom_call.1} parent=1 // pred_region
      %923 = dma.done [#allocation69], 1536
    $region429: #{tpu_custom_call.1} parent=1 // pred_fallthru
      _
    // Predicated region
    $region430: #{tpu_custom_call.1} parent=1 // pred_check
      _
    $region431: #{tpu_custom_call.1} parent=1 // pred_check_branch
      %925 = sbr.rel (0) target = $region433
    $region432: #{tpu_custom_call.1} parent=1 // pred_region
      %926 = dma.done [#allocation69], 1536
    $region433: #{tpu_custom_call.1} parent=1 // pred_fallthru
      _
    // Predicated region
    $region434: #{tpu_custom_call.1} parent=1 // pred_check
      _
    $region435: #{tpu_custom_call.1} parent=1 // pred_check_branch
      %928 = sbr.rel (0) target = $region437
    $region436: #{tpu_custom_call.1} parent=1 // pred_region
      %929 = dma.done [#allocation72], 48
    $region437: #{tpu_custom_call.1} parent=1 // pred_fallthru
      _
    // Predicated region
    $region438: #{tpu_custom_call.1} parent=1 // pred_check
      _
    $region439: #{tpu_custom_call.1} parent=1 // pred_check_branch
      %931 = sbr.rel (0) target = $region441
    $region440: #{tpu_custom_call.1} parent=1 // pred_region
      %932 = dma.done [#allocation72], 1536
    $region441: #{tpu_custom_call.1} parent=1 // pred_fallthru
      _
    // Predicated region
    $region442: #{tpu_custom_call.1} parent=1 // pred_check
      _
    $region443: #{tpu_custom_call.1} parent=1 // pred_check_branch
      %934 = sbr.rel (0) target = $region445
    $region444: #{tpu_custom_call.1} parent=1 // pred_region
      %935 = dma.done [#allocation75], 1536
    $region445: #{tpu_custom_call.1} parent=1 // pred_fallthru
      _
    // Predicated region
    $region446: #{tpu_custom_call.1} parent=1 // pred_check
      _
    $region447: #{tpu_custom_call.1} parent=1 // pred_check_branch
      %937 = sbr.rel (0) target = $region449
    $region448: #{tpu_custom_call.1} parent=1 // pred_region
      %938 = dma.done [#allocation75], 16
    $region449: #{tpu_custom_call.1} parent=1 // pred_fallthru
      _
    // Predicated region
    $region450: #{tpu_custom_call.1} parent=1 // pred_check
      _
    $region451: #{tpu_custom_call.1} parent=1 // pred_check_branch
      %940 = sbr.rel (0) target = $region453
    $region452: #{tpu_custom_call.1} parent=1 // pred_region
      %941 = dma.done [#allocation78], 16
    $region453: #{tpu_custom_call.1} parent=1 // pred_fallthru
      _
    // Predicated region
    $region454: #{tpu_custom_call.1} parent=1 // pred_check
      _
    $region455: #{tpu_custom_call.1} parent=1 // pred_check_branch
      %943 = sbr.rel (0) target = $region457
    $region456: #{tpu_custom_call.1} parent=1 // pred_region
      %944 = dma.done [#allocation78], 16
    $region457: #{tpu_custom_call.1} parent=1 // pred_fallthru
      _
    // Predicated region
    $region458: #{tpu_custom_call.1} parent=1 // pred_check
      _
    $region459: #{tpu_custom_call.1} parent=1 // pred_check_branch
      %946 = sbr.rel (0) target = $region461
    $region460: #{tpu_custom_call.1} parent=1 // pred_region
      %947 = dma.done [#allocation81], 512
    $region461: #{tpu_custom_call.1} parent=1 // pred_fallthru
      _
    // Predicated region
    $region462: #{tpu_custom_call.1} parent=1 // pred_check
      _
    $region463: #{tpu_custom_call.1} parent=1 // pred_check_branch
      %949 = sbr.rel (0) target = $region465
    $region464: #{tpu_custom_call.1} parent=1 // pred_region
      %950 = dma.done [#allocation81], 512
    $region465: #{tpu_custom_call.1} parent=1 // pred_fallthru
      _
    // Predicated region
    $region466: #{tpu_custom_call.1} parent=1 // pred_check
      _
    $region467: #{tpu_custom_call.1} parent=1 // pred_check_branch
      %952 = sbr.rel (0) target = $region469
    $region468: #{tpu_custom_call.1} parent=1 // pred_region
      %953 = dma.done [#allocation84], 256
    $region469: #{tpu_custom_call.1} parent=1 // pred_fallthru
      _
    // Predicated region
    $region470: #{tpu_custom_call.1} parent=1 // pred_check
      _
    $region471: #{tpu_custom_call.1} parent=1 // pred_check_branch
      %955 = sbr.rel (0) target = $region473
    $region472: #{tpu_custom_call.1} parent=1 // pred_region
      %956 = dma.done [#allocation84], 256
    $region473: #{tpu_custom_call.1} parent=1 // pred_fallthru
      _
    %v957 = vld [vmem:[#allocation2] sm:$0xff]
    %v958 = vld [vmem:[#allocation2 + $0x8] sm:$0xff]
    %v959 = vld [vmem:[#allocation5] sm:$0xf]
    %v960 = vld [vmem:[#allocation7] sm:$0xff]
    %v961 = vld [vmem:[#allocation7 + $0x8] sm:$0xff]
    %v962 = vld [vmem:[#allocation8] sm:$0xff]
    %v963 = vld [vmem:[#allocation8 + $0x8] sm:$0xff]
    %v964 = vld [vmem:[#allocation10] sm:$0xf]
    %v965 = vld [vmem:[#allocation11] sm:$0xff]
    %v966 = vld [vmem:[#allocation11 + $0x8] sm:$0xff]
    %v967 = vld [vmem:[%s13] sm:$0x1]
    %v968 = vld [vmem:[%s15] sm:$0xff]
    %v969 = vld [vmem:[%s15 + $0x8] sm:$0xff]
    %v970 = vld [vmem:[%s15 + $0x10] sm:$0xff]
    %v971 = vld [vmem:[%s15 + $0x18] sm:$0xff]
    %v972 = vld [vmem:[#allocation13] sm:$0x1]
    %v973 = vld [vmem:[%s19] sm:$0xff]
    %v974 = vld [vmem:[%s19 + $0x8] sm:$0xff]
    %v975 = vld [vmem:[%s19 + $0x10] sm:$0xff]
    %v976 = vld [vmem:[%s19 + $0x18] sm:$0xff]
    %v977 = vld [vmem:[#allocation14] sm:$0x1]
    %v978 = vld [vmem:[%s23] sm:$0xff]
    %v979 = vld [vmem:[%s23 + $0x8] sm:$0xff]
    %v980 = vld [vmem:[%s23 + $0x10] sm:$0xff]
    %v981 = vld [vmem:[%s23 + $0x18] sm:$0xff]
    %v982 = vld [vmem:[#allocation16] sm:$0x1]
    %v983 = vld [vmem:[#allocation17] sm:$0xff]
    %v984 = vld [vmem:[#allocation17 + $0x8] sm:$0xff]
    %v985 = vld [vmem:[#allocation17 + $0x10] sm:$0xff]
    %v986 = vld [vmem:[#allocation17 + $0x18] sm:$0xff]
    %v987 = vld [vmem:[#allocation19] sm:$0x1]
    %v988 = vld [vmem:[#allocation20] sm:$0xff]
    %v989 = vld [vmem:[#allocation20 + $0x8] sm:$0xff]
    %v990 = vld [vmem:[#allocation20 + $0x10] sm:$0xff]
    %v991 = vld [vmem:[#allocation20 + $0x18] sm:$0xff]
    %v992 = vld [vmem:[#allocation22] sm:$0x1]
    %v993 = vld [vmem:[#allocation23] sm:$0xff]
    %v994 = vld [vmem:[#allocation23 + $0x8] sm:$0xff]
    %v995 = vld [vmem:[#allocation23 + $0x10] sm:$0xff]
    %v996 = vld [vmem:[#allocation23 + $0x18] sm:$0xff]
    %v997 = vld [vmem:[#allocation25] sm:$0x7]
    %v998 = vld [vmem:[#allocation26] sm:$0xff]
    %v999 = vld [vmem:[#allocation26 + $0x8] sm:$0xff]
    %v1000 = vld [vmem:[#allocation26 + $0x10] sm:$0xff]
    %v1001 = vld [vmem:[#allocation26 + $0x18] sm:$0xf]
    %v1002 = vld [vmem:[#allocation26 + $0x20] sm:$0xf]
    %v1003 = vld [vmem:[#allocation26 + $0x28] sm:$0xf]
    %v1004 = vld [vmem:[#allocation28] sm:$0xff]
    %v1005 = vld [vmem:[#allocation28 + $0x8] sm:$0xff]
    %v1006 = vld [vmem:[#allocation28 + $0x10] sm:$0xff]
    %v1007 = vld [vmem:[#allocation28 + $0x18] sm:$0xf]
    %v1008 = vld [vmem:[#allocation28 + $0x20] sm:$0xf]
    %v1009 = vld [vmem:[#allocation28 + $0x28] sm:$0xf]
    %v1010 = vld [vmem:[#allocation29] sm:$0x7]
    %v1011 = vld [vmem:[#allocation31] sm:$0xff]
    %v1012 = vld [vmem:[#allocation31 + $0x8] sm:$0xff]
    %v1013 = vld [vmem:[#allocation31 + $0x10] sm:$0xff]
    %v1014 = vld [vmem:[#allocation31 + $0x18] sm:$0xf]
    %v1015 = vld [vmem:[#allocation31 + $0x20] sm:$0xf]
    %v1016 = vld [vmem:[#allocation31 + $0x28] sm:$0xf]
    %v1017 = vld [vmem:[#allocation32] sm:$0xff]
    %v1018 = vld [vmem:[#allocation32 + $0x8] sm:$0xff]
    %v1019 = vld [vmem:[#allocation32 + $0x10] sm:$0xff]
    %v1020 = vld [vmem:[#allocation32 + $0x18] sm:$0xf]
    %v1021 = vld [vmem:[#allocation32 + $0x20] sm:$0xf]
    %v1022 = vld [vmem:[#allocation32 + $0x28] sm:$0xf]
    %v1023 = vld [vmem:[#allocation34] sm:$0x7]
    %v1024 = vld [vmem:[#allocation35] sm:$0xff]
    %v1025 = vld [vmem:[#allocation35 + $0x8] sm:$0xff]
    %v1026 = vld [vmem:[#allocation35 + $0x10] sm:$0xff]
    %v1027 = vld [vmem:[#allocation35 + $0x18] sm:$0xf]
    %v1028 = vld [vmem:[#allocation35 + $0x20] sm:$0xf]
    %v1029 = vld [vmem:[#allocation35 + $0x28] sm:$0xf]
    %v1030 = vld [vmem:[#allocation37] sm:$0xff]
    %v1031 = vld [vmem:[#allocation37 + $0x8] sm:$0xff]
    %v1032 = vld [vmem:[#allocation37 + $0x10] sm:$0xff]
    %v1033 = vld [vmem:[#allocation37 + $0x18] sm:$0xf]
    %v1034 = vld [vmem:[#allocation37 + $0x20] sm:$0xf]
    %v1035 = vld [vmem:[#allocation37 + $0x28] sm:$0xf]
    %v1036 = vld [vmem:[#allocation38] sm:$0x7]
    %v1037 = vld [vmem:[#allocation40] sm:$0xff]
    %v1038 = vld [vmem:[#allocation40 + $0x8] sm:$0xff]
    %v1039 = vld [vmem:[#allocation40 + $0x10] sm:$0xff]
    %v1040 = vld [vmem:[#allocation40 + $0x18] sm:$0xf]
    %v1041 = vld [vmem:[#allocation40 + $0x20] sm:$0xf]
    %v1042 = vld [vmem:[#allocation40 + $0x28] sm:$0xf]
    %v1043 = vld [vmem:[#allocation41] sm:$0xff]
    %v1044 = vld [vmem:[#allocation41 + $0x8] sm:$0xff]
    %v1045 = vld [vmem:[#allocation41 + $0x10] sm:$0xff]
    %v1046 = vld [vmem:[#allocation41 + $0x18] sm:$0xf]
    %v1047 = vld [vmem:[#allocation41 + $0x20] sm:$0xf]
    %v1048 = vld [vmem:[#allocation41 + $0x28] sm:$0xf]
    %v1049 = vld [vmem:[#allocation43] sm:$0x1]
    %v1050 = vld [vmem:[#allocation44] sm:$0x1]
    %v1051 = vld [vmem:[#allocation46] sm:$0x1]
    %v1052 = vld [vmem:[#allocation47] sm:$0xff]
    %v1053 = vld [vmem:[#allocation47 + $0x8] sm:$0xf]
    %v1054 = vld [vmem:[#allocation49] sm:$0xff]
    %v1055 = vld [vmem:[#allocation49 + $0x8] sm:$0xf]
    %v1056 = vld [vmem:[#allocation50] sm:$0x3f]
    %v1057 = vld [vmem:[#allocation52] sm:$0x1]
    %v1058 = vld [vmem:[#allocation53] sm:$0xff]
    %v1059 = vld [vmem:[#allocation53 + $0x8] sm:$0xff]
    %v1060 = vld [vmem:[#allocation53 + $0x10] sm:$0xff]
    %v1061 = vld [vmem:[#allocation53 + $0x18] sm:$0xff]
    %v1062 = vld [vmem:[#allocation55] sm:$0x1]
    %v1063 = vld [vmem:[#allocation56] sm:$0xff]
    %v1064 = vld [vmem:[#allocation56 + $0x8] sm:$0xff]
    %v1065 = vld [vmem:[#allocation56 + $0x10] sm:$0xff]
    %v1066 = vld [vmem:[#allocation56 + $0x18] sm:$0xff]
    %v1067 = vld [vmem:[#allocation58] sm:$0x1]
    %v1068 = vld [vmem:[#allocation59] sm:$0xff]
    %v1069 = vld [vmem:[#allocation59 + $0x8] sm:$0xff]
    %v1070 = vld [vmem:[#allocation59 + $0x10] sm:$0xff]
    %v1071 = vld [vmem:[#allocation59 + $0x18] sm:$0xff]
    %v1072 = vld [vmem:[#allocation61] sm:$0x7]
    %v1073 = vld [vmem:[%s87] sm:$0xff]
    %v1074 = vld [vmem:[%s87 + $0x8] sm:$0xff]
    %v1075 = vld [vmem:[%s87 + $0x10] sm:$0xff]
    %v1076 = vld [vmem:[%s87 + $0x18] sm:$0xff]
    %v1077 = vld [vmem:[%s87 + $0x20] sm:$0xff]
    %v1078 = vld [vmem:[%s87 + $0x28] sm:$0xff]
    %v1079 = vld [vmem:[%s87 + $0x30] sm:$0xff]
    %v1080 = vld [vmem:[%s87 + $0x38] sm:$0xff]
    %v1081 = vld [vmem:[%s87 + $0x40] sm:$0xff]
    %v1082 = vld [vmem:[%s87 + $0x48] sm:$0xff]
    %v1083 = vld [vmem:[%s87 + $0x50] sm:$0xff]
    %v1084 = vld [vmem:[%s87 + $0x58] sm:$0xff]
    %v1085 = vld [vmem:[%s89] sm:$0xff]
    %v1086 = vld [vmem:[%s89 + $0x8] sm:$0xff]
    %v1087 = vld [vmem:[%s89 + $0x10] sm:$0xff]
    %v1088 = vld [vmem:[%s89 + $0x18] sm:$0xff]
    %v1089 = vld [vmem:[%s89 + $0x20] sm:$0xff]
    %v1090 = vld [vmem:[%s89 + $0x28] sm:$0xff]
    %v1091 = vld [vmem:[%s89 + $0x30] sm:$0xff]
    %v1092 = vld [vmem:[%s89 + $0x38] sm:$0xff]
    %v1093 = vld [vmem:[%s89 + $0x40] sm:$0xff]
    %v1094 = vld [vmem:[%s89 + $0x48] sm:$0xff]
    %v1095 = vld [vmem:[%s89 + $0x50] sm:$0xff]
    %v1096 = vld [vmem:[%s89 + $0x58] sm:$0xff]
    %v1097 = vld [vmem:[#allocation62] sm:$0x7]
    %v1098 = vld [vmem:[#allocation64] sm:$0xff]
    %v1099 = vld [vmem:[#allocation64 + $0x8] sm:$0xff]
    %v1100 = vld [vmem:[#allocation64 + $0x10] sm:$0xff]
    %v1101 = vld [vmem:[#allocation64 + $0x18] sm:$0xff]
    %v1102 = vld [vmem:[#allocation64 + $0x20] sm:$0xff]
    %v1103 = vld [vmem:[#allocation64 + $0x28] sm:$0xff]
    %v1104 = vld [vmem:[#allocation64 + $0x30] sm:$0xff]
    %v1105 = vld [vmem:[#allocation64 + $0x38] sm:$0xff]
    %v1106 = vld [vmem:[#allocation64 + $0x40] sm:$0xff]
    %v1107 = vld [vmem:[#allocation64 + $0x48] sm:$0xff]
    %v1108 = vld [vmem:[#allocation64 + $0x50] sm:$0xff]
    %v1109 = vld [vmem:[#allocation64 + $0x58] sm:$0xff]
    %v1110 = vld [vmem:[#allocation65] sm:$0xff]
    %v1111 = vld [vmem:[#allocation65 + $0x8] sm:$0xff]
    %v1112 = vld [vmem:[#allocation65 + $0x10] sm:$0xff]
    %v1113 = vld [vmem:[#allocation65 + $0x18] sm:$0xff]
    %v1114 = vld [vmem:[#allocation65 + $0x20] sm:$0xff]
    %v1115 = vld [vmem:[#allocation65 + $0x28] sm:$0xff]
    %v1116 = vld [vmem:[#allocation65 + $0x30] sm:$0xff]
    %v1117 = vld [vmem:[#allocation65 + $0x38] sm:$0xff]
    %v1118 = vld [vmem:[#allocation65 + $0x40] sm:$0xff]
    %v1119 = vld [vmem:[#allocation65 + $0x48] sm:$0xff]
    %v1120 = vld [vmem:[#allocation65 + $0x50] sm:$0xff]
    %v1121 = vld [vmem:[#allocation65 + $0x58] sm:$0xff]
    %v1122 = vld [vmem:[#allocation67] sm:$0x7]
    %v1123 = vld [vmem:[#allocation68] sm:$0xff]
    %v1124 = vld [vmem:[#allocation68 + $0x8] sm:$0xff]
    %v1125 = vld [vmem:[#allocation68 + $0x10] sm:$0xff]
    %v1126 = vld [vmem:[#allocation68 + $0x18] sm:$0xff]
    %v1127 = vld [vmem:[#allocation68 + $0x20] sm:$0xff]
    %v1128 = vld [vmem:[#allocation68 + $0x28] sm:$0xff]
    %v1129 = vld [vmem:[#allocation68 + $0x30] sm:$0xff]
    %v1130 = vld [vmem:[#allocation68 + $0x38] sm:$0xff]
    %v1131 = vld [vmem:[#allocation68 + $0x40] sm:$0xff]
    %v1132 = vld [vmem:[#allocation68 + $0x48] sm:$0xff]
    %v1133 = vld [vmem:[#allocation68 + $0x50] sm:$0xff]
    %v1134 = vld [vmem:[#allocation68 + $0x58] sm:$0xff]
    %v1135 = vld [vmem:[#allocation70] sm:$0xff]
    %v1136 = vld [vmem:[#allocation70 + $0x8] sm:$0xff]
    %v1137 = vld [vmem:[#allocation70 + $0x10] sm:$0xff]
    %v1138 = vld [vmem:[#allocation70 + $0x18] sm:$0xff]
    %v1139 = vld [vmem:[#allocation70 + $0x20] sm:$0xff]
    %v1140 = vld [vmem:[#allocation70 + $0x28] sm:$0xff]
    %v1141 = vld [vmem:[#allocation70 + $0x30] sm:$0xff]
    %v1142 = vld [vmem:[#allocation70 + $0x38] sm:$0xff]
    %v1143 = vld [vmem:[#allocation70 + $0x40] sm:$0xff]
    %v1144 = vld [vmem:[#allocation70 + $0x48] sm:$0xff]
    %v1145 = vld [vmem:[#allocation70 + $0x50] sm:$0xff]
    %v1146 = vld [vmem:[#allocation70 + $0x58] sm:$0xff]
    %v1147 = vld [vmem:[#allocation71] sm:$0x7]
    %v1148 = vld [vmem:[#allocation73] sm:$0xff]
    %v1149 = vld [vmem:[#allocation73 + $0x8] sm:$0xff]
    %v1150 = vld [vmem:[#allocation73 + $0x10] sm:$0xff]
    %v1151 = vld [vmem:[#allocation73 + $0x18] sm:$0xff]
    %v1152 = vld [vmem:[#allocation73 + $0x20] sm:$0xff]
    %v1153 = vld [vmem:[#allocation73 + $0x28] sm:$0xff]
    %v1154 = vld [vmem:[#allocation73 + $0x30] sm:$0xff]
    %v1155 = vld [vmem:[#allocation73 + $0x38] sm:$0xff]
    %v1156 = vld [vmem:[#allocation73 + $0x40] sm:$0xff]
    %v1157 = vld [vmem:[#allocation73 + $0x48] sm:$0xff]
    %v1158 = vld [vmem:[#allocation73 + $0x50] sm:$0xff]
    %v1159 = vld [vmem:[#allocation73 + $0x58] sm:$0xff]
    %v1160 = vld [vmem:[#allocation74] sm:$0xff]
    %v1161 = vld [vmem:[#allocation74 + $0x8] sm:$0xff]
    %v1162 = vld [vmem:[#allocation74 + $0x10] sm:$0xff]
    %v1163 = vld [vmem:[#allocation74 + $0x18] sm:$0xff]
    %v1164 = vld [vmem:[#allocation74 + $0x20] sm:$0xff]
    %v1165 = vld [vmem:[#allocation74 + $0x28] sm:$0xff]
    %v1166 = vld [vmem:[#allocation74 + $0x30] sm:$0xff]
    %v1167 = vld [vmem:[#allocation74 + $0x38] sm:$0xff]
    %v1168 = vld [vmem:[#allocation74 + $0x40] sm:$0xff]
    %v1169 = vld [vmem:[#allocation74 + $0x48] sm:$0xff]
    %v1170 = vld [vmem:[#allocation74 + $0x50] sm:$0xff]
    %v1171 = vld [vmem:[#allocation74 + $0x58] sm:$0xff]
    %v1172 = vld [vmem:[#allocation76] sm:$0x1]
    %v1173 = vld [vmem:[#allocation77] sm:$0x1]
    %v1174 = vld [vmem:[#allocation79] sm:$0x1]
    %v1175 = vld [vmem:[#allocation80] sm:$0xff]
    %v1176 = vld [vmem:[#allocation80 + $0x8] sm:$0xff]
    %v1177 = vld [vmem:[#allocation80 + $0x10] sm:$0xff]
    %v1178 = vld [vmem:[#allocation80 + $0x18] sm:$0xff]
    %v1179 = vld [vmem:[%s117] sm:$0xff]
    %v1180 = vld [vmem:[%s117 + $0x8] sm:$0xff]
    %v1181 = vld [vmem:[%s117 + $0x10] sm:$0xff]
    %v1182 = vld [vmem:[%s117 + $0x18] sm:$0xff]
    %v1183 = vld [vmem:[#allocation82] sm:$0xff]
    %v1184 = vld [vmem:[#allocation82 + $0x8] sm:$0xff]
    %v1185 = vld [vmem:[#allocation82 + $0x10] sm:$0xff]
    %v1186 = vld [vmem:[#allocation82 + $0x18] sm:$0xff]
    %v1187 = vld [vmem:[#allocation83] sm:$0xff]
    %v1188 = vld [vmem:[#allocation83 + $0x8] sm:$0xff]
    %v1189 = vld [vmem:[%s123] sm:$0xf]
    %v1190 = vld [vmem:[#allocation85] sm:$0xff]
    %v1191 = vld [vmem:[#allocation85 + $0x8] sm:$0xff]
    %vm1192 = vcmask 130048
    %v1194 = vsel %vm1192, %v965, 0
    %v1197 = vsel %vm1192, %v966, 0
    %1199 = vmatprep.subr.mxu0 0.0
    %1200 = vmatpush1.msra.mxu0 0.0
    %1201 = vmatprep.subr.mxu0 0.0
    %1202 = vmatpush1.msra.mxu0 0.0
    %1203 = vmatprep.subr.mxu0 0.0
    %1204 = vmatpush1.msra.mxu0 0.0
    %1205 = vmatprep.subr.mxu0 0.0
    %1206 = vmatpush1.msra.mxu0 0.0
    %1207 = vmatprep.subr.mxu0 0.0
    %1208 = vmatpush1.msra.mxu0 0.0
    %1209 = vmatprep.subr.mxu0 0.0
    %1210 = vmatpush1.msra.mxu0 0.0
    %1211 = vmatprep.subr.mxu0 0.0
    %1212 = vmatpush1.msra.mxu0 0.0
    %1213 = vmatprep.subr.mxu0 0.0
    %1214 = vmatpush1.msra.mxu0 0.0
    %1215 = vmatprep.subr.mxu0 0.0
    %1216 = vmatpush1.msra.mxu0 0.0
    %1217 = vmatprep.subr.mxu0 0.0
    %1218 = vmatpush1.msra.mxu0 0.0
    %1219 = vmatprep.subr.mxu0 0.0
    %1220 = vmatpush1.msra.mxu0 0.0
    %1221 = vmatprep.subr.mxu0 0.0
    %1222 = vmatpush1.msra.mxu0 0.0
    %1223 = vmatprep.subr.mxu0 0.0
    %1224 = vmatpush1.msra.mxu0 0.0
    %1225 = vmatprep.subr.mxu0 0.0
    %1226 = vmatpush1.msra.mxu0 0.0
    %1227 = vmatprep.subr.mxu0 0.0
    %1228 = vmatpush1.msra.mxu0 %v1191
    %1229 = vmatprep.subr.mxu0 0.0
    %1230 = vmatpush1.msra.mxu0 %v1190
    %1231 = vmatprep.subr.mxu0 0.0
    %1232 = vmatpush2.msra.mxu0 0.0
    %1233 = vmatprep.subr.mxu0 0.0
    %1234 = vmatpush2.msra.mxu0 0.0
    %1235 = vmatprep.subr.mxu0 0.0
    %1236 = vmatpush2.msra.mxu0 0.0
    %1237 = vmatprep.subr.mxu0 0.0
    %1238 = vmatpush2.msra.mxu0 0.0
    %1239 = vmatprep.subr.mxu0 0.0
    %1240 = vmatpush2.msra.mxu0 0.0
    %1241 = vmatprep.subr.mxu0 0.0
    %1242 = vmatpush2.msra.mxu0 0.0
    %1243 = vmatprep.subr.mxu0 0.0
    %1244 = vmatpush2.msra.mxu0 0.0
    %1245 = vmatprep.subr.mxu0 0.0
    %1246 = vmatpush2.msra.mxu0 0.0
    %1247 = vmatprep.subr.mxu0 0.0
    %1248 = vmatpush2.msra.mxu0 0.0
    %1249 = vmatprep.subr.mxu0 0.0
    %1250 = vmatpush2.msra.mxu0 0.0
    %1251 = vmatprep.subr.mxu0 0.0
    %1252 = vmatpush2.msra.mxu0 0.0
    %1253 = vmatprep.subr.mxu0 0.0
    %1254 = vmatpush2.msra.mxu0 0.0
    %1255 = vmatprep.subr.mxu0 0.0
    %1256 = vmatpush2.msra.mxu0 0.0
    %1257 = vmatprep.subr.mxu0 0.0
    %1258 = vmatpush2.msra.mxu0 0.0
    %1259 = vmatprep.subr.mxu0 0.0
    %1260 = vmatpush2.msra.mxu0 0.0
    %1261 = vmatprep.subr.mxu0 0.0
    %1262 = vmatpush2.msra.mxu0 0.0
    %1263 = vmatprep.mubr.f32.mxu0 0.0
    %1264 = vmatmul.mubr.f32.gmra.mxu0 %v1194
    %v1265 = vpop.f32.mrf.mxu0
    %v1266 = vadd.f32 0.0, %v1265
    %v1267 = vpop.f32.mrf.mxu0
    %1268 = vmatprep.mubr.f32.mxu0 0.0
    %1269 = vmatmul.mubr.f32.gmra.mxu0 %v1197
    %v1270 = vpop.f32.mrf.mxu0
    %v1271 = vadd.f32 0.0, %v1270
    %v1272 = vpop.f32.mrf.mxu0
    %1273 = vdwg.mxu0
    %v1274 = vsel %vm1192, %v965, 0.0
    %1275 = vadd.xlane.f32.xlu0 %v1274
    %v1276 = vpop.xlane.xlu0 %1275
    %v1277 = vsel %vm1192, %v966, 0.0
    %1278 = vadd.xlane.f32.xlu0 %v1277
    %v1279 = vpop.xlane.xlu0 %1278
    %v1280 = vmin.f32 %v1276, 10.0
    %v1281 = vmin.f32 %v1279, 10.0
    %v1282 = vcvt.f32.s32.to.zero.pseudo %v1280
    %v1283 = vcvt.f32.s32.to.zero.pseudo %v1281
    %vm1284 = vcmask 97280
    %v1286 = vsel %vm1284, %v1190, 0
    %v1289 = vsel %vm1284, %v1191, 0
    %vm1291 = vcmask 1043456
    %v1293 = vsel %vm1291, %v1046, 0
    %v1296 = vsel %vm1291, %v1047, 0
    %v1299 = vsel %vm1291, %v1048, 0
    %1301 = vmatprep.subr.mxu0 0.0
    %1302 = vmatpush1.msra.mxu0 0.0
    %1303 = vmatprep.subr.mxu0 0.0
    %1304 = vmatpush1.msra.mxu0 0.0
    %1305 = vmatprep.subr.mxu0 0.0
    %1306 = vmatpush1.msra.mxu0 0.0
    %1307 = vmatprep.subr.mxu0 0.0
    %1308 = vmatpush1.msra.mxu0 0.0
    %1309 = vmatprep.subr.mxu0 0.0
    %1310 = vmatpush1.msra.mxu0 0.0
    %1311 = vmatprep.subr.mxu0 0.0
    %1312 = vmatpush1.msra.mxu0 0.0
    %1313 = vmatprep.subr.mxu0 0.0
    %1314 = vmatpush1.msra.mxu0 0.0
    %1315 = vmatprep.subr.mxu0 0.0
    %1316 = vmatpush1.msra.mxu0 0.0
    %1317 = vmatprep.subr.mxu0 0.0
    %1318 = vmatpush1.msra.mxu0 0.0
    %1319 = vmatprep.subr.mxu0 0.0
    %1320 = vmatpush1.msra.mxu0 0.0
    %1321 = vmatprep.subr.mxu0 0.0
    %1322 = vmatpush1.msra.mxu0 0.0
    %1323 = vmatprep.subr.mxu0 0.0
    %1324 = vmatpush1.msra.mxu0 0.0
    %1325 = vmatprep.subr.mxu0 0.0
    %1326 = vmatpush1.msra.mxu0 0.0
    %1327 = vmatprep.subr.mxu0 0.0
    %1328 = vmatpush1.msra.mxu0 0.0
    %1329 = vmatprep.subr.mxu0 %v1296
    %1330 = vmatpush1.msra.mxu0 %v1293
    %1331 = vmatprep.subr.mxu0 %v1044
    %1332 = vmatpush1.msra.mxu0 %v1043
    %1333 = vmatprep.subr.mxu0 0.0
    %1334 = vmatpush2.msra.mxu0 0.0
    %1335 = vmatprep.subr.mxu0 0.0
    %1336 = vmatpush2.msra.mxu0 0.0
    %1337 = vmatprep.subr.mxu0 0.0
    %1338 = vmatpush2.msra.mxu0 0.0
    %1339 = vmatprep.subr.mxu0 0.0
    %1340 = vmatpush2.msra.mxu0 0.0
    %1341 = vmatprep.subr.mxu0 0.0
    %1342 = vmatpush2.msra.mxu0 0.0
    %1343 = vmatprep.subr.mxu0 0.0
    %1344 = vmatpush2.msra.mxu0 0.0
    %1345 = vmatprep.subr.mxu0 0.0
    %1346 = vmatpush2.msra.mxu0 0.0
    %1347 = vmatprep.subr.mxu0 0.0
    %1348 = vmatpush2.msra.mxu0 0.0
    %1349 = vmatprep.subr.mxu0 0.0
    %1350 = vmatpush2.msra.mxu0 0.0
    %1351 = vmatprep.subr.mxu0 0.0
    %1352 = vmatpush2.msra.mxu0 0.0
    %1353 = vmatprep.subr.mxu0 0.0
    %1354 = vmatpush2.msra.mxu0 0.0
    %1355 = vmatprep.subr.mxu0 0.0
    %1356 = vmatpush2.msra.mxu0 0.0
    %1357 = vmatprep.subr.mxu0 0.0
    %1358 = vmatpush2.msra.mxu0 0.0
    %1359 = vmatprep.subr.mxu0 0.0
    %1360 = vmatpush2.msra.mxu0 0.0
    %1361 = vmatprep.subr.mxu0 0.0
    %1362 = vmatpush2.msra.mxu0 0.0
    %1363 = vmatprep.subr.mxu0 0.0
    %1364 = vmatpush2.msra.mxu0 0.0
    %1365 = vmatprep.mubr.f32.mxu0 0.0
    %1366 = vmatmul.mubr.f32.gmra.mxu0 %v1286
    %v1367 = vpop.f32.mrf.mxu0
    %v1368 = vadd.f32 0.0, %v1367
    %v1369 = vpop.f32.mrf.mxu0
    %v1370 = vadd.f32 0.0, %v1369
    %1371 = vmatprep.mubr.f32.mxu0 0.0
    %1372 = vmatmul.mubr.f32.gmra.mxu0 %v1289
    %v1373 = vpop.f32.mrf.mxu0
    %v1374 = vadd.f32 0.0, %v1373
    %v1375 = vpop.f32.mrf.mxu0
    %v1376 = vadd.f32 0.0, %v1375
    %1377 = vdwg.mxu0
    %1378 = vmatprep.subr.mxu0 0.0
    %1379 = vmatpush1.msra.mxu0 0.0
    %1380 = vmatprep.subr.mxu0 0.0
    %1381 = vmatpush1.msra.mxu0 0.0
    %1382 = vmatprep.subr.mxu0 0.0
    %1383 = vmatpush1.msra.mxu0 0.0
    %1384 = vmatprep.subr.mxu0 0.0
    %1385 = vmatpush1.msra.mxu0 0.0
    %1386 = vmatprep.subr.mxu0 0.0
    %1387 = vmatpush1.msra.mxu0 0.0
    %1388 = vmatprep.subr.mxu0 0.0
    %1389 = vmatpush1.msra.mxu0 0.0
    %1390 = vmatprep.subr.mxu0 0.0
    %1391 = vmatpush1.msra.mxu0 0.0
    %1392 = vmatprep.subr.mxu0 0.0
    %1393 = vmatpush1.msra.mxu0 0.0
    %1394 = vmatprep.subr.mxu0 0.0
    %1395 = vmatpush1.msra.mxu0 0.0
    %1396 = vmatprep.subr.mxu0 0.0
    %1397 = vmatpush1.msra.mxu0 0.0
    %1398 = vmatprep.subr.mxu0 0.0
    %1399 = vmatpush1.msra.mxu0 0.0
    %1400 = vmatprep.subr.mxu0 0.0
    %1401 = vmatpush1.msra.mxu0 0.0
    %1402 = vmatprep.subr.mxu0 0.0
    %1403 = vmatpush1.msra.mxu0 0.0
    %1404 = vmatprep.subr.mxu0 0.0
    %1405 = vmatpush1.msra.mxu0 0.0
    %1406 = vmatprep.subr.mxu0 0.0
    %1407 = vmatpush1.msra.mxu0 %v1299
    %1408 = vmatprep.subr.mxu0 0.0
    %1409 = vmatpush1.msra.mxu0 %v1045
    %1410 = vmatprep.subr.mxu0 0.0
    %1411 = vmatpush2.msra.mxu0 0.0
    %1412 = vmatprep.subr.mxu0 0.0
    %1413 = vmatpush2.msra.mxu0 0.0
    %1414 = vmatprep.subr.mxu0 0.0
    %1415 = vmatpush2.msra.mxu0 0.0
    %1416 = vmatprep.subr.mxu0 0.0
    %1417 = vmatpush2.msra.mxu0 0.0
    %1418 = vmatprep.subr.mxu0 0.0
    %1419 = vmatpush2.msra.mxu0 0.0
    %1420 = vmatprep.subr.mxu0 0.0
    %1421 = vmatpush2.msra.mxu0 0.0
    %1422 = vmatprep.subr.mxu0 0.0
    %1423 = vmatpush2.msra.mxu0 0.0
    %1424 = vmatprep.subr.mxu0 0.0
    %1425 = vmatpush2.msra.mxu0 0.0
    %1426 = vmatprep.subr.mxu0 0.0
    %1427 = vmatpush2.msra.mxu0 0.0
    %1428 = vmatprep.subr.mxu0 0.0
    %1429 = vmatpush2.msra.mxu0 0.0
    %1430 = vmatprep.subr.mxu0 0.0
    %1431 = vmatpush2.msra.mxu0 0.0
    %1432 = vmatprep.subr.mxu0 0.0
    %1433 = vmatpush2.msra.mxu0 0.0
    %1434 = vmatprep.subr.mxu0 0.0
    %1435 = vmatpush2.msra.mxu0 0.0
    %1436 = vmatprep.subr.mxu0 0.0
    %1437 = vmatpush2.msra.mxu0 0.0
    %1438 = vmatprep.subr.mxu0 0.0
    %1439 = vmatpush2.msra.mxu0 0.0
    %1440 = vmatprep.subr.mxu0 0.0
    %1441 = vmatpush2.msra.mxu0 0.0
    %1442 = vmatprep.mubr.f32.mxu0 0.0
    %1443 = vmatmul.mubr.f32.gmra.mxu0 %v1286
    %v1444 = vpop.f32.mrf.mxu0
    %v1445 = vadd.f32 0.0, %v1444
    %v1446 = vpop.f32.mrf.mxu0
    %1447 = vmatprep.mubr.f32.mxu0 0.0
    %1448 = vmatmul.mubr.f32.gmra.mxu0 %v1289
    %v1449 = vpop.f32.mrf.mxu0
    %v1450 = vadd.f32 0.0, %v1449
    %v1451 = vpop.f32.mrf.mxu0
    %1452 = vdwg.mxu0
    %v1454 = vsel %vm1284, %v1266, 0
    %v1457 = vsel %vm1284, %v1271, 0
    %v1460 = vsel %vm1291, %v1040, 0
    %v1463 = vsel %vm1291, %v1041, 0
    %v1466 = vsel %vm1291, %v1042, 0
    %1468 = vmatprep.subr.mxu0 0.0
    %1469 = vmatpush1.msra.mxu0 0.0
    %1470 = vmatprep.subr.mxu0 0.0
    %1471 = vmatpush1.msra.mxu0 0.0
    %1472 = vmatprep.subr.mxu0 0.0
    %1473 = vmatpush1.msra.mxu0 0.0
    %1474 = vmatprep.subr.mxu0 0.0
    %1475 = vmatpush1.msra.mxu0 0.0
    %1476 = vmatprep.subr.mxu0 0.0
    %1477 = vmatpush1.msra.mxu0 0.0
    %1478 = vmatprep.subr.mxu0 0.0
    %1479 = vmatpush1.msra.mxu0 0.0
    %1480 = vmatprep.subr.mxu0 0.0
    %1481 = vmatpush1.msra.mxu0 0.0
    %1482 = vmatprep.subr.mxu0 0.0
    %1483 = vmatpush1.msra.mxu0 0.0
    %1484 = vmatprep.subr.mxu0 0.0
    %1485 = vmatpush1.msra.mxu0 0.0
    %1486 = vmatprep.subr.mxu0 0.0
    %1487 = vmatpush1.msra.mxu0 0.0
    %1488 = vmatprep.subr.mxu0 0.0
    %1489 = vmatpush1.msra.mxu0 0.0
    %1490 = vmatprep.subr.mxu0 0.0
    %1491 = vmatpush1.msra.mxu0 0.0
    %1492 = vmatprep.subr.mxu0 0.0
    %1493 = vmatpush1.msra.mxu0 0.0
    %1494 = vmatprep.subr.mxu0 0.0
    %1495 = vmatpush1.msra.mxu0 0.0
    %1496 = vmatprep.subr.mxu0 %v1463
    %1497 = vmatpush1.msra.mxu0 %v1460
    %1498 = vmatprep.subr.mxu0 %v1038
    %1499 = vmatpush1.msra.mxu0 %v1037
    %1500 = vmatprep.subr.mxu0 0.0
    %1501 = vmatpush2.msra.mxu0 0.0
    %1502 = vmatprep.subr.mxu0 0.0
    %1503 = vmatpush2.msra.mxu0 0.0
    %1504 = vmatprep.subr.mxu0 0.0
    %1505 = vmatpush2.msra.mxu0 0.0
    %1506 = vmatprep.subr.mxu0 0.0
    %1507 = vmatpush2.msra.mxu0 0.0
    %1508 = vmatprep.subr.mxu0 0.0
    %1509 = vmatpush2.msra.mxu0 0.0
    %1510 = vmatprep.subr.mxu0 0.0
    %1511 = vmatpush2.msra.mxu0 0.0
    %1512 = vmatprep.subr.mxu0 0.0
    %1513 = vmatpush2.msra.mxu0 0.0
    %1514 = vmatprep.subr.mxu0 0.0
    %1515 = vmatpush2.msra.mxu0 0.0
    %1516 = vmatprep.subr.mxu0 0.0
    %1517 = vmatpush2.msra.mxu0 0.0
    %1518 = vmatprep.subr.mxu0 0.0
    %1519 = vmatpush2.msra.mxu0 0.0
    %1520 = vmatprep.subr.mxu0 0.0
    %1521 = vmatpush2.msra.mxu0 0.0
    %1522 = vmatprep.subr.mxu0 0.0
    %1523 = vmatpush2.msra.mxu0 0.0
    %1524 = vmatprep.subr.mxu0 0.0
    %1525 = vmatpush2.msra.mxu0 0.0
    %1526 = vmatprep.subr.mxu0 0.0
    %1527 = vmatpush2.msra.mxu0 0.0
    %1528 = vmatprep.subr.mxu0 0.0
    %1529 = vmatpush2.msra.mxu0 0.0
    %1530 = vmatprep.subr.mxu0 0.0
    %1531 = vmatpush2.msra.mxu0 0.0
    %1532 = vmatprep.mubr.f32.mxu0 0.0
    %1533 = vmatmul.mubr.f32.gmra.mxu0 %v1454
    %v1534 = vpop.f32.mrf.mxu0
    %v1535 = vadd.f32 %v1368, %v1534
    %v1536 = vpop.f32.mrf.mxu0
    %v1537 = vadd.f32 %v1370, %v1536
    %1538 = vmatprep.mubr.f32.mxu0 0.0
    %1539 = vmatmul.mubr.f32.gmra.mxu0 %v1457
    %v1540 = vpop.f32.mrf.mxu0
    %v1541 = vadd.f32 %v1374, %v1540
    %v1542 = vpop.f32.mrf.mxu0
    %v1543 = vadd.f32 %v1376, %v1542
    %1544 = vdwg.mxu0
    %1545 = vmatprep.subr.mxu0 0.0
    %1546 = vmatpush1.msra.mxu0 0.0
    %1547 = vmatprep.subr.mxu0 0.0
    %1548 = vmatpush1.msra.mxu0 0.0
    %1549 = vmatprep.subr.mxu0 0.0
    %1550 = vmatpush1.msra.mxu0 0.0
    %1551 = vmatprep.subr.mxu0 0.0
    %1552 = vmatpush1.msra.mxu0 0.0
    %1553 = vmatprep.subr.mxu0 0.0
    %1554 = vmatpush1.msra.mxu0 0.0
    %1555 = vmatprep.subr.mxu0 0.0
    %1556 = vmatpush1.msra.mxu0 0.0
    %1557 = vmatprep.subr.mxu0 0.0
    %1558 = vmatpush1.msra.mxu0 0.0
    %1559 = vmatprep.subr.mxu0 0.0
    %1560 = vmatpush1.msra.mxu0 0.0
    %1561 = vmatprep.subr.mxu0 0.0
    %1562 = vmatpush1.msra.mxu0 0.0
    %1563 = vmatprep.subr.mxu0 0.0
    %1564 = vmatpush1.msra.mxu0 0.0
    %1565 = vmatprep.subr.mxu0 0.0
    %1566 = vmatpush1.msra.mxu0 0.0
    %1567 = vmatprep.subr.mxu0 0.0
    %1568 = vmatpush1.msra.mxu0 0.0
    %1569 = vmatprep.subr.mxu0 0.0
    %1570 = vmatpush1.msra.mxu0 0.0
    %1571 = vmatprep.subr.mxu0 0.0
    %1572 = vmatpush1.msra.mxu0 0.0
    %1573 = vmatprep.subr.mxu0 0.0
    %1574 = vmatpush1.msra.mxu0 %v1466
    %1575 = vmatprep.subr.mxu0 0.0
    %1576 = vmatpush1.msra.mxu0 %v1039
    %1577 = vmatprep.subr.mxu0 0.0
    %1578 = vmatpush2.msra.mxu0 0.0
    %1579 = vmatprep.subr.mxu0 0.0
    %1580 = vmatpush2.msra.mxu0 0.0
    %1581 = vmatprep.subr.mxu0 0.0
    %1582 = vmatpush2.msra.mxu0 0.0
    %1583 = vmatprep.subr.mxu0 0.0
    %1584 = vmatpush2.msra.mxu0 0.0
    %1585 = vmatprep.subr.mxu0 0.0
    %1586 = vmatpush2.msra.mxu0 0.0
    %1587 = vmatprep.subr.mxu0 0.0
    %1588 = vmatpush2.msra.mxu0 0.0
    %1589 = vmatprep.subr.mxu0 0.0
    %1590 = vmatpush2.msra.mxu0 0.0
    %1591 = vmatprep.subr.mxu0 0.0
    %1592 = vmatpush2.msra.mxu0 0.0
    %1593 = vmatprep.subr.mxu0 0.0
    %1594 = vmatpush2.msra.mxu0 0.0
    %1595 = vmatprep.subr.mxu0 0.0
    %1596 = vmatpush2.msra.mxu0 0.0
    %1597 = vmatprep.subr.mxu0 0.0
    %1598 = vmatpush2.msra.mxu0 0.0
    %1599 = vmatprep.subr.mxu0 0.0
    %1600 = vmatpush2.msra.mxu0 0.0
    %1601 = vmatprep.subr.mxu0 0.0
    %1602 = vmatpush2.msra.mxu0 0.0
    %1603 = vmatprep.subr.mxu0 0.0
    %1604 = vmatpush2.msra.mxu0 0.0
    %1605 = vmatprep.subr.mxu0 0.0
    %1606 = vmatpush2.msra.mxu0 0.0
    %1607 = vmatprep.subr.mxu0 0.0
    %1608 = vmatpush2.msra.mxu0 0.0
    %1609 = vmatprep.mubr.f32.mxu0 0.0
    %1610 = vmatmul.mubr.f32.gmra.mxu0 %v1454
    %v1611 = vpop.f32.mrf.mxu0
    %v1612 = vadd.f32 %v1445, %v1611
    %v1613 = vpop.f32.mrf.mxu0
    %1614 = vmatprep.mubr.f32.mxu0 0.0
    %1615 = vmatmul.mubr.f32.gmra.mxu0 %v1457
    %v1616 = vpop.f32.mrf.mxu0
    %v1617 = vadd.f32 %v1450, %v1616
    %v1618 = vpop.f32.mrf.mxu0
    %1619 = vdwg.mxu0
    %v1621 = vlaneseq
    %v1622 = vshrl.u32 %v1621, 7
    %v1623 = vsub.s32 0, %v1622
    %v1624 = vrot.slane %v1036, %v1623
    %v1625 = vlaneseq
    %v1626 = vshrl.u32 %v1625, 7
    %v1627 = vsub.s32 1, %v1626
    %v1628 = vrot.slane %v1036, %v1627
    %v1629 = vlaneseq
    %v1630 = vshrl.u32 %v1629, 7
    %v1631 = vsub.s32 2, %v1630
    %v1632 = vrot.slane %v1036, %v1631
    %v1636 = vadd.f32 %v1535, %v1624
    %v1637 = vadd.f32 %v1537, %v1628
    %v1638 = vadd.f32 %v1612, %v1632
    %v1639 = vadd.f32 %v1541, %v1624
    %v1640 = vadd.f32 %v1543, %v1628
    %v1641 = vadd.f32 %v1617, %v1632
    %vm1642 = vcmp.eq.s32.totalorder %v1282, 0
    %vm1643 = vcmp.eq.s32.totalorder %v1283, 0
    %v1644 = vsel %vm1642, 1, 0
    %v1645 = vsel %vm1643, 1, 0
    %vm1646 = vcmp.eq.s32.totalorder %v1644, 1
    %vm1647 = vcmp.eq.s32.totalorder %v1645, 1
    %v1648 = vsel %vm1646, %v1636, 0.0
    %v1649 = vsel %vm1647, %v1639, 0.0
    %v1650 = vadd.f32 %v1648, 0.0
    %v1651 = vadd.f32 %v1649, 0.0
    %vm1652 = vcmp.eq.s32.totalorder %v1282, 1
    %vm1653 = vcmp.eq.s32.totalorder %v1283, 1
    %v1654 = vsel %vm1652, 1, 0
    %v1655 = vsel %vm1653, 1, 0
    %vm1656 = vcmp.eq.s32.totalorder %v1654, 1
    %vm1657 = vcmp.eq.s32.totalorder %v1655, 1
    %v1658 = vsel %vm1656, %v1636, 0.0
    %v1659 = vsel %vm1657, %v1639, 0.0
    %1662 = vrot.lane.b32.xlu0 %v1658, 96
    %v1663 = vpop.permute.xlu0 %1662
    %1664 = vrot.lane.b32.xlu0 %v1659, 96
    %v1665 = vpop.permute.xlu0 %1664
    %v1668 = vadd.f32 %v1650, %v1663
    %v1669 = vadd.f32 %v1651, %v1665
    %vm1670 = vcmp.eq.s32.totalorder %v1282, 2
    %vm1671 = vcmp.eq.s32.totalorder %v1283, 2
    %v1672 = vsel %vm1670, 1, 0
    %v1673 = vsel %vm1671, 1, 0
    %vm1674 = vcmp.eq.s32.totalorder %v1672, 1
    %vm1675 = vcmp.eq.s32.totalorder %v1673, 1
    %v1676 = vsel %vm1674, %v1636, 0.0
    %v1677 = vsel %vm1675, %v1639, 0.0
    %1680 = vrot.lane.b32.xlu0 %v1676, 64
    %v1681 = vpop.permute.xlu0 %1680
    %1682 = vrot.lane.b32.xlu0 %v1677, 64
    %v1683 = vpop.permute.xlu0 %1682
    %v1686 = vadd.f32 %v1668, %v1681
    %v1687 = vadd.f32 %v1669, %v1683
    %vm1688 = vcmp.eq.s32.totalorder %v1282, 3
    %vm1689 = vcmp.eq.s32.totalorder %v1283, 3
    %v1690 = vsel %vm1688, 1, 0
    %v1691 = vsel %vm1689, 1, 0
    %vm1692 = vcmp.eq.s32.totalorder %v1690, 1
    %vm1693 = vcmp.eq.s32.totalorder %v1691, 1
    %v1694 = vsel %vm1692, %v1636, 0.0
    %v1695 = vsel %vm1693, %v1639, 0.0
    %1698 = vrot.lane.b32.xlu0 %v1694, 32
    %v1699 = vpop.permute.xlu0 %1698
    %1700 = vrot.lane.b32.xlu0 %v1695, 32
    %v1701 = vpop.permute.xlu0 %1700
    %v1704 = vadd.f32 %v1686, %v1699
    %v1705 = vadd.f32 %v1687, %v1701
    %vm1706 = vcmp.eq.s32.totalorder %v1282, 4
    %vm1707 = vcmp.eq.s32.totalorder %v1283, 4
    %v1708 = vsel %vm1706, 1, 0
    %v1709 = vsel %vm1707, 1, 0
    %vm1710 = vcmp.eq.s32.totalorder %v1708, 1
    %vm1711 = vcmp.eq.s32.totalorder %v1709, 1
    %v1712 = vsel %vm1710, %v1637, 0.0
    %v1713 = vsel %vm1711, %v1640, 0.0
    %v1714 = vadd.f32 %v1704, %v1712
    %v1715 = vadd.f32 %v1705, %v1713
    %vm1716 = vcmp.eq.s32.totalorder %v1282, 5
    %vm1717 = vcmp.eq.s32.totalorder %v1283, 5
    %v1718 = vsel %vm1716, 1, 0
    %v1719 = vsel %vm1717, 1, 0
    %vm1720 = vcmp.eq.s32.totalorder %v1718, 1
    %vm1721 = vcmp.eq.s32.totalorder %v1719, 1
    %v1722 = vsel %vm1720, %v1637, 0.0
    %v1723 = vsel %vm1721, %v1640, 0.0
    %1726 = vrot.lane.b32.xlu0 %v1722, 96
    %v1727 = vpop.permute.xlu0 %1726
    %1728 = vrot.lane.b32.xlu0 %v1723, 96
    %v1729 = vpop.permute.xlu0 %1728
    %v1732 = vadd.f32 %v1714, %v1727
    %v1733 = vadd.f32 %v1715, %v1729
    %vm1734 = vcmp.eq.s32.totalorder %v1282, 6
    %vm1735 = vcmp.eq.s32.totalorder %v1283, 6
    %v1736 = vsel %vm1734, 1, 0
    %v1737 = vsel %vm1735, 1, 0
    %vm1738 = vcmp.eq.s32.totalorder %v1736, 1
    %vm1739 = vcmp.eq.s32.totalorder %v1737, 1
    %v1740 = vsel %vm1738, %v1637, 0.0
    %v1741 = vsel %vm1739, %v1640, 0.0
    %1744 = vrot.lane.b32.xlu0 %v1740, 64
    %v1745 = vpop.permute.xlu0 %1744
    %1746 = vrot.lane.b32.xlu0 %v1741, 64
    %v1747 = vpop.permute.xlu0 %1746
    %v1750 = vadd.f32 %v1732, %v1745
    %v1751 = vadd.f32 %v1733, %v1747
    %vm1752 = vcmp.eq.s32.totalorder %v1282, 7
    %vm1753 = vcmp.eq.s32.totalorder %v1283, 7
    %v1754 = vsel %vm1752, 1, 0
    %v1755 = vsel %vm1753, 1, 0
    %vm1756 = vcmp.eq.s32.totalorder %v1754, 1
    %vm1757 = vcmp.eq.s32.totalorder %v1755, 1
    %v1758 = vsel %vm1756, %v1637, 0.0
    %v1759 = vsel %vm1757, %v1640, 0.0
    %1762 = vrot.lane.b32.xlu0 %v1758, 32
    %v1763 = vpop.permute.xlu0 %1762
    %1764 = vrot.lane.b32.xlu0 %v1759, 32
    %v1765 = vpop.permute.xlu0 %1764
    %v1768 = vadd.f32 %v1750, %v1763
    %v1769 = vadd.f32 %v1751, %v1765
    %vm1770 = vcmp.eq.s32.totalorder %v1282, 8
    %vm1771 = vcmp.eq.s32.totalorder %v1283, 8
    %v1772 = vsel %vm1770, 1, 0
    %v1773 = vsel %vm1771, 1, 0
    %vm1774 = vcmp.eq.s32.totalorder %v1772, 1
    %vm1775 = vcmp.eq.s32.totalorder %v1773, 1
    %v1776 = vsel %vm1774, %v1638, 0.0
    %v1777 = vsel %vm1775, %v1641, 0.0
    %v1778 = vadd.f32 %v1768, %v1776
    %v1779 = vadd.f32 %v1769, %v1777
    %vm1780 = vcmp.eq.s32.totalorder %v1282, 9
    %vm1781 = vcmp.eq.s32.totalorder %v1283, 9
    %v1782 = vsel %vm1780, 1, 0
    %v1783 = vsel %vm1781, 1, 0
    %vm1784 = vcmp.eq.s32.totalorder %v1782, 1
    %vm1785 = vcmp.eq.s32.totalorder %v1783, 1
    %v1786 = vsel %vm1784, %v1638, 0.0
    %v1787 = vsel %vm1785, %v1641, 0.0
    %1790 = vrot.lane.b32.xlu0 %v1786, 96
    %v1791 = vpop.permute.xlu0 %1790
    %1792 = vrot.lane.b32.xlu0 %v1787, 96
    %v1793 = vpop.permute.xlu0 %1792
    %v1796 = vadd.f32 %v1778, %v1791
    %v1797 = vadd.f32 %v1779, %v1793
    %vm1798 = vcmp.eq.s32.totalorder %v1282, 10
    %vm1799 = vcmp.eq.s32.totalorder %v1283, 10
    %v1800 = vsel %vm1798, 1, 0
    %v1801 = vsel %vm1799, 1, 0
    %vm1802 = vcmp.eq.s32.totalorder %v1800, 1
    %vm1803 = vcmp.eq.s32.totalorder %v1801, 1
    %v1804 = vsel %vm1802, %v1638, 0.0
    %v1805 = vsel %vm1803, %v1641, 0.0
    %1808 = vrot.lane.b32.xlu0 %v1804, 64
    %v1809 = vpop.permute.xlu0 %1808
    %1810 = vrot.lane.b32.xlu0 %v1805, 64
    %v1811 = vpop.permute.xlu0 %1810
    %v1814 = vadd.f32 %v1796, %v1809
    %v1815 = vadd.f32 %v1797, %v1811
    %v1817 = vsel %vm1192, %v960, 0
    %v1820 = vsel %vm1192, %v961, 0
    %1822 = vmatprep.subr.mxu0 0.0
    %1823 = vmatpush1.msra.mxu0 0.0
    %1824 = vmatprep.subr.mxu0 0.0
    %1825 = vmatpush1.msra.mxu0 0.0
    %1826 = vmatprep.subr.mxu0 0.0
    %1827 = vmatpush1.msra.mxu0 0.0
    %1828 = vmatprep.subr.mxu0 0.0
    %1829 = vmatpush1.msra.mxu0 0.0
    %1830 = vmatprep.subr.mxu0 0.0
    %1831 = vmatpush1.msra.mxu0 0.0
    %1832 = vmatprep.subr.mxu0 0.0
    %1833 = vmatpush1.msra.mxu0 0.0
    %1834 = vmatprep.subr.mxu0 0.0
    %1835 = vmatpush1.msra.mxu0 0.0
    %1836 = vmatprep.subr.mxu0 0.0
    %1837 = vmatpush1.msra.mxu0 0.0
    %1838 = vmatprep.subr.mxu0 0.0
    %1839 = vmatpush1.msra.mxu0 0.0
    %1840 = vmatprep.subr.mxu0 0.0
    %1841 = vmatpush1.msra.mxu0 0.0
    %1842 = vmatprep.subr.mxu0 0.0
    %1843 = vmatpush1.msra.mxu0 0.0
    %1844 = vmatprep.subr.mxu0 0.0
    %1845 = vmatpush1.msra.mxu0 0.0
    %1846 = vmatprep.subr.mxu0 0.0
    %1847 = vmatpush1.msra.mxu0 0.0
    %1848 = vmatprep.subr.mxu0 0.0
    %1849 = vmatpush1.msra.mxu0 0.0
    %1850 = vmatprep.subr.mxu0 0.0
    %1851 = vmatpush1.msra.mxu0 %v1188
    %1852 = vmatprep.subr.mxu0 0.0
    %1853 = vmatpush1.msra.mxu0 %v1187
    %1854 = vmatprep.subr.mxu0 0.0
    %1855 = vmatpush2.msra.mxu0 0.0
    %1856 = vmatprep.subr.mxu0 0.0
    %1857 = vmatpush2.msra.mxu0 0.0
    %1858 = vmatprep.subr.mxu0 0.0
    %1859 = vmatpush2.msra.mxu0 0.0
    %1860 = vmatprep.subr.mxu0 0.0
    %1861 = vmatpush2.msra.mxu0 0.0
    %1862 = vmatprep.subr.mxu0 0.0
    %1863 = vmatpush2.msra.mxu0 0.0
    %1864 = vmatprep.subr.mxu0 0.0
    %1865 = vmatpush2.msra.mxu0 0.0
    %1866 = vmatprep.subr.mxu0 0.0
    %1867 = vmatpush2.msra.mxu0 0.0
    %1868 = vmatprep.subr.mxu0 0.0
    %1869 = vmatpush2.msra.mxu0 0.0
    %1870 = vmatprep.subr.mxu0 0.0
    %1871 = vmatpush2.msra.mxu0 0.0
    %1872 = vmatprep.subr.mxu0 0.0
    %1873 = vmatpush2.msra.mxu0 0.0
    %1874 = vmatprep.subr.mxu0 0.0
    %1875 = vmatpush2.msra.mxu0 0.0
    %1876 = vmatprep.subr.mxu0 0.0
    %1877 = vmatpush2.msra.mxu0 0.0
    %1878 = vmatprep.subr.mxu0 0.0
    %1879 = vmatpush2.msra.mxu0 0.0
    %1880 = vmatprep.subr.mxu0 0.0
    %1881 = vmatpush2.msra.mxu0 0.0
    %1882 = vmatprep.subr.mxu0 0.0
    %1883 = vmatpush2.msra.mxu0 0.0
    %1884 = vmatprep.subr.mxu0 0.0
    %1885 = vmatpush2.msra.mxu0 0.0
    %1886 = vmatprep.mubr.f32.mxu0 0.0
    %1887 = vmatmul.mubr.f32.gmra.mxu0 %v1817
    %v1888 = vpop.f32.mrf.mxu0
    %v1889 = vadd.f32 0.0, %v1888
    %v1890 = vpop.f32.mrf.mxu0
    %1891 = vmatprep.mubr.f32.mxu0 0.0
    %1892 = vmatmul.mubr.f32.gmra.mxu0 %v1820
    %v1893 = vpop.f32.mrf.mxu0
    %v1894 = vadd.f32 0.0, %v1893
    %v1895 = vpop.f32.mrf.mxu0
    %1896 = vdwg.mxu0
    %v1897 = vsel %vm1192, %v960, 0.0
    %1898 = vadd.xlane.f32.xlu0 %v1897
    %v1899 = vpop.xlane.xlu0 %1898
    %v1900 = vsel %vm1192, %v961, 0.0
    %1901 = vadd.xlane.f32.xlu0 %v1900
    %v1902 = vpop.xlane.xlu0 %1901
    %v1903 = vmin.f32 %v1899, 10.0
    %v1904 = vmin.f32 %v1902, 10.0
    %v1905 = vcvt.f32.s32.to.zero.pseudo %v1903
    %v1906 = vcvt.f32.s32.to.zero.pseudo %v1904
    %v1908 = vsel %vm1291, %v1020, 0
    %v1911 = vsel %vm1291, %v1021, 0
    %v1914 = vsel %vm1291, %v1022, 0
    %1916 = vmatprep.subr.mxu0 0.0
    %1917 = vmatpush1.msra.mxu0 0.0
    %1918 = vmatprep.subr.mxu0 0.0
    %1919 = vmatpush1.msra.mxu0 0.0
    %1920 = vmatprep.subr.mxu0 0.0
    %1921 = vmatpush1.msra.mxu0 0.0
    %1922 = vmatprep.subr.mxu0 0.0
    %1923 = vmatpush1.msra.mxu0 0.0
    %1924 = vmatprep.subr.mxu0 0.0
    %1925 = vmatpush1.msra.mxu0 0.0
    %1926 = vmatprep.subr.mxu0 0.0
    %1927 = vmatpush1.msra.mxu0 0.0
    %1928 = vmatprep.subr.mxu0 0.0
    %1929 = vmatpush1.msra.mxu0 0.0
    %1930 = vmatprep.subr.mxu0 0.0
    %1931 = vmatpush1.msra.mxu0 0.0
    %1932 = vmatprep.subr.mxu0 0.0
    %1933 = vmatpush1.msra.mxu0 0.0
    %1934 = vmatprep.subr.mxu0 0.0
    %1935 = vmatpush1.msra.mxu0 0.0
    %1936 = vmatprep.subr.mxu0 0.0
    %1937 = vmatpush1.msra.mxu0 0.0
    %1938 = vmatprep.subr.mxu0 0.0
    %1939 = vmatpush1.msra.mxu0 0.0
    %1940 = vmatprep.subr.mxu0 0.0
    %1941 = vmatpush1.msra.mxu0 0.0
    %1942 = vmatprep.subr.mxu0 0.0
    %1943 = vmatpush1.msra.mxu0 0.0
    %1944 = vmatprep.subr.mxu0 %v1911
    %1945 = vmatpush1.msra.mxu0 %v1908
    %1946 = vmatprep.subr.mxu0 %v1018
    %1947 = vmatpush1.msra.mxu0 %v1017
    %1948 = vmatprep.subr.mxu0 0.0
    %1949 = vmatpush2.msra.mxu0 0.0
    %1950 = vmatprep.subr.mxu0 0.0
    %1951 = vmatpush2.msra.mxu0 0.0
    %1952 = vmatprep.subr.mxu0 0.0
    %1953 = vmatpush2.msra.mxu0 0.0
    %1954 = vmatprep.subr.mxu0 0.0
    %1955 = vmatpush2.msra.mxu0 0.0
    %1956 = vmatprep.subr.mxu0 0.0
    %1957 = vmatpush2.msra.mxu0 0.0
    %1958 = vmatprep.subr.mxu0 0.0
    %1959 = vmatpush2.msra.mxu0 0.0
    %1960 = vmatprep.subr.mxu0 0.0
    %1961 = vmatpush2.msra.mxu0 0.0
    %1962 = vmatprep.subr.mxu0 0.0
    %1963 = vmatpush2.msra.mxu0 0.0
    %1964 = vmatprep.subr.mxu0 0.0
    %1965 = vmatpush2.msra.mxu0 0.0
    %1966 = vmatprep.subr.mxu0 0.0
    %1967 = vmatpush2.msra.mxu0 0.0
    %1968 = vmatprep.subr.mxu0 0.0
    %1969 = vmatpush2.msra.mxu0 0.0
    %1970 = vmatprep.subr.mxu0 0.0
    %1971 = vmatpush2.msra.mxu0 0.0
    %1972 = vmatprep.subr.mxu0 0.0
    %1973 = vmatpush2.msra.mxu0 0.0
    %1974 = vmatprep.subr.mxu0 0.0
    %1975 = vmatpush2.msra.mxu0 0.0
    %1976 = vmatprep.subr.mxu0 0.0
    %1977 = vmatpush2.msra.mxu0 0.0
    %1978 = vmatprep.subr.mxu0 0.0
    %1979 = vmatpush2.msra.mxu0 0.0
    %1980 = vmatprep.mubr.f32.mxu0 0.0
    %1981 = vmatmul.mubr.f32.gmra.mxu0 %v1286
    %v1982 = vpop.f32.mrf.mxu0
    %v1983 = vadd.f32 0.0, %v1982
    %v1984 = vpop.f32.mrf.mxu0
    %v1985 = vadd.f32 0.0, %v1984
    %1986 = vmatprep.mubr.f32.mxu0 0.0
    %1987 = vmatmul.mubr.f32.gmra.mxu0 %v1289
    %v1988 = vpop.f32.mrf.mxu0
    %v1989 = vadd.f32 0.0, %v1988
    %v1990 = vpop.f32.mrf.mxu0
    %v1991 = vadd.f32 0.0, %v1990
    %1992 = vdwg.mxu0
    %1993 = vmatprep.subr.mxu0 0.0
    %1994 = vmatpush1.msra.mxu0 0.0
    %1995 = vmatprep.subr.mxu0 0.0
    %1996 = vmatpush1.msra.mxu0 0.0
    %1997 = vmatprep.subr.mxu0 0.0
    %1998 = vmatpush1.msra.mxu0 0.0
    %1999 = vmatprep.subr.mxu0 0.0
    %2000 = vmatpush1.msra.mxu0 0.0
    %2001 = vmatprep.subr.mxu0 0.0
    %2002 = vmatpush1.msra.mxu0 0.0
    %2003 = vmatprep.subr.mxu0 0.0
    %2004 = vmatpush1.msra.mxu0 0.0
    %2005 = vmatprep.subr.mxu0 0.0
    %2006 = vmatpush1.msra.mxu0 0.0
    %2007 = vmatprep.subr.mxu0 0.0
    %2008 = vmatpush1.msra.mxu0 0.0
    %2009 = vmatprep.subr.mxu0 0.0
    %2010 = vmatpush1.msra.mxu0 0.0
    %2011 = vmatprep.subr.mxu0 0.0
    %2012 = vmatpush1.msra.mxu0 0.0
    %2013 = vmatprep.subr.mxu0 0.0
    %2014 = vmatpush1.msra.mxu0 0.0
    %2015 = vmatprep.subr.mxu0 0.0
    %2016 = vmatpush1.msra.mxu0 0.0
    %2017 = vmatprep.subr.mxu0 0.0
    %2018 = vmatpush1.msra.mxu0 0.0
    %2019 = vmatprep.subr.mxu0 0.0
    %2020 = vmatpush1.msra.mxu0 0.0
    %2021 = vmatprep.subr.mxu0 0.0
    %2022 = vmatpush1.msra.mxu0 %v1914
    %2023 = vmatprep.subr.mxu0 0.0
    %2024 = vmatpush1.msra.mxu0 %v1019
    %2025 = vmatprep.subr.mxu0 0.0
    %2026 = vmatpush2.msra.mxu0 0.0
    %2027 = vmatprep.subr.mxu0 0.0
    %2028 = vmatpush2.msra.mxu0 0.0
    %2029 = vmatprep.subr.mxu0 0.0
    %2030 = vmatpush2.msra.mxu0 0.0
    %2031 = vmatprep.subr.mxu0 0.0
    %2032 = vmatpush2.msra.mxu0 0.0
    %2033 = vmatprep.subr.mxu0 0.0
    %2034 = vmatpush2.msra.mxu0 0.0
    %2035 = vmatprep.subr.mxu0 0.0
    %2036 = vmatpush2.msra.mxu0 0.0
    %2037 = vmatprep.subr.mxu0 0.0
    %2038 = vmatpush2.msra.mxu0 0.0
    %2039 = vmatprep.subr.mxu0 0.0
    %2040 = vmatpush2.msra.mxu0 0.0
    %2041 = vmatprep.subr.mxu0 0.0
    %2042 = vmatpush2.msra.mxu0 0.0
    %2043 = vmatprep.subr.mxu0 0.0
    %2044 = vmatpush2.msra.mxu0 0.0
    %2045 = vmatprep.subr.mxu0 0.0
    %2046 = vmatpush2.msra.mxu0 0.0
    %2047 = vmatprep.subr.mxu0 0.0
    %2048 = vmatpush2.msra.mxu0 0.0
    %2049 = vmatprep.subr.mxu0 0.0
    %2050 = vmatpush2.msra.mxu0 0.0
    %2051 = vmatprep.subr.mxu0 0.0
    %2052 = vmatpush2.msra.mxu0 0.0
    %2053 = vmatprep.subr.mxu0 0.0
    %2054 = vmatpush2.msra.mxu0 0.0
    %2055 = vmatprep.subr.mxu0 0.0
    %2056 = vmatpush2.msra.mxu0 0.0
    %2057 = vmatprep.mubr.f32.mxu0 0.0
    %2058 = vmatmul.mubr.f32.gmra.mxu0 %v1286
    %v2059 = vpop.f32.mrf.mxu0
    %v2060 = vadd.f32 0.0, %v2059
    %v2061 = vpop.f32.mrf.mxu0
    %2062 = vmatprep.mubr.f32.mxu0 0.0
    %2063 = vmatmul.mubr.f32.gmra.mxu0 %v1289
    %v2064 = vpop.f32.mrf.mxu0
    %v2065 = vadd.f32 0.0, %v2064
    %v2066 = vpop.f32.mrf.mxu0
    %2067 = vdwg.mxu0
    %v2069 = vsel %vm1284, %v1889, 0
    %v2072 = vsel %vm1284, %v1894, 0
    %v2075 = vsel %vm1291, %v1014, 0
    %v2078 = vsel %vm1291, %v1015, 0
    %v2081 = vsel %vm1291, %v1016, 0
    %2083 = vmatprep.subr.mxu0 0.0
    %2084 = vmatpush1.msra.mxu0 0.0
    %2085 = vmatprep.subr.mxu0 0.0
    %2086 = vmatpush1.msra.mxu0 0.0
    %2087 = vmatprep.subr.mxu0 0.0
    %2088 = vmatpush1.msra.mxu0 0.0
    %2089 = vmatprep.subr.mxu0 0.0
    %2090 = vmatpush1.msra.mxu0 0.0
    %2091 = vmatprep.subr.mxu0 0.0
    %2092 = vmatpush1.msra.mxu0 0.0
    %2093 = vmatprep.subr.mxu0 0.0
    %2094 = vmatpush1.msra.mxu0 0.0
    %2095 = vmatprep.subr.mxu0 0.0
    %2096 = vmatpush1.msra.mxu0 0.0
    %2097 = vmatprep.subr.mxu0 0.0
    %2098 = vmatpush1.msra.mxu0 0.0
    %2099 = vmatprep.subr.mxu0 0.0
    %2100 = vmatpush1.msra.mxu0 0.0
    %2101 = vmatprep.subr.mxu0 0.0
    %2102 = vmatpush1.msra.mxu0 0.0
    %2103 = vmatprep.subr.mxu0 0.0
    %2104 = vmatpush1.msra.mxu0 0.0
    %2105 = vmatprep.subr.mxu0 0.0
    %2106 = vmatpush1.msra.mxu0 0.0
    %2107 = vmatprep.subr.mxu0 0.0
    %2108 = vmatpush1.msra.mxu0 0.0
    %2109 = vmatprep.subr.mxu0 0.0
    %2110 = vmatpush1.msra.mxu0 0.0
    %2111 = vmatprep.subr.mxu0 %v2078
    %2112 = vmatpush1.msra.mxu0 %v2075
    %2113 = vmatprep.subr.mxu0 %v1012
    %2114 = vmatpush1.msra.mxu0 %v1011
    %2115 = vmatprep.subr.mxu0 0.0
    %2116 = vmatpush2.msra.mxu0 0.0
    %2117 = vmatprep.subr.mxu0 0.0
    %2118 = vmatpush2.msra.mxu0 0.0
    %2119 = vmatprep.subr.mxu0 0.0
    %2120 = vmatpush2.msra.mxu0 0.0
    %2121 = vmatprep.subr.mxu0 0.0
    %2122 = vmatpush2.msra.mxu0 0.0
    %2123 = vmatprep.subr.mxu0 0.0
    %2124 = vmatpush2.msra.mxu0 0.0
    %2125 = vmatprep.subr.mxu0 0.0
    %2126 = vmatpush2.msra.mxu0 0.0
    %2127 = vmatprep.subr.mxu0 0.0
    %2128 = vmatpush2.msra.mxu0 0.0
    %2129 = vmatprep.subr.mxu0 0.0
    %2130 = vmatpush2.msra.mxu0 0.0
    %2131 = vmatprep.subr.mxu0 0.0
    %2132 = vmatpush2.msra.mxu0 0.0
    %2133 = vmatprep.subr.mxu0 0.0
    %2134 = vmatpush2.msra.mxu0 0.0
    %2135 = vmatprep.subr.mxu0 0.0
    %2136 = vmatpush2.msra.mxu0 0.0
    %2137 = vmatprep.subr.mxu0 0.0
    %2138 = vmatpush2.msra.mxu0 0.0
    %2139 = vmatprep.subr.mxu0 0.0
    %2140 = vmatpush2.msra.mxu0 0.0
    %2141 = vmatprep.subr.mxu0 0.0
    %2142 = vmatpush2.msra.mxu0 0.0
    %2143 = vmatprep.subr.mxu0 0.0
    %2144 = vmatpush2.msra.mxu0 0.0
    %2145 = vmatprep.subr.mxu0 0.0
    %2146 = vmatpush2.msra.mxu0 0.0
    %2147 = vmatprep.mubr.f32.mxu0 0.0
    %2148 = vmatmul.mubr.f32.gmra.mxu0 %v2069
    %v2149 = vpop.f32.mrf.mxu0
    %v2150 = vadd.f32 %v1983, %v2149
    %v2151 = vpop.f32.mrf.mxu0
    %v2152 = vadd.f32 %v1985, %v2151
    %2153 = vmatprep.mubr.f32.mxu0 0.0
    %2154 = vmatmul.mubr.f32.gmra.mxu0 %v2072
    %v2155 = vpop.f32.mrf.mxu0
    %v2156 = vadd.f32 %v1989, %v2155
    %v2157 = vpop.f32.mrf.mxu0
    %v2158 = vadd.f32 %v1991, %v2157
    %2159 = vdwg.mxu0
    %2160 = vmatprep.subr.mxu0 0.0
    %2161 = vmatpush1.msra.mxu0 0.0
    %2162 = vmatprep.subr.mxu0 0.0
    %2163 = vmatpush1.msra.mxu0 0.0
    %2164 = vmatprep.subr.mxu0 0.0
    %2165 = vmatpush1.msra.mxu0 0.0
    %2166 = vmatprep.subr.mxu0 0.0
    %2167 = vmatpush1.msra.mxu0 0.0
    %2168 = vmatprep.subr.mxu0 0.0
    %2169 = vmatpush1.msra.mxu0 0.0
    %2170 = vmatprep.subr.mxu0 0.0
    %2171 = vmatpush1.msra.mxu0 0.0
    %2172 = vmatprep.subr.mxu0 0.0
    %2173 = vmatpush1.msra.mxu0 0.0
    %2174 = vmatprep.subr.mxu0 0.0
    %2175 = vmatpush1.msra.mxu0 0.0
    %2176 = vmatprep.subr.mxu0 0.0
    %2177 = vmatpush1.msra.mxu0 0.0
    %2178 = vmatprep.subr.mxu0 0.0
    %2179 = vmatpush1.msra.mxu0 0.0
    %2180 = vmatprep.subr.mxu0 0.0
    %2181 = vmatpush1.msra.mxu0 0.0
    %2182 = vmatprep.subr.mxu0 0.0
    %2183 = vmatpush1.msra.mxu0 0.0
    %2184 = vmatprep.subr.mxu0 0.0
    %2185 = vmatpush1.msra.mxu0 0.0
    %2186 = vmatprep.subr.mxu0 0.0
    %2187 = vmatpush1.msra.mxu0 0.0
    %2188 = vmatprep.subr.mxu0 0.0
    %2189 = vmatpush1.msra.mxu0 %v2081
    %2190 = vmatprep.subr.mxu0 0.0
    %2191 = vmatpush1.msra.mxu0 %v1013
    %2192 = vmatprep.subr.mxu0 0.0
    %2193 = vmatpush2.msra.mxu0 0.0
    %2194 = vmatprep.subr.mxu0 0.0
    %2195 = vmatpush2.msra.mxu0 0.0
    %2196 = vmatprep.subr.mxu0 0.0
    %2197 = vmatpush2.msra.mxu0 0.0
    %2198 = vmatprep.subr.mxu0 0.0
    %2199 = vmatpush2.msra.mxu0 0.0
    %2200 = vmatprep.subr.mxu0 0.0
    %2201 = vmatpush2.msra.mxu0 0.0
    %2202 = vmatprep.subr.mxu0 0.0
    %2203 = vmatpush2.msra.mxu0 0.0
    %2204 = vmatprep.subr.mxu0 0.0
    %2205 = vmatpush2.msra.mxu0 0.0
    %2206 = vmatprep.subr.mxu0 0.0
    %2207 = vmatpush2.msra.mxu0 0.0
    %2208 = vmatprep.subr.mxu0 0.0
    %2209 = vmatpush2.msra.mxu0 0.0
    %2210 = vmatprep.subr.mxu0 0.0
    %2211 = vmatpush2.msra.mxu0 0.0
    %2212 = vmatprep.subr.mxu0 0.0
    %2213 = vmatpush2.msra.mxu0 0.0
    %2214 = vmatprep.subr.mxu0 0.0
    %2215 = vmatpush2.msra.mxu0 0.0
    %2216 = vmatprep.subr.mxu0 0.0
    %2217 = vmatpush2.msra.mxu0 0.0
    %2218 = vmatprep.subr.mxu0 0.0
    %2219 = vmatpush2.msra.mxu0 0.0
    %2220 = vmatprep.subr.mxu0 0.0
    %2221 = vmatpush2.msra.mxu0 0.0
    %2222 = vmatprep.subr.mxu0 0.0
    %2223 = vmatpush2.msra.mxu0 0.0
    %2224 = vmatprep.mubr.f32.mxu0 0.0
    %2225 = vmatmul.mubr.f32.gmra.mxu0 %v2069
    %v2226 = vpop.f32.mrf.mxu0
    %v2227 = vadd.f32 %v2060, %v2226
    %v2228 = vpop.f32.mrf.mxu0
    %2229 = vmatprep.mubr.f32.mxu0 0.0
    %2230 = vmatmul.mubr.f32.gmra.mxu0 %v2072
    %v2231 = vpop.f32.mrf.mxu0
    %v2232 = vadd.f32 %v2065, %v2231
    %v2233 = vpop.f32.mrf.mxu0
    %2234 = vdwg.mxu0
    %v2236 = vlaneseq
    %v2237 = vshrl.u32 %v2236, 7
    %v2238 = vsub.s32 0, %v2237
    %v2239 = vrot.slane %v1010, %v2238
    %v2240 = vlaneseq
    %v2241 = vshrl.u32 %v2240, 7
    %v2242 = vsub.s32 1, %v2241
    %v2243 = vrot.slane %v1010, %v2242
    %v2244 = vlaneseq
    %v2245 = vshrl.u32 %v2244, 7
    %v2246 = vsub.s32 2, %v2245
    %v2247 = vrot.slane %v1010, %v2246
    %v2251 = vadd.f32 %v2150, %v2239
    %v2252 = vadd.f32 %v2152, %v2243
    %v2253 = vadd.f32 %v2227, %v2247
    %v2254 = vadd.f32 %v2156, %v2239
    %v2255 = vadd.f32 %v2158, %v2243
    %v2256 = vadd.f32 %v2232, %v2247
    %vm2257 = vcmp.eq.s32.totalorder %v1905, 0
    %vm2258 = vcmp.eq.s32.totalorder %v1906, 0
    %v2259 = vsel %vm2257, 1, 0
    %v2260 = vsel %vm2258, 1, 0
    %vm2261 = vcmp.eq.s32.totalorder %v2259, 1
    %vm2262 = vcmp.eq.s32.totalorder %v2260, 1
    %v2263 = vsel %vm2261, %v2251, 0.0
    %v2264 = vsel %vm2262, %v2254, 0.0
    %v2265 = vadd.f32 %v2263, 0.0
    %v2266 = vadd.f32 %v2264, 0.0
    %vm2267 = vcmp.eq.s32.totalorder %v1905, 1
    %vm2268 = vcmp.eq.s32.totalorder %v1906, 1
    %v2269 = vsel %vm2267, 1, 0
    %v2270 = vsel %vm2268, 1, 0
    %vm2271 = vcmp.eq.s32.totalorder %v2269, 1
    %vm2272 = vcmp.eq.s32.totalorder %v2270, 1
    %v2273 = vsel %vm2271, %v2251, 0.0
    %v2274 = vsel %vm2272, %v2254, 0.0
    %2277 = vrot.lane.b32.xlu0 %v2273, 96
    %v2278 = vpop.permute.xlu0 %2277
    %2279 = vrot.lane.b32.xlu0 %v2274, 96
    %v2280 = vpop.permute.xlu0 %2279
    %v2283 = vadd.f32 %v2265, %v2278
    %v2284 = vadd.f32 %v2266, %v2280
    %vm2285 = vcmp.eq.s32.totalorder %v1905, 2
    %vm2286 = vcmp.eq.s32.totalorder %v1906, 2
    %v2287 = vsel %vm2285, 1, 0
    %v2288 = vsel %vm2286, 1, 0
    %vm2289 = vcmp.eq.s32.totalorder %v2287, 1
    %vm2290 = vcmp.eq.s32.totalorder %v2288, 1
    %v2291 = vsel %vm2289, %v2251, 0.0
    %v2292 = vsel %vm2290, %v2254, 0.0
    %2295 = vrot.lane.b32.xlu0 %v2291, 64
    %v2296 = vpop.permute.xlu0 %2295
    %2297 = vrot.lane.b32.xlu0 %v2292, 64
    %v2298 = vpop.permute.xlu0 %2297
    %v2301 = vadd.f32 %v2283, %v2296
    %v2302 = vadd.f32 %v2284, %v2298
    %vm2303 = vcmp.eq.s32.totalorder %v1905, 3
    %vm2304 = vcmp.eq.s32.totalorder %v1906, 3
    %v2305 = vsel %vm2303, 1, 0
    %v2306 = vsel %vm2304, 1, 0
    %vm2307 = vcmp.eq.s32.totalorder %v2305, 1
    %vm2308 = vcmp.eq.s32.totalorder %v2306, 1
    %v2309 = vsel %vm2307, %v2251, 0.0
    %v2310 = vsel %vm2308, %v2254, 0.0
    %2313 = vrot.lane.b32.xlu0 %v2309, 32
    %v2314 = vpop.permute.xlu0 %2313
    %2315 = vrot.lane.b32.xlu0 %v2310, 32
    %v2316 = vpop.permute.xlu0 %2315
    %v2319 = vadd.f32 %v2301, %v2314
    %v2320 = vadd.f32 %v2302, %v2316
    %vm2321 = vcmp.eq.s32.totalorder %v1905, 4
    %vm2322 = vcmp.eq.s32.totalorder %v1906, 4
    %v2323 = vsel %vm2321, 1, 0
    %v2324 = vsel %vm2322, 1, 0
    %vm2325 = vcmp.eq.s32.totalorder %v2323, 1
    %vm2326 = vcmp.eq.s32.totalorder %v2324, 1
    %v2327 = vsel %vm2325, %v2252, 0.0
    %v2328 = vsel %vm2326, %v2255, 0.0
    %v2329 = vadd.f32 %v2319, %v2327
    %v2330 = vadd.f32 %v2320, %v2328
    %vm2331 = vcmp.eq.s32.totalorder %v1905, 5
    %vm2332 = vcmp.eq.s32.totalorder %v1906, 5
    %v2333 = vsel %vm2331, 1, 0
    %v2334 = vsel %vm2332, 1, 0
    %vm2335 = vcmp.eq.s32.totalorder %v2333, 1
    %vm2336 = vcmp.eq.s32.totalorder %v2334, 1
    %v2337 = vsel %vm2335, %v2252, 0.0
    %v2338 = vsel %vm2336, %v2255, 0.0
    %2341 = vrot.lane.b32.xlu0 %v2337, 96
    %v2342 = vpop.permute.xlu0 %2341
    %2343 = vrot.lane.b32.xlu0 %v2338, 96
    %v2344 = vpop.permute.xlu0 %2343
    %v2347 = vadd.f32 %v2329, %v2342
    %v2348 = vadd.f32 %v2330, %v2344
    %vm2349 = vcmp.eq.s32.totalorder %v1905, 6
    %vm2350 = vcmp.eq.s32.totalorder %v1906, 6
    %v2351 = vsel %vm2349, 1, 0
    %v2352 = vsel %vm2350, 1, 0
    %vm2353 = vcmp.eq.s32.totalorder %v2351, 1
    %vm2354 = vcmp.eq.s32.totalorder %v2352, 1
    %v2355 = vsel %vm2353, %v2252, 0.0
    %v2356 = vsel %vm2354, %v2255, 0.0
    %2359 = vrot.lane.b32.xlu0 %v2355, 64
    %v2360 = vpop.permute.xlu0 %2359
    %2361 = vrot.lane.b32.xlu0 %v2356, 64
    %v2362 = vpop.permute.xlu0 %2361
    %v2365 = vadd.f32 %v2347, %v2360
    %v2366 = vadd.f32 %v2348, %v2362
    %vm2367 = vcmp.eq.s32.totalorder %v1905, 7
    %vm2368 = vcmp.eq.s32.totalorder %v1906, 7
    %v2369 = vsel %vm2367, 1, 0
    %v2370 = vsel %vm2368, 1, 0
    %vm2371 = vcmp.eq.s32.totalorder %v2369, 1
    %vm2372 = vcmp.eq.s32.totalorder %v2370, 1
    %v2373 = vsel %vm2371, %v2252, 0.0
    %v2374 = vsel %vm2372, %v2255, 0.0
    %2377 = vrot.lane.b32.xlu0 %v2373, 32
    %v2378 = vpop.permute.xlu0 %2377
    %2379 = vrot.lane.b32.xlu0 %v2374, 32
    %v2380 = vpop.permute.xlu0 %2379
    %v2383 = vadd.f32 %v2365, %v2378
    %v2384 = vadd.f32 %v2366, %v2380
    %vm2385 = vcmp.eq.s32.totalorder %v1905, 8
    %vm2386 = vcmp.eq.s32.totalorder %v1906, 8
    %v2387 = vsel %vm2385, 1, 0
    %v2388 = vsel %vm2386, 1, 0
    %vm2389 = vcmp.eq.s32.totalorder %v2387, 1
    %vm2390 = vcmp.eq.s32.totalorder %v2388, 1
    %v2391 = vsel %vm2389, %v2253, 0.0
    %v2392 = vsel %vm2390, %v2256, 0.0
    %v2393 = vadd.f32 %v2383, %v2391
    %v2394 = vadd.f32 %v2384, %v2392
    %vm2395 = vcmp.eq.s32.totalorder %v1905, 9
    %vm2396 = vcmp.eq.s32.totalorder %v1906, 9
    %v2397 = vsel %vm2395, 1, 0
    %v2398 = vsel %vm2396, 1, 0
    %vm2399 = vcmp.eq.s32.totalorder %v2397, 1
    %vm2400 = vcmp.eq.s32.totalorder %v2398, 1
    %v2401 = vsel %vm2399, %v2253, 0.0
    %v2402 = vsel %vm2400, %v2256, 0.0
    %2405 = vrot.lane.b32.xlu0 %v2401, 96
    %v2406 = vpop.permute.xlu0 %2405
    %2407 = vrot.lane.b32.xlu0 %v2402, 96
    %v2408 = vpop.permute.xlu0 %2407
    %v2411 = vadd.f32 %v2393, %v2406
    %v2412 = vadd.f32 %v2394, %v2408
    %vm2413 = vcmp.eq.s32.totalorder %v1905, 10
    %vm2414 = vcmp.eq.s32.totalorder %v1906, 10
    %v2415 = vsel %vm2413, 1, 0
    %v2416 = vsel %vm2414, 1, 0
    %vm2417 = vcmp.eq.s32.totalorder %v2415, 1
    %vm2418 = vcmp.eq.s32.totalorder %v2416, 1
    %v2419 = vsel %vm2417, %v2253, 0.0
    %v2420 = vsel %vm2418, %v2256, 0.0
    %2423 = vrot.lane.b32.xlu0 %v2419, 64
    %v2424 = vpop.permute.xlu0 %2423
    %2425 = vrot.lane.b32.xlu0 %v2420, 64
    %v2426 = vpop.permute.xlu0 %2425
    %v2429 = vadd.f32 %v2411, %v2424
    %v2430 = vadd.f32 %v2412, %v2426
    %v2431 = vadd.f32 %v1814, %v2429
    %v2432 = vadd.f32 %v1815, %v2430
    %v2434 = vsel %vm1192, %v957, 0
    %v2437 = vsel %vm1192, %v958, 0
    %2439 = vmatprep.subr.mxu0 0.0
    %2440 = vmatpush1.msra.mxu0 0.0
    %2441 = vmatprep.subr.mxu0 0.0
    %2442 = vmatpush1.msra.mxu0 0.0
    %2443 = vmatprep.subr.mxu0 0.0
    %2444 = vmatpush1.msra.mxu0 0.0
    %2445 = vmatprep.subr.mxu0 0.0
    %2446 = vmatpush1.msra.mxu0 0.0
    %2447 = vmatprep.subr.mxu0 0.0
    %2448 = vmatpush1.msra.mxu0 0.0
    %2449 = vmatprep.subr.mxu0 0.0
    %2450 = vmatpush1.msra.mxu0 0.0
    %2451 = vmatprep.subr.mxu0 0.0
    %2452 = vmatpush1.msra.mxu0 0.0
    %2453 = vmatprep.subr.mxu0 0.0
    %2454 = vmatpush1.msra.mxu0 0.0
    %2455 = vmatprep.subr.mxu0 0.0
    %2456 = vmatpush1.msra.mxu0 0.0
    %2457 = vmatprep.subr.mxu0 0.0
    %2458 = vmatpush1.msra.mxu0 0.0
    %2459 = vmatprep.subr.mxu0 0.0
    %2460 = vmatpush1.msra.mxu0 0.0
    %2461 = vmatprep.subr.mxu0 0.0
    %2462 = vmatpush1.msra.mxu0 0.0
    %2463 = vmatprep.subr.mxu0 0.0
    %2464 = vmatpush1.msra.mxu0 0.0
    %2465 = vmatprep.subr.mxu0 0.0
    %2466 = vmatpush1.msra.mxu0 0.0
    %2467 = vmatprep.subr.mxu0 0.0
    %2468 = vmatpush1.msra.mxu0 %v1188
    %2469 = vmatprep.subr.mxu0 0.0
    %2470 = vmatpush1.msra.mxu0 %v1187
    %2471 = vmatprep.subr.mxu0 0.0
    %2472 = vmatpush2.msra.mxu0 0.0
    %2473 = vmatprep.subr.mxu0 0.0
    %2474 = vmatpush2.msra.mxu0 0.0
    %2475 = vmatprep.subr.mxu0 0.0
    %2476 = vmatpush2.msra.mxu0 0.0
    %2477 = vmatprep.subr.mxu0 0.0
    %2478 = vmatpush2.msra.mxu0 0.0
    %2479 = vmatprep.subr.mxu0 0.0
    %2480 = vmatpush2.msra.mxu0 0.0
    %2481 = vmatprep.subr.mxu0 0.0
    %2482 = vmatpush2.msra.mxu0 0.0
    %2483 = vmatprep.subr.mxu0 0.0
    %2484 = vmatpush2.msra.mxu0 0.0
    %2485 = vmatprep.subr.mxu0 0.0
    %2486 = vmatpush2.msra.mxu0 0.0
    %2487 = vmatprep.subr.mxu0 0.0
    %2488 = vmatpush2.msra.mxu0 0.0
    %2489 = vmatprep.subr.mxu0 0.0
    %2490 = vmatpush2.msra.mxu0 0.0
    %2491 = vmatprep.subr.mxu0 0.0
    %2492 = vmatpush2.msra.mxu0 0.0
    %2493 = vmatprep.subr.mxu0 0.0
    %2494 = vmatpush2.msra.mxu0 0.0
    %2495 = vmatprep.subr.mxu0 0.0
    %2496 = vmatpush2.msra.mxu0 0.0
    %2497 = vmatprep.subr.mxu0 0.0
    %2498 = vmatpush2.msra.mxu0 0.0
    %2499 = vmatprep.subr.mxu0 0.0
    %2500 = vmatpush2.msra.mxu0 0.0
    %2501 = vmatprep.subr.mxu0 0.0
    %2502 = vmatpush2.msra.mxu0 0.0
    %2503 = vmatprep.mubr.f32.mxu0 0.0
    %2504 = vmatmul.mubr.f32.gmra.mxu0 %v2434
    %v2505 = vpop.f32.mrf.mxu0
    %v2506 = vadd.f32 0.0, %v2505
    %v2507 = vpop.f32.mrf.mxu0
    %2508 = vmatprep.mubr.f32.mxu0 0.0
    %2509 = vmatmul.mubr.f32.gmra.mxu0 %v2437
    %v2510 = vpop.f32.mrf.mxu0
    %v2511 = vadd.f32 0.0, %v2510
    %v2512 = vpop.f32.mrf.mxu0
    %2513 = vdwg.mxu0
    %v2514 = vsel %vm1192, %v957, 0.0
    %2515 = vadd.xlane.f32.xlu0 %v2514
    %v2516 = vpop.xlane.xlu0 %2515
    %v2517 = vsel %vm1192, %v958, 0.0
    %2518 = vadd.xlane.f32.xlu0 %v2517
    %v2519 = vpop.xlane.xlu0 %2518
    %v2520 = vmin.f32 %v2516, 10.0
    %v2521 = vmin.f32 %v2519, 10.0
    %v2522 = vcvt.f32.s32.to.zero.pseudo %v2520
    %v2523 = vcvt.f32.s32.to.zero.pseudo %v2521
    %v2525 = vsel %vm1284, %v1187, 0
    %v2528 = vsel %vm1284, %v1188, 0
    %v2531 = vsel %vm1291, %v1007, 0
    %v2534 = vsel %vm1291, %v1008, 0
    %v2537 = vsel %vm1291, %v1009, 0
    %2539 = vmatprep.subr.mxu0 0.0
    %2540 = vmatpush1.msra.mxu0 0.0
    %2541 = vmatprep.subr.mxu0 0.0
    %2542 = vmatpush1.msra.mxu0 0.0
    %2543 = vmatprep.subr.mxu0 0.0
    %2544 = vmatpush1.msra.mxu0 0.0
    %2545 = vmatprep.subr.mxu0 0.0
    %2546 = vmatpush1.msra.mxu0 0.0
    %2547 = vmatprep.subr.mxu0 0.0
    %2548 = vmatpush1.msra.mxu0 0.0
    %2549 = vmatprep.subr.mxu0 0.0
    %2550 = vmatpush1.msra.mxu0 0.0
    %2551 = vmatprep.subr.mxu0 0.0
    %2552 = vmatpush1.msra.mxu0 0.0
    %2553 = vmatprep.subr.mxu0 0.0
    %2554 = vmatpush1.msra.mxu0 0.0
    %2555 = vmatprep.subr.mxu0 0.0
    %2556 = vmatpush1.msra.mxu0 0.0
    %2557 = vmatprep.subr.mxu0 0.0
    %2558 = vmatpush1.msra.mxu0 0.0
    %2559 = vmatprep.subr.mxu0 0.0
    %2560 = vmatpush1.msra.mxu0 0.0
    %2561 = vmatprep.subr.mxu0 0.0
    %2562 = vmatpush1.msra.mxu0 0.0
    %2563 = vmatprep.subr.mxu0 0.0
    %2564 = vmatpush1.msra.mxu0 0.0
    %2565 = vmatprep.subr.mxu0 0.0
    %2566 = vmatpush1.msra.mxu0 0.0
    %2567 = vmatprep.subr.mxu0 %v2534
    %2568 = vmatpush1.msra.mxu0 %v2531
    %2569 = vmatprep.subr.mxu0 %v1005
    %2570 = vmatpush1.msra.mxu0 %v1004
    %2571 = vmatprep.subr.mxu0 0.0
    %2572 = vmatpush2.msra.mxu0 0.0
    %2573 = vmatprep.subr.mxu0 0.0
    %2574 = vmatpush2.msra.mxu0 0.0
    %2575 = vmatprep.subr.mxu0 0.0
    %2576 = vmatpush2.msra.mxu0 0.0
    %2577 = vmatprep.subr.mxu0 0.0
    %2578 = vmatpush2.msra.mxu0 0.0
    %2579 = vmatprep.subr.mxu0 0.0
    %2580 = vmatpush2.msra.mxu0 0.0
    %2581 = vmatprep.subr.mxu0 0.0
    %2582 = vmatpush2.msra.mxu0 0.0
    %2583 = vmatprep.subr.mxu0 0.0
    %2584 = vmatpush2.msra.mxu0 0.0
    %2585 = vmatprep.subr.mxu0 0.0
    %2586 = vmatpush2.msra.mxu0 0.0
    %2587 = vmatprep.subr.mxu0 0.0
    %2588 = vmatpush2.msra.mxu0 0.0
    %2589 = vmatprep.subr.mxu0 0.0
    %2590 = vmatpush2.msra.mxu0 0.0
    %2591 = vmatprep.subr.mxu0 0.0
    %2592 = vmatpush2.msra.mxu0 0.0
    %2593 = vmatprep.subr.mxu0 0.0
    %2594 = vmatpush2.msra.mxu0 0.0
    %2595 = vmatprep.subr.mxu0 0.0
    %2596 = vmatpush2.msra.mxu0 0.0
    %2597 = vmatprep.subr.mxu0 0.0
    %2598 = vmatpush2.msra.mxu0 0.0
    %2599 = vmatprep.subr.mxu0 0.0
    %2600 = vmatpush2.msra.mxu0 0.0
    %2601 = vmatprep.subr.mxu0 0.0
    %2602 = vmatpush2.msra.mxu0 0.0
    %2603 = vmatprep.mubr.f32.mxu0 0.0
    %2604 = vmatmul.mubr.f32.gmra.mxu0 %v2525
    %v2605 = vpop.f32.mrf.mxu0
    %v2606 = vadd.f32 0.0, %v2605
    %v2607 = vpop.f32.mrf.mxu0
    %v2608 = vadd.f32 0.0, %v2607
    %2609 = vmatprep.mubr.f32.mxu0 0.0
    %2610 = vmatmul.mubr.f32.gmra.mxu0 %v2528
    %v2611 = vpop.f32.mrf.mxu0
    %v2612 = vadd.f32 0.0, %v2611
    %v2613 = vpop.f32.mrf.mxu0
    %v2614 = vadd.f32 0.0, %v2613
    %2615 = vdwg.mxu0
    %2616 = vmatprep.subr.mxu0 0.0
    %2617 = vmatpush1.msra.mxu0 0.0
    %2618 = vmatprep.subr.mxu0 0.0
    %2619 = vmatpush1.msra.mxu0 0.0
    %2620 = vmatprep.subr.mxu0 0.0
    %2621 = vmatpush1.msra.mxu0 0.0
    %2622 = vmatprep.subr.mxu0 0.0
    %2623 = vmatpush1.msra.mxu0 0.0
    %2624 = vmatprep.subr.mxu0 0.0
    %2625 = vmatpush1.msra.mxu0 0.0
    %2626 = vmatprep.subr.mxu0 0.0
    %2627 = vmatpush1.msra.mxu0 0.0
    %2628 = vmatprep.subr.mxu0 0.0
    %2629 = vmatpush1.msra.mxu0 0.0
    %2630 = vmatprep.subr.mxu0 0.0
    %2631 = vmatpush1.msra.mxu0 0.0
    %2632 = vmatprep.subr.mxu0 0.0
    %2633 = vmatpush1.msra.mxu0 0.0
    %2634 = vmatprep.subr.mxu0 0.0
    %2635 = vmatpush1.msra.mxu0 0.0
    %2636 = vmatprep.subr.mxu0 0.0
    %2637 = vmatpush1.msra.mxu0 0.0
    %2638 = vmatprep.subr.mxu0 0.0
    %2639 = vmatpush1.msra.mxu0 0.0
    %2640 = vmatprep.subr.mxu0 0.0
    %2641 = vmatpush1.msra.mxu0 0.0
    %2642 = vmatprep.subr.mxu0 0.0
    %2643 = vmatpush1.msra.mxu0 0.0
    %2644 = vmatprep.subr.mxu0 0.0
    %2645 = vmatpush1.msra.mxu0 %v2537
    %2646 = vmatprep.subr.mxu0 0.0
    %2647 = vmatpush1.msra.mxu0 %v1006
    %2648 = vmatprep.subr.mxu0 0.0
    %2649 = vmatpush2.msra.mxu0 0.0
    %2650 = vmatprep.subr.mxu0 0.0
    %2651 = vmatpush2.msra.mxu0 0.0
    %2652 = vmatprep.subr.mxu0 0.0
    %2653 = vmatpush2.msra.mxu0 0.0
    %2654 = vmatprep.subr.mxu0 0.0
    %2655 = vmatpush2.msra.mxu0 0.0
    %2656 = vmatprep.subr.mxu0 0.0
    %2657 = vmatpush2.msra.mxu0 0.0
    %2658 = vmatprep.subr.mxu0 0.0
    %2659 = vmatpush2.msra.mxu0 0.0
    %2660 = vmatprep.subr.mxu0 0.0
    %2661 = vmatpush2.msra.mxu0 0.0
    %2662 = vmatprep.subr.mxu0 0.0
    %2663 = vmatpush2.msra.mxu0 0.0
    %2664 = vmatprep.subr.mxu0 0.0
    %2665 = vmatpush2.msra.mxu0 0.0
    %2666 = vmatprep.subr.mxu0 0.0
    %2667 = vmatpush2.msra.mxu0 0.0
    %2668 = vmatprep.subr.mxu0 0.0
    %2669 = vmatpush2.msra.mxu0 0.0
    %2670 = vmatprep.subr.mxu0 0.0
    %2671 = vmatpush2.msra.mxu0 0.0
    %2672 = vmatprep.subr.mxu0 0.0
    %2673 = vmatpush2.msra.mxu0 0.0
    %2674 = vmatprep.subr.mxu0 0.0
    %2675 = vmatpush2.msra.mxu0 0.0
    %2676 = vmatprep.subr.mxu0 0.0
    %2677 = vmatpush2.msra.mxu0 0.0
    %2678 = vmatprep.subr.mxu0 0.0
    %2679 = vmatpush2.msra.mxu0 0.0
    %2680 = vmatprep.mubr.f32.mxu0 0.0
    %2681 = vmatmul.mubr.f32.gmra.mxu0 %v2525
    %v2682 = vpop.f32.mrf.mxu0
    %v2683 = vadd.f32 0.0, %v2682
    %v2684 = vpop.f32.mrf.mxu0
    %2685 = vmatprep.mubr.f32.mxu0 0.0
    %2686 = vmatmul.mubr.f32.gmra.mxu0 %v2528
    %v2687 = vpop.f32.mrf.mxu0
    %v2688 = vadd.f32 0.0, %v2687
    %v2689 = vpop.f32.mrf.mxu0
    %2690 = vdwg.mxu0
    %v2692 = vsel %vm1284, %v2506, 0
    %v2695 = vsel %vm1284, %v2511, 0
    %v2698 = vsel %vm1291, %v1001, 0
    %v2701 = vsel %vm1291, %v1002, 0
    %v2704 = vsel %vm1291, %v1003, 0
    %2706 = vmatprep.subr.mxu0 0.0
    %2707 = vmatpush1.msra.mxu0 0.0
    %2708 = vmatprep.subr.mxu0 0.0
    %2709 = vmatpush1.msra.mxu0 0.0
    %2710 = vmatprep.subr.mxu0 0.0
    %2711 = vmatpush1.msra.mxu0 0.0
    %2712 = vmatprep.subr.mxu0 0.0
    %2713 = vmatpush1.msra.mxu0 0.0
    %2714 = vmatprep.subr.mxu0 0.0
    %2715 = vmatpush1.msra.mxu0 0.0
    %2716 = vmatprep.subr.mxu0 0.0
    %2717 = vmatpush1.msra.mxu0 0.0
    %2718 = vmatprep.subr.mxu0 0.0
    %2719 = vmatpush1.msra.mxu0 0.0
    %2720 = vmatprep.subr.mxu0 0.0
    %2721 = vmatpush1.msra.mxu0 0.0
    %2722 = vmatprep.subr.mxu0 0.0
    %2723 = vmatpush1.msra.mxu0 0.0
    %2724 = vmatprep.subr.mxu0 0.0
    %2725 = vmatpush1.msra.mxu0 0.0
    %2726 = vmatprep.subr.mxu0 0.0
    %2727 = vmatpush1.msra.mxu0 0.0
    %2728 = vmatprep.subr.mxu0 0.0
    %2729 = vmatpush1.msra.mxu0 0.0
    %2730 = vmatprep.subr.mxu0 0.0
    %2731 = vmatpush1.msra.mxu0 0.0
    %2732 = vmatprep.subr.mxu0 0.0
    %2733 = vmatpush1.msra.mxu0 0.0
    %2734 = vmatprep.subr.mxu0 %v2701
    %2735 = vmatpush1.msra.mxu0 %v2698
    %2736 = vmatprep.subr.mxu0 %v999
    %2737 = vmatpush1.msra.mxu0 %v998
    %2738 = vmatprep.subr.mxu0 0.0
    %2739 = vmatpush2.msra.mxu0 0.0
    %2740 = vmatprep.subr.mxu0 0.0
    %2741 = vmatpush2.msra.mxu0 0.0
    %2742 = vmatprep.subr.mxu0 0.0
    %2743 = vmatpush2.msra.mxu0 0.0
    %2744 = vmatprep.subr.mxu0 0.0
    %2745 = vmatpush2.msra.mxu0 0.0
    %2746 = vmatprep.subr.mxu0 0.0
    %2747 = vmatpush2.msra.mxu0 0.0
    %2748 = vmatprep.subr.mxu0 0.0
    %2749 = vmatpush2.msra.mxu0 0.0
    %2750 = vmatprep.subr.mxu0 0.0
    %2751 = vmatpush2.msra.mxu0 0.0
    %2752 = vmatprep.subr.mxu0 0.0
    %2753 = vmatpush2.msra.mxu0 0.0
    %2754 = vmatprep.subr.mxu0 0.0
    %2755 = vmatpush2.msra.mxu0 0.0
    %2756 = vmatprep.subr.mxu0 0.0
    %2757 = vmatpush2.msra.mxu0 0.0
    %2758 = vmatprep.subr.mxu0 0.0
    %2759 = vmatpush2.msra.mxu0 0.0
    %2760 = vmatprep.subr.mxu0 0.0
    %2761 = vmatpush2.msra.mxu0 0.0
    %2762 = vmatprep.subr.mxu0 0.0
    %2763 = vmatpush2.msra.mxu0 0.0
    %2764 = vmatprep.subr.mxu0 0.0
    %2765 = vmatpush2.msra.mxu0 0.0
    %2766 = vmatprep.subr.mxu0 0.0
    %2767 = vmatpush2.msra.mxu0 0.0
    %2768 = vmatprep.subr.mxu0 0.0
    %2769 = vmatpush2.msra.mxu0 0.0
    %2770 = vmatprep.mubr.f32.mxu0 0.0
    %2771 = vmatmul.mubr.f32.gmra.mxu0 %v2692
    %v2772 = vpop.f32.mrf.mxu0
    %v2773 = vadd.f32 %v2606, %v2772
    %v2774 = vpop.f32.mrf.mxu0
    %v2775 = vadd.f32 %v2608, %v2774
    %2776 = vmatprep.mubr.f32.mxu0 0.0
    %2777 = vmatmul.mubr.f32.gmra.mxu0 %v2695
    %v2778 = vpop.f32.mrf.mxu0
    %v2779 = vadd.f32 %v2612, %v2778
    %v2780 = vpop.f32.mrf.mxu0
    %v2781 = vadd.f32 %v2614, %v2780
    %2782 = vdwg.mxu0
    %2783 = vmatprep.subr.mxu0 0.0
    %2784 = vmatpush1.msra.mxu0 0.0
    %2785 = vmatprep.subr.mxu0 0.0
    %2786 = vmatpush1.msra.mxu0 0.0
    %2787 = vmatprep.subr.mxu0 0.0
    %2788 = vmatpush1.msra.mxu0 0.0
    %2789 = vmatprep.subr.mxu0 0.0
    %2790 = vmatpush1.msra.mxu0 0.0
    %2791 = vmatprep.subr.mxu0 0.0
    %2792 = vmatpush1.msra.mxu0 0.0
    %2793 = vmatprep.subr.mxu0 0.0
    %2794 = vmatpush1.msra.mxu0 0.0
    %2795 = vmatprep.subr.mxu0 0.0
    %2796 = vmatpush1.msra.mxu0 0.0
    %2797 = vmatprep.subr.mxu0 0.0
    %2798 = vmatpush1.msra.mxu0 0.0
    %2799 = vmatprep.subr.mxu0 0.0
    %2800 = vmatpush1.msra.mxu0 0.0
    %2801 = vmatprep.subr.mxu0 0.0
    %2802 = vmatpush1.msra.mxu0 0.0
    %2803 = vmatprep.subr.mxu0 0.0
    %2804 = vmatpush1.msra.mxu0 0.0
    %2805 = vmatprep.subr.mxu0 0.0
    %2806 = vmatpush1.msra.mxu0 0.0
    %2807 = vmatprep.subr.mxu0 0.0
    %2808 = vmatpush1.msra.mxu0 0.0
    %2809 = vmatprep.subr.mxu0 0.0
    %2810 = vmatpush1.msra.mxu0 0.0
    %2811 = vmatprep.subr.mxu0 0.0
    %2812 = vmatpush1.msra.mxu0 %v2704
    %2813 = vmatprep.subr.mxu0 0.0
    %2814 = vmatpush1.msra.mxu0 %v1000
    %2815 = vmatprep.subr.mxu0 0.0
    %2816 = vmatpush2.msra.mxu0 0.0
    %2817 = vmatprep.subr.mxu0 0.0
    %2818 = vmatpush2.msra.mxu0 0.0
    %2819 = vmatprep.subr.mxu0 0.0
    %2820 = vmatpush2.msra.mxu0 0.0
    %2821 = vmatprep.subr.mxu0 0.0
    %2822 = vmatpush2.msra.mxu0 0.0
    %2823 = vmatprep.subr.mxu0 0.0
    %2824 = vmatpush2.msra.mxu0 0.0
    %2825 = vmatprep.subr.mxu0 0.0
    %2826 = vmatpush2.msra.mxu0 0.0
    %2827 = vmatprep.subr.mxu0 0.0
    %2828 = vmatpush2.msra.mxu0 0.0
    %2829 = vmatprep.subr.mxu0 0.0
    %2830 = vmatpush2.msra.mxu0 0.0
    %2831 = vmatprep.subr.mxu0 0.0
    %2832 = vmatpush2.msra.mxu0 0.0
    %2833 = vmatprep.subr.mxu0 0.0
    %2834 = vmatpush2.msra.mxu0 0.0
    %2835 = vmatprep.subr.mxu0 0.0
    %2836 = vmatpush2.msra.mxu0 0.0
    %2837 = vmatprep.subr.mxu0 0.0
    %2838 = vmatpush2.msra.mxu0 0.0
    %2839 = vmatprep.subr.mxu0 0.0
    %2840 = vmatpush2.msra.mxu0 0.0
    %2841 = vmatprep.subr.mxu0 0.0
    %2842 = vmatpush2.msra.mxu0 0.0
    %2843 = vmatprep.subr.mxu0 0.0
    %2844 = vmatpush2.msra.mxu0 0.0
    %2845 = vmatprep.subr.mxu0 0.0
    %2846 = vmatpush2.msra.mxu0 0.0
    %2847 = vmatprep.mubr.f32.mxu0 0.0
    %2848 = vmatmul.mubr.f32.gmra.mxu0 %v2692
    %v2849 = vpop.f32.mrf.mxu0
    %v2850 = vadd.f32 %v2683, %v2849
    %v2851 = vpop.f32.mrf.mxu0
    %2852 = vmatprep.mubr.f32.mxu0 0.0
    %2853 = vmatmul.mubr.f32.gmra.mxu0 %v2695
    %v2854 = vpop.f32.mrf.mxu0
    %v2855 = vadd.f32 %v2688, %v2854
    %v2856 = vpop.f32.mrf.mxu0
    %2857 = vdwg.mxu0
    %v2859 = vlaneseq
    %v2860 = vshrl.u32 %v2859, 7
    %v2861 = vsub.s32 0, %v2860
    %v2862 = vrot.slane %v997, %v2861
    %v2863 = vlaneseq
    %v2864 = vshrl.u32 %v2863, 7
    %v2865 = vsub.s32 1, %v2864
    %v2866 = vrot.slane %v997, %v2865
    %v2867 = vlaneseq
    %v2868 = vshrl.u32 %v2867, 7
    %v2869 = vsub.s32 2, %v2868
    %v2870 = vrot.slane %v997, %v2869
    %v2874 = vadd.f32 %v2773, %v2862
    %v2875 = vadd.f32 %v2775, %v2866
    %v2876 = vadd.f32 %v2850, %v2870
    %v2877 = vadd.f32 %v2779, %v2862
    %v2878 = vadd.f32 %v2781, %v2866
    %v2879 = vadd.f32 %v2855, %v2870
    %vm2880 = vcmp.eq.s32.totalorder %v2522, 0
    %vm2881 = vcmp.eq.s32.totalorder %v2523, 0
    %v2882 = vsel %vm2880, 1, 0
    %v2883 = vsel %vm2881, 1, 0
    %vm2884 = vcmp.eq.s32.totalorder %v2882, 1
    %vm2885 = vcmp.eq.s32.totalorder %v2883, 1
    %v2886 = vsel %vm2884, %v2874, 0.0
    %v2887 = vsel %vm2885, %v2877, 0.0
    %v2888 = vadd.f32 %v2886, 0.0
    %v2889 = vadd.f32 %v2887, 0.0
    %vm2890 = vcmp.eq.s32.totalorder %v2522, 1
    %vm2891 = vcmp.eq.s32.totalorder %v2523, 1
    %v2892 = vsel %vm2890, 1, 0
    %v2893 = vsel %vm2891, 1, 0
    %vm2894 = vcmp.eq.s32.totalorder %v2892, 1
    %vm2895 = vcmp.eq.s32.totalorder %v2893, 1
    %v2896 = vsel %vm2894, %v2874, 0.0
    %v2897 = vsel %vm2895, %v2877, 0.0
    %2900 = vrot.lane.b32.xlu0 %v2896, 96
    %v2901 = vpop.permute.xlu0 %2900
    %2902 = vrot.lane.b32.xlu0 %v2897, 96
    %v2903 = vpop.permute.xlu0 %2902
    %v2906 = vadd.f32 %v2888, %v2901
    %v2907 = vadd.f32 %v2889, %v2903
    %vm2908 = vcmp.eq.s32.totalorder %v2522, 2
    %vm2909 = vcmp.eq.s32.totalorder %v2523, 2
    %v2910 = vsel %vm2908, 1, 0
    %v2911 = vsel %vm2909, 1, 0
    %vm2912 = vcmp.eq.s32.totalorder %v2910, 1
    %vm2913 = vcmp.eq.s32.totalorder %v2911, 1
    %v2914 = vsel %vm2912, %v2874, 0.0
    %v2915 = vsel %vm2913, %v2877, 0.0
    %2918 = vrot.lane.b32.xlu0 %v2914, 64
    %v2919 = vpop.permute.xlu0 %2918
    %2920 = vrot.lane.b32.xlu0 %v2915, 64
    %v2921 = vpop.permute.xlu0 %2920
    %v2924 = vadd.f32 %v2906, %v2919
    %v2925 = vadd.f32 %v2907, %v2921
    %vm2926 = vcmp.eq.s32.totalorder %v2522, 3
    %vm2927 = vcmp.eq.s32.totalorder %v2523, 3
    %v2928 = vsel %vm2926, 1, 0
    %v2929 = vsel %vm2927, 1, 0
    %vm2930 = vcmp.eq.s32.totalorder %v2928, 1
    %vm2931 = vcmp.eq.s32.totalorder %v2929, 1
    %v2932 = vsel %vm2930, %v2874, 0.0
    %v2933 = vsel %vm2931, %v2877, 0.0
    %2936 = vrot.lane.b32.xlu0 %v2932, 32
    %v2937 = vpop.permute.xlu0 %2936
    %2938 = vrot.lane.b32.xlu0 %v2933, 32
    %v2939 = vpop.permute.xlu0 %2938
    %v2942 = vadd.f32 %v2924, %v2937
    %v2943 = vadd.f32 %v2925, %v2939
    %vm2944 = vcmp.eq.s32.totalorder %v2522, 4
    %vm2945 = vcmp.eq.s32.totalorder %v2523, 4
    %v2946 = vsel %vm2944, 1, 0
    %v2947 = vsel %vm2945, 1, 0
    %vm2948 = vcmp.eq.s32.totalorder %v2946, 1
    %vm2949 = vcmp.eq.s32.totalorder %v2947, 1
    %v2950 = vsel %vm2948, %v2875, 0.0
    %v2951 = vsel %vm2949, %v2878, 0.0
    %v2952 = vadd.f32 %v2942, %v2950
    %v2953 = vadd.f32 %v2943, %v2951
    %vm2954 = vcmp.eq.s32.totalorder %v2522, 5
    %vm2955 = vcmp.eq.s32.totalorder %v2523, 5
    %v2956 = vsel %vm2954, 1, 0
    %v2957 = vsel %vm2955, 1, 0
    %vm2958 = vcmp.eq.s32.totalorder %v2956, 1
    %vm2959 = vcmp.eq.s32.totalorder %v2957, 1
    %v2960 = vsel %vm2958, %v2875, 0.0
    %v2961 = vsel %vm2959, %v2878, 0.0
    %2964 = vrot.lane.b32.xlu0 %v2960, 96
    %v2965 = vpop.permute.xlu0 %2964
    %2966 = vrot.lane.b32.xlu0 %v2961, 96
    %v2967 = vpop.permute.xlu0 %2966
    %v2970 = vadd.f32 %v2952, %v2965
    %v2971 = vadd.f32 %v2953, %v2967
    %vm2972 = vcmp.eq.s32.totalorder %v2522, 6
    %vm2973 = vcmp.eq.s32.totalorder %v2523, 6
    %v2974 = vsel %vm2972, 1, 0
    %v2975 = vsel %vm2973, 1, 0
    %vm2976 = vcmp.eq.s32.totalorder %v2974, 1
    %vm2977 = vcmp.eq.s32.totalorder %v2975, 1
    %v2978 = vsel %vm2976, %v2875, 0.0
    %v2979 = vsel %vm2977, %v2878, 0.0
    %2982 = vrot.lane.b32.xlu0 %v2978, 64
    %v2983 = vpop.permute.xlu0 %2982
    %2984 = vrot.lane.b32.xlu0 %v2979, 64
    %v2985 = vpop.permute.xlu0 %2984
    %v2988 = vadd.f32 %v2970, %v2983
    %v2989 = vadd.f32 %v2971, %v2985
    %vm2990 = vcmp.eq.s32.totalorder %v2522, 7
    %vm2991 = vcmp.eq.s32.totalorder %v2523, 7
    %v2992 = vsel %vm2990, 1, 0
    %v2993 = vsel %vm2991, 1, 0
    %vm2994 = vcmp.eq.s32.totalorder %v2992, 1
    %vm2995 = vcmp.eq.s32.totalorder %v2993, 1
    %v2996 = vsel %vm2994, %v2875, 0.0
    %v2997 = vsel %vm2995, %v2878, 0.0
    %3000 = vrot.lane.b32.xlu0 %v2996, 32
    %v3001 = vpop.permute.xlu0 %3000
    %3002 = vrot.lane.b32.xlu0 %v2997, 32
    %v3003 = vpop.permute.xlu0 %3002
    %v3006 = vadd.f32 %v2988, %v3001
    %v3007 = vadd.f32 %v2989, %v3003
    %vm3008 = vcmp.eq.s32.totalorder %v2522, 8
    %vm3009 = vcmp.eq.s32.totalorder %v2523, 8
    %v3010 = vsel %vm3008, 1, 0
    %v3011 = vsel %vm3009, 1, 0
    %vm3012 = vcmp.eq.s32.totalorder %v3010, 1
    %vm3013 = vcmp.eq.s32.totalorder %v3011, 1
    %v3014 = vsel %vm3012, %v2876, 0.0
    %v3015 = vsel %vm3013, %v2879, 0.0
    %v3016 = vadd.f32 %v3006, %v3014
    %v3017 = vadd.f32 %v3007, %v3015
    %vm3018 = vcmp.eq.s32.totalorder %v2522, 9
    %vm3019 = vcmp.eq.s32.totalorder %v2523, 9
    %v3020 = vsel %vm3018, 1, 0
    %v3021 = vsel %vm3019, 1, 0
    %vm3022 = vcmp.eq.s32.totalorder %v3020, 1
    %vm3023 = vcmp.eq.s32.totalorder %v3021, 1
    %v3024 = vsel %vm3022, %v2876, 0.0
    %v3025 = vsel %vm3023, %v2879, 0.0
    %3028 = vrot.lane.b32.xlu0 %v3024, 96
    %v3029 = vpop.permute.xlu0 %3028
    %3030 = vrot.lane.b32.xlu0 %v3025, 96
    %v3031 = vpop.permute.xlu0 %3030
    %v3034 = vadd.f32 %v3016, %v3029
    %v3035 = vadd.f32 %v3017, %v3031
    %vm3036 = vcmp.eq.s32.totalorder %v2522, 10
    %vm3037 = vcmp.eq.s32.totalorder %v2523, 10
    %v3038 = vsel %vm3036, 1, 0
    %v3039 = vsel %vm3037, 1, 0
    %vm3040 = vcmp.eq.s32.totalorder %v3038, 1
    %vm3041 = vcmp.eq.s32.totalorder %v3039, 1
    %v3042 = vsel %vm3040, %v2876, 0.0
    %v3043 = vsel %vm3041, %v2879, 0.0
    %3046 = vrot.lane.b32.xlu0 %v3042, 64
    %v3047 = vpop.permute.xlu0 %3046
    %3048 = vrot.lane.b32.xlu0 %v3043, 64
    %v3049 = vpop.permute.xlu0 %3048
    %v3052 = vadd.f32 %v3034, %v3047
    %v3053 = vadd.f32 %v3035, %v3049
    %v3055 = vsel %vm1192, %v962, 0
    %v3058 = vsel %vm1192, %v963, 0
    %3060 = vmatprep.subr.mxu0 0.0
    %3061 = vmatpush1.msra.mxu0 0.0
    %3062 = vmatprep.subr.mxu0 0.0
    %3063 = vmatpush1.msra.mxu0 0.0
    %3064 = vmatprep.subr.mxu0 0.0
    %3065 = vmatpush1.msra.mxu0 0.0
    %3066 = vmatprep.subr.mxu0 0.0
    %3067 = vmatpush1.msra.mxu0 0.0
    %3068 = vmatprep.subr.mxu0 0.0
    %3069 = vmatpush1.msra.mxu0 0.0
    %3070 = vmatprep.subr.mxu0 0.0
    %3071 = vmatpush1.msra.mxu0 0.0
    %3072 = vmatprep.subr.mxu0 0.0
    %3073 = vmatpush1.msra.mxu0 0.0
    %3074 = vmatprep.subr.mxu0 0.0
    %3075 = vmatpush1.msra.mxu0 0.0
    %3076 = vmatprep.subr.mxu0 0.0
    %3077 = vmatpush1.msra.mxu0 0.0
    %3078 = vmatprep.subr.mxu0 0.0
    %3079 = vmatpush1.msra.mxu0 0.0
    %3080 = vmatprep.subr.mxu0 0.0
    %3081 = vmatpush1.msra.mxu0 0.0
    %3082 = vmatprep.subr.mxu0 0.0
    %3083 = vmatpush1.msra.mxu0 0.0
    %3084 = vmatprep.subr.mxu0 0.0
    %3085 = vmatpush1.msra.mxu0 0.0
    %3086 = vmatprep.subr.mxu0 0.0
    %3087 = vmatpush1.msra.mxu0 0.0
    %3088 = vmatprep.subr.mxu0 0.0
    %3089 = vmatpush1.msra.mxu0 %v1191
    %3090 = vmatprep.subr.mxu0 0.0
    %3091 = vmatpush1.msra.mxu0 %v1190
    %3092 = vmatprep.subr.mxu0 0.0
    %3093 = vmatpush2.msra.mxu0 0.0
    %3094 = vmatprep.subr.mxu0 0.0
    %3095 = vmatpush2.msra.mxu0 0.0
    %3096 = vmatprep.subr.mxu0 0.0
    %3097 = vmatpush2.msra.mxu0 0.0
    %3098 = vmatprep.subr.mxu0 0.0
    %3099 = vmatpush2.msra.mxu0 0.0
    %3100 = vmatprep.subr.mxu0 0.0
    %3101 = vmatpush2.msra.mxu0 0.0
    %3102 = vmatprep.subr.mxu0 0.0
    %3103 = vmatpush2.msra.mxu0 0.0
    %3104 = vmatprep.subr.mxu0 0.0
    %3105 = vmatpush2.msra.mxu0 0.0
    %3106 = vmatprep.subr.mxu0 0.0
    %3107 = vmatpush2.msra.mxu0 0.0
    %3108 = vmatprep.subr.mxu0 0.0
    %3109 = vmatpush2.msra.mxu0 0.0
    %3110 = vmatprep.subr.mxu0 0.0
    %3111 = vmatpush2.msra.mxu0 0.0
    %3112 = vmatprep.subr.mxu0 0.0
    %3113 = vmatpush2.msra.mxu0 0.0
    %3114 = vmatprep.subr.mxu0 0.0
    %3115 = vmatpush2.msra.mxu0 0.0
    %3116 = vmatprep.subr.mxu0 0.0
    %3117 = vmatpush2.msra.mxu0 0.0
    %3118 = vmatprep.subr.mxu0 0.0
    %3119 = vmatpush2.msra.mxu0 0.0
    %3120 = vmatprep.subr.mxu0 0.0
    %3121 = vmatpush2.msra.mxu0 0.0
    %3122 = vmatprep.subr.mxu0 0.0
    %3123 = vmatpush2.msra.mxu0 0.0
    %3124 = vmatprep.mubr.f32.mxu0 0.0
    %3125 = vmatmul.mubr.f32.gmra.mxu0 %v3055
    %v3126 = vpop.f32.mrf.mxu0
    %v3127 = vadd.f32 0.0, %v3126
    %v3128 = vpop.f32.mrf.mxu0
    %3129 = vmatprep.mubr.f32.mxu0 0.0
    %3130 = vmatmul.mubr.f32.gmra.mxu0 %v3058
    %v3131 = vpop.f32.mrf.mxu0
    %v3132 = vadd.f32 0.0, %v3131
    %v3133 = vpop.f32.mrf.mxu0
    %3134 = vdwg.mxu0
    %v3135 = vsel %vm1192, %v962, 0.0
    %3136 = vadd.xlane.f32.xlu0 %v3135
    %v3137 = vpop.xlane.xlu0 %3136
    %v3138 = vsel %vm1192, %v963, 0.0
    %3139 = vadd.xlane.f32.xlu0 %v3138
    %v3140 = vpop.xlane.xlu0 %3139
    %v3141 = vmin.f32 %v3137, 10.0
    %v3142 = vmin.f32 %v3140, 10.0
    %v3143 = vcvt.f32.s32.to.zero.pseudo %v3141
    %v3144 = vcvt.f32.s32.to.zero.pseudo %v3142
    %v3146 = vsel %vm1291, %v1033, 0
    %v3149 = vsel %vm1291, %v1034, 0
    %v3152 = vsel %vm1291, %v1035, 0
    %3154 = vmatprep.subr.mxu0 0.0
    %3155 = vmatpush1.msra.mxu0 0.0
    %3156 = vmatprep.subr.mxu0 0.0
    %3157 = vmatpush1.msra.mxu0 0.0
    %3158 = vmatprep.subr.mxu0 0.0
    %3159 = vmatpush1.msra.mxu0 0.0
    %3160 = vmatprep.subr.mxu0 0.0
    %3161 = vmatpush1.msra.mxu0 0.0
    %3162 = vmatprep.subr.mxu0 0.0
    %3163 = vmatpush1.msra.mxu0 0.0
    %3164 = vmatprep.subr.mxu0 0.0
    %3165 = vmatpush1.msra.mxu0 0.0
    %3166 = vmatprep.subr.mxu0 0.0
    %3167 = vmatpush1.msra.mxu0 0.0
    %3168 = vmatprep.subr.mxu0 0.0
    %3169 = vmatpush1.msra.mxu0 0.0
    %3170 = vmatprep.subr.mxu0 0.0
    %3171 = vmatpush1.msra.mxu0 0.0
    %3172 = vmatprep.subr.mxu0 0.0
    %3173 = vmatpush1.msra.mxu0 0.0
    %3174 = vmatprep.subr.mxu0 0.0
    %3175 = vmatpush1.msra.mxu0 0.0
    %3176 = vmatprep.subr.mxu0 0.0
    %3177 = vmatpush1.msra.mxu0 0.0
    %3178 = vmatprep.subr.mxu0 0.0
    %3179 = vmatpush1.msra.mxu0 0.0
    %3180 = vmatprep.subr.mxu0 0.0
    %3181 = vmatpush1.msra.mxu0 0.0
    %3182 = vmatprep.subr.mxu0 %v3149
    %3183 = vmatpush1.msra.mxu0 %v3146
    %3184 = vmatprep.subr.mxu0 %v1031
    %3185 = vmatpush1.msra.mxu0 %v1030
    %3186 = vmatprep.subr.mxu0 0.0
    %3187 = vmatpush2.msra.mxu0 0.0
    %3188 = vmatprep.subr.mxu0 0.0
    %3189 = vmatpush2.msra.mxu0 0.0
    %3190 = vmatprep.subr.mxu0 0.0
    %3191 = vmatpush2.msra.mxu0 0.0
    %3192 = vmatprep.subr.mxu0 0.0
    %3193 = vmatpush2.msra.mxu0 0.0
    %3194 = vmatprep.subr.mxu0 0.0
    %3195 = vmatpush2.msra.mxu0 0.0
    %3196 = vmatprep.subr.mxu0 0.0
    %3197 = vmatpush2.msra.mxu0 0.0
    %3198 = vmatprep.subr.mxu0 0.0
    %3199 = vmatpush2.msra.mxu0 0.0
    %3200 = vmatprep.subr.mxu0 0.0
    %3201 = vmatpush2.msra.mxu0 0.0
    %3202 = vmatprep.subr.mxu0 0.0
    %3203 = vmatpush2.msra.mxu0 0.0
    %3204 = vmatprep.subr.mxu0 0.0
    %3205 = vmatpush2.msra.mxu0 0.0
    %3206 = vmatprep.subr.mxu0 0.0
    %3207 = vmatpush2.msra.mxu0 0.0
    %3208 = vmatprep.subr.mxu0 0.0
    %3209 = vmatpush2.msra.mxu0 0.0
    %3210 = vmatprep.subr.mxu0 0.0
    %3211 = vmatpush2.msra.mxu0 0.0
    %3212 = vmatprep.subr.mxu0 0.0
    %3213 = vmatpush2.msra.mxu0 0.0
    %3214 = vmatprep.subr.mxu0 0.0
    %3215 = vmatpush2.msra.mxu0 0.0
    %3216 = vmatprep.subr.mxu0 0.0
    %3217 = vmatpush2.msra.mxu0 0.0
    %3218 = vmatprep.mubr.f32.mxu0 0.0
    %3219 = vmatmul.mubr.f32.gmra.mxu0 %v2525
    %v3220 = vpop.f32.mrf.mxu0
    %v3221 = vadd.f32 0.0, %v3220
    %v3222 = vpop.f32.mrf.mxu0
    %v3223 = vadd.f32 0.0, %v3222
    %3224 = vmatprep.mubr.f32.mxu0 0.0
    %3225 = vmatmul.mubr.f32.gmra.mxu0 %v2528
    %v3226 = vpop.f32.mrf.mxu0
    %v3227 = vadd.f32 0.0, %v3226
    %v3228 = vpop.f32.mrf.mxu0
    %v3229 = vadd.f32 0.0, %v3228
    %3230 = vdwg.mxu0
    %3231 = vmatprep.subr.mxu0 0.0
    %3232 = vmatpush1.msra.mxu0 0.0
    %3233 = vmatprep.subr.mxu0 0.0
    %3234 = vmatpush1.msra.mxu0 0.0
    %3235 = vmatprep.subr.mxu0 0.0
    %3236 = vmatpush1.msra.mxu0 0.0
    %3237 = vmatprep.subr.mxu0 0.0
    %3238 = vmatpush1.msra.mxu0 0.0
    %3239 = vmatprep.subr.mxu0 0.0
    %3240 = vmatpush1.msra.mxu0 0.0
    %3241 = vmatprep.subr.mxu0 0.0
    %3242 = vmatpush1.msra.mxu0 0.0
    %3243 = vmatprep.subr.mxu0 0.0
    %3244 = vmatpush1.msra.mxu0 0.0
    %3245 = vmatprep.subr.mxu0 0.0
    %3246 = vmatpush1.msra.mxu0 0.0
    %3247 = vmatprep.subr.mxu0 0.0
    %3248 = vmatpush1.msra.mxu0 0.0
    %3249 = vmatprep.subr.mxu0 0.0
    %3250 = vmatpush1.msra.mxu0 0.0
    %3251 = vmatprep.subr.mxu0 0.0
    %3252 = vmatpush1.msra.mxu0 0.0
    %3253 = vmatprep.subr.mxu0 0.0
    %3254 = vmatpush1.msra.mxu0 0.0
    %3255 = vmatprep.subr.mxu0 0.0
    %3256 = vmatpush1.msra.mxu0 0.0
    %3257 = vmatprep.subr.mxu0 0.0
    %3258 = vmatpush1.msra.mxu0 0.0
    %3259 = vmatprep.subr.mxu0 0.0
    %3260 = vmatpush1.msra.mxu0 %v3152
    %3261 = vmatprep.subr.mxu0 0.0
    %3262 = vmatpush1.msra.mxu0 %v1032
    %3263 = vmatprep.subr.mxu0 0.0
    %3264 = vmatpush2.msra.mxu0 0.0
    %3265 = vmatprep.subr.mxu0 0.0
    %3266 = vmatpush2.msra.mxu0 0.0
    %3267 = vmatprep.subr.mxu0 0.0
    %3268 = vmatpush2.msra.mxu0 0.0
    %3269 = vmatprep.subr.mxu0 0.0
    %3270 = vmatpush2.msra.mxu0 0.0
    %3271 = vmatprep.subr.mxu0 0.0
    %3272 = vmatpush2.msra.mxu0 0.0
    %3273 = vmatprep.subr.mxu0 0.0
    %3274 = vmatpush2.msra.mxu0 0.0
    %3275 = vmatprep.subr.mxu0 0.0
    %3276 = vmatpush2.msra.mxu0 0.0
    %3277 = vmatprep.subr.mxu0 0.0
    %3278 = vmatpush2.msra.mxu0 0.0
    %3279 = vmatprep.subr.mxu0 0.0
    %3280 = vmatpush2.msra.mxu0 0.0
    %3281 = vmatprep.subr.mxu0 0.0
    %3282 = vmatpush2.msra.mxu0 0.0
    %3283 = vmatprep.subr.mxu0 0.0
    %3284 = vmatpush2.msra.mxu0 0.0
    %3285 = vmatprep.subr.mxu0 0.0
    %3286 = vmatpush2.msra.mxu0 0.0
    %3287 = vmatprep.subr.mxu0 0.0
    %3288 = vmatpush2.msra.mxu0 0.0
    %3289 = vmatprep.subr.mxu0 0.0
    %3290 = vmatpush2.msra.mxu0 0.0
    %3291 = vmatprep.subr.mxu0 0.0
    %3292 = vmatpush2.msra.mxu0 0.0
    %3293 = vmatprep.subr.mxu0 0.0
    %3294 = vmatpush2.msra.mxu0 0.0
    %3295 = vmatprep.mubr.f32.mxu0 0.0
    %3296 = vmatmul.mubr.f32.gmra.mxu0 %v2525
    %v3297 = vpop.f32.mrf.mxu0
    %v3298 = vadd.f32 0.0, %v3297
    %v3299 = vpop.f32.mrf.mxu0
    %3300 = vmatprep.mubr.f32.mxu0 0.0
    %3301 = vmatmul.mubr.f32.gmra.mxu0 %v2528
    %v3302 = vpop.f32.mrf.mxu0
    %v3303 = vadd.f32 0.0, %v3302
    %v3304 = vpop.f32.mrf.mxu0
    %3305 = vdwg.mxu0
    %v3307 = vsel %vm1284, %v3127, 0
    %v3310 = vsel %vm1284, %v3132, 0
    %v3313 = vsel %vm1291, %v1027, 0
    %v3316 = vsel %vm1291, %v1028, 0
    %v3319 = vsel %vm1291, %v1029, 0
    %3321 = vmatprep.subr.mxu0 0.0
    %3322 = vmatpush1.msra.mxu0 0.0
    %3323 = vmatprep.subr.mxu0 0.0
    %3324 = vmatpush1.msra.mxu0 0.0
    %3325 = vmatprep.subr.mxu0 0.0
    %3326 = vmatpush1.msra.mxu0 0.0
    %3327 = vmatprep.subr.mxu0 0.0
    %3328 = vmatpush1.msra.mxu0 0.0
    %3329 = vmatprep.subr.mxu0 0.0
    %3330 = vmatpush1.msra.mxu0 0.0
    %3331 = vmatprep.subr.mxu0 0.0
    %3332 = vmatpush1.msra.mxu0 0.0
    %3333 = vmatprep.subr.mxu0 0.0
    %3334 = vmatpush1.msra.mxu0 0.0
    %3335 = vmatprep.subr.mxu0 0.0
    %3336 = vmatpush1.msra.mxu0 0.0
    %3337 = vmatprep.subr.mxu0 0.0
    %3338 = vmatpush1.msra.mxu0 0.0
    %3339 = vmatprep.subr.mxu0 0.0
    %3340 = vmatpush1.msra.mxu0 0.0
    %3341 = vmatprep.subr.mxu0 0.0
    %3342 = vmatpush1.msra.mxu0 0.0
    %3343 = vmatprep.subr.mxu0 0.0
    %3344 = vmatpush1.msra.mxu0 0.0
    %3345 = vmatprep.subr.mxu0 0.0
    %3346 = vmatpush1.msra.mxu0 0.0
    %3347 = vmatprep.subr.mxu0 0.0
    %3348 = vmatpush1.msra.mxu0 0.0
    %3349 = vmatprep.subr.mxu0 %v3316
    %3350 = vmatpush1.msra.mxu0 %v3313
    %3351 = vmatprep.subr.mxu0 %v1025
    %3352 = vmatpush1.msra.mxu0 %v1024
    %3353 = vmatprep.subr.mxu0 0.0
    %3354 = vmatpush2.msra.mxu0 0.0
    %3355 = vmatprep.subr.mxu0 0.0
    %3356 = vmatpush2.msra.mxu0 0.0
    %3357 = vmatprep.subr.mxu0 0.0
    %3358 = vmatpush2.msra.mxu0 0.0
    %3359 = vmatprep.subr.mxu0 0.0
    %3360 = vmatpush2.msra.mxu0 0.0
    %3361 = vmatprep.subr.mxu0 0.0
    %3362 = vmatpush2.msra.mxu0 0.0
    %3363 = vmatprep.subr.mxu0 0.0
    %3364 = vmatpush2.msra.mxu0 0.0
    %3365 = vmatprep.subr.mxu0 0.0
    %3366 = vmatpush2.msra.mxu0 0.0
    %3367 = vmatprep.subr.mxu0 0.0
    %3368 = vmatpush2.msra.mxu0 0.0
    %3369 = vmatprep.subr.mxu0 0.0
    %3370 = vmatpush2.msra.mxu0 0.0
    %3371 = vmatprep.subr.mxu0 0.0
    %3372 = vmatpush2.msra.mxu0 0.0
    %3373 = vmatprep.subr.mxu0 0.0
    %3374 = vmatpush2.msra.mxu0 0.0
    %3375 = vmatprep.subr.mxu0 0.0
    %3376 = vmatpush2.msra.mxu0 0.0
    %3377 = vmatprep.subr.mxu0 0.0
    %3378 = vmatpush2.msra.mxu0 0.0
    %3379 = vmatprep.subr.mxu0 0.0
    %3380 = vmatpush2.msra.mxu0 0.0
    %3381 = vmatprep.subr.mxu0 0.0
    %3382 = vmatpush2.msra.mxu0 0.0
    %3383 = vmatprep.subr.mxu0 0.0
    %3384 = vmatpush2.msra.mxu0 0.0
    %3385 = vmatprep.mubr.f32.mxu0 0.0
    %3386 = vmatmul.mubr.f32.gmra.mxu0 %v3307
    %v3387 = vpop.f32.mrf.mxu0
    %v3388 = vadd.f32 %v3221, %v3387
    %v3389 = vpop.f32.mrf.mxu0
    %v3390 = vadd.f32 %v3223, %v3389
    %3391 = vmatprep.mubr.f32.mxu0 0.0
    %3392 = vmatmul.mubr.f32.gmra.mxu0 %v3310
    %v3393 = vpop.f32.mrf.mxu0
    %v3394 = vadd.f32 %v3227, %v3393
    %v3395 = vpop.f32.mrf.mxu0
    %v3396 = vadd.f32 %v3229, %v3395
    %3397 = vdwg.mxu0
    %3398 = vmatprep.subr.mxu0 0.0
    %3399 = vmatpush1.msra.mxu0 0.0
    %3400 = vmatprep.subr.mxu0 0.0
    %3401 = vmatpush1.msra.mxu0 0.0
    %3402 = vmatprep.subr.mxu0 0.0
    %3403 = vmatpush1.msra.mxu0 0.0
    %3404 = vmatprep.subr.mxu0 0.0
    %3405 = vmatpush1.msra.mxu0 0.0
    %3406 = vmatprep.subr.mxu0 0.0
    %3407 = vmatpush1.msra.mxu0 0.0
    %3408 = vmatprep.subr.mxu0 0.0
    %3409 = vmatpush1.msra.mxu0 0.0
    %3410 = vmatprep.subr.mxu0 0.0
    %3411 = vmatpush1.msra.mxu0 0.0
    %3412 = vmatprep.subr.mxu0 0.0
    %3413 = vmatpush1.msra.mxu0 0.0
    %3414 = vmatprep.subr.mxu0 0.0
    %3415 = vmatpush1.msra.mxu0 0.0
    %3416 = vmatprep.subr.mxu0 0.0
    %3417 = vmatpush1.msra.mxu0 0.0
    %3418 = vmatprep.subr.mxu0 0.0
    %3419 = vmatpush1.msra.mxu0 0.0
    %3420 = vmatprep.subr.mxu0 0.0
    %3421 = vmatpush1.msra.mxu0 0.0
    %3422 = vmatprep.subr.mxu0 0.0
    %3423 = vmatpush1.msra.mxu0 0.0
    %3424 = vmatprep.subr.mxu0 0.0
    %3425 = vmatpush1.msra.mxu0 0.0
    %3426 = vmatprep.subr.mxu0 0.0
    %3427 = vmatpush1.msra.mxu0 %v3319
    %3428 = vmatprep.subr.mxu0 0.0
    %3429 = vmatpush1.msra.mxu0 %v1026
    %3430 = vmatprep.subr.mxu0 0.0
    %3431 = vmatpush2.msra.mxu0 0.0
    %3432 = vmatprep.subr.mxu0 0.0
    %3433 = vmatpush2.msra.mxu0 0.0
    %3434 = vmatprep.subr.mxu0 0.0
    %3435 = vmatpush2.msra.mxu0 0.0
    %3436 = vmatprep.subr.mxu0 0.0
    %3437 = vmatpush2.msra.mxu0 0.0
    %3438 = vmatprep.subr.mxu0 0.0
    %3439 = vmatpush2.msra.mxu0 0.0
    %3440 = vmatprep.subr.mxu0 0.0
    %3441 = vmatpush2.msra.mxu0 0.0
    %3442 = vmatprep.subr.mxu0 0.0
    %3443 = vmatpush2.msra.mxu0 0.0
    %3444 = vmatprep.subr.mxu0 0.0
    %3445 = vmatpush2.msra.mxu0 0.0
    %3446 = vmatprep.subr.mxu0 0.0
    %3447 = vmatpush2.msra.mxu0 0.0
    %3448 = vmatprep.subr.mxu0 0.0
    %3449 = vmatpush2.msra.mxu0 0.0
    %3450 = vmatprep.subr.mxu0 0.0
    %3451 = vmatpush2.msra.mxu0 0.0
    %3452 = vmatprep.subr.mxu0 0.0
    %3453 = vmatpush2.msra.mxu0 0.0
    %3454 = vmatprep.subr.mxu0 0.0
    %3455 = vmatpush2.msra.mxu0 0.0
    %3456 = vmatprep.subr.mxu0 0.0
    %3457 = vmatpush2.msra.mxu0 0.0
    %3458 = vmatprep.subr.mxu0 0.0
    %3459 = vmatpush2.msra.mxu0 0.0
    %3460 = vmatprep.subr.mxu0 0.0
    %3461 = vmatpush2.msra.mxu0 0.0
    %3462 = vmatprep.mubr.f32.mxu0 0.0
    %3463 = vmatmul.mubr.f32.gmra.mxu0 %v3307
    %v3464 = vpop.f32.mrf.mxu0
    %v3465 = vadd.f32 %v3298, %v3464
    %v3466 = vpop.f32.mrf.mxu0
    %3467 = vmatprep.mubr.f32.mxu0 0.0
    %3468 = vmatmul.mubr.f32.gmra.mxu0 %v3310
    %v3469 = vpop.f32.mrf.mxu0
    %v3470 = vadd.f32 %v3303, %v3469
    %v3471 = vpop.f32.mrf.mxu0
    %3472 = vdwg.mxu0
    %v3474 = vlaneseq
    %v3475 = vshrl.u32 %v3474, 7
    %v3476 = vsub.s32 0, %v3475
    %v3477 = vrot.slane %v1023, %v3476
    %v3478 = vlaneseq
    %v3479 = vshrl.u32 %v3478, 7
    %v3480 = vsub.s32 1, %v3479
    %v3481 = vrot.slane %v1023, %v3480
    %v3482 = vlaneseq
    %v3483 = vshrl.u32 %v3482, 7
    %v3484 = vsub.s32 2, %v3483
    %v3485 = vrot.slane %v1023, %v3484
    %v3489 = vadd.f32 %v3388, %v3477
    %v3490 = vadd.f32 %v3390, %v3481
    %v3491 = vadd.f32 %v3465, %v3485
    %v3492 = vadd.f32 %v3394, %v3477
    %v3493 = vadd.f32 %v3396, %v3481
    %v3494 = vadd.f32 %v3470, %v3485
    %vm3495 = vcmp.eq.s32.totalorder %v3143, 0
    %vm3496 = vcmp.eq.s32.totalorder %v3144, 0
    %v3497 = vsel %vm3495, 1, 0
    %v3498 = vsel %vm3496, 1, 0
    %vm3499 = vcmp.eq.s32.totalorder %v3497, 1
    %vm3500 = vcmp.eq.s32.totalorder %v3498, 1
    %v3501 = vsel %vm3499, %v3489, 0.0
    %v3502 = vsel %vm3500, %v3492, 0.0
    %v3503 = vadd.f32 %v3501, 0.0
    %v3504 = vadd.f32 %v3502, 0.0
    %vm3505 = vcmp.eq.s32.totalorder %v3143, 1
    %vm3506 = vcmp.eq.s32.totalorder %v3144, 1
    %v3507 = vsel %vm3505, 1, 0
    %v3508 = vsel %vm3506, 1, 0
    %vm3509 = vcmp.eq.s32.totalorder %v3507, 1
    %vm3510 = vcmp.eq.s32.totalorder %v3508, 1
    %v3511 = vsel %vm3509, %v3489, 0.0
    %v3512 = vsel %vm3510, %v3492, 0.0
    %3515 = vrot.lane.b32.xlu0 %v3511, 96
    %v3516 = vpop.permute.xlu0 %3515
    %3517 = vrot.lane.b32.xlu0 %v3512, 96
    %v3518 = vpop.permute.xlu0 %3517
    %v3521 = vadd.f32 %v3503, %v3516
    %v3522 = vadd.f32 %v3504, %v3518
    %vm3523 = vcmp.eq.s32.totalorder %v3143, 2
    %vm3524 = vcmp.eq.s32.totalorder %v3144, 2
    %v3525 = vsel %vm3523, 1, 0
    %v3526 = vsel %vm3524, 1, 0
    %vm3527 = vcmp.eq.s32.totalorder %v3525, 1
    %vm3528 = vcmp.eq.s32.totalorder %v3526, 1
    %v3529 = vsel %vm3527, %v3489, 0.0
    %v3530 = vsel %vm3528, %v3492, 0.0
    %3533 = vrot.lane.b32.xlu0 %v3529, 64
    %v3534 = vpop.permute.xlu0 %3533
    %3535 = vrot.lane.b32.xlu0 %v3530, 64
    %v3536 = vpop.permute.xlu0 %3535
    %v3539 = vadd.f32 %v3521, %v3534
    %v3540 = vadd.f32 %v3522, %v3536
    %vm3541 = vcmp.eq.s32.totalorder %v3143, 3
    %vm3542 = vcmp.eq.s32.totalorder %v3144, 3
    %v3543 = vsel %vm3541, 1, 0
    %v3544 = vsel %vm3542, 1, 0
    %vm3545 = vcmp.eq.s32.totalorder %v3543, 1
    %vm3546 = vcmp.eq.s32.totalorder %v3544, 1
    %v3547 = vsel %vm3545, %v3489, 0.0
    %v3548 = vsel %vm3546, %v3492, 0.0
    %3551 = vrot.lane.b32.xlu0 %v3547, 32
    %v3552 = vpop.permute.xlu0 %3551
    %3553 = vrot.lane.b32.xlu0 %v3548, 32
    %v3554 = vpop.permute.xlu0 %3553
    %v3557 = vadd.f32 %v3539, %v3552
    %v3558 = vadd.f32 %v3540, %v3554
    %vm3559 = vcmp.eq.s32.totalorder %v3143, 4
    %vm3560 = vcmp.eq.s32.totalorder %v3144, 4
    %v3561 = vsel %vm3559, 1, 0
    %v3562 = vsel %vm3560, 1, 0
    %vm3563 = vcmp.eq.s32.totalorder %v3561, 1
    %vm3564 = vcmp.eq.s32.totalorder %v3562, 1
    %v3565 = vsel %vm3563, %v3490, 0.0
    %v3566 = vsel %vm3564, %v3493, 0.0
    %v3567 = vadd.f32 %v3557, %v3565
    %v3568 = vadd.f32 %v3558, %v3566
    %vm3569 = vcmp.eq.s32.totalorder %v3143, 5
    %vm3570 = vcmp.eq.s32.totalorder %v3144, 5
    %v3571 = vsel %vm3569, 1, 0
    %v3572 = vsel %vm3570, 1, 0
    %vm3573 = vcmp.eq.s32.totalorder %v3571, 1
    %vm3574 = vcmp.eq.s32.totalorder %v3572, 1
    %v3575 = vsel %vm3573, %v3490, 0.0
    %v3576 = vsel %vm3574, %v3493, 0.0
    %3579 = vrot.lane.b32.xlu0 %v3575, 96
    %v3580 = vpop.permute.xlu0 %3579
    %3581 = vrot.lane.b32.xlu0 %v3576, 96
    %v3582 = vpop.permute.xlu0 %3581
    %v3585 = vadd.f32 %v3567, %v3580
    %v3586 = vadd.f32 %v3568, %v3582
    %vm3587 = vcmp.eq.s32.totalorder %v3143, 6
    %vm3588 = vcmp.eq.s32.totalorder %v3144, 6
    %v3589 = vsel %vm3587, 1, 0
    %v3590 = vsel %vm3588, 1, 0
    %vm3591 = vcmp.eq.s32.totalorder %v3589, 1
    %vm3592 = vcmp.eq.s32.totalorder %v3590, 1
    %v3593 = vsel %vm3591, %v3490, 0.0
    %v3594 = vsel %vm3592, %v3493, 0.0
    %3597 = vrot.lane.b32.xlu0 %v3593, 64
    %v3598 = vpop.permute.xlu0 %3597
    %3599 = vrot.lane.b32.xlu0 %v3594, 64
    %v3600 = vpop.permute.xlu0 %3599
    %v3603 = vadd.f32 %v3585, %v3598
    %v3604 = vadd.f32 %v3586, %v3600
    %vm3605 = vcmp.eq.s32.totalorder %v3143, 7
    %vm3606 = vcmp.eq.s32.totalorder %v3144, 7
    %v3607 = vsel %vm3605, 1, 0
    %v3608 = vsel %vm3606, 1, 0
    %vm3609 = vcmp.eq.s32.totalorder %v3607, 1
    %vm3610 = vcmp.eq.s32.totalorder %v3608, 1
    %v3611 = vsel %vm3609, %v3490, 0.0
    %v3612 = vsel %vm3610, %v3493, 0.0
    %3615 = vrot.lane.b32.xlu0 %v3611, 32
    %v3616 = vpop.permute.xlu0 %3615
    %3617 = vrot.lane.b32.xlu0 %v3612, 32
    %v3618 = vpop.permute.xlu0 %3617
    %v3621 = vadd.f32 %v3603, %v3616
    %v3622 = vadd.f32 %v3604, %v3618
    %vm3623 = vcmp.eq.s32.totalorder %v3143, 8
    %vm3624 = vcmp.eq.s32.totalorder %v3144, 8
    %v3625 = vsel %vm3623, 1, 0
    %v3626 = vsel %vm3624, 1, 0
    %vm3627 = vcmp.eq.s32.totalorder %v3625, 1
    %vm3628 = vcmp.eq.s32.totalorder %v3626, 1
    %v3629 = vsel %vm3627, %v3491, 0.0
    %v3630 = vsel %vm3628, %v3494, 0.0
    %v3631 = vadd.f32 %v3621, %v3629
    %v3632 = vadd.f32 %v3622, %v3630
    %vm3633 = vcmp.eq.s32.totalorder %v3143, 9
    %vm3634 = vcmp.eq.s32.totalorder %v3144, 9
    %v3635 = vsel %vm3633, 1, 0
    %v3636 = vsel %vm3634, 1, 0
    %vm3637 = vcmp.eq.s32.totalorder %v3635, 1
    %vm3638 = vcmp.eq.s32.totalorder %v3636, 1
    %v3639 = vsel %vm3637, %v3491, 0.0
    %v3640 = vsel %vm3638, %v3494, 0.0
    %3643 = vrot.lane.b32.xlu0 %v3639, 96
    %v3644 = vpop.permute.xlu0 %3643
    %3645 = vrot.lane.b32.xlu0 %v3640, 96
    %v3646 = vpop.permute.xlu0 %3645
    %v3649 = vadd.f32 %v3631, %v3644
    %v3650 = vadd.f32 %v3632, %v3646
    %vm3651 = vcmp.eq.s32.totalorder %v3143, 10
    %vm3652 = vcmp.eq.s32.totalorder %v3144, 10
    %v3653 = vsel %vm3651, 1, 0
    %v3654 = vsel %vm3652, 1, 0
    %vm3655 = vcmp.eq.s32.totalorder %v3653, 1
    %vm3656 = vcmp.eq.s32.totalorder %v3654, 1
    %v3657 = vsel %vm3655, %v3491, 0.0
    %v3658 = vsel %vm3656, %v3494, 0.0
    %3661 = vrot.lane.b32.xlu0 %v3657, 64
    %v3662 = vpop.permute.xlu0 %3661
    %3663 = vrot.lane.b32.xlu0 %v3658, 64
    %v3664 = vpop.permute.xlu0 %3663
    %v3667 = vadd.f32 %v3649, %v3662
    %v3668 = vadd.f32 %v3650, %v3664
    %v3669 = vadd.f32 %v3052, %v3667
    %v3670 = vadd.f32 %v3053, %v3668
    %v3672 = vlaneseq
    %v3673 = vshrl.u32 %v3672, 7
    %v3674 = vsub.s32 0, %v3673
    %v3675 = vrot.slane %v1051, %v3674
    %vm3677 = vcmask 48128
    %v3679 = vsel %vm3677, %v1189, 0
    %vm3681 = vcmask 1045504
    %v3683 = vsel %vm3681, %v1056, 0
    %3685 = vmatprep.subr.mxu0 0.0
    %3686 = vmatpush1.msra.mxu0 0.0
    %3687 = vmatprep.subr.mxu0 0.0
    %3688 = vmatpush1.msra.mxu0 0.0
    %3689 = vmatprep.subr.mxu0 0.0
    %3690 = vmatpush1.msra.mxu0 0.0
    %3691 = vmatprep.subr.mxu0 0.0
    %3692 = vmatpush1.msra.mxu0 0.0
    %3693 = vmatprep.subr.mxu0 0.0
    %3694 = vmatpush1.msra.mxu0 0.0
    %3695 = vmatprep.subr.mxu0 0.0
    %3696 = vmatpush1.msra.mxu0 0.0
    %3697 = vmatprep.subr.mxu0 0.0
    %3698 = vmatpush1.msra.mxu0 0.0
    %3699 = vmatprep.subr.mxu0 0.0
    %3700 = vmatpush1.msra.mxu0 0.0
    %3701 = vmatprep.subr.mxu0 0.0
    %3702 = vmatpush1.msra.mxu0 0.0
    %3703 = vmatprep.subr.mxu0 0.0
    %3704 = vmatpush1.msra.mxu0 0.0
    %3705 = vmatprep.subr.mxu0 0.0
    %3706 = vmatpush1.msra.mxu0 0.0
    %3707 = vmatprep.subr.mxu0 0.0
    %3708 = vmatpush1.msra.mxu0 0.0
    %3709 = vmatprep.subr.mxu0 0.0
    %3710 = vmatpush1.msra.mxu0 0.0
    %3711 = vmatprep.subr.mxu0 0.0
    %3712 = vmatpush1.msra.mxu0 0.0
    %3713 = vmatprep.subr.mxu0 0.0
    %3714 = vmatpush1.msra.mxu0 0.0
    %3715 = vmatprep.subr.mxu0 0.0
    %3716 = vmatpush1.msra.mxu0 %v3683
    %3717 = vmatprep.subr.mxu0 0.0
    %3718 = vmatpush2.msra.mxu0 0.0
    %3719 = vmatprep.subr.mxu0 0.0
    %3720 = vmatpush2.msra.mxu0 0.0
    %3721 = vmatprep.subr.mxu0 0.0
    %3722 = vmatpush2.msra.mxu0 0.0
    %3723 = vmatprep.subr.mxu0 0.0
    %3724 = vmatpush2.msra.mxu0 0.0
    %3725 = vmatprep.subr.mxu0 0.0
    %3726 = vmatpush2.msra.mxu0 0.0
    %3727 = vmatprep.subr.mxu0 0.0
    %3728 = vmatpush2.msra.mxu0 0.0
    %3729 = vmatprep.subr.mxu0 0.0
    %3730 = vmatpush2.msra.mxu0 0.0
    %3731 = vmatprep.subr.mxu0 0.0
    %3732 = vmatpush2.msra.mxu0 0.0
    %3733 = vmatprep.subr.mxu0 0.0
    %3734 = vmatpush2.msra.mxu0 0.0
    %3735 = vmatprep.subr.mxu0 0.0
    %3736 = vmatpush2.msra.mxu0 0.0
    %3737 = vmatprep.subr.mxu0 0.0
    %3738 = vmatpush2.msra.mxu0 0.0
    %3739 = vmatprep.subr.mxu0 0.0
    %3740 = vmatpush2.msra.mxu0 0.0
    %3741 = vmatprep.subr.mxu0 0.0
    %3742 = vmatpush2.msra.mxu0 0.0
    %3743 = vmatprep.subr.mxu0 0.0
    %3744 = vmatpush2.msra.mxu0 0.0
    %3745 = vmatprep.subr.mxu0 0.0
    %3746 = vmatpush2.msra.mxu0 0.0
    %3747 = vmatprep.subr.mxu0 0.0
    %3748 = vmatpush2.msra.mxu0 0.0
    %3749 = vmatprep.mubr.f32.mxu0 0.0
    %3750 = vmatmul.mubr.f32.gmra.mxu0 %v3679
    %v3751 = vpop.f32.mrf.mxu0
    %v3752 = vadd.f32 %v3675, %v3751
    %v3753 = vpop.f32.mrf.mxu0
    %3754 = vdwg.mxu0
    %v3756 = vlaneseq
    %v3757 = vshrl.u32 %v3756, 7
    %v3758 = vsub.s32 0, %v3757
    %v3759 = vrot.slane %v1049, %v3758
    %v3762 = vsel %vm1291, %v1053, 0
    %3764 = vmatprep.subr.mxu0 0.0
    %3765 = vmatpush1.msra.mxu0 0.0
    %3766 = vmatprep.subr.mxu0 0.0
    %3767 = vmatpush1.msra.mxu0 0.0
    %3768 = vmatprep.subr.mxu0 0.0
    %3769 = vmatpush1.msra.mxu0 0.0
    %3770 = vmatprep.subr.mxu0 0.0
    %3771 = vmatpush1.msra.mxu0 0.0
    %3772 = vmatprep.subr.mxu0 0.0
    %3773 = vmatpush1.msra.mxu0 0.0
    %3774 = vmatprep.subr.mxu0 0.0
    %3775 = vmatpush1.msra.mxu0 0.0
    %3776 = vmatprep.subr.mxu0 0.0
    %3777 = vmatpush1.msra.mxu0 0.0
    %3778 = vmatprep.subr.mxu0 0.0
    %3779 = vmatpush1.msra.mxu0 0.0
    %3780 = vmatprep.subr.mxu0 0.0
    %3781 = vmatpush1.msra.mxu0 0.0
    %3782 = vmatprep.subr.mxu0 0.0
    %3783 = vmatpush1.msra.mxu0 0.0
    %3784 = vmatprep.subr.mxu0 0.0
    %3785 = vmatpush1.msra.mxu0 0.0
    %3786 = vmatprep.subr.mxu0 0.0
    %3787 = vmatpush1.msra.mxu0 0.0
    %3788 = vmatprep.subr.mxu0 0.0
    %3789 = vmatpush1.msra.mxu0 0.0
    %3790 = vmatprep.subr.mxu0 0.0
    %3791 = vmatpush1.msra.mxu0 0.0
    %3792 = vmatprep.subr.mxu0 0.0
    %3793 = vmatpush1.msra.mxu0 %v3762
    %3794 = vmatprep.subr.mxu0 0.0
    %3795 = vmatpush1.msra.mxu0 %v1052
    %3796 = vmatprep.subr.mxu0 0.0
    %3797 = vmatpush2.msra.mxu0 0.0
    %3798 = vmatprep.subr.mxu0 0.0
    %3799 = vmatpush2.msra.mxu0 0.0
    %3800 = vmatprep.subr.mxu0 0.0
    %3801 = vmatpush2.msra.mxu0 0.0
    %3802 = vmatprep.subr.mxu0 0.0
    %3803 = vmatpush2.msra.mxu0 0.0
    %3804 = vmatprep.subr.mxu0 0.0
    %3805 = vmatpush2.msra.mxu0 0.0
    %3806 = vmatprep.subr.mxu0 0.0
    %3807 = vmatpush2.msra.mxu0 0.0
    %3808 = vmatprep.subr.mxu0 0.0
    %3809 = vmatpush2.msra.mxu0 0.0
    %3810 = vmatprep.subr.mxu0 0.0
    %3811 = vmatpush2.msra.mxu0 0.0
    %3812 = vmatprep.subr.mxu0 0.0
    %3813 = vmatpush2.msra.mxu0 0.0
    %3814 = vmatprep.subr.mxu0 0.0
    %3815 = vmatpush2.msra.mxu0 0.0
    %3816 = vmatprep.subr.mxu0 0.0
    %3817 = vmatpush2.msra.mxu0 0.0
    %3818 = vmatprep.subr.mxu0 0.0
    %3819 = vmatpush2.msra.mxu0 0.0
    %3820 = vmatprep.subr.mxu0 0.0
    %3821 = vmatpush2.msra.mxu0 0.0
    %3822 = vmatprep.subr.mxu0 0.0
    %3823 = vmatpush2.msra.mxu0 0.0
    %3824 = vmatprep.subr.mxu0 0.0
    %3825 = vmatpush2.msra.mxu0 0.0
    %3826 = vmatprep.subr.mxu0 0.0
    %3827 = vmatpush2.msra.mxu0 0.0
    %3828 = vmatprep.mubr.f32.mxu0 0.0
    %3829 = vmatmul.mubr.f32.gmra.mxu0 %v2525
    %v3830 = vpop.f32.mrf.mxu0
    %v3831 = vadd.f32 %v3759, %v3830
    %v3832 = vpop.f32.mrf.mxu0
    %3833 = vmatprep.mubr.f32.mxu0 0.0
    %3834 = vmatmul.mubr.f32.gmra.mxu0 %v2528
    %v3835 = vpop.f32.mrf.mxu0
    %v3836 = vadd.f32 %v3759, %v3835
    %v3837 = vpop.f32.mrf.mxu0
    %3838 = vdwg.mxu0
    %v3840 = vlaneseq
    %v3841 = vshrl.u32 %v3840, 7
    %v3842 = vsub.s32 0, %v3841
    %v3843 = vrot.slane %v1050, %v3842
    %v3846 = vsel %vm1291, %v1055, 0
    %3848 = vmatprep.subr.mxu0 0.0
    %3849 = vmatpush1.msra.mxu0 0.0
    %3850 = vmatprep.subr.mxu0 0.0
    %3851 = vmatpush1.msra.mxu0 0.0
    %3852 = vmatprep.subr.mxu0 0.0
    %3853 = vmatpush1.msra.mxu0 0.0
    %3854 = vmatprep.subr.mxu0 0.0
    %3855 = vmatpush1.msra.mxu0 0.0
    %3856 = vmatprep.subr.mxu0 0.0
    %3857 = vmatpush1.msra.mxu0 0.0
    %3858 = vmatprep.subr.mxu0 0.0
    %3859 = vmatpush1.msra.mxu0 0.0
    %3860 = vmatprep.subr.mxu0 0.0
    %3861 = vmatpush1.msra.mxu0 0.0
    %3862 = vmatprep.subr.mxu0 0.0
    %3863 = vmatpush1.msra.mxu0 0.0
    %3864 = vmatprep.subr.mxu0 0.0
    %3865 = vmatpush1.msra.mxu0 0.0
    %3866 = vmatprep.subr.mxu0 0.0
    %3867 = vmatpush1.msra.mxu0 0.0
    %3868 = vmatprep.subr.mxu0 0.0
    %3869 = vmatpush1.msra.mxu0 0.0
    %3870 = vmatprep.subr.mxu0 0.0
    %3871 = vmatpush1.msra.mxu0 0.0
    %3872 = vmatprep.subr.mxu0 0.0
    %3873 = vmatpush1.msra.mxu0 0.0
    %3874 = vmatprep.subr.mxu0 0.0
    %3875 = vmatpush1.msra.mxu0 0.0
    %3876 = vmatprep.subr.mxu0 0.0
    %3877 = vmatpush1.msra.mxu0 %v3846
    %3878 = vmatprep.subr.mxu0 0.0
    %3879 = vmatpush1.msra.mxu0 %v1054
    %3880 = vmatprep.subr.mxu0 0.0
    %3881 = vmatpush2.msra.mxu0 0.0
    %3882 = vmatprep.subr.mxu0 0.0
    %3883 = vmatpush2.msra.mxu0 0.0
    %3884 = vmatprep.subr.mxu0 0.0
    %3885 = vmatpush2.msra.mxu0 0.0
    %3886 = vmatprep.subr.mxu0 0.0
    %3887 = vmatpush2.msra.mxu0 0.0
    %3888 = vmatprep.subr.mxu0 0.0
    %3889 = vmatpush2.msra.mxu0 0.0
    %3890 = vmatprep.subr.mxu0 0.0
    %3891 = vmatpush2.msra.mxu0 0.0
    %3892 = vmatprep.subr.mxu0 0.0
    %3893 = vmatpush2.msra.mxu0 0.0
    %3894 = vmatprep.subr.mxu0 0.0
    %3895 = vmatpush2.msra.mxu0 0.0
    %3896 = vmatprep.subr.mxu0 0.0
    %3897 = vmatpush2.msra.mxu0 0.0
    %3898 = vmatprep.subr.mxu0 0.0
    %3899 = vmatpush2.msra.mxu0 0.0
    %3900 = vmatprep.subr.mxu0 0.0
    %3901 = vmatpush2.msra.mxu0 0.0
    %3902 = vmatprep.subr.mxu0 0.0
    %3903 = vmatpush2.msra.mxu0 0.0
    %3904 = vmatprep.subr.mxu0 0.0
    %3905 = vmatpush2.msra.mxu0 0.0
    %3906 = vmatprep.subr.mxu0 0.0
    %3907 = vmatpush2.msra.mxu0 0.0
    %3908 = vmatprep.subr.mxu0 0.0
    %3909 = vmatpush2.msra.mxu0 0.0
    %3910 = vmatprep.subr.mxu0 0.0
    %3911 = vmatpush2.msra.mxu0 0.0
    %3912 = vmatprep.mubr.f32.mxu0 0.0
    %3913 = vmatmul.mubr.f32.gmra.mxu0 %v1286
    %v3914 = vpop.f32.mrf.mxu0
    %v3915 = vadd.f32 %v3843, %v3914
    %v3916 = vpop.f32.mrf.mxu0
    %3917 = vmatprep.mubr.f32.mxu0 0.0
    %3918 = vmatmul.mubr.f32.gmra.mxu0 %v1289
    %v3919 = vpop.f32.mrf.mxu0
    %v3920 = vadd.f32 %v3843, %v3919
    %v3921 = vpop.f32.mrf.mxu0
    %3922 = vdwg.mxu0
    %vm3923 = vcmask 261120
    %v3925 = vsel %vm3923, %v3752, 0
    %v3928 = vsel %vm3923, %v3831, 0
    %v3931 = vsel %vm3923, %v3836, 0
    %3933 = vmatprep.subr.mxu0 0.0
    %3934 = vmatpush1.xpose.msra.mxu0 0.0
    %3935 = vmatprep.subr.mxu0 0.0
    %3936 = vmatpush1.xpose.msra.mxu0 0.0
    %3937 = vmatprep.subr.mxu0 0.0
    %3938 = vmatpush1.xpose.msra.mxu0 0.0
    %3939 = vmatprep.subr.mxu0 0.0
    %3940 = vmatpush1.xpose.msra.mxu0 0.0
    %3941 = vmatprep.subr.mxu0 0.0
    %3942 = vmatpush1.xpose.msra.mxu0 0.0
    %3943 = vmatprep.subr.mxu0 0.0
    %3944 = vmatpush1.xpose.msra.mxu0 0.0
    %3945 = vmatprep.subr.mxu0 0.0
    %3946 = vmatpush1.xpose.msra.mxu0 0.0
    %3947 = vmatprep.subr.mxu0 0.0
    %3948 = vmatpush1.xpose.msra.mxu0 0.0
    %3949 = vmatprep.subr.mxu0 0.0
    %3950 = vmatpush1.xpose.msra.mxu0 0.0
    %3951 = vmatprep.subr.mxu0 0.0
    %3952 = vmatpush1.xpose.msra.mxu0 0.0
    %3953 = vmatprep.subr.mxu0 0.0
    %3954 = vmatpush1.xpose.msra.mxu0 0.0
    %3955 = vmatprep.subr.mxu0 0.0
    %3956 = vmatpush1.xpose.msra.mxu0 0.0
    %3957 = vmatprep.subr.mxu0 0.0
    %3958 = vmatpush1.xpose.msra.mxu0 0.0
    %3959 = vmatprep.subr.mxu0 0.0
    %3960 = vmatpush1.xpose.msra.mxu0 0.0
    %3961 = vmatprep.subr.mxu0 0.0
    %3962 = vmatpush1.xpose.msra.mxu0 %v3931
    %3963 = vmatprep.subr.mxu0 0.0
    %3964 = vmatpush1.xpose.msra.mxu0 %v3928
    %3965 = vmatprep.subr.mxu0 0.0
    %3966 = vmatpush2.xpose.msra.mxu0 0.0
    %3967 = vmatprep.subr.mxu0 0.0
    %3968 = vmatpush2.xpose.msra.mxu0 0.0
    %3969 = vmatprep.subr.mxu0 0.0
    %3970 = vmatpush2.xpose.msra.mxu0 0.0
    %3971 = vmatprep.subr.mxu0 0.0
    %3972 = vmatpush2.xpose.msra.mxu0 0.0
    %3973 = vmatprep.subr.mxu0 0.0
    %3974 = vmatpush2.xpose.msra.mxu0 0.0
    %3975 = vmatprep.subr.mxu0 0.0
    %3976 = vmatpush2.xpose.msra.mxu0 0.0
    %3977 = vmatprep.subr.mxu0 0.0
    %3978 = vmatpush2.xpose.msra.mxu0 0.0
    %3979 = vmatprep.subr.mxu0 0.0
    %3980 = vmatpush2.xpose.msra.mxu0 0.0
    %3981 = vmatprep.subr.mxu0 0.0
    %3982 = vmatpush2.xpose.msra.mxu0 0.0
    %3983 = vmatprep.subr.mxu0 0.0
    %3984 = vmatpush2.xpose.msra.mxu0 0.0
    %3985 = vmatprep.subr.mxu0 0.0
    %3986 = vmatpush2.xpose.msra.mxu0 0.0
    %3987 = vmatprep.subr.mxu0 0.0
    %3988 = vmatpush2.xpose.msra.mxu0 0.0
    %3989 = vmatprep.subr.mxu0 0.0
    %3990 = vmatpush2.xpose.msra.mxu0 0.0
    %3991 = vmatprep.subr.mxu0 0.0
    %3992 = vmatpush2.xpose.msra.mxu0 0.0
    %3993 = vmatprep.subr.mxu0 0.0
    %3994 = vmatpush2.xpose.msra.mxu0 0.0
    %3995 = vmatprep.subr.mxu0 0.0
    %3996 = vmatpush2.xpose.msra.mxu0 0.0
    %3997 = vmatprep.mubr.f32.mxu0 0.0
    %3998 = vmatmul.mubr.f32.gmra.mxu0 %v3925
    %v3999 = vpop.f32.mrf.mxu0
    %v4000 = vadd.f32 0.0, %v3999
    %v4001 = vpop.f32.mrf.mxu0
    %4002 = vdwg.mxu0
    %vm4003 = vcmask 125952
    %v4004 = vsel %vm4003, %v959, 0.0
    %4005 = vadd.xlane.f32.xlu0 %v4004
    %v4006 = vpop.xlane.xlu0 %4005
    %vm4007 = vcmp.gt.f32.partialorder %v4006, 0.0
    %vm4008 = vcmp.gt.f32.partialorder %v959, 0.0
    %v4009 = vsel %vm4008, %v4000, -1e+30
    %v4010 = vsel %vm4003, %v4009, -inf
    %4011 = vmax.xlane.f32.xlu0 %v4010
    %v4012 = vpop.xlane.xlu0 %4011
    %v4013 = vsel %vm4007, %v4012, 0.0
    %v4014 = vsub.f32 %v4009, %v4013
    %v4015 = vmul.f32 %v4014, 1.442695
    %v4016 = vpow.pop %v4015
    %v4017 = vsel %vm4008, %v4016, 0.0
    %v4018 = vsel %vm4003, %v4017, 0.0
    %4019 = vadd.xlane.f32.xlu0 %v4018
    %v4020 = vpop.xlane.xlu0 %4019
    %v4021 = vadd.f32 %v4020, 1e-16
    %v4022 = vrcp.pop %v4021
    %v4023 = vmul.f32 %v4017, %v4022
    %4024 = vrot.lane.b32.xlu0 %v3752, 96
    %v4025 = vpop.permute.xlu0 %4024
    %v4026 = vsel %vm3923, %v4025, 0
    %v4029 = vsel %vm3923, %v3915, 0
    %v4032 = vsel %vm3923, %v3920, 0
    %4034 = vmatprep.subr.mxu0 0.0
    %4035 = vmatpush1.xpose.msra.mxu0 0.0
    %4036 = vmatprep.subr.mxu0 0.0
    %4037 = vmatpush1.xpose.msra.mxu0 0.0
    %4038 = vmatprep.subr.mxu0 0.0
    %4039 = vmatpush1.xpose.msra.mxu0 0.0
    %4040 = vmatprep.subr.mxu0 0.0
    %4041 = vmatpush1.xpose.msra.mxu0 0.0
    %4042 = vmatprep.subr.mxu0 0.0
    %4043 = vmatpush1.xpose.msra.mxu0 0.0
    %4044 = vmatprep.subr.mxu0 0.0
    %4045 = vmatpush1.xpose.msra.mxu0 0.0
    %4046 = vmatprep.subr.mxu0 0.0
    %4047 = vmatpush1.xpose.msra.mxu0 0.0
    %4048 = vmatprep.subr.mxu0 0.0
    %4049 = vmatpush1.xpose.msra.mxu0 0.0
    %4050 = vmatprep.subr.mxu0 0.0
    %4051 = vmatpush1.xpose.msra.mxu0 0.0
    %4052 = vmatprep.subr.mxu0 0.0
    %4053 = vmatpush1.xpose.msra.mxu0 0.0
    %4054 = vmatprep.subr.mxu0 0.0
    %4055 = vmatpush1.xpose.msra.mxu0 0.0
    %4056 = vmatprep.subr.mxu0 0.0
    %4057 = vmatpush1.xpose.msra.mxu0 0.0
    %4058 = vmatprep.subr.mxu0 0.0
    %4059 = vmatpush1.xpose.msra.mxu0 0.0
    %4060 = vmatprep.subr.mxu0 0.0
    %4061 = vmatpush1.xpose.msra.mxu0 0.0
    %4062 = vmatprep.subr.mxu0 0.0
    %4063 = vmatpush1.xpose.msra.mxu0 %v4032
    %4064 = vmatprep.subr.mxu0 0.0
    %4065 = vmatpush1.xpose.msra.mxu0 %v4029
    %4066 = vmatprep.subr.mxu0 0.0
    %4067 = vmatpush2.xpose.msra.mxu0 0.0
    %4068 = vmatprep.subr.mxu0 0.0
    %4069 = vmatpush2.xpose.msra.mxu0 0.0
    %4070 = vmatprep.subr.mxu0 0.0
    %4071 = vmatpush2.xpose.msra.mxu0 0.0
    %4072 = vmatprep.subr.mxu0 0.0
    %4073 = vmatpush2.xpose.msra.mxu0 0.0
    %4074 = vmatprep.subr.mxu0 0.0
    %4075 = vmatpush2.xpose.msra.mxu0 0.0
    %4076 = vmatprep.subr.mxu0 0.0
    %4077 = vmatpush2.xpose.msra.mxu0 0.0
    %4078 = vmatprep.subr.mxu0 0.0
    %4079 = vmatpush2.xpose.msra.mxu0 0.0
    %4080 = vmatprep.subr.mxu0 0.0
    %4081 = vmatpush2.xpose.msra.mxu0 0.0
    %4082 = vmatprep.subr.mxu0 0.0
    %4083 = vmatpush2.xpose.msra.mxu0 0.0
    %4084 = vmatprep.subr.mxu0 0.0
    %4085 = vmatpush2.xpose.msra.mxu0 0.0
    %4086 = vmatprep.subr.mxu0 0.0
    %4087 = vmatpush2.xpose.msra.mxu0 0.0
    %4088 = vmatprep.subr.mxu0 0.0
    %4089 = vmatpush2.xpose.msra.mxu0 0.0
    %4090 = vmatprep.subr.mxu0 0.0
    %4091 = vmatpush2.xpose.msra.mxu0 0.0
    %4092 = vmatprep.subr.mxu0 0.0
    %4093 = vmatpush2.xpose.msra.mxu0 0.0
    %4094 = vmatprep.subr.mxu0 0.0
    %4095 = vmatpush2.xpose.msra.mxu0 0.0
    %4096 = vmatprep.subr.mxu0 0.0
    %4097 = vmatpush2.xpose.msra.mxu0 0.0
    %4098 = vmatprep.mubr.f32.mxu0 0.0
    %4099 = vmatmul.mubr.f32.gmra.mxu0 %v4026
    %v4100 = vpop.f32.mrf.mxu0
    %v4101 = vadd.f32 0.0, %v4100
    %v4102 = vpop.f32.mrf.mxu0
    %4103 = vdwg.mxu0
    %v4104 = vsel %vm4003, %v964, 0.0
    %4105 = vadd.xlane.f32.xlu0 %v4104
    %v4106 = vpop.xlane.xlu0 %4105
    %vm4107 = vcmp.gt.f32.partialorder %v4106, 0.0
    %vm4108 = vcmp.gt.f32.partialorder %v964, 0.0
    %v4109 = vsel %vm4108, %v4101, -1e+30
    %v4110 = vsel %vm4003, %v4109, -inf
    %4111 = vmax.xlane.f32.xlu0 %v4110
    %v4112 = vpop.xlane.xlu0 %4111
    %v4113 = vsel %vm4107, %v4112, 0.0
    %v4114 = vsub.f32 %v4109, %v4113
    %v4115 = vmul.f32 %v4114, 1.442695
    %v4116 = vpow.pop %v4115
    %v4117 = vsel %vm4108, %v4116, 0.0
    %v4118 = vsel %vm4003, %v4117, 0.0
    %4119 = vadd.xlane.f32.xlu0 %v4118
    %v4120 = vpop.xlane.xlu0 %4119
    %v4121 = vadd.f32 %v4120, 1e-16
    %v4122 = vrcp.pop %v4121
    %v4123 = vmul.f32 %v4117, %v4122
    %4124 = vrot.lane.b32.xlu0 %v3915, 96
    %v4125 = vpop.permute.xlu0 %4124
    %4126 = vrot.lane.b32.xlu0 %v3920, 96
    %v4127 = vpop.permute.xlu0 %4126
    %v4131 = vsel %vm1192, %v4123, 0
    %4133 = vmatprep.subr.mxu0 0.0
    %4134 = vmatpush1.msra.mxu0 0.0
    %4135 = vmatprep.subr.mxu0 0.0
    %4136 = vmatpush1.msra.mxu0 0.0
    %4137 = vmatprep.subr.mxu0 0.0
    %4138 = vmatpush1.msra.mxu0 0.0
    %4139 = vmatprep.subr.mxu0 0.0
    %4140 = vmatpush1.msra.mxu0 0.0
    %4141 = vmatprep.subr.mxu0 0.0
    %4142 = vmatpush1.msra.mxu0 0.0
    %4143 = vmatprep.subr.mxu0 0.0
    %4144 = vmatpush1.msra.mxu0 0.0
    %4145 = vmatprep.subr.mxu0 0.0
    %4146 = vmatpush1.msra.mxu0 0.0
    %4147 = vmatprep.subr.mxu0 0.0
    %4148 = vmatpush1.msra.mxu0 0.0
    %4149 = vmatprep.subr.mxu0 0.0
    %4150 = vmatpush1.msra.mxu0 0.0
    %4151 = vmatprep.subr.mxu0 0.0
    %4152 = vmatpush1.msra.mxu0 0.0
    %4153 = vmatprep.subr.mxu0 0.0
    %4154 = vmatpush1.msra.mxu0 0.0
    %4155 = vmatprep.subr.mxu0 0.0
    %4156 = vmatpush1.msra.mxu0 0.0
    %4157 = vmatprep.subr.mxu0 0.0
    %4158 = vmatpush1.msra.mxu0 0.0
    %4159 = vmatprep.subr.mxu0 0.0
    %4160 = vmatpush1.msra.mxu0 0.0
    %4161 = vmatprep.subr.mxu0 0.0
    %4162 = vmatpush1.msra.mxu0 %v4127
    %4163 = vmatprep.subr.mxu0 0.0
    %4164 = vmatpush1.msra.mxu0 %v4125
    %4165 = vmatprep.subr.mxu0 0.0
    %4166 = vmatpush2.msra.mxu0 0.0
    %4167 = vmatprep.subr.mxu0 0.0
    %4168 = vmatpush2.msra.mxu0 0.0
    %4169 = vmatprep.subr.mxu0 0.0
    %4170 = vmatpush2.msra.mxu0 0.0
    %4171 = vmatprep.subr.mxu0 0.0
    %4172 = vmatpush2.msra.mxu0 0.0
    %4173 = vmatprep.subr.mxu0 0.0
    %4174 = vmatpush2.msra.mxu0 0.0
    %4175 = vmatprep.subr.mxu0 0.0
    %4176 = vmatpush2.msra.mxu0 0.0
    %4177 = vmatprep.subr.mxu0 0.0
    %4178 = vmatpush2.msra.mxu0 0.0
    %4179 = vmatprep.subr.mxu0 0.0
    %4180 = vmatpush2.msra.mxu0 0.0
    %4181 = vmatprep.subr.mxu0 0.0
    %4182 = vmatpush2.msra.mxu0 0.0
    %4183 = vmatprep.subr.mxu0 0.0
    %4184 = vmatpush2.msra.mxu0 0.0
    %4185 = vmatprep.subr.mxu0 0.0
    %4186 = vmatpush2.msra.mxu0 0.0
    %4187 = vmatprep.subr.mxu0 0.0
    %4188 = vmatpush2.msra.mxu0 0.0
    %4189 = vmatprep.subr.mxu0 0.0
    %4190 = vmatpush2.msra.mxu0 0.0
    %4191 = vmatprep.subr.mxu0 0.0
    %4192 = vmatpush2.msra.mxu0 0.0
    %4193 = vmatprep.subr.mxu0 0.0
    %4194 = vmatpush2.msra.mxu0 0.0
    %4195 = vmatprep.subr.mxu0 0.0
    %4196 = vmatpush2.msra.mxu0 0.0
    %4197 = vmatprep.mubr.f32.mxu0 0.0
    %4198 = vmatmul.mubr.f32.gmra.mxu0 %v4131
    %v4199 = vpop.f32.mrf.mxu0
    %v4200 = vadd.f32 0.0, %v4199
    %v4201 = vpop.f32.mrf.mxu0
    %4202 = vdwg.mxu0
    %4203 = vrot.lane.b32.xlu0 %v3831, 96
    %v4204 = vpop.permute.xlu0 %4203
    %4205 = vrot.lane.b32.xlu0 %v3836, 96
    %v4206 = vpop.permute.xlu0 %4205
    %v4210 = vsel %vm1192, %v4023, 0
    %4212 = vmatprep.subr.mxu0 0.0
    %4213 = vmatpush1.msra.mxu0 0.0
    %4214 = vmatprep.subr.mxu0 0.0
    %4215 = vmatpush1.msra.mxu0 0.0
    %4216 = vmatprep.subr.mxu0 0.0
    %4217 = vmatpush1.msra.mxu0 0.0
    %4218 = vmatprep.subr.mxu0 0.0
    %4219 = vmatpush1.msra.mxu0 0.0
    %4220 = vmatprep.subr.mxu0 0.0
    %4221 = vmatpush1.msra.mxu0 0.0
    %4222 = vmatprep.subr.mxu0 0.0
    %4223 = vmatpush1.msra.mxu0 0.0
    %4224 = vmatprep.subr.mxu0 0.0
    %4225 = vmatpush1.msra.mxu0 0.0
    %4226 = vmatprep.subr.mxu0 0.0
    %4227 = vmatpush1.msra.mxu0 0.0
    %4228 = vmatprep.subr.mxu0 0.0
    %4229 = vmatpush1.msra.mxu0 0.0
    %4230 = vmatprep.subr.mxu0 0.0
    %4231 = vmatpush1.msra.mxu0 0.0
    %4232 = vmatprep.subr.mxu0 0.0
    %4233 = vmatpush1.msra.mxu0 0.0
    %4234 = vmatprep.subr.mxu0 0.0
    %4235 = vmatpush1.msra.mxu0 0.0
    %4236 = vmatprep.subr.mxu0 0.0
    %4237 = vmatpush1.msra.mxu0 0.0
    %4238 = vmatprep.subr.mxu0 0.0
    %4239 = vmatpush1.msra.mxu0 0.0
    %4240 = vmatprep.subr.mxu0 0.0
    %4241 = vmatpush1.msra.mxu0 %v4206
    %4242 = vmatprep.subr.mxu0 0.0
    %4243 = vmatpush1.msra.mxu0 %v4204
    %4244 = vmatprep.subr.mxu0 0.0
    %4245 = vmatpush2.msra.mxu0 0.0
    %4246 = vmatprep.subr.mxu0 0.0
    %4247 = vmatpush2.msra.mxu0 0.0
    %4248 = vmatprep.subr.mxu0 0.0
    %4249 = vmatpush2.msra.mxu0 0.0
    %4250 = vmatprep.subr.mxu0 0.0
    %4251 = vmatpush2.msra.mxu0 0.0
    %4252 = vmatprep.subr.mxu0 0.0
    %4253 = vmatpush2.msra.mxu0 0.0
    %4254 = vmatprep.subr.mxu0 0.0
    %4255 = vmatpush2.msra.mxu0 0.0
    %4256 = vmatprep.subr.mxu0 0.0
    %4257 = vmatpush2.msra.mxu0 0.0
    %4258 = vmatprep.subr.mxu0 0.0
    %4259 = vmatpush2.msra.mxu0 0.0
    %4260 = vmatprep.subr.mxu0 0.0
    %4261 = vmatpush2.msra.mxu0 0.0
    %4262 = vmatprep.subr.mxu0 0.0
    %4263 = vmatpush2.msra.mxu0 0.0
    %4264 = vmatprep.subr.mxu0 0.0
    %4265 = vmatpush2.msra.mxu0 0.0
    %4266 = vmatprep.subr.mxu0 0.0
    %4267 = vmatpush2.msra.mxu0 0.0
    %4268 = vmatprep.subr.mxu0 0.0
    %4269 = vmatpush2.msra.mxu0 0.0
    %4270 = vmatprep.subr.mxu0 0.0
    %4271 = vmatpush2.msra.mxu0 0.0
    %4272 = vmatprep.subr.mxu0 0.0
    %4273 = vmatpush2.msra.mxu0 0.0
    %4274 = vmatprep.subr.mxu0 0.0
    %4275 = vmatpush2.msra.mxu0 0.0
    %4276 = vmatprep.mubr.f32.mxu0 0.0
    %4277 = vmatmul.mubr.f32.gmra.mxu0 %v4210
    %v4278 = vpop.f32.mrf.mxu0
    %v4279 = vadd.f32 %v4200, %v4278
    %v4280 = vpop.f32.mrf.mxu0
    %4281 = vdwg.mxu0
    %4282 = vrot.lane.b32.xlu0 %v3752, 64
    %v4283 = vpop.permute.xlu0 %4282
    %v4285 = vadd.f32 %v4279, %v4283
    %v4287 = vlaneseq
    %v4288 = vshrl.u32 %v4287, 7
    %v4289 = vsub.s32 0, %v4288
    %v4290 = vrot.slane %v992, %v4289
    %v4293 = vsel %vm3923, %v2431, 0
    %v4296 = vsel %vm3923, %v2432, 0
    %4298 = vmatprep.subr.mxu0 0.0
    %4299 = vmatpush1.msra.mxu0 0.0
    %4300 = vmatprep.subr.mxu0 0.0
    %4301 = vmatpush1.msra.mxu0 0.0
    %4302 = vmatprep.subr.mxu0 0.0
    %4303 = vmatpush1.msra.mxu0 0.0
    %4304 = vmatprep.subr.mxu0 0.0
    %4305 = vmatpush1.msra.mxu0 0.0
    %4306 = vmatprep.subr.mxu0 0.0
    %4307 = vmatpush1.msra.mxu0 0.0
    %4308 = vmatprep.subr.mxu0 0.0
    %4309 = vmatpush1.msra.mxu0 0.0
    %4310 = vmatprep.subr.mxu0 0.0
    %4311 = vmatpush1.msra.mxu0 0.0
    %4312 = vmatprep.subr.mxu0 0.0
    %4313 = vmatpush1.msra.mxu0 0.0
    %4314 = vmatprep.subr.mxu0 0.0
    %4315 = vmatpush1.msra.mxu0 0.0
    %4316 = vmatprep.subr.mxu0 0.0
    %4317 = vmatpush1.msra.mxu0 0.0
    %4318 = vmatprep.subr.mxu0 0.0
    %4319 = vmatpush1.msra.mxu0 0.0
    %4320 = vmatprep.subr.mxu0 0.0
    %4321 = vmatpush1.msra.mxu0 0.0
    %4322 = vmatprep.subr.mxu0 0.0
    %4323 = vmatpush1.msra.mxu0 %v996
    %4324 = vmatprep.subr.mxu0 0.0
    %4325 = vmatpush1.msra.mxu0 %v995
    %4326 = vmatprep.subr.mxu0 0.0
    %4327 = vmatpush1.msra.mxu0 %v994
    %4328 = vmatprep.subr.mxu0 0.0
    %4329 = vmatpush1.msra.mxu0 %v993
    %4330 = vmatprep.subr.mxu0 0.0
    %4331 = vmatpush2.msra.mxu0 0.0
    %4332 = vmatprep.subr.mxu0 0.0
    %4333 = vmatpush2.msra.mxu0 0.0
    %4334 = vmatprep.subr.mxu0 0.0
    %4335 = vmatpush2.msra.mxu0 0.0
    %4336 = vmatprep.subr.mxu0 0.0
    %4337 = vmatpush2.msra.mxu0 0.0
    %4338 = vmatprep.subr.mxu0 0.0
    %4339 = vmatpush2.msra.mxu0 0.0
    %4340 = vmatprep.subr.mxu0 0.0
    %4341 = vmatpush2.msra.mxu0 0.0
    %4342 = vmatprep.subr.mxu0 0.0
    %4343 = vmatpush2.msra.mxu0 0.0
    %4344 = vmatprep.subr.mxu0 0.0
    %4345 = vmatpush2.msra.mxu0 0.0
    %4346 = vmatprep.subr.mxu0 0.0
    %4347 = vmatpush2.msra.mxu0 0.0
    %4348 = vmatprep.subr.mxu0 0.0
    %4349 = vmatpush2.msra.mxu0 0.0
    %4350 = vmatprep.subr.mxu0 0.0
    %4351 = vmatpush2.msra.mxu0 0.0
    %4352 = vmatprep.subr.mxu0 0.0
    %4353 = vmatpush2.msra.mxu0 0.0
    %4354 = vmatprep.subr.mxu0 0.0
    %4355 = vmatpush2.msra.mxu0 0.0
    %4356 = vmatprep.subr.mxu0 0.0
    %4357 = vmatpush2.msra.mxu0 0.0
    %4358 = vmatprep.subr.mxu0 0.0
    %4359 = vmatpush2.msra.mxu0 0.0
    %4360 = vmatprep.subr.mxu0 0.0
    %4361 = vmatpush2.msra.mxu0 0.0
    %4362 = vmatprep.mubr.f32.mxu0 0.0
    %4363 = vmatmul.mubr.f32.gmra.mxu0 %v4293
    %v4364 = vpop.f32.mrf.mxu0
    %v4365 = vadd.f32 %v4290, %v4364
    %v4366 = vpop.f32.mrf.mxu0
    %4367 = vmatprep.mubr.f32.mxu0 0.0
    %4368 = vmatmul.mubr.f32.gmra.mxu0 %v4296
    %v4369 = vpop.f32.mrf.mxu0
    %v4370 = vadd.f32 %v4290, %v4369
    %v4371 = vpop.f32.mrf.mxu0
    %4372 = vdwg.mxu0
    %v4374 = vlaneseq
    %v4375 = vshrl.u32 %v4374, 7
    %v4376 = vsub.s32 0, %v4375
    %v4377 = vrot.slane %v982, %v4376
    %v4380 = vsel %vm3923, %v3669, 0
    %v4383 = vsel %vm3923, %v3670, 0
    %4385 = vmatprep.subr.mxu0 0.0
    %4386 = vmatpush1.msra.mxu0 0.0
    %4387 = vmatprep.subr.mxu0 0.0
    %4388 = vmatpush1.msra.mxu0 0.0
    %4389 = vmatprep.subr.mxu0 0.0
    %4390 = vmatpush1.msra.mxu0 0.0
    %4391 = vmatprep.subr.mxu0 0.0
    %4392 = vmatpush1.msra.mxu0 0.0
    %4393 = vmatprep.subr.mxu0 0.0
    %4394 = vmatpush1.msra.mxu0 0.0
    %4395 = vmatprep.subr.mxu0 0.0
    %4396 = vmatpush1.msra.mxu0 0.0
    %4397 = vmatprep.subr.mxu0 0.0
    %4398 = vmatpush1.msra.mxu0 0.0
    %4399 = vmatprep.subr.mxu0 0.0
    %4400 = vmatpush1.msra.mxu0 0.0
    %4401 = vmatprep.subr.mxu0 0.0
    %4402 = vmatpush1.msra.mxu0 0.0
    %4403 = vmatprep.subr.mxu0 0.0
    %4404 = vmatpush1.msra.mxu0 0.0
    %4405 = vmatprep.subr.mxu0 0.0
    %4406 = vmatpush1.msra.mxu0 0.0
    %4407 = vmatprep.subr.mxu0 0.0
    %4408 = vmatpush1.msra.mxu0 0.0
    %4409 = vmatprep.subr.mxu0 0.0
    %4410 = vmatpush1.msra.mxu0 %v986
    %4411 = vmatprep.subr.mxu0 0.0
    %4412 = vmatpush1.msra.mxu0 %v985
    %4413 = vmatprep.subr.mxu0 0.0
    %4414 = vmatpush1.msra.mxu0 %v984
    %4415 = vmatprep.subr.mxu0 0.0
    %4416 = vmatpush1.msra.mxu0 %v983
    %4417 = vmatprep.subr.mxu0 0.0
    %4418 = vmatpush2.msra.mxu0 0.0
    %4419 = vmatprep.subr.mxu0 0.0
    %4420 = vmatpush2.msra.mxu0 0.0
    %4421 = vmatprep.subr.mxu0 0.0
    %4422 = vmatpush2.msra.mxu0 0.0
    %4423 = vmatprep.subr.mxu0 0.0
    %4424 = vmatpush2.msra.mxu0 0.0
    %4425 = vmatprep.subr.mxu0 0.0
    %4426 = vmatpush2.msra.mxu0 0.0
    %4427 = vmatprep.subr.mxu0 0.0
    %4428 = vmatpush2.msra.mxu0 0.0
    %4429 = vmatprep.subr.mxu0 0.0
    %4430 = vmatpush2.msra.mxu0 0.0
    %4431 = vmatprep.subr.mxu0 0.0
    %4432 = vmatpush2.msra.mxu0 0.0
    %4433 = vmatprep.subr.mxu0 0.0
    %4434 = vmatpush2.msra.mxu0 0.0
    %4435 = vmatprep.subr.mxu0 0.0
    %4436 = vmatpush2.msra.mxu0 0.0
    %4437 = vmatprep.subr.mxu0 0.0
    %4438 = vmatpush2.msra.mxu0 0.0
    %4439 = vmatprep.subr.mxu0 0.0
    %4440 = vmatpush2.msra.mxu0 0.0
    %4441 = vmatprep.subr.mxu0 0.0
    %4442 = vmatpush2.msra.mxu0 0.0
    %4443 = vmatprep.subr.mxu0 0.0
    %4444 = vmatpush2.msra.mxu0 0.0
    %4445 = vmatprep.subr.mxu0 0.0
    %4446 = vmatpush2.msra.mxu0 0.0
    %4447 = vmatprep.subr.mxu0 0.0
    %4448 = vmatpush2.msra.mxu0 0.0
    %4449 = vmatprep.mubr.f32.mxu0 0.0
    %4450 = vmatmul.mubr.f32.gmra.mxu0 %v4380
    %v4451 = vpop.f32.mrf.mxu0
    %v4452 = vadd.f32 %v4377, %v4451
    %v4453 = vpop.f32.mrf.mxu0
    %4454 = vmatprep.mubr.f32.mxu0 0.0
    %4455 = vmatmul.mubr.f32.gmra.mxu0 %v4383
    %v4456 = vpop.f32.mrf.mxu0
    %v4457 = vadd.f32 %v4377, %v4456
    %v4458 = vpop.f32.mrf.mxu0
    %4459 = vdwg.mxu0
    %v4461 = vlaneseq
    %v4462 = vshrl.u32 %v4461, 7
    %v4463 = vsub.s32 0, %v4462
    %v4464 = vrot.slane %v987, %v4463
    %v4467 = vsel %vm3923, %v4285, 0
    %4469 = vmatprep.subr.mxu0 0.0
    %4470 = vmatpush1.msra.mxu0 0.0
    %4471 = vmatprep.subr.mxu0 0.0
    %4472 = vmatpush1.msra.mxu0 0.0
    %4473 = vmatprep.subr.mxu0 0.0
    %4474 = vmatpush1.msra.mxu0 0.0
    %4475 = vmatprep.subr.mxu0 0.0
    %4476 = vmatpush1.msra.mxu0 0.0
    %4477 = vmatprep.subr.mxu0 0.0
    %4478 = vmatpush1.msra.mxu0 0.0
    %4479 = vmatprep.subr.mxu0 0.0
    %4480 = vmatpush1.msra.mxu0 0.0
    %4481 = vmatprep.subr.mxu0 0.0
    %4482 = vmatpush1.msra.mxu0 0.0
    %4483 = vmatprep.subr.mxu0 0.0
    %4484 = vmatpush1.msra.mxu0 0.0
    %4485 = vmatprep.subr.mxu0 0.0
    %4486 = vmatpush1.msra.mxu0 0.0
    %4487 = vmatprep.subr.mxu0 0.0
    %4488 = vmatpush1.msra.mxu0 0.0
    %4489 = vmatprep.subr.mxu0 0.0
    %4490 = vmatpush1.msra.mxu0 0.0
    %4491 = vmatprep.subr.mxu0 0.0
    %4492 = vmatpush1.msra.mxu0 0.0
    %4493 = vmatprep.subr.mxu0 0.0
    %4494 = vmatpush1.msra.mxu0 %v991
    %4495 = vmatprep.subr.mxu0 0.0
    %4496 = vmatpush1.msra.mxu0 %v990
    %4497 = vmatprep.subr.mxu0 0.0
    %4498 = vmatpush1.msra.mxu0 %v989
    %4499 = vmatprep.subr.mxu0 0.0
    %4500 = vmatpush1.msra.mxu0 %v988
    %4501 = vmatprep.subr.mxu0 0.0
    %4502 = vmatpush2.msra.mxu0 0.0
    %4503 = vmatprep.subr.mxu0 0.0
    %4504 = vmatpush2.msra.mxu0 0.0
    %4505 = vmatprep.subr.mxu0 0.0
    %4506 = vmatpush2.msra.mxu0 0.0
    %4507 = vmatprep.subr.mxu0 0.0
    %4508 = vmatpush2.msra.mxu0 0.0
    %4509 = vmatprep.subr.mxu0 0.0
    %4510 = vmatpush2.msra.mxu0 0.0
    %4511 = vmatprep.subr.mxu0 0.0
    %4512 = vmatpush2.msra.mxu0 0.0
    %4513 = vmatprep.subr.mxu0 0.0
    %4514 = vmatpush2.msra.mxu0 0.0
    %4515 = vmatprep.subr.mxu0 0.0
    %4516 = vmatpush2.msra.mxu0 0.0
    %4517 = vmatprep.subr.mxu0 0.0
    %4518 = vmatpush2.msra.mxu0 0.0
    %4519 = vmatprep.subr.mxu0 0.0
    %4520 = vmatpush2.msra.mxu0 0.0
    %4521 = vmatprep.subr.mxu0 0.0
    %4522 = vmatpush2.msra.mxu0 0.0
    %4523 = vmatprep.subr.mxu0 0.0
    %4524 = vmatpush2.msra.mxu0 0.0
    %4525 = vmatprep.subr.mxu0 0.0
    %4526 = vmatpush2.msra.mxu0 0.0
    %4527 = vmatprep.subr.mxu0 0.0
    %4528 = vmatpush2.msra.mxu0 0.0
    %4529 = vmatprep.subr.mxu0 0.0
    %4530 = vmatpush2.msra.mxu0 0.0
    %4531 = vmatprep.subr.mxu0 0.0
    %4532 = vmatpush2.msra.mxu0 0.0
    %4533 = vmatprep.mubr.f32.mxu0 0.0
    %4534 = vmatmul.mubr.f32.gmra.mxu0 %v4467
    %v4535 = vpop.f32.mrf.mxu0
    %v4536 = vadd.f32 %v4464, %v4535
    %v4537 = vpop.f32.mrf.mxu0
    %4538 = vdwg.mxu0
    %4539 = vmatprep.subr.mxu0 0.0
    %4540 = vmatpush1.msra.mxu0 0.0
    %4541 = vmatprep.subr.mxu0 0.0
    %4542 = vmatpush1.msra.mxu0 0.0
    %4543 = vmatprep.subr.mxu0 0.0
    %4544 = vmatpush1.msra.mxu0 0.0
    %4545 = vmatprep.subr.mxu0 0.0
    %4546 = vmatpush1.msra.mxu0 0.0
    %4547 = vmatprep.subr.mxu0 0.0
    %4548 = vmatpush1.msra.mxu0 0.0
    %4549 = vmatprep.subr.mxu0 0.0
    %4550 = vmatpush1.msra.mxu0 0.0
    %4551 = vmatprep.subr.mxu0 0.0
    %4552 = vmatpush1.msra.mxu0 0.0
    %4553 = vmatprep.subr.mxu0 0.0
    %4554 = vmatpush1.msra.mxu0 0.0
    %4555 = vmatprep.subr.mxu0 0.0
    %4556 = vmatpush1.msra.mxu0 0.0
    %4557 = vmatprep.subr.mxu0 0.0
    %4558 = vmatpush1.msra.mxu0 0.0
    %4559 = vmatprep.subr.mxu0 0.0
    %4560 = vmatpush1.msra.mxu0 0.0
    %4561 = vmatprep.subr.mxu0 0.0
    %4562 = vmatpush1.msra.mxu0 0.0
    %4563 = vmatprep.subr.mxu0 0.0
    %4564 = vmatpush1.msra.mxu0 0.0
    %4565 = vmatprep.subr.mxu0 0.0
    %4566 = vmatpush1.msra.mxu0 0.0
    %4567 = vmatprep.subr.mxu0 0.0
    %4568 = vmatpush1.msra.mxu0 %v4370
    %4569 = vmatprep.subr.mxu0 0.0
    %4570 = vmatpush1.msra.mxu0 %v4365
    %4571 = vmatprep.subr.mxu0 0.0
    %4572 = vmatpush2.msra.mxu0 0.0
    %4573 = vmatprep.subr.mxu0 0.0
    %4574 = vmatpush2.msra.mxu0 0.0
    %4575 = vmatprep.subr.mxu0 0.0
    %4576 = vmatpush2.msra.mxu0 0.0
    %4577 = vmatprep.subr.mxu0 0.0
    %4578 = vmatpush2.msra.mxu0 0.0
    %4579 = vmatprep.subr.mxu0 0.0
    %4580 = vmatpush2.msra.mxu0 0.0
    %4581 = vmatprep.subr.mxu0 0.0
    %4582 = vmatpush2.msra.mxu0 0.0
    %4583 = vmatprep.subr.mxu0 0.0
    %4584 = vmatpush2.msra.mxu0 0.0
    %4585 = vmatprep.subr.mxu0 0.0
    %4586 = vmatpush2.msra.mxu0 0.0
    %4587 = vmatprep.subr.mxu0 0.0
    %4588 = vmatpush2.msra.mxu0 0.0
    %4589 = vmatprep.subr.mxu0 0.0
    %4590 = vmatpush2.msra.mxu0 0.0
    %4591 = vmatprep.subr.mxu0 0.0
    %4592 = vmatpush2.msra.mxu0 0.0
    %4593 = vmatprep.subr.mxu0 0.0
    %4594 = vmatpush2.msra.mxu0 0.0
    %4595 = vmatprep.subr.mxu0 0.0
    %4596 = vmatpush2.msra.mxu0 0.0
    %4597 = vmatprep.subr.mxu0 0.0
    %4598 = vmatpush2.msra.mxu0 0.0
    %4599 = vmatprep.subr.mxu0 0.0
    %4600 = vmatpush2.msra.mxu0 0.0
    %4601 = vmatprep.subr.mxu0 0.0
    %4602 = vmatpush2.msra.mxu0 0.0
    %4603 = vmatprep.mubr.f32.mxu0 0.0
    %4604 = vmatmul.mubr.f32.gmra.mxu0 %v1194
    %v4605 = vpop.f32.mrf.mxu0
    %v4606 = vadd.f32 0.0, %v4605
    %v4607 = vpop.f32.mrf.mxu0
    %4608 = vmatprep.mubr.f32.mxu0 0.0
    %4609 = vmatmul.mubr.f32.gmra.mxu0 %v1197
    %v4610 = vpop.f32.mrf.mxu0
    %v4611 = vadd.f32 0.0, %v4610
    %v4612 = vpop.f32.mrf.mxu0
    %4613 = vdwg.mxu0
    %v4615 = vsel %vm3923, %v4365, 0
    %v4618 = vsel %vm3923, %v4370, 0
    %4620 = vmatprep.subr.mxu0 0.0
    %4621 = vmatpush1.msra.mxu0 0.0
    %4622 = vmatprep.subr.mxu0 0.0
    %4623 = vmatpush1.msra.mxu0 0.0
    %4624 = vmatprep.subr.mxu0 0.0
    %4625 = vmatpush1.msra.mxu0 0.0
    %4626 = vmatprep.subr.mxu0 0.0
    %4627 = vmatpush1.msra.mxu0 0.0
    %4628 = vmatprep.subr.mxu0 0.0
    %4629 = vmatpush1.msra.mxu0 0.0
    %4630 = vmatprep.subr.mxu0 0.0
    %4631 = vmatpush1.msra.mxu0 0.0
    %4632 = vmatprep.subr.mxu0 0.0
    %4633 = vmatpush1.msra.mxu0 0.0
    %4634 = vmatprep.subr.mxu0 0.0
    %4635 = vmatpush1.msra.mxu0 0.0
    %4636 = vmatprep.subr.mxu0 0.0
    %4637 = vmatpush1.msra.mxu0 0.0
    %4638 = vmatprep.subr.mxu0 0.0
    %4639 = vmatpush1.msra.mxu0 0.0
    %4640 = vmatprep.subr.mxu0 0.0
    %4641 = vmatpush1.msra.mxu0 0.0
    %4642 = vmatprep.subr.mxu0 0.0
    %4643 = vmatpush1.msra.mxu0 0.0
    %4644 = vmatprep.subr.mxu0 %v1170
    %4645 = vmatpush1.msra.mxu0 %v1169
    %4646 = vmatprep.subr.mxu0 %v1167
    %4647 = vmatpush1.msra.mxu0 %v1166
    %4648 = vmatprep.subr.mxu0 %v1164
    %4649 = vmatpush1.msra.mxu0 %v1163
    %4650 = vmatprep.subr.mxu0 %v1161
    %4651 = vmatpush1.msra.mxu0 %v1160
    %4652 = vmatprep.subr.mxu0 0.0
    %4653 = vmatpush2.msra.mxu0 0.0
    %4654 = vmatprep.subr.mxu0 0.0
    %4655 = vmatpush2.msra.mxu0 0.0
    %4656 = vmatprep.subr.mxu0 0.0
    %4657 = vmatpush2.msra.mxu0 0.0
    %4658 = vmatprep.subr.mxu0 0.0
    %4659 = vmatpush2.msra.mxu0 0.0
    %4660 = vmatprep.subr.mxu0 0.0
    %4661 = vmatpush2.msra.mxu0 0.0
    %4662 = vmatprep.subr.mxu0 0.0
    %4663 = vmatpush2.msra.mxu0 0.0
    %4664 = vmatprep.subr.mxu0 0.0
    %4665 = vmatpush2.msra.mxu0 0.0
    %4666 = vmatprep.subr.mxu0 0.0
    %4667 = vmatpush2.msra.mxu0 0.0
    %4668 = vmatprep.subr.mxu0 0.0
    %4669 = vmatpush2.msra.mxu0 0.0
    %4670 = vmatprep.subr.mxu0 0.0
    %4671 = vmatpush2.msra.mxu0 0.0
    %4672 = vmatprep.subr.mxu0 0.0
    %4673 = vmatpush2.msra.mxu0 0.0
    %4674 = vmatprep.subr.mxu0 0.0
    %4675 = vmatpush2.msra.mxu0 0.0
    %4676 = vmatprep.subr.mxu0 0.0
    %4677 = vmatpush2.msra.mxu0 0.0
    %4678 = vmatprep.subr.mxu0 0.0
    %4679 = vmatpush2.msra.mxu0 0.0
    %4680 = vmatprep.subr.mxu0 0.0
    %4681 = vmatpush2.msra.mxu0 0.0
    %4682 = vmatprep.subr.mxu0 0.0
    %4683 = vmatpush2.msra.mxu0 0.0
    %4684 = vmatprep.mubr.f32.mxu0 0.0
    %4685 = vmatmul.mubr.f32.gmra.mxu0 %v4615
    %v4686 = vpop.f32.mrf.mxu0
    %v4687 = vadd.f32 0.0, %v4686
    %v4688 = vpop.f32.mrf.mxu0
    %v4689 = vadd.f32 0.0, %v4688
    %4690 = vmatprep.mubr.f32.mxu0 0.0
    %4691 = vmatmul.mubr.f32.gmra.mxu0 %v4618
    %v4692 = vpop.f32.mrf.mxu0
    %v4693 = vadd.f32 0.0, %v4692
    %v4694 = vpop.f32.mrf.mxu0
    %v4695 = vadd.f32 0.0, %v4694
    %4696 = vdwg.mxu0
    %4697 = vmatprep.subr.mxu0 0.0
    %4698 = vmatpush1.msra.mxu0 0.0
    %4699 = vmatprep.subr.mxu0 0.0
    %4700 = vmatpush1.msra.mxu0 0.0
    %4701 = vmatprep.subr.mxu0 0.0
    %4702 = vmatpush1.msra.mxu0 0.0
    %4703 = vmatprep.subr.mxu0 0.0
    %4704 = vmatpush1.msra.mxu0 0.0
    %4705 = vmatprep.subr.mxu0 0.0
    %4706 = vmatpush1.msra.mxu0 0.0
    %4707 = vmatprep.subr.mxu0 0.0
    %4708 = vmatpush1.msra.mxu0 0.0
    %4709 = vmatprep.subr.mxu0 0.0
    %4710 = vmatpush1.msra.mxu0 0.0
    %4711 = vmatprep.subr.mxu0 0.0
    %4712 = vmatpush1.msra.mxu0 0.0
    %4713 = vmatprep.subr.mxu0 0.0
    %4714 = vmatpush1.msra.mxu0 0.0
    %4715 = vmatprep.subr.mxu0 0.0
    %4716 = vmatpush1.msra.mxu0 0.0
    %4717 = vmatprep.subr.mxu0 0.0
    %4718 = vmatpush1.msra.mxu0 0.0
    %4719 = vmatprep.subr.mxu0 0.0
    %4720 = vmatpush1.msra.mxu0 0.0
    %4721 = vmatprep.subr.mxu0 0.0
    %4722 = vmatpush1.msra.mxu0 %v1171
    %4723 = vmatprep.subr.mxu0 0.0
    %4724 = vmatpush1.msra.mxu0 %v1168
    %4725 = vmatprep.subr.mxu0 0.0
    %4726 = vmatpush1.msra.mxu0 %v1165
    %4727 = vmatprep.subr.mxu0 0.0
    %4728 = vmatpush1.msra.mxu0 %v1162
    %4729 = vmatprep.subr.mxu0 0.0
    %4730 = vmatpush2.msra.mxu0 0.0
    %4731 = vmatprep.subr.mxu0 0.0
    %4732 = vmatpush2.msra.mxu0 0.0
    %4733 = vmatprep.subr.mxu0 0.0
    %4734 = vmatpush2.msra.mxu0 0.0
    %4735 = vmatprep.subr.mxu0 0.0
    %4736 = vmatpush2.msra.mxu0 0.0
    %4737 = vmatprep.subr.mxu0 0.0
    %4738 = vmatpush2.msra.mxu0 0.0
    %4739 = vmatprep.subr.mxu0 0.0
    %4740 = vmatpush2.msra.mxu0 0.0
    %4741 = vmatprep.subr.mxu0 0.0
    %4742 = vmatpush2.msra.mxu0 0.0
    %4743 = vmatprep.subr.mxu0 0.0
    %4744 = vmatpush2.msra.mxu0 0.0
    %4745 = vmatprep.subr.mxu0 0.0
    %4746 = vmatpush2.msra.mxu0 0.0
    %4747 = vmatprep.subr.mxu0 0.0
    %4748 = vmatpush2.msra.mxu0 0.0
    %4749 = vmatprep.subr.mxu0 0.0
    %4750 = vmatpush2.msra.mxu0 0.0
    %4751 = vmatprep.subr.mxu0 0.0
    %4752 = vmatpush2.msra.mxu0 0.0
    %4753 = vmatprep.subr.mxu0 0.0
    %4754 = vmatpush2.msra.mxu0 0.0
    %4755 = vmatprep.subr.mxu0 0.0
    %4756 = vmatpush2.msra.mxu0 0.0
    %4757 = vmatprep.subr.mxu0 0.0
    %4758 = vmatpush2.msra.mxu0 0.0
    %4759 = vmatprep.subr.mxu0 0.0
    %4760 = vmatpush2.msra.mxu0 0.0
    %4761 = vmatprep.mubr.f32.mxu0 0.0
    %4762 = vmatmul.mubr.f32.gmra.mxu0 %v4615
    %v4763 = vpop.f32.mrf.mxu0
    %v4764 = vadd.f32 0.0, %v4763
    %v4765 = vpop.f32.mrf.mxu0
    %4766 = vmatprep.mubr.f32.mxu0 0.0
    %4767 = vmatmul.mubr.f32.gmra.mxu0 %v4618
    %v4768 = vpop.f32.mrf.mxu0
    %v4769 = vadd.f32 0.0, %v4768
    %v4770 = vpop.f32.mrf.mxu0
    %4771 = vdwg.mxu0
    %v4773 = vsel %vm3923, %v4606, 0
    %v4776 = vsel %vm3923, %v4611, 0
    %4778 = vmatprep.subr.mxu0 0.0
    %4779 = vmatpush1.msra.mxu0 0.0
    %4780 = vmatprep.subr.mxu0 0.0
    %4781 = vmatpush1.msra.mxu0 0.0
    %4782 = vmatprep.subr.mxu0 0.0
    %4783 = vmatpush1.msra.mxu0 0.0
    %4784 = vmatprep.subr.mxu0 0.0
    %4785 = vmatpush1.msra.mxu0 0.0
    %4786 = vmatprep.subr.mxu0 0.0
    %4787 = vmatpush1.msra.mxu0 0.0
    %4788 = vmatprep.subr.mxu0 0.0
    %4789 = vmatpush1.msra.mxu0 0.0
    %4790 = vmatprep.subr.mxu0 0.0
    %4791 = vmatpush1.msra.mxu0 0.0
    %4792 = vmatprep.subr.mxu0 0.0
    %4793 = vmatpush1.msra.mxu0 0.0
    %4794 = vmatprep.subr.mxu0 0.0
    %4795 = vmatpush1.msra.mxu0 0.0
    %4796 = vmatprep.subr.mxu0 0.0
    %4797 = vmatpush1.msra.mxu0 0.0
    %4798 = vmatprep.subr.mxu0 0.0
    %4799 = vmatpush1.msra.mxu0 0.0
    %4800 = vmatprep.subr.mxu0 0.0
    %4801 = vmatpush1.msra.mxu0 0.0
    %4802 = vmatprep.subr.mxu0 %v1158
    %4803 = vmatpush1.msra.mxu0 %v1157
    %4804 = vmatprep.subr.mxu0 %v1155
    %4805 = vmatpush1.msra.mxu0 %v1154
    %4806 = vmatprep.subr.mxu0 %v1152
    %4807 = vmatpush1.msra.mxu0 %v1151
    %4808 = vmatprep.subr.mxu0 %v1149
    %4809 = vmatpush1.msra.mxu0 %v1148
    %4810 = vmatprep.subr.mxu0 0.0
    %4811 = vmatpush2.msra.mxu0 0.0
    %4812 = vmatprep.subr.mxu0 0.0
    %4813 = vmatpush2.msra.mxu0 0.0
    %4814 = vmatprep.subr.mxu0 0.0
    %4815 = vmatpush2.msra.mxu0 0.0
    %4816 = vmatprep.subr.mxu0 0.0
    %4817 = vmatpush2.msra.mxu0 0.0
    %4818 = vmatprep.subr.mxu0 0.0
    %4819 = vmatpush2.msra.mxu0 0.0
    %4820 = vmatprep.subr.mxu0 0.0
    %4821 = vmatpush2.msra.mxu0 0.0
    %4822 = vmatprep.subr.mxu0 0.0
    %4823 = vmatpush2.msra.mxu0 0.0
    %4824 = vmatprep.subr.mxu0 0.0
    %4825 = vmatpush2.msra.mxu0 0.0
    %4826 = vmatprep.subr.mxu0 0.0
    %4827 = vmatpush2.msra.mxu0 0.0
    %4828 = vmatprep.subr.mxu0 0.0
    %4829 = vmatpush2.msra.mxu0 0.0
    %4830 = vmatprep.subr.mxu0 0.0
    %4831 = vmatpush2.msra.mxu0 0.0
    %4832 = vmatprep.subr.mxu0 0.0
    %4833 = vmatpush2.msra.mxu0 0.0
    %4834 = vmatprep.subr.mxu0 0.0
    %4835 = vmatpush2.msra.mxu0 0.0
    %4836 = vmatprep.subr.mxu0 0.0
    %4837 = vmatpush2.msra.mxu0 0.0
    %4838 = vmatprep.subr.mxu0 0.0
    %4839 = vmatpush2.msra.mxu0 0.0
    %4840 = vmatprep.subr.mxu0 0.0
    %4841 = vmatpush2.msra.mxu0 0.0
    %4842 = vmatprep.mubr.f32.mxu0 0.0
    %4843 = vmatmul.mubr.f32.gmra.mxu0 %v4773
    %v4844 = vpop.f32.mrf.mxu0
    %v4845 = vadd.f32 %v4687, %v4844
    %v4846 = vpop.f32.mrf.mxu0
    %v4847 = vadd.f32 %v4689, %v4846
    %4848 = vmatprep.mubr.f32.mxu0 0.0
    %4849 = vmatmul.mubr.f32.gmra.mxu0 %v4776
    %v4850 = vpop.f32.mrf.mxu0
    %v4851 = vadd.f32 %v4693, %v4850
    %v4852 = vpop.f32.mrf.mxu0
    %v4853 = vadd.f32 %v4695, %v4852
    %4854 = vdwg.mxu0
    %4855 = vmatprep.subr.mxu0 0.0
    %4856 = vmatpush1.msra.mxu0 0.0
    %4857 = vmatprep.subr.mxu0 0.0
    %4858 = vmatpush1.msra.mxu0 0.0
    %4859 = vmatprep.subr.mxu0 0.0
    %4860 = vmatpush1.msra.mxu0 0.0
    %4861 = vmatprep.subr.mxu0 0.0
    %4862 = vmatpush1.msra.mxu0 0.0
    %4863 = vmatprep.subr.mxu0 0.0
    %4864 = vmatpush1.msra.mxu0 0.0
    %4865 = vmatprep.subr.mxu0 0.0
    %4866 = vmatpush1.msra.mxu0 0.0
    %4867 = vmatprep.subr.mxu0 0.0
    %4868 = vmatpush1.msra.mxu0 0.0
    %4869 = vmatprep.subr.mxu0 0.0
    %4870 = vmatpush1.msra.mxu0 0.0
    %4871 = vmatprep.subr.mxu0 0.0
    %4872 = vmatpush1.msra.mxu0 0.0
    %4873 = vmatprep.subr.mxu0 0.0
    %4874 = vmatpush1.msra.mxu0 0.0
    %4875 = vmatprep.subr.mxu0 0.0
    %4876 = vmatpush1.msra.mxu0 0.0
    %4877 = vmatprep.subr.mxu0 0.0
    %4878 = vmatpush1.msra.mxu0 0.0
    %4879 = vmatprep.subr.mxu0 0.0
    %4880 = vmatpush1.msra.mxu0 %v1159
    %4881 = vmatprep.subr.mxu0 0.0
    %4882 = vmatpush1.msra.mxu0 %v1156
    %4883 = vmatprep.subr.mxu0 0.0
    %4884 = vmatpush1.msra.mxu0 %v1153
    %4885 = vmatprep.subr.mxu0 0.0
    %4886 = vmatpush1.msra.mxu0 %v1150
    %4887 = vmatprep.subr.mxu0 0.0
    %4888 = vmatpush2.msra.mxu0 0.0
    %4889 = vmatprep.subr.mxu0 0.0
    %4890 = vmatpush2.msra.mxu0 0.0
    %4891 = vmatprep.subr.mxu0 0.0
    %4892 = vmatpush2.msra.mxu0 0.0
    %4893 = vmatprep.subr.mxu0 0.0
    %4894 = vmatpush2.msra.mxu0 0.0
    %4895 = vmatprep.subr.mxu0 0.0
    %4896 = vmatpush2.msra.mxu0 0.0
    %4897 = vmatprep.subr.mxu0 0.0
    %4898 = vmatpush2.msra.mxu0 0.0
    %4899 = vmatprep.subr.mxu0 0.0
    %4900 = vmatpush2.msra.mxu0 0.0
    %4901 = vmatprep.subr.mxu0 0.0
    %4902 = vmatpush2.msra.mxu0 0.0
    %4903 = vmatprep.subr.mxu0 0.0
    %4904 = vmatpush2.msra.mxu0 0.0
    %4905 = vmatprep.subr.mxu0 0.0
    %4906 = vmatpush2.msra.mxu0 0.0
    %4907 = vmatprep.subr.mxu0 0.0
    %4908 = vmatpush2.msra.mxu0 0.0
    %4909 = vmatprep.subr.mxu0 0.0
    %4910 = vmatpush2.msra.mxu0 0.0
    %4911 = vmatprep.subr.mxu0 0.0
    %4912 = vmatpush2.msra.mxu0 0.0
    %4913 = vmatprep.subr.mxu0 0.0
    %4914 = vmatpush2.msra.mxu0 0.0
    %4915 = vmatprep.subr.mxu0 0.0
    %4916 = vmatpush2.msra.mxu0 0.0
    %4917 = vmatprep.subr.mxu0 0.0
    %4918 = vmatpush2.msra.mxu0 0.0
    %4919 = vmatprep.mubr.f32.mxu0 0.0
    %4920 = vmatmul.mubr.f32.gmra.mxu0 %v4773
    %v4921 = vpop.f32.mrf.mxu0
    %v4922 = vadd.f32 %v4764, %v4921
    %v4923 = vpop.f32.mrf.mxu0
    %4924 = vmatprep.mubr.f32.mxu0 0.0
    %4925 = vmatmul.mubr.f32.gmra.mxu0 %v4776
    %v4926 = vpop.f32.mrf.mxu0
    %v4927 = vadd.f32 %v4769, %v4926
    %v4928 = vpop.f32.mrf.mxu0
    %4929 = vdwg.mxu0
    %v4931 = vlaneseq
    %v4932 = vshrl.u32 %v4931, 7
    %v4933 = vsub.s32 0, %v4932
    %v4934 = vrot.slane %v1147, %v4933
    %v4935 = vlaneseq
    %v4936 = vshrl.u32 %v4935, 7
    %v4937 = vsub.s32 1, %v4936
    %v4938 = vrot.slane %v1147, %v4937
    %v4939 = vlaneseq
    %v4940 = vshrl.u32 %v4939, 7
    %v4941 = vsub.s32 2, %v4940
    %v4942 = vrot.slane %v1147, %v4941
    %v4946 = vadd.f32 %v4845, %v4934
    %v4947 = vadd.f32 %v4847, %v4938
    %v4948 = vadd.f32 %v4922, %v4942
    %v4949 = vadd.f32 %v4851, %v4934
    %v4950 = vadd.f32 %v4853, %v4938
    %v4951 = vadd.f32 %v4927, %v4942
    %v4952 = vsel %vm1646, %v4946, 0.0
    %v4953 = vsel %vm1647, %v4949, 0.0
    %v4954 = vadd.f32 %v4952, 0.0
    %v4955 = vadd.f32 %v4953, 0.0
    %v4956 = vsel %vm1656, %v4946, 0.0
    %v4957 = vsel %vm1657, %v4949, 0.0
    %4960 = vrot.lane.b32.xlu0 %v4956, 96
    %v4961 = vpop.permute.xlu0 %4960
    %4962 = vrot.lane.b32.xlu0 %v4957, 96
    %v4963 = vpop.permute.xlu0 %4962
    %v4966 = vadd.f32 %v4954, %v4961
    %v4967 = vadd.f32 %v4955, %v4963
    %v4968 = vsel %vm1674, %v4946, 0.0
    %v4969 = vsel %vm1675, %v4949, 0.0
    %4972 = vrot.lane.b32.xlu0 %v4968, 64
    %v4973 = vpop.permute.xlu0 %4972
    %4974 = vrot.lane.b32.xlu0 %v4969, 64
    %v4975 = vpop.permute.xlu0 %4974
    %v4978 = vadd.f32 %v4966, %v4973
    %v4979 = vadd.f32 %v4967, %v4975
    %v4980 = vsel %vm1692, %v4946, 0.0
    %v4981 = vsel %vm1693, %v4949, 0.0
    %4984 = vrot.lane.b32.xlu0 %v4980, 32
    %v4985 = vpop.permute.xlu0 %4984
    %4986 = vrot.lane.b32.xlu0 %v4981, 32
    %v4987 = vpop.permute.xlu0 %4986
    %v4990 = vadd.f32 %v4978, %v4985
    %v4991 = vadd.f32 %v4979, %v4987
    %v4992 = vsel %vm1710, %v4947, 0.0
    %v4993 = vsel %vm1711, %v4950, 0.0
    %v4994 = vadd.f32 %v4990, %v4992
    %v4995 = vadd.f32 %v4991, %v4993
    %v4996 = vsel %vm1720, %v4947, 0.0
    %v4997 = vsel %vm1721, %v4950, 0.0
    %5000 = vrot.lane.b32.xlu0 %v4996, 96
    %v5001 = vpop.permute.xlu0 %5000
    %5002 = vrot.lane.b32.xlu0 %v4997, 96
    %v5003 = vpop.permute.xlu0 %5002
    %v5006 = vadd.f32 %v4994, %v5001
    %v5007 = vadd.f32 %v4995, %v5003
    %v5008 = vsel %vm1738, %v4947, 0.0
    %v5009 = vsel %vm1739, %v4950, 0.0
    %5012 = vrot.lane.b32.xlu0 %v5008, 64
    %v5013 = vpop.permute.xlu0 %5012
    %5014 = vrot.lane.b32.xlu0 %v5009, 64
    %v5015 = vpop.permute.xlu0 %5014
    %v5018 = vadd.f32 %v5006, %v5013
    %v5019 = vadd.f32 %v5007, %v5015
    %v5020 = vsel %vm1756, %v4947, 0.0
    %v5021 = vsel %vm1757, %v4950, 0.0
    %5024 = vrot.lane.b32.xlu0 %v5020, 32
    %v5025 = vpop.permute.xlu0 %5024
    %5026 = vrot.lane.b32.xlu0 %v5021, 32
    %v5027 = vpop.permute.xlu0 %5026
    %v5030 = vadd.f32 %v5018, %v5025
    %v5031 = vadd.f32 %v5019, %v5027
    %v5032 = vsel %vm1774, %v4948, 0.0
    %v5033 = vsel %vm1775, %v4951, 0.0
    %v5034 = vadd.f32 %v5030, %v5032
    %v5035 = vadd.f32 %v5031, %v5033
    %v5036 = vsel %vm1784, %v4948, 0.0
    %v5037 = vsel %vm1785, %v4951, 0.0
    %5040 = vrot.lane.b32.xlu0 %v5036, 96
    %v5041 = vpop.permute.xlu0 %5040
    %5042 = vrot.lane.b32.xlu0 %v5037, 96
    %v5043 = vpop.permute.xlu0 %5042
    %v5046 = vadd.f32 %v5034, %v5041
    %v5047 = vadd.f32 %v5035, %v5043
    %v5048 = vsel %vm1802, %v4948, 0.0
    %v5049 = vsel %vm1803, %v4951, 0.0
    %5052 = vrot.lane.b32.xlu0 %v5048, 64
    %v5053 = vpop.permute.xlu0 %5052
    %5054 = vrot.lane.b32.xlu0 %v5049, 64
    %v5055 = vpop.permute.xlu0 %5054
    %v5058 = vadd.f32 %v5046, %v5053
    %v5059 = vadd.f32 %v5047, %v5055
    %5060 = vmatprep.subr.mxu0 0.0
    %5061 = vmatpush1.msra.mxu0 0.0
    %5062 = vmatprep.subr.mxu0 0.0
    %5063 = vmatpush1.msra.mxu0 0.0
    %5064 = vmatprep.subr.mxu0 0.0
    %5065 = vmatpush1.msra.mxu0 0.0
    %5066 = vmatprep.subr.mxu0 0.0
    %5067 = vmatpush1.msra.mxu0 0.0
    %5068 = vmatprep.subr.mxu0 0.0
    %5069 = vmatpush1.msra.mxu0 0.0
    %5070 = vmatprep.subr.mxu0 0.0
    %5071 = vmatpush1.msra.mxu0 0.0
    %5072 = vmatprep.subr.mxu0 0.0
    %5073 = vmatpush1.msra.mxu0 0.0
    %5074 = vmatprep.subr.mxu0 0.0
    %5075 = vmatpush1.msra.mxu0 0.0
    %5076 = vmatprep.subr.mxu0 0.0
    %5077 = vmatpush1.msra.mxu0 0.0
    %5078 = vmatprep.subr.mxu0 0.0
    %5079 = vmatpush1.msra.mxu0 0.0
    %5080 = vmatprep.subr.mxu0 0.0
    %5081 = vmatpush1.msra.mxu0 0.0
    %5082 = vmatprep.subr.mxu0 0.0
    %5083 = vmatpush1.msra.mxu0 0.0
    %5084 = vmatprep.subr.mxu0 0.0
    %5085 = vmatpush1.msra.mxu0 0.0
    %5086 = vmatprep.subr.mxu0 0.0
    %5087 = vmatpush1.msra.mxu0 0.0
    %5088 = vmatprep.subr.mxu0 0.0
    %5089 = vmatpush1.msra.mxu0 %v4457
    %5090 = vmatprep.subr.mxu0 0.0
    %5091 = vmatpush1.msra.mxu0 %v4452
    %5092 = vmatprep.subr.mxu0 0.0
    %5093 = vmatpush2.msra.mxu0 0.0
    %5094 = vmatprep.subr.mxu0 0.0
    %5095 = vmatpush2.msra.mxu0 0.0
    %5096 = vmatprep.subr.mxu0 0.0
    %5097 = vmatpush2.msra.mxu0 0.0
    %5098 = vmatprep.subr.mxu0 0.0
    %5099 = vmatpush2.msra.mxu0 0.0
    %5100 = vmatprep.subr.mxu0 0.0
    %5101 = vmatpush2.msra.mxu0 0.0
    %5102 = vmatprep.subr.mxu0 0.0
    %5103 = vmatpush2.msra.mxu0 0.0
    %5104 = vmatprep.subr.mxu0 0.0
    %5105 = vmatpush2.msra.mxu0 0.0
    %5106 = vmatprep.subr.mxu0 0.0
    %5107 = vmatpush2.msra.mxu0 0.0
    %5108 = vmatprep.subr.mxu0 0.0
    %5109 = vmatpush2.msra.mxu0 0.0
    %5110 = vmatprep.subr.mxu0 0.0
    %5111 = vmatpush2.msra.mxu0 0.0
    %5112 = vmatprep.subr.mxu0 0.0
    %5113 = vmatpush2.msra.mxu0 0.0
    %5114 = vmatprep.subr.mxu0 0.0
    %5115 = vmatpush2.msra.mxu0 0.0
    %5116 = vmatprep.subr.mxu0 0.0
    %5117 = vmatpush2.msra.mxu0 0.0
    %5118 = vmatprep.subr.mxu0 0.0
    %5119 = vmatpush2.msra.mxu0 0.0
    %5120 = vmatprep.subr.mxu0 0.0
    %5121 = vmatpush2.msra.mxu0 0.0
    %5122 = vmatprep.subr.mxu0 0.0
    %5123 = vmatpush2.msra.mxu0 0.0
    %5124 = vmatprep.mubr.f32.mxu0 0.0
    %5125 = vmatmul.mubr.f32.gmra.mxu0 %v1817
    %v5126 = vpop.f32.mrf.mxu0
    %v5127 = vadd.f32 0.0, %v5126
    %v5128 = vpop.f32.mrf.mxu0
    %5129 = vmatprep.mubr.f32.mxu0 0.0
    %5130 = vmatmul.mubr.f32.gmra.mxu0 %v1820
    %v5131 = vpop.f32.mrf.mxu0
    %v5132 = vadd.f32 0.0, %v5131
    %v5133 = vpop.f32.mrf.mxu0
    %5134 = vdwg.mxu0
    %5135 = vmatprep.subr.mxu0 0.0
    %5136 = vmatpush1.msra.mxu0 0.0
    %5137 = vmatprep.subr.mxu0 0.0
    %5138 = vmatpush1.msra.mxu0 0.0
    %5139 = vmatprep.subr.mxu0 0.0
    %5140 = vmatpush1.msra.mxu0 0.0
    %5141 = vmatprep.subr.mxu0 0.0
    %5142 = vmatpush1.msra.mxu0 0.0
    %5143 = vmatprep.subr.mxu0 0.0
    %5144 = vmatpush1.msra.mxu0 0.0
    %5145 = vmatprep.subr.mxu0 0.0
    %5146 = vmatpush1.msra.mxu0 0.0
    %5147 = vmatprep.subr.mxu0 0.0
    %5148 = vmatpush1.msra.mxu0 0.0
    %5149 = vmatprep.subr.mxu0 0.0
    %5150 = vmatpush1.msra.mxu0 0.0
    %5151 = vmatprep.subr.mxu0 0.0
    %5152 = vmatpush1.msra.mxu0 0.0
    %5153 = vmatprep.subr.mxu0 0.0
    %5154 = vmatpush1.msra.mxu0 0.0
    %5155 = vmatprep.subr.mxu0 0.0
    %5156 = vmatpush1.msra.mxu0 0.0
    %5157 = vmatprep.subr.mxu0 0.0
    %5158 = vmatpush1.msra.mxu0 0.0
    %5159 = vmatprep.subr.mxu0 %v1120
    %5160 = vmatpush1.msra.mxu0 %v1119
    %5161 = vmatprep.subr.mxu0 %v1117
    %5162 = vmatpush1.msra.mxu0 %v1116
    %5163 = vmatprep.subr.mxu0 %v1114
    %5164 = vmatpush1.msra.mxu0 %v1113
    %5165 = vmatprep.subr.mxu0 %v1111
    %5166 = vmatpush1.msra.mxu0 %v1110
    %5167 = vmatprep.subr.mxu0 0.0
    %5168 = vmatpush2.msra.mxu0 0.0
    %5169 = vmatprep.subr.mxu0 0.0
    %5170 = vmatpush2.msra.mxu0 0.0
    %5171 = vmatprep.subr.mxu0 0.0
    %5172 = vmatpush2.msra.mxu0 0.0
    %5173 = vmatprep.subr.mxu0 0.0
    %5174 = vmatpush2.msra.mxu0 0.0
    %5175 = vmatprep.subr.mxu0 0.0
    %5176 = vmatpush2.msra.mxu0 0.0
    %5177 = vmatprep.subr.mxu0 0.0
    %5178 = vmatpush2.msra.mxu0 0.0
    %5179 = vmatprep.subr.mxu0 0.0
    %5180 = vmatpush2.msra.mxu0 0.0
    %5181 = vmatprep.subr.mxu0 0.0
    %5182 = vmatpush2.msra.mxu0 0.0
    %5183 = vmatprep.subr.mxu0 0.0
    %5184 = vmatpush2.msra.mxu0 0.0
    %5185 = vmatprep.subr.mxu0 0.0
    %5186 = vmatpush2.msra.mxu0 0.0
    %5187 = vmatprep.subr.mxu0 0.0
    %5188 = vmatpush2.msra.mxu0 0.0
    %5189 = vmatprep.subr.mxu0 0.0
    %5190 = vmatpush2.msra.mxu0 0.0
    %5191 = vmatprep.subr.mxu0 0.0
    %5192 = vmatpush2.msra.mxu0 0.0
    %5193 = vmatprep.subr.mxu0 0.0
    %5194 = vmatpush2.msra.mxu0 0.0
    %5195 = vmatprep.subr.mxu0 0.0
    %5196 = vmatpush2.msra.mxu0 0.0
    %5197 = vmatprep.subr.mxu0 0.0
    %5198 = vmatpush2.msra.mxu0 0.0
    %5199 = vmatprep.mubr.f32.mxu0 0.0
    %5200 = vmatmul.mubr.f32.gmra.mxu0 %v4615
    %v5201 = vpop.f32.mrf.mxu0
    %v5202 = vadd.f32 0.0, %v5201
    %v5203 = vpop.f32.mrf.mxu0
    %v5204 = vadd.f32 0.0, %v5203
    %5205 = vmatprep.mubr.f32.mxu0 0.0
    %5206 = vmatmul.mubr.f32.gmra.mxu0 %v4618
    %v5207 = vpop.f32.mrf.mxu0
    %v5208 = vadd.f32 0.0, %v5207
    %v5209 = vpop.f32.mrf.mxu0
    %v5210 = vadd.f32 0.0, %v5209
    %5211 = vdwg.mxu0
    %5212 = vmatprep.subr.mxu0 0.0
    %5213 = vmatpush1.msra.mxu0 0.0
    %5214 = vmatprep.subr.mxu0 0.0
    %5215 = vmatpush1.msra.mxu0 0.0
    %5216 = vmatprep.subr.mxu0 0.0
    %5217 = vmatpush1.msra.mxu0 0.0
    %5218 = vmatprep.subr.mxu0 0.0
    %5219 = vmatpush1.msra.mxu0 0.0
    %5220 = vmatprep.subr.mxu0 0.0
    %5221 = vmatpush1.msra.mxu0 0.0
    %5222 = vmatprep.subr.mxu0 0.0
    %5223 = vmatpush1.msra.mxu0 0.0
    %5224 = vmatprep.subr.mxu0 0.0
    %5225 = vmatpush1.msra.mxu0 0.0
    %5226 = vmatprep.subr.mxu0 0.0
    %5227 = vmatpush1.msra.mxu0 0.0
    %5228 = vmatprep.subr.mxu0 0.0
    %5229 = vmatpush1.msra.mxu0 0.0
    %5230 = vmatprep.subr.mxu0 0.0
    %5231 = vmatpush1.msra.mxu0 0.0
    %5232 = vmatprep.subr.mxu0 0.0
    %5233 = vmatpush1.msra.mxu0 0.0
    %5234 = vmatprep.subr.mxu0 0.0
    %5235 = vmatpush1.msra.mxu0 0.0
    %5236 = vmatprep.subr.mxu0 0.0
    %5237 = vmatpush1.msra.mxu0 %v1121
    %5238 = vmatprep.subr.mxu0 0.0
    %5239 = vmatpush1.msra.mxu0 %v1118
    %5240 = vmatprep.subr.mxu0 0.0
    %5241 = vmatpush1.msra.mxu0 %v1115
    %5242 = vmatprep.subr.mxu0 0.0
    %5243 = vmatpush1.msra.mxu0 %v1112
    %5244 = vmatprep.subr.mxu0 0.0
    %5245 = vmatpush2.msra.mxu0 0.0
    %5246 = vmatprep.subr.mxu0 0.0
    %5247 = vmatpush2.msra.mxu0 0.0
    %5248 = vmatprep.subr.mxu0 0.0
    %5249 = vmatpush2.msra.mxu0 0.0
    %5250 = vmatprep.subr.mxu0 0.0
    %5251 = vmatpush2.msra.mxu0 0.0
    %5252 = vmatprep.subr.mxu0 0.0
    %5253 = vmatpush2.msra.mxu0 0.0
    %5254 = vmatprep.subr.mxu0 0.0
    %5255 = vmatpush2.msra.mxu0 0.0
    %5256 = vmatprep.subr.mxu0 0.0
    %5257 = vmatpush2.msra.mxu0 0.0
    %5258 = vmatprep.subr.mxu0 0.0
    %5259 = vmatpush2.msra.mxu0 0.0
    %5260 = vmatprep.subr.mxu0 0.0
    %5261 = vmatpush2.msra.mxu0 0.0
    %5262 = vmatprep.subr.mxu0 0.0
    %5263 = vmatpush2.msra.mxu0 0.0
    %5264 = vmatprep.subr.mxu0 0.0
    %5265 = vmatpush2.msra.mxu0 0.0
    %5266 = vmatprep.subr.mxu0 0.0
    %5267 = vmatpush2.msra.mxu0 0.0
    %5268 = vmatprep.subr.mxu0 0.0
    %5269 = vmatpush2.msra.mxu0 0.0
    %5270 = vmatprep.subr.mxu0 0.0
    %5271 = vmatpush2.msra.mxu0 0.0
    %5272 = vmatprep.subr.mxu0 0.0
    %5273 = vmatpush2.msra.mxu0 0.0
    %5274 = vmatprep.subr.mxu0 0.0
    %5275 = vmatpush2.msra.mxu0 0.0
    %5276 = vmatprep.mubr.f32.mxu0 0.0
    %5277 = vmatmul.mubr.f32.gmra.mxu0 %v4615
    %v5278 = vpop.f32.mrf.mxu0
    %v5279 = vadd.f32 0.0, %v5278
    %v5280 = vpop.f32.mrf.mxu0
    %5281 = vmatprep.mubr.f32.mxu0 0.0
    %5282 = vmatmul.mubr.f32.gmra.mxu0 %v4618
    %v5283 = vpop.f32.mrf.mxu0
    %v5284 = vadd.f32 0.0, %v5283
    %v5285 = vpop.f32.mrf.mxu0
    %5286 = vdwg.mxu0
    %v5288 = vsel %vm3923, %v5127, 0
    %v5291 = vsel %vm3923, %v5132, 0
    %5293 = vmatprep.subr.mxu0 0.0
    %5294 = vmatpush1.msra.mxu0 0.0
    %5295 = vmatprep.subr.mxu0 0.0
    %5296 = vmatpush1.msra.mxu0 0.0
    %5297 = vmatprep.subr.mxu0 0.0
    %5298 = vmatpush1.msra.mxu0 0.0
    %5299 = vmatprep.subr.mxu0 0.0
    %5300 = vmatpush1.msra.mxu0 0.0
    %5301 = vmatprep.subr.mxu0 0.0
    %5302 = vmatpush1.msra.mxu0 0.0
    %5303 = vmatprep.subr.mxu0 0.0
    %5304 = vmatpush1.msra.mxu0 0.0
    %5305 = vmatprep.subr.mxu0 0.0
    %5306 = vmatpush1.msra.mxu0 0.0
    %5307 = vmatprep.subr.mxu0 0.0
    %5308 = vmatpush1.msra.mxu0 0.0
    %5309 = vmatprep.subr.mxu0 0.0
    %5310 = vmatpush1.msra.mxu0 0.0
    %5311 = vmatprep.subr.mxu0 0.0
    %5312 = vmatpush1.msra.mxu0 0.0
    %5313 = vmatprep.subr.mxu0 0.0
    %5314 = vmatpush1.msra.mxu0 0.0
    %5315 = vmatprep.subr.mxu0 0.0
    %5316 = vmatpush1.msra.mxu0 0.0
    %5317 = vmatprep.subr.mxu0 %v1108
    %5318 = vmatpush1.msra.mxu0 %v1107
    %5319 = vmatprep.subr.mxu0 %v1105
    %5320 = vmatpush1.msra.mxu0 %v1104
    %5321 = vmatprep.subr.mxu0 %v1102
    %5322 = vmatpush1.msra.mxu0 %v1101
    %5323 = vmatprep.subr.mxu0 %v1099
    %5324 = vmatpush1.msra.mxu0 %v1098
    %5325 = vmatprep.subr.mxu0 0.0
    %5326 = vmatpush2.msra.mxu0 0.0
    %5327 = vmatprep.subr.mxu0 0.0
    %5328 = vmatpush2.msra.mxu0 0.0
    %5329 = vmatprep.subr.mxu0 0.0
    %5330 = vmatpush2.msra.mxu0 0.0
    %5331 = vmatprep.subr.mxu0 0.0
    %5332 = vmatpush2.msra.mxu0 0.0
    %5333 = vmatprep.subr.mxu0 0.0
    %5334 = vmatpush2.msra.mxu0 0.0
    %5335 = vmatprep.subr.mxu0 0.0
    %5336 = vmatpush2.msra.mxu0 0.0
    %5337 = vmatprep.subr.mxu0 0.0
    %5338 = vmatpush2.msra.mxu0 0.0
    %5339 = vmatprep.subr.mxu0 0.0
    %5340 = vmatpush2.msra.mxu0 0.0
    %5341 = vmatprep.subr.mxu0 0.0
    %5342 = vmatpush2.msra.mxu0 0.0
    %5343 = vmatprep.subr.mxu0 0.0
    %5344 = vmatpush2.msra.mxu0 0.0
    %5345 = vmatprep.subr.mxu0 0.0
    %5346 = vmatpush2.msra.mxu0 0.0
    %5347 = vmatprep.subr.mxu0 0.0
    %5348 = vmatpush2.msra.mxu0 0.0
    %5349 = vmatprep.subr.mxu0 0.0
    %5350 = vmatpush2.msra.mxu0 0.0
    %5351 = vmatprep.subr.mxu0 0.0
    %5352 = vmatpush2.msra.mxu0 0.0
    %5353 = vmatprep.subr.mxu0 0.0
    %5354 = vmatpush2.msra.mxu0 0.0
    %5355 = vmatprep.subr.mxu0 0.0
    %5356 = vmatpush2.msra.mxu0 0.0
    %5357 = vmatprep.mubr.f32.mxu0 0.0
    %5358 = vmatmul.mubr.f32.gmra.mxu0 %v5288
    %v5359 = vpop.f32.mrf.mxu0
    %v5360 = vadd.f32 %v5202, %v5359
    %v5361 = vpop.f32.mrf.mxu0
    %v5362 = vadd.f32 %v5204, %v5361
    %5363 = vmatprep.mubr.f32.mxu0 0.0
    %5364 = vmatmul.mubr.f32.gmra.mxu0 %v5291
    %v5365 = vpop.f32.mrf.mxu0
    %v5366 = vadd.f32 %v5208, %v5365
    %v5367 = vpop.f32.mrf.mxu0
    %v5368 = vadd.f32 %v5210, %v5367
    %5369 = vdwg.mxu0
    %5370 = vmatprep.subr.mxu0 0.0
    %5371 = vmatpush1.msra.mxu0 0.0
    %5372 = vmatprep.subr.mxu0 0.0
    %5373 = vmatpush1.msra.mxu0 0.0
    %5374 = vmatprep.subr.mxu0 0.0
    %5375 = vmatpush1.msra.mxu0 0.0
    %5376 = vmatprep.subr.mxu0 0.0
    %5377 = vmatpush1.msra.mxu0 0.0
    %5378 = vmatprep.subr.mxu0 0.0
    %5379 = vmatpush1.msra.mxu0 0.0
    %5380 = vmatprep.subr.mxu0 0.0
    %5381 = vmatpush1.msra.mxu0 0.0
    %5382 = vmatprep.subr.mxu0 0.0
    %5383 = vmatpush1.msra.mxu0 0.0
    %5384 = vmatprep.subr.mxu0 0.0
    %5385 = vmatpush1.msra.mxu0 0.0
    %5386 = vmatprep.subr.mxu0 0.0
    %5387 = vmatpush1.msra.mxu0 0.0
    %5388 = vmatprep.subr.mxu0 0.0
    %5389 = vmatpush1.msra.mxu0 0.0
    %5390 = vmatprep.subr.mxu0 0.0
    %5391 = vmatpush1.msra.mxu0 0.0
    %5392 = vmatprep.subr.mxu0 0.0
    %5393 = vmatpush1.msra.mxu0 0.0
    %5394 = vmatprep.subr.mxu0 0.0
    %5395 = vmatpush1.msra.mxu0 %v1109
    %5396 = vmatprep.subr.mxu0 0.0
    %5397 = vmatpush1.msra.mxu0 %v1106
    %5398 = vmatprep.subr.mxu0 0.0
    %5399 = vmatpush1.msra.mxu0 %v1103
    %5400 = vmatprep.subr.mxu0 0.0
    %5401 = vmatpush1.msra.mxu0 %v1100
    %5402 = vmatprep.subr.mxu0 0.0
    %5403 = vmatpush2.msra.mxu0 0.0
    %5404 = vmatprep.subr.mxu0 0.0
    %5405 = vmatpush2.msra.mxu0 0.0
    %5406 = vmatprep.subr.mxu0 0.0
    %5407 = vmatpush2.msra.mxu0 0.0
    %5408 = vmatprep.subr.mxu0 0.0
    %5409 = vmatpush2.msra.mxu0 0.0
    %5410 = vmatprep.subr.mxu0 0.0
    %5411 = vmatpush2.msra.mxu0 0.0
    %5412 = vmatprep.subr.mxu0 0.0
    %5413 = vmatpush2.msra.mxu0 0.0
    %5414 = vmatprep.subr.mxu0 0.0
    %5415 = vmatpush2.msra.mxu0 0.0
    %5416 = vmatprep.subr.mxu0 0.0
    %5417 = vmatpush2.msra.mxu0 0.0
    %5418 = vmatprep.subr.mxu0 0.0
    %5419 = vmatpush2.msra.mxu0 0.0
    %5420 = vmatprep.subr.mxu0 0.0
    %5421 = vmatpush2.msra.mxu0 0.0
    %5422 = vmatprep.subr.mxu0 0.0
    %5423 = vmatpush2.msra.mxu0 0.0
    %5424 = vmatprep.subr.mxu0 0.0
    %5425 = vmatpush2.msra.mxu0 0.0
    %5426 = vmatprep.subr.mxu0 0.0
    %5427 = vmatpush2.msra.mxu0 0.0
    %5428 = vmatprep.subr.mxu0 0.0
    %5429 = vmatpush2.msra.mxu0 0.0
    %5430 = vmatprep.subr.mxu0 0.0
    %5431 = vmatpush2.msra.mxu0 0.0
    %5432 = vmatprep.subr.mxu0 0.0
    %5433 = vmatpush2.msra.mxu0 0.0
    %5434 = vmatprep.mubr.f32.mxu0 0.0
    %5435 = vmatmul.mubr.f32.gmra.mxu0 %v5288
    %v5436 = vpop.f32.mrf.mxu0
    %v5437 = vadd.f32 %v5279, %v5436
    %v5438 = vpop.f32.mrf.mxu0
    %5439 = vmatprep.mubr.f32.mxu0 0.0
    %5440 = vmatmul.mubr.f32.gmra.mxu0 %v5291
    %v5441 = vpop.f32.mrf.mxu0
    %v5442 = vadd.f32 %v5284, %v5441
    %v5443 = vpop.f32.mrf.mxu0
    %5444 = vdwg.mxu0
    %v5446 = vlaneseq
    %v5447 = vshrl.u32 %v5446, 7
    %v5448 = vsub.s32 0, %v5447
    %v5449 = vrot.slane %v1097, %v5448
    %v5450 = vlaneseq
    %v5451 = vshrl.u32 %v5450, 7
    %v5452 = vsub.s32 1, %v5451
    %v5453 = vrot.slane %v1097, %v5452
    %v5454 = vlaneseq
    %v5455 = vshrl.u32 %v5454, 7
    %v5456 = vsub.s32 2, %v5455
    %v5457 = vrot.slane %v1097, %v5456
    %v5461 = vadd.f32 %v5360, %v5449
    %v5462 = vadd.f32 %v5362, %v5453
    %v5463 = vadd.f32 %v5437, %v5457
    %v5464 = vadd.f32 %v5366, %v5449
    %v5465 = vadd.f32 %v5368, %v5453
    %v5466 = vadd.f32 %v5442, %v5457
    %v5467 = vsel %vm2261, %v5461, 0.0
    %v5468 = vsel %vm2262, %v5464, 0.0
    %v5469 = vadd.f32 %v5467, 0.0
    %v5470 = vadd.f32 %v5468, 0.0
    %v5471 = vsel %vm2271, %v5461, 0.0
    %v5472 = vsel %vm2272, %v5464, 0.0
    %5475 = vrot.lane.b32.xlu0 %v5471, 96
    %v5476 = vpop.permute.xlu0 %5475
    %5477 = vrot.lane.b32.xlu0 %v5472, 96
    %v5478 = vpop.permute.xlu0 %5477
    %v5481 = vadd.f32 %v5469, %v5476
    %v5482 = vadd.f32 %v5470, %v5478
    %v5483 = vsel %vm2289, %v5461, 0.0
    %v5484 = vsel %vm2290, %v5464, 0.0
    %5487 = vrot.lane.b32.xlu0 %v5483, 64
    %v5488 = vpop.permute.xlu0 %5487
    %5489 = vrot.lane.b32.xlu0 %v5484, 64
    %v5490 = vpop.permute.xlu0 %5489
    %v5493 = vadd.f32 %v5481, %v5488
    %v5494 = vadd.f32 %v5482, %v5490
    %v5495 = vsel %vm2307, %v5461, 0.0
    %v5496 = vsel %vm2308, %v5464, 0.0
    %5499 = vrot.lane.b32.xlu0 %v5495, 32
    %v5500 = vpop.permute.xlu0 %5499
    %5501 = vrot.lane.b32.xlu0 %v5496, 32
    %v5502 = vpop.permute.xlu0 %5501
    %v5505 = vadd.f32 %v5493, %v5500
    %v5506 = vadd.f32 %v5494, %v5502
    %v5507 = vsel %vm2325, %v5462, 0.0
    %v5508 = vsel %vm2326, %v5465, 0.0
    %v5509 = vadd.f32 %v5505, %v5507
    %v5510 = vadd.f32 %v5506, %v5508
    %v5511 = vsel %vm2335, %v5462, 0.0
    %v5512 = vsel %vm2336, %v5465, 0.0
    %5515 = vrot.lane.b32.xlu0 %v5511, 96
    %v5516 = vpop.permute.xlu0 %5515
    %5517 = vrot.lane.b32.xlu0 %v5512, 96
    %v5518 = vpop.permute.xlu0 %5517
    %v5521 = vadd.f32 %v5509, %v5516
    %v5522 = vadd.f32 %v5510, %v5518
    %v5523 = vsel %vm2353, %v5462, 0.0
    %v5524 = vsel %vm2354, %v5465, 0.0
    %5527 = vrot.lane.b32.xlu0 %v5523, 64
    %v5528 = vpop.permute.xlu0 %5527
    %5529 = vrot.lane.b32.xlu0 %v5524, 64
    %v5530 = vpop.permute.xlu0 %5529
    %v5533 = vadd.f32 %v5521, %v5528
    %v5534 = vadd.f32 %v5522, %v5530
    %v5535 = vsel %vm2371, %v5462, 0.0
    %v5536 = vsel %vm2372, %v5465, 0.0
    %5539 = vrot.lane.b32.xlu0 %v5535, 32
    %v5540 = vpop.permute.xlu0 %5539
    %5541 = vrot.lane.b32.xlu0 %v5536, 32
    %v5542 = vpop.permute.xlu0 %5541
    %v5545 = vadd.f32 %v5533, %v5540
    %v5546 = vadd.f32 %v5534, %v5542
    %v5547 = vsel %vm2389, %v5463, 0.0
    %v5548 = vsel %vm2390, %v5466, 0.0
    %v5549 = vadd.f32 %v5545, %v5547
    %v5550 = vadd.f32 %v5546, %v5548
    %v5551 = vsel %vm2399, %v5463, 0.0
    %v5552 = vsel %vm2400, %v5466, 0.0
    %5555 = vrot.lane.b32.xlu0 %v5551, 96
    %v5556 = vpop.permute.xlu0 %5555
    %5557 = vrot.lane.b32.xlu0 %v5552, 96
    %v5558 = vpop.permute.xlu0 %5557
    %v5561 = vadd.f32 %v5549, %v5556
    %v5562 = vadd.f32 %v5550, %v5558
    %v5563 = vsel %vm2417, %v5463, 0.0
    %v5564 = vsel %vm2418, %v5466, 0.0
    %5567 = vrot.lane.b32.xlu0 %v5563, 64
    %v5568 = vpop.permute.xlu0 %5567
    %5569 = vrot.lane.b32.xlu0 %v5564, 64
    %v5570 = vpop.permute.xlu0 %5569
    %v5573 = vadd.f32 %v5561, %v5568
    %v5574 = vadd.f32 %v5562, %v5570
    %v5575 = vadd.f32 %v5058, %v5573
    %v5576 = vadd.f32 %v5059, %v5574
    %5577 = vmatprep.subr.mxu0 0.0
    %5578 = vmatpush1.msra.mxu0 0.0
    %5579 = vmatprep.subr.mxu0 0.0
    %5580 = vmatpush1.msra.mxu0 0.0
    %5581 = vmatprep.subr.mxu0 0.0
    %5582 = vmatpush1.msra.mxu0 0.0
    %5583 = vmatprep.subr.mxu0 0.0
    %5584 = vmatpush1.msra.mxu0 0.0
    %5585 = vmatprep.subr.mxu0 0.0
    %5586 = vmatpush1.msra.mxu0 0.0
    %5587 = vmatprep.subr.mxu0 0.0
    %5588 = vmatpush1.msra.mxu0 0.0
    %5589 = vmatprep.subr.mxu0 0.0
    %5590 = vmatpush1.msra.mxu0 0.0
    %5591 = vmatprep.subr.mxu0 0.0
    %5592 = vmatpush1.msra.mxu0 0.0
    %5593 = vmatprep.subr.mxu0 0.0
    %5594 = vmatpush1.msra.mxu0 0.0
    %5595 = vmatprep.subr.mxu0 0.0
    %5596 = vmatpush1.msra.mxu0 0.0
    %5597 = vmatprep.subr.mxu0 0.0
    %5598 = vmatpush1.msra.mxu0 0.0
    %5599 = vmatprep.subr.mxu0 0.0
    %5600 = vmatpush1.msra.mxu0 0.0
    %5601 = vmatprep.subr.mxu0 0.0
    %5602 = vmatpush1.msra.mxu0 0.0
    %5603 = vmatprep.subr.mxu0 0.0
    %5604 = vmatpush1.msra.mxu0 0.0
    %5605 = vmatprep.subr.mxu0 0.0
    %5606 = vmatpush1.msra.mxu0 %v4457
    %5607 = vmatprep.subr.mxu0 0.0
    %5608 = vmatpush1.msra.mxu0 %v4452
    %5609 = vmatprep.subr.mxu0 0.0
    %5610 = vmatpush2.msra.mxu0 0.0
    %5611 = vmatprep.subr.mxu0 0.0
    %5612 = vmatpush2.msra.mxu0 0.0
    %5613 = vmatprep.subr.mxu0 0.0
    %5614 = vmatpush2.msra.mxu0 0.0
    %5615 = vmatprep.subr.mxu0 0.0
    %5616 = vmatpush2.msra.mxu0 0.0
    %5617 = vmatprep.subr.mxu0 0.0
    %5618 = vmatpush2.msra.mxu0 0.0
    %5619 = vmatprep.subr.mxu0 0.0
    %5620 = vmatpush2.msra.mxu0 0.0
    %5621 = vmatprep.subr.mxu0 0.0
    %5622 = vmatpush2.msra.mxu0 0.0
    %5623 = vmatprep.subr.mxu0 0.0
    %5624 = vmatpush2.msra.mxu0 0.0
    %5625 = vmatprep.subr.mxu0 0.0
    %5626 = vmatpush2.msra.mxu0 0.0
    %5627 = vmatprep.subr.mxu0 0.0
    %5628 = vmatpush2.msra.mxu0 0.0
    %5629 = vmatprep.subr.mxu0 0.0
    %5630 = vmatpush2.msra.mxu0 0.0
    %5631 = vmatprep.subr.mxu0 0.0
    %5632 = vmatpush2.msra.mxu0 0.0
    %5633 = vmatprep.subr.mxu0 0.0
    %5634 = vmatpush2.msra.mxu0 0.0
    %5635 = vmatprep.subr.mxu0 0.0
    %5636 = vmatpush2.msra.mxu0 0.0
    %5637 = vmatprep.subr.mxu0 0.0
    %5638 = vmatpush2.msra.mxu0 0.0
    %5639 = vmatprep.subr.mxu0 0.0
    %5640 = vmatpush2.msra.mxu0 0.0
    %5641 = vmatprep.mubr.f32.mxu0 0.0
    %5642 = vmatmul.mubr.f32.gmra.mxu0 %v2434
    %v5643 = vpop.f32.mrf.mxu0
    %v5644 = vadd.f32 0.0, %v5643
    %v5645 = vpop.f32.mrf.mxu0
    %5646 = vmatprep.mubr.f32.mxu0 0.0
    %5647 = vmatmul.mubr.f32.gmra.mxu0 %v2437
    %v5648 = vpop.f32.mrf.mxu0
    %v5649 = vadd.f32 0.0, %v5648
    %v5650 = vpop.f32.mrf.mxu0
    %5651 = vdwg.mxu0
    %v5653 = vsel %vm3923, %v4452, 0
    %v5656 = vsel %vm3923, %v4457, 0
    %5658 = vmatprep.subr.mxu0 0.0
    %5659 = vmatpush1.msra.mxu0 0.0
    %5660 = vmatprep.subr.mxu0 0.0
    %5661 = vmatpush1.msra.mxu0 0.0
    %5662 = vmatprep.subr.mxu0 0.0
    %5663 = vmatpush1.msra.mxu0 0.0
    %5664 = vmatprep.subr.mxu0 0.0
    %5665 = vmatpush1.msra.mxu0 0.0
    %5666 = vmatprep.subr.mxu0 0.0
    %5667 = vmatpush1.msra.mxu0 0.0
    %5668 = vmatprep.subr.mxu0 0.0
    %5669 = vmatpush1.msra.mxu0 0.0
    %5670 = vmatprep.subr.mxu0 0.0
    %5671 = vmatpush1.msra.mxu0 0.0
    %5672 = vmatprep.subr.mxu0 0.0
    %5673 = vmatpush1.msra.mxu0 0.0
    %5674 = vmatprep.subr.mxu0 0.0
    %5675 = vmatpush1.msra.mxu0 0.0
    %5676 = vmatprep.subr.mxu0 0.0
    %5677 = vmatpush1.msra.mxu0 0.0
    %5678 = vmatprep.subr.mxu0 0.0
    %5679 = vmatpush1.msra.mxu0 0.0
    %5680 = vmatprep.subr.mxu0 0.0
    %5681 = vmatpush1.msra.mxu0 0.0
    %5682 = vmatprep.subr.mxu0 %v1095
    %5683 = vmatpush1.msra.mxu0 %v1094
    %5684 = vmatprep.subr.mxu0 %v1092
    %5685 = vmatpush1.msra.mxu0 %v1091
    %5686 = vmatprep.subr.mxu0 %v1089
    %5687 = vmatpush1.msra.mxu0 %v1088
    %5688 = vmatprep.subr.mxu0 %v1086
    %5689 = vmatpush1.msra.mxu0 %v1085
    %5690 = vmatprep.subr.mxu0 0.0
    %5691 = vmatpush2.msra.mxu0 0.0
    %5692 = vmatprep.subr.mxu0 0.0
    %5693 = vmatpush2.msra.mxu0 0.0
    %5694 = vmatprep.subr.mxu0 0.0
    %5695 = vmatpush2.msra.mxu0 0.0
    %5696 = vmatprep.subr.mxu0 0.0
    %5697 = vmatpush2.msra.mxu0 0.0
    %5698 = vmatprep.subr.mxu0 0.0
    %5699 = vmatpush2.msra.mxu0 0.0
    %5700 = vmatprep.subr.mxu0 0.0
    %5701 = vmatpush2.msra.mxu0 0.0
    %5702 = vmatprep.subr.mxu0 0.0
    %5703 = vmatpush2.msra.mxu0 0.0
    %5704 = vmatprep.subr.mxu0 0.0
    %5705 = vmatpush2.msra.mxu0 0.0
    %5706 = vmatprep.subr.mxu0 0.0
    %5707 = vmatpush2.msra.mxu0 0.0
    %5708 = vmatprep.subr.mxu0 0.0
    %5709 = vmatpush2.msra.mxu0 0.0
    %5710 = vmatprep.subr.mxu0 0.0
    %5711 = vmatpush2.msra.mxu0 0.0
    %5712 = vmatprep.subr.mxu0 0.0
    %5713 = vmatpush2.msra.mxu0 0.0
    %5714 = vmatprep.subr.mxu0 0.0
    %5715 = vmatpush2.msra.mxu0 0.0
    %5716 = vmatprep.subr.mxu0 0.0
    %5717 = vmatpush2.msra.mxu0 0.0
    %5718 = vmatprep.subr.mxu0 0.0
    %5719 = vmatpush2.msra.mxu0 0.0
    %5720 = vmatprep.subr.mxu0 0.0
    %5721 = vmatpush2.msra.mxu0 0.0
    %5722 = vmatprep.mubr.f32.mxu0 0.0
    %5723 = vmatmul.mubr.f32.gmra.mxu0 %v5653
    %v5724 = vpop.f32.mrf.mxu0
    %v5725 = vadd.f32 0.0, %v5724
    %v5726 = vpop.f32.mrf.mxu0
    %v5727 = vadd.f32 0.0, %v5726
    %5728 = vmatprep.mubr.f32.mxu0 0.0
    %5729 = vmatmul.mubr.f32.gmra.mxu0 %v5656
    %v5730 = vpop.f32.mrf.mxu0
    %v5731 = vadd.f32 0.0, %v5730
    %v5732 = vpop.f32.mrf.mxu0
    %v5733 = vadd.f32 0.0, %v5732
    %5734 = vdwg.mxu0
    %5735 = vmatprep.subr.mxu0 0.0
    %5736 = vmatpush1.msra.mxu0 0.0
    %5737 = vmatprep.subr.mxu0 0.0
    %5738 = vmatpush1.msra.mxu0 0.0
    %5739 = vmatprep.subr.mxu0 0.0
    %5740 = vmatpush1.msra.mxu0 0.0
    %5741 = vmatprep.subr.mxu0 0.0
    %5742 = vmatpush1.msra.mxu0 0.0
    %5743 = vmatprep.subr.mxu0 0.0
    %5744 = vmatpush1.msra.mxu0 0.0
    %5745 = vmatprep.subr.mxu0 0.0
    %5746 = vmatpush1.msra.mxu0 0.0
    %5747 = vmatprep.subr.mxu0 0.0
    %5748 = vmatpush1.msra.mxu0 0.0
    %5749 = vmatprep.subr.mxu0 0.0
    %5750 = vmatpush1.msra.mxu0 0.0
    %5751 = vmatprep.subr.mxu0 0.0
    %5752 = vmatpush1.msra.mxu0 0.0
    %5753 = vmatprep.subr.mxu0 0.0
    %5754 = vmatpush1.msra.mxu0 0.0
    %5755 = vmatprep.subr.mxu0 0.0
    %5756 = vmatpush1.msra.mxu0 0.0
    %5757 = vmatprep.subr.mxu0 0.0
    %5758 = vmatpush1.msra.mxu0 0.0
    %5759 = vmatprep.subr.mxu0 0.0
    %5760 = vmatpush1.msra.mxu0 %v1096
    %5761 = vmatprep.subr.mxu0 0.0
    %5762 = vmatpush1.msra.mxu0 %v1093
    %5763 = vmatprep.subr.mxu0 0.0
    %5764 = vmatpush1.msra.mxu0 %v1090
    %5765 = vmatprep.subr.mxu0 0.0
    %5766 = vmatpush1.msra.mxu0 %v1087
    %5767 = vmatprep.subr.mxu0 0.0
    %5768 = vmatpush2.msra.mxu0 0.0
    %5769 = vmatprep.subr.mxu0 0.0
    %5770 = vmatpush2.msra.mxu0 0.0
    %5771 = vmatprep.subr.mxu0 0.0
    %5772 = vmatpush2.msra.mxu0 0.0
    %5773 = vmatprep.subr.mxu0 0.0
    %5774 = vmatpush2.msra.mxu0 0.0
    %5775 = vmatprep.subr.mxu0 0.0
    %5776 = vmatpush2.msra.mxu0 0.0
    %5777 = vmatprep.subr.mxu0 0.0
    %5778 = vmatpush2.msra.mxu0 0.0
    %5779 = vmatprep.subr.mxu0 0.0
    %5780 = vmatpush2.msra.mxu0 0.0
    %5781 = vmatprep.subr.mxu0 0.0
    %5782 = vmatpush2.msra.mxu0 0.0
    %5783 = vmatprep.subr.mxu0 0.0
    %5784 = vmatpush2.msra.mxu0 0.0
    %5785 = vmatprep.subr.mxu0 0.0
    %5786 = vmatpush2.msra.mxu0 0.0
    %5787 = vmatprep.subr.mxu0 0.0
    %5788 = vmatpush2.msra.mxu0 0.0
    %5789 = vmatprep.subr.mxu0 0.0
    %5790 = vmatpush2.msra.mxu0 0.0
    %5791 = vmatprep.subr.mxu0 0.0
    %5792 = vmatpush2.msra.mxu0 0.0
    %5793 = vmatprep.subr.mxu0 0.0
    %5794 = vmatpush2.msra.mxu0 0.0
    %5795 = vmatprep.subr.mxu0 0.0
    %5796 = vmatpush2.msra.mxu0 0.0
    %5797 = vmatprep.subr.mxu0 0.0
    %5798 = vmatpush2.msra.mxu0 0.0
    %5799 = vmatprep.mubr.f32.mxu0 0.0
    %5800 = vmatmul.mubr.f32.gmra.mxu0 %v5653
    %v5801 = vpop.f32.mrf.mxu0
    %v5802 = vadd.f32 0.0, %v5801
    %v5803 = vpop.f32.mrf.mxu0
    %5804 = vmatprep.mubr.f32.mxu0 0.0
    %5805 = vmatmul.mubr.f32.gmra.mxu0 %v5656
    %v5806 = vpop.f32.mrf.mxu0
    %v5807 = vadd.f32 0.0, %v5806
    %v5808 = vpop.f32.mrf.mxu0
    %5809 = vdwg.mxu0
    %v5811 = vsel %vm3923, %v5644, 0
    %v5814 = vsel %vm3923, %v5649, 0
    %5816 = vmatprep.subr.mxu0 0.0
    %5817 = vmatpush1.msra.mxu0 0.0
    %5818 = vmatprep.subr.mxu0 0.0
    %5819 = vmatpush1.msra.mxu0 0.0
    %5820 = vmatprep.subr.mxu0 0.0
    %5821 = vmatpush1.msra.mxu0 0.0
    %5822 = vmatprep.subr.mxu0 0.0
    %5823 = vmatpush1.msra.mxu0 0.0
    %5824 = vmatprep.subr.mxu0 0.0
    %5825 = vmatpush1.msra.mxu0 0.0
    %5826 = vmatprep.subr.mxu0 0.0
    %5827 = vmatpush1.msra.mxu0 0.0
    %5828 = vmatprep.subr.mxu0 0.0
    %5829 = vmatpush1.msra.mxu0 0.0
    %5830 = vmatprep.subr.mxu0 0.0
    %5831 = vmatpush1.msra.mxu0 0.0
    %5832 = vmatprep.subr.mxu0 0.0
    %5833 = vmatpush1.msra.mxu0 0.0
    %5834 = vmatprep.subr.mxu0 0.0
    %5835 = vmatpush1.msra.mxu0 0.0
    %5836 = vmatprep.subr.mxu0 0.0
    %5837 = vmatpush1.msra.mxu0 0.0
    %5838 = vmatprep.subr.mxu0 0.0
    %5839 = vmatpush1.msra.mxu0 0.0
    %5840 = vmatprep.subr.mxu0 %v1083
    %5841 = vmatpush1.msra.mxu0 %v1082
    %5842 = vmatprep.subr.mxu0 %v1080
    %5843 = vmatpush1.msra.mxu0 %v1079
    %5844 = vmatprep.subr.mxu0 %v1077
    %5845 = vmatpush1.msra.mxu0 %v1076
    %5846 = vmatprep.subr.mxu0 %v1074
    %5847 = vmatpush1.msra.mxu0 %v1073
    %5848 = vmatprep.subr.mxu0 0.0
    %5849 = vmatpush2.msra.mxu0 0.0
    %5850 = vmatprep.subr.mxu0 0.0
    %5851 = vmatpush2.msra.mxu0 0.0
    %5852 = vmatprep.subr.mxu0 0.0
    %5853 = vmatpush2.msra.mxu0 0.0
    %5854 = vmatprep.subr.mxu0 0.0
    %5855 = vmatpush2.msra.mxu0 0.0
    %5856 = vmatprep.subr.mxu0 0.0
    %5857 = vmatpush2.msra.mxu0 0.0
    %5858 = vmatprep.subr.mxu0 0.0
    %5859 = vmatpush2.msra.mxu0 0.0
    %5860 = vmatprep.subr.mxu0 0.0
    %5861 = vmatpush2.msra.mxu0 0.0
    %5862 = vmatprep.subr.mxu0 0.0
    %5863 = vmatpush2.msra.mxu0 0.0
    %5864 = vmatprep.subr.mxu0 0.0
    %5865 = vmatpush2.msra.mxu0 0.0
    %5866 = vmatprep.subr.mxu0 0.0
    %5867 = vmatpush2.msra.mxu0 0.0
    %5868 = vmatprep.subr.mxu0 0.0
    %5869 = vmatpush2.msra.mxu0 0.0
    %5870 = vmatprep.subr.mxu0 0.0
    %5871 = vmatpush2.msra.mxu0 0.0
    %5872 = vmatprep.subr.mxu0 0.0
    %5873 = vmatpush2.msra.mxu0 0.0
    %5874 = vmatprep.subr.mxu0 0.0
    %5875 = vmatpush2.msra.mxu0 0.0
    %5876 = vmatprep.subr.mxu0 0.0
    %5877 = vmatpush2.msra.mxu0 0.0
    %5878 = vmatprep.subr.mxu0 0.0
    %5879 = vmatpush2.msra.mxu0 0.0
    %5880 = vmatprep.mubr.f32.mxu0 0.0
    %5881 = vmatmul.mubr.f32.gmra.mxu0 %v5811
    %v5882 = vpop.f32.mrf.mxu0
    %v5883 = vadd.f32 %v5725, %v5882
    %v5884 = vpop.f32.mrf.mxu0
    %v5885 = vadd.f32 %v5727, %v5884
    %5886 = vmatprep.mubr.f32.mxu0 0.0
    %5887 = vmatmul.mubr.f32.gmra.mxu0 %v5814
    %v5888 = vpop.f32.mrf.mxu0
    %v5889 = vadd.f32 %v5731, %v5888
    %v5890 = vpop.f32.mrf.mxu0
    %v5891 = vadd.f32 %v5733, %v5890
    %5892 = vdwg.mxu0
    %5893 = vmatprep.subr.mxu0 0.0
    %5894 = vmatpush1.msra.mxu0 0.0
    %5895 = vmatprep.subr.mxu0 0.0
    %5896 = vmatpush1.msra.mxu0 0.0
    %5897 = vmatprep.subr.mxu0 0.0
    %5898 = vmatpush1.msra.mxu0 0.0
    %5899 = vmatprep.subr.mxu0 0.0
    %5900 = vmatpush1.msra.mxu0 0.0
    %5901 = vmatprep.subr.mxu0 0.0
    %5902 = vmatpush1.msra.mxu0 0.0
    %5903 = vmatprep.subr.mxu0 0.0
    %5904 = vmatpush1.msra.mxu0 0.0
    %5905 = vmatprep.subr.mxu0 0.0
    %5906 = vmatpush1.msra.mxu0 0.0
    %5907 = vmatprep.subr.mxu0 0.0
    %5908 = vmatpush1.msra.mxu0 0.0
    %5909 = vmatprep.subr.mxu0 0.0
    %5910 = vmatpush1.msra.mxu0 0.0
    %5911 = vmatprep.subr.mxu0 0.0
    %5912 = vmatpush1.msra.mxu0 0.0
    %5913 = vmatprep.subr.mxu0 0.0
    %5914 = vmatpush1.msra.mxu0 0.0
    %5915 = vmatprep.subr.mxu0 0.0
    %5916 = vmatpush1.msra.mxu0 0.0
    %5917 = vmatprep.subr.mxu0 0.0
    %5918 = vmatpush1.msra.mxu0 %v1084
    %5919 = vmatprep.subr.mxu0 0.0
    %5920 = vmatpush1.msra.mxu0 %v1081
    %5921 = vmatprep.subr.mxu0 0.0
    %5922 = vmatpush1.msra.mxu0 %v1078
    %5923 = vmatprep.subr.mxu0 0.0
    %5924 = vmatpush1.msra.mxu0 %v1075
    %5925 = vmatprep.subr.mxu0 0.0
    %5926 = vmatpush2.msra.mxu0 0.0
    %5927 = vmatprep.subr.mxu0 0.0
    %5928 = vmatpush2.msra.mxu0 0.0
    %5929 = vmatprep.subr.mxu0 0.0
    %5930 = vmatpush2.msra.mxu0 0.0
    %5931 = vmatprep.subr.mxu0 0.0
    %5932 = vmatpush2.msra.mxu0 0.0
    %5933 = vmatprep.subr.mxu0 0.0
    %5934 = vmatpush2.msra.mxu0 0.0
    %5935 = vmatprep.subr.mxu0 0.0
    %5936 = vmatpush2.msra.mxu0 0.0
    %5937 = vmatprep.subr.mxu0 0.0
    %5938 = vmatpush2.msra.mxu0 0.0
    %5939 = vmatprep.subr.mxu0 0.0
    %5940 = vmatpush2.msra.mxu0 0.0
    %5941 = vmatprep.subr.mxu0 0.0
    %5942 = vmatpush2.msra.mxu0 0.0
    %5943 = vmatprep.subr.mxu0 0.0
    %5944 = vmatpush2.msra.mxu0 0.0
    %5945 = vmatprep.subr.mxu0 0.0
    %5946 = vmatpush2.msra.mxu0 0.0
    %5947 = vmatprep.subr.mxu0 0.0
    %5948 = vmatpush2.msra.mxu0 0.0
    %5949 = vmatprep.subr.mxu0 0.0
    %5950 = vmatpush2.msra.mxu0 0.0
    %5951 = vmatprep.subr.mxu0 0.0
    %5952 = vmatpush2.msra.mxu0 0.0
    %5953 = vmatprep.subr.mxu0 0.0
    %5954 = vmatpush2.msra.mxu0 0.0
    %5955 = vmatprep.subr.mxu0 0.0
    %5956 = vmatpush2.msra.mxu0 0.0
    %5957 = vmatprep.mubr.f32.mxu0 0.0
    %5958 = vmatmul.mubr.f32.gmra.mxu0 %v5811
    %v5959 = vpop.f32.mrf.mxu0
    %v5960 = vadd.f32 %v5802, %v5959
    %v5961 = vpop.f32.mrf.mxu0
    %5962 = vmatprep.mubr.f32.mxu0 0.0
    %5963 = vmatmul.mubr.f32.gmra.mxu0 %v5814
    %v5964 = vpop.f32.mrf.mxu0
    %v5965 = vadd.f32 %v5807, %v5964
    %v5966 = vpop.f32.mrf.mxu0
    %5967 = vdwg.mxu0
    %v5969 = vlaneseq
    %v5970 = vshrl.u32 %v5969, 7
    %v5971 = vsub.s32 0, %v5970
    %v5972 = vrot.slane %v1072, %v5971
    %v5973 = vlaneseq
    %v5974 = vshrl.u32 %v5973, 7
    %v5975 = vsub.s32 1, %v5974
    %v5976 = vrot.slane %v1072, %v5975
    %v5977 = vlaneseq
    %v5978 = vshrl.u32 %v5977, 7
    %v5979 = vsub.s32 2, %v5978
    %v5980 = vrot.slane %v1072, %v5979
    %v5984 = vadd.f32 %v5883, %v5972
    %v5985 = vadd.f32 %v5885, %v5976
    %v5986 = vadd.f32 %v5960, %v5980
    %v5987 = vadd.f32 %v5889, %v5972
    %v5988 = vadd.f32 %v5891, %v5976
    %v5989 = vadd.f32 %v5965, %v5980
    %v5990 = vsel %vm2884, %v5984, 0.0
    %v5991 = vsel %vm2885, %v5987, 0.0
    %v5992 = vadd.f32 %v5990, 0.0
    %v5993 = vadd.f32 %v5991, 0.0
    %v5994 = vsel %vm2894, %v5984, 0.0
    %v5995 = vsel %vm2895, %v5987, 0.0
    %5998 = vrot.lane.b32.xlu0 %v5994, 96
    %v5999 = vpop.permute.xlu0 %5998
    %6000 = vrot.lane.b32.xlu0 %v5995, 96
    %v6001 = vpop.permute.xlu0 %6000
    %v6004 = vadd.f32 %v5992, %v5999
    %v6005 = vadd.f32 %v5993, %v6001
    %v6006 = vsel %vm2912, %v5984, 0.0
    %v6007 = vsel %vm2913, %v5987, 0.0
    %6010 = vrot.lane.b32.xlu0 %v6006, 64
    %v6011 = vpop.permute.xlu0 %6010
    %6012 = vrot.lane.b32.xlu0 %v6007, 64
    %v6013 = vpop.permute.xlu0 %6012
    %v6016 = vadd.f32 %v6004, %v6011
    %v6017 = vadd.f32 %v6005, %v6013
    %v6018 = vsel %vm2930, %v5984, 0.0
    %v6019 = vsel %vm2931, %v5987, 0.0
    %6022 = vrot.lane.b32.xlu0 %v6018, 32
    %v6023 = vpop.permute.xlu0 %6022
    %6024 = vrot.lane.b32.xlu0 %v6019, 32
    %v6025 = vpop.permute.xlu0 %6024
    %v6028 = vadd.f32 %v6016, %v6023
    %v6029 = vadd.f32 %v6017, %v6025
    %v6030 = vsel %vm2948, %v5985, 0.0
    %v6031 = vsel %vm2949, %v5988, 0.0
    %v6032 = vadd.f32 %v6028, %v6030
    %v6033 = vadd.f32 %v6029, %v6031
    %v6034 = vsel %vm2958, %v5985, 0.0
    %v6035 = vsel %vm2959, %v5988, 0.0
    %6038 = vrot.lane.b32.xlu0 %v6034, 96
    %v6039 = vpop.permute.xlu0 %6038
    %6040 = vrot.lane.b32.xlu0 %v6035, 96
    %v6041 = vpop.permute.xlu0 %6040
    %v6044 = vadd.f32 %v6032, %v6039
    %v6045 = vadd.f32 %v6033, %v6041
    %v6046 = vsel %vm2976, %v5985, 0.0
    %v6047 = vsel %vm2977, %v5988, 0.0
    %6050 = vrot.lane.b32.xlu0 %v6046, 64
    %v6051 = vpop.permute.xlu0 %6050
    %6052 = vrot.lane.b32.xlu0 %v6047, 64
    %v6053 = vpop.permute.xlu0 %6052
    %v6056 = vadd.f32 %v6044, %v6051
    %v6057 = vadd.f32 %v6045, %v6053
    %v6058 = vsel %vm2994, %v5985, 0.0
    %v6059 = vsel %vm2995, %v5988, 0.0
    %6062 = vrot.lane.b32.xlu0 %v6058, 32
    %v6063 = vpop.permute.xlu0 %6062
    %6064 = vrot.lane.b32.xlu0 %v6059, 32
    %v6065 = vpop.permute.xlu0 %6064
    %v6068 = vadd.f32 %v6056, %v6063
    %v6069 = vadd.f32 %v6057, %v6065
    %v6070 = vsel %vm3012, %v5986, 0.0
    %v6071 = vsel %vm3013, %v5989, 0.0
    %v6072 = vadd.f32 %v6068, %v6070
    %v6073 = vadd.f32 %v6069, %v6071
    %v6074 = vsel %vm3022, %v5986, 0.0
    %v6075 = vsel %vm3023, %v5989, 0.0
    %6078 = vrot.lane.b32.xlu0 %v6074, 96
    %v6079 = vpop.permute.xlu0 %6078
    %6080 = vrot.lane.b32.xlu0 %v6075, 96
    %v6081 = vpop.permute.xlu0 %6080
    %v6084 = vadd.f32 %v6072, %v6079
    %v6085 = vadd.f32 %v6073, %v6081
    %v6086 = vsel %vm3040, %v5986, 0.0
    %v6087 = vsel %vm3041, %v5989, 0.0
    %6090 = vrot.lane.b32.xlu0 %v6086, 64
    %v6091 = vpop.permute.xlu0 %6090
    %6092 = vrot.lane.b32.xlu0 %v6087, 64
    %v6093 = vpop.permute.xlu0 %6092
    %v6096 = vadd.f32 %v6084, %v6091
    %v6097 = vadd.f32 %v6085, %v6093
    %6098 = vmatprep.subr.mxu0 0.0
    %6099 = vmatpush1.msra.mxu0 0.0
    %6100 = vmatprep.subr.mxu0 0.0
    %6101 = vmatpush1.msra.mxu0 0.0
    %6102 = vmatprep.subr.mxu0 0.0
    %6103 = vmatpush1.msra.mxu0 0.0
    %6104 = vmatprep.subr.mxu0 0.0
    %6105 = vmatpush1.msra.mxu0 0.0
    %6106 = vmatprep.subr.mxu0 0.0
    %6107 = vmatpush1.msra.mxu0 0.0
    %6108 = vmatprep.subr.mxu0 0.0
    %6109 = vmatpush1.msra.mxu0 0.0
    %6110 = vmatprep.subr.mxu0 0.0
    %6111 = vmatpush1.msra.mxu0 0.0
    %6112 = vmatprep.subr.mxu0 0.0
    %6113 = vmatpush1.msra.mxu0 0.0
    %6114 = vmatprep.subr.mxu0 0.0
    %6115 = vmatpush1.msra.mxu0 0.0
    %6116 = vmatprep.subr.mxu0 0.0
    %6117 = vmatpush1.msra.mxu0 0.0
    %6118 = vmatprep.subr.mxu0 0.0
    %6119 = vmatpush1.msra.mxu0 0.0
    %6120 = vmatprep.subr.mxu0 0.0
    %6121 = vmatpush1.msra.mxu0 0.0
    %6122 = vmatprep.subr.mxu0 0.0
    %6123 = vmatpush1.msra.mxu0 0.0
    %6124 = vmatprep.subr.mxu0 0.0
    %6125 = vmatpush1.msra.mxu0 0.0
    %6126 = vmatprep.subr.mxu0 0.0
    %6127 = vmatpush1.msra.mxu0 %v4370
    %6128 = vmatprep.subr.mxu0 0.0
    %6129 = vmatpush1.msra.mxu0 %v4365
    %6130 = vmatprep.subr.mxu0 0.0
    %6131 = vmatpush2.msra.mxu0 0.0
    %6132 = vmatprep.subr.mxu0 0.0
    %6133 = vmatpush2.msra.mxu0 0.0
    %6134 = vmatprep.subr.mxu0 0.0
    %6135 = vmatpush2.msra.mxu0 0.0
    %6136 = vmatprep.subr.mxu0 0.0
    %6137 = vmatpush2.msra.mxu0 0.0
    %6138 = vmatprep.subr.mxu0 0.0
    %6139 = vmatpush2.msra.mxu0 0.0
    %6140 = vmatprep.subr.mxu0 0.0
    %6141 = vmatpush2.msra.mxu0 0.0
    %6142 = vmatprep.subr.mxu0 0.0
    %6143 = vmatpush2.msra.mxu0 0.0
    %6144 = vmatprep.subr.mxu0 0.0
    %6145 = vmatpush2.msra.mxu0 0.0
    %6146 = vmatprep.subr.mxu0 0.0
    %6147 = vmatpush2.msra.mxu0 0.0
    %6148 = vmatprep.subr.mxu0 0.0
    %6149 = vmatpush2.msra.mxu0 0.0
    %6150 = vmatprep.subr.mxu0 0.0
    %6151 = vmatpush2.msra.mxu0 0.0
    %6152 = vmatprep.subr.mxu0 0.0
    %6153 = vmatpush2.msra.mxu0 0.0
    %6154 = vmatprep.subr.mxu0 0.0
    %6155 = vmatpush2.msra.mxu0 0.0
    %6156 = vmatprep.subr.mxu0 0.0
    %6157 = vmatpush2.msra.mxu0 0.0
    %6158 = vmatprep.subr.mxu0 0.0
    %6159 = vmatpush2.msra.mxu0 0.0
    %6160 = vmatprep.subr.mxu0 0.0
    %6161 = vmatpush2.msra.mxu0 0.0
    %6162 = vmatprep.mubr.f32.mxu0 0.0
    %6163 = vmatmul.mubr.f32.gmra.mxu0 %v3055
    %v6164 = vpop.f32.mrf.mxu0
    %v6165 = vadd.f32 0.0, %v6164
    %v6166 = vpop.f32.mrf.mxu0
    %6167 = vmatprep.mubr.f32.mxu0 0.0
    %6168 = vmatmul.mubr.f32.gmra.mxu0 %v3058
    %v6169 = vpop.f32.mrf.mxu0
    %v6170 = vadd.f32 0.0, %v6169
    %v6171 = vpop.f32.mrf.mxu0
    %6172 = vdwg.mxu0
    %6173 = vmatprep.subr.mxu0 0.0
    %6174 = vmatpush1.msra.mxu0 0.0
    %6175 = vmatprep.subr.mxu0 0.0
    %6176 = vmatpush1.msra.mxu0 0.0
    %6177 = vmatprep.subr.mxu0 0.0
    %6178 = vmatpush1.msra.mxu0 0.0
    %6179 = vmatprep.subr.mxu0 0.0
    %6180 = vmatpush1.msra.mxu0 0.0
    %6181 = vmatprep.subr.mxu0 0.0
    %6182 = vmatpush1.msra.mxu0 0.0
    %6183 = vmatprep.subr.mxu0 0.0
    %6184 = vmatpush1.msra.mxu0 0.0
    %6185 = vmatprep.subr.mxu0 0.0
    %6186 = vmatpush1.msra.mxu0 0.0
    %6187 = vmatprep.subr.mxu0 0.0
    %6188 = vmatpush1.msra.mxu0 0.0
    %6189 = vmatprep.subr.mxu0 0.0
    %6190 = vmatpush1.msra.mxu0 0.0
    %6191 = vmatprep.subr.mxu0 0.0
    %6192 = vmatpush1.msra.mxu0 0.0
    %6193 = vmatprep.subr.mxu0 0.0
    %6194 = vmatpush1.msra.mxu0 0.0
    %6195 = vmatprep.subr.mxu0 0.0
    %6196 = vmatpush1.msra.mxu0 0.0
    %6197 = vmatprep.subr.mxu0 %v1145
    %6198 = vmatpush1.msra.mxu0 %v1144
    %6199 = vmatprep.subr.mxu0 %v1142
    %6200 = vmatpush1.msra.mxu0 %v1141
    %6201 = vmatprep.subr.mxu0 %v1139
    %6202 = vmatpush1.msra.mxu0 %v1138
    %6203 = vmatprep.subr.mxu0 %v1136
    %6204 = vmatpush1.msra.mxu0 %v1135
    %6205 = vmatprep.subr.mxu0 0.0
    %6206 = vmatpush2.msra.mxu0 0.0
    %6207 = vmatprep.subr.mxu0 0.0
    %6208 = vmatpush2.msra.mxu0 0.0
    %6209 = vmatprep.subr.mxu0 0.0
    %6210 = vmatpush2.msra.mxu0 0.0
    %6211 = vmatprep.subr.mxu0 0.0
    %6212 = vmatpush2.msra.mxu0 0.0
    %6213 = vmatprep.subr.mxu0 0.0
    %6214 = vmatpush2.msra.mxu0 0.0
    %6215 = vmatprep.subr.mxu0 0.0
    %6216 = vmatpush2.msra.mxu0 0.0
    %6217 = vmatprep.subr.mxu0 0.0
    %6218 = vmatpush2.msra.mxu0 0.0
    %6219 = vmatprep.subr.mxu0 0.0
    %6220 = vmatpush2.msra.mxu0 0.0
    %6221 = vmatprep.subr.mxu0 0.0
    %6222 = vmatpush2.msra.mxu0 0.0
    %6223 = vmatprep.subr.mxu0 0.0
    %6224 = vmatpush2.msra.mxu0 0.0
    %6225 = vmatprep.subr.mxu0 0.0
    %6226 = vmatpush2.msra.mxu0 0.0
    %6227 = vmatprep.subr.mxu0 0.0
    %6228 = vmatpush2.msra.mxu0 0.0
    %6229 = vmatprep.subr.mxu0 0.0
    %6230 = vmatpush2.msra.mxu0 0.0
    %6231 = vmatprep.subr.mxu0 0.0
    %6232 = vmatpush2.msra.mxu0 0.0
    %6233 = vmatprep.subr.mxu0 0.0
    %6234 = vmatpush2.msra.mxu0 0.0
    %6235 = vmatprep.subr.mxu0 0.0
    %6236 = vmatpush2.msra.mxu0 0.0
    %6237 = vmatprep.mubr.f32.mxu0 0.0
    %6238 = vmatmul.mubr.f32.gmra.mxu0 %v5653
    %v6239 = vpop.f32.mrf.mxu0
    %v6240 = vadd.f32 0.0, %v6239
    %v6241 = vpop.f32.mrf.mxu0
    %v6242 = vadd.f32 0.0, %v6241
    %6243 = vmatprep.mubr.f32.mxu0 0.0
    %6244 = vmatmul.mubr.f32.gmra.mxu0 %v5656
    %v6245 = vpop.f32.mrf.mxu0
    %v6246 = vadd.f32 0.0, %v6245
    %v6247 = vpop.f32.mrf.mxu0
    %v6248 = vadd.f32 0.0, %v6247
    %6249 = vdwg.mxu0
    %6250 = vmatprep.subr.mxu0 0.0
    %6251 = vmatpush1.msra.mxu0 0.0
    %6252 = vmatprep.subr.mxu0 0.0
    %6253 = vmatpush1.msra.mxu0 0.0
    %6254 = vmatprep.subr.mxu0 0.0
    %6255 = vmatpush1.msra.mxu0 0.0
    %6256 = vmatprep.subr.mxu0 0.0
    %6257 = vmatpush1.msra.mxu0 0.0
    %6258 = vmatprep.subr.mxu0 0.0
    %6259 = vmatpush1.msra.mxu0 0.0
    %6260 = vmatprep.subr.mxu0 0.0
    %6261 = vmatpush1.msra.mxu0 0.0
    %6262 = vmatprep.subr.mxu0 0.0
    %6263 = vmatpush1.msra.mxu0 0.0
    %6264 = vmatprep.subr.mxu0 0.0
    %6265 = vmatpush1.msra.mxu0 0.0
    %6266 = vmatprep.subr.mxu0 0.0
    %6267 = vmatpush1.msra.mxu0 0.0
    %6268 = vmatprep.subr.mxu0 0.0
    %6269 = vmatpush1.msra.mxu0 0.0
    %6270 = vmatprep.subr.mxu0 0.0
    %6271 = vmatpush1.msra.mxu0 0.0
    %6272 = vmatprep.subr.mxu0 0.0
    %6273 = vmatpush1.msra.mxu0 0.0
    %6274 = vmatprep.subr.mxu0 0.0
    %6275 = vmatpush1.msra.mxu0 %v1146
    %6276 = vmatprep.subr.mxu0 0.0
    %6277 = vmatpush1.msra.mxu0 %v1143
    %6278 = vmatprep.subr.mxu0 0.0
    %6279 = vmatpush1.msra.mxu0 %v1140
    %6280 = vmatprep.subr.mxu0 0.0
    %6281 = vmatpush1.msra.mxu0 %v1137
    %6282 = vmatprep.subr.mxu0 0.0
    %6283 = vmatpush2.msra.mxu0 0.0
    %6284 = vmatprep.subr.mxu0 0.0
    %6285 = vmatpush2.msra.mxu0 0.0
    %6286 = vmatprep.subr.mxu0 0.0
    %6287 = vmatpush2.msra.mxu0 0.0
    %6288 = vmatprep.subr.mxu0 0.0
    %6289 = vmatpush2.msra.mxu0 0.0
    %6290 = vmatprep.subr.mxu0 0.0
    %6291 = vmatpush2.msra.mxu0 0.0
    %6292 = vmatprep.subr.mxu0 0.0
    %6293 = vmatpush2.msra.mxu0 0.0
    %6294 = vmatprep.subr.mxu0 0.0
    %6295 = vmatpush2.msra.mxu0 0.0
    %6296 = vmatprep.subr.mxu0 0.0
    %6297 = vmatpush2.msra.mxu0 0.0
    %6298 = vmatprep.subr.mxu0 0.0
    %6299 = vmatpush2.msra.mxu0 0.0
    %6300 = vmatprep.subr.mxu0 0.0
    %6301 = vmatpush2.msra.mxu0 0.0
    %6302 = vmatprep.subr.mxu0 0.0
    %6303 = vmatpush2.msra.mxu0 0.0
    %6304 = vmatprep.subr.mxu0 0.0
    %6305 = vmatpush2.msra.mxu0 0.0
    %6306 = vmatprep.subr.mxu0 0.0
    %6307 = vmatpush2.msra.mxu0 0.0
    %6308 = vmatprep.subr.mxu0 0.0
    %6309 = vmatpush2.msra.mxu0 0.0
    %6310 = vmatprep.subr.mxu0 0.0
    %6311 = vmatpush2.msra.mxu0 0.0
    %6312 = vmatprep.subr.mxu0 0.0
    %6313 = vmatpush2.msra.mxu0 0.0
    %6314 = vmatprep.mubr.f32.mxu0 0.0
    %6315 = vmatmul.mubr.f32.gmra.mxu0 %v5653
    %v6316 = vpop.f32.mrf.mxu0
    %v6317 = vadd.f32 0.0, %v6316
    %v6318 = vpop.f32.mrf.mxu0
    %6319 = vmatprep.mubr.f32.mxu0 0.0
    %6320 = vmatmul.mubr.f32.gmra.mxu0 %v5656
    %v6321 = vpop.f32.mrf.mxu0
    %v6322 = vadd.f32 0.0, %v6321
    %v6323 = vpop.f32.mrf.mxu0
    %6324 = vdwg.mxu0
    %v6326 = vsel %vm3923, %v6165, 0
    %v6329 = vsel %vm3923, %v6170, 0
    %6331 = vmatprep.subr.mxu0 0.0
    %6332 = vmatpush1.msra.mxu0 0.0
    %6333 = vmatprep.subr.mxu0 0.0
    %6334 = vmatpush1.msra.mxu0 0.0
    %6335 = vmatprep.subr.mxu0 0.0
    %6336 = vmatpush1.msra.mxu0 0.0
    %6337 = vmatprep.subr.mxu0 0.0
    %6338 = vmatpush1.msra.mxu0 0.0
    %6339 = vmatprep.subr.mxu0 0.0
    %6340 = vmatpush1.msra.mxu0 0.0
    %6341 = vmatprep.subr.mxu0 0.0
    %6342 = vmatpush1.msra.mxu0 0.0
    %6343 = vmatprep.subr.mxu0 0.0
    %6344 = vmatpush1.msra.mxu0 0.0
    %6345 = vmatprep.subr.mxu0 0.0
    %6346 = vmatpush1.msra.mxu0 0.0
    %6347 = vmatprep.subr.mxu0 0.0
    %6348 = vmatpush1.msra.mxu0 0.0
    %6349 = vmatprep.subr.mxu0 0.0
    %6350 = vmatpush1.msra.mxu0 0.0
    %6351 = vmatprep.subr.mxu0 0.0
    %6352 = vmatpush1.msra.mxu0 0.0
    %6353 = vmatprep.subr.mxu0 0.0
    %6354 = vmatpush1.msra.mxu0 0.0
    %6355 = vmatprep.subr.mxu0 %v1133
    %6356 = vmatpush1.msra.mxu0 %v1132
    %6357 = vmatprep.subr.mxu0 %v1130
    %6358 = vmatpush1.msra.mxu0 %v1129
    %6359 = vmatprep.subr.mxu0 %v1127
    %6360 = vmatpush1.msra.mxu0 %v1126
    %6361 = vmatprep.subr.mxu0 %v1124
    %6362 = vmatpush1.msra.mxu0 %v1123
    %6363 = vmatprep.subr.mxu0 0.0
    %6364 = vmatpush2.msra.mxu0 0.0
    %6365 = vmatprep.subr.mxu0 0.0
    %6366 = vmatpush2.msra.mxu0 0.0
    %6367 = vmatprep.subr.mxu0 0.0
    %6368 = vmatpush2.msra.mxu0 0.0
    %6369 = vmatprep.subr.mxu0 0.0
    %6370 = vmatpush2.msra.mxu0 0.0
    %6371 = vmatprep.subr.mxu0 0.0
    %6372 = vmatpush2.msra.mxu0 0.0
    %6373 = vmatprep.subr.mxu0 0.0
    %6374 = vmatpush2.msra.mxu0 0.0
    %6375 = vmatprep.subr.mxu0 0.0
    %6376 = vmatpush2.msra.mxu0 0.0
    %6377 = vmatprep.subr.mxu0 0.0
    %6378 = vmatpush2.msra.mxu0 0.0
    %6379 = vmatprep.subr.mxu0 0.0
    %6380 = vmatpush2.msra.mxu0 0.0
    %6381 = vmatprep.subr.mxu0 0.0
    %6382 = vmatpush2.msra.mxu0 0.0
    %6383 = vmatprep.subr.mxu0 0.0
    %6384 = vmatpush2.msra.mxu0 0.0
    %6385 = vmatprep.subr.mxu0 0.0
    %6386 = vmatpush2.msra.mxu0 0.0
    %6387 = vmatprep.subr.mxu0 0.0
    %6388 = vmatpush2.msra.mxu0 0.0
    %6389 = vmatprep.subr.mxu0 0.0
    %6390 = vmatpush2.msra.mxu0 0.0
    %6391 = vmatprep.subr.mxu0 0.0
    %6392 = vmatpush2.msra.mxu0 0.0
    %6393 = vmatprep.subr.mxu0 0.0
    %6394 = vmatpush2.msra.mxu0 0.0
    %6395 = vmatprep.mubr.f32.mxu0 0.0
    %6396 = vmatmul.mubr.f32.gmra.mxu0 %v6326
    %v6397 = vpop.f32.mrf.mxu0
    %v6398 = vadd.f32 %v6240, %v6397
    %v6399 = vpop.f32.mrf.mxu0
    %v6400 = vadd.f32 %v6242, %v6399
    %6401 = vmatprep.mubr.f32.mxu0 0.0
    %6402 = vmatmul.mubr.f32.gmra.mxu0 %v6329
    %v6403 = vpop.f32.mrf.mxu0
    %v6404 = vadd.f32 %v6246, %v6403
    %v6405 = vpop.f32.mrf.mxu0
    %v6406 = vadd.f32 %v6248, %v6405
    %6407 = vdwg.mxu0
    %6408 = vmatprep.subr.mxu0 0.0
    %6409 = vmatpush1.msra.mxu0 0.0
    %6410 = vmatprep.subr.mxu0 0.0
    %6411 = vmatpush1.msra.mxu0 0.0
    %6412 = vmatprep.subr.mxu0 0.0
    %6413 = vmatpush1.msra.mxu0 0.0
    %6414 = vmatprep.subr.mxu0 0.0
    %6415 = vmatpush1.msra.mxu0 0.0
    %6416 = vmatprep.subr.mxu0 0.0
    %6417 = vmatpush1.msra.mxu0 0.0
    %6418 = vmatprep.subr.mxu0 0.0
    %6419 = vmatpush1.msra.mxu0 0.0
    %6420 = vmatprep.subr.mxu0 0.0
    %6421 = vmatpush1.msra.mxu0 0.0
    %6422 = vmatprep.subr.mxu0 0.0
    %6423 = vmatpush1.msra.mxu0 0.0
    %6424 = vmatprep.subr.mxu0 0.0
    %6425 = vmatpush1.msra.mxu0 0.0
    %6426 = vmatprep.subr.mxu0 0.0
    %6427 = vmatpush1.msra.mxu0 0.0
    %6428 = vmatprep.subr.mxu0 0.0
    %6429 = vmatpush1.msra.mxu0 0.0
    %6430 = vmatprep.subr.mxu0 0.0
    %6431 = vmatpush1.msra.mxu0 0.0
    %6432 = vmatprep.subr.mxu0 0.0
    %6433 = vmatpush1.msra.mxu0 %v1134
    %6434 = vmatprep.subr.mxu0 0.0
    %6435 = vmatpush1.msra.mxu0 %v1131
    %6436 = vmatprep.subr.mxu0 0.0
    %6437 = vmatpush1.msra.mxu0 %v1128
    %6438 = vmatprep.subr.mxu0 0.0
    %6439 = vmatpush1.msra.mxu0 %v1125
    %6440 = vmatprep.subr.mxu0 0.0
    %6441 = vmatpush2.msra.mxu0 0.0
    %6442 = vmatprep.subr.mxu0 0.0
    %6443 = vmatpush2.msra.mxu0 0.0
    %6444 = vmatprep.subr.mxu0 0.0
    %6445 = vmatpush2.msra.mxu0 0.0
    %6446 = vmatprep.subr.mxu0 0.0
    %6447 = vmatpush2.msra.mxu0 0.0
    %6448 = vmatprep.subr.mxu0 0.0
    %6449 = vmatpush2.msra.mxu0 0.0
    %6450 = vmatprep.subr.mxu0 0.0
    %6451 = vmatpush2.msra.mxu0 0.0
    %6452 = vmatprep.subr.mxu0 0.0
    %6453 = vmatpush2.msra.mxu0 0.0
    %6454 = vmatprep.subr.mxu0 0.0
    %6455 = vmatpush2.msra.mxu0 0.0
    %6456 = vmatprep.subr.mxu0 0.0
    %6457 = vmatpush2.msra.mxu0 0.0
    %6458 = vmatprep.subr.mxu0 0.0
    %6459 = vmatpush2.msra.mxu0 0.0
    %6460 = vmatprep.subr.mxu0 0.0
    %6461 = vmatpush2.msra.mxu0 0.0
    %6462 = vmatprep.subr.mxu0 0.0
    %6463 = vmatpush2.msra.mxu0 0.0
    %6464 = vmatprep.subr.mxu0 0.0
    %6465 = vmatpush2.msra.mxu0 0.0
    %6466 = vmatprep.subr.mxu0 0.0
    %6467 = vmatpush2.msra.mxu0 0.0
    %6468 = vmatprep.subr.mxu0 0.0
    %6469 = vmatpush2.msra.mxu0 0.0
    %6470 = vmatprep.subr.mxu0 0.0
    %6471 = vmatpush2.msra.mxu0 0.0
    %6472 = vmatprep.mubr.f32.mxu0 0.0
    %6473 = vmatmul.mubr.f32.gmra.mxu0 %v6326
    %v6474 = vpop.f32.mrf.mxu0
    %v6475 = vadd.f32 %v6317, %v6474
    %v6476 = vpop.f32.mrf.mxu0
    %6477 = vmatprep.mubr.f32.mxu0 0.0
    %6478 = vmatmul.mubr.f32.gmra.mxu0 %v6329
    %v6479 = vpop.f32.mrf.mxu0
    %v6480 = vadd.f32 %v6322, %v6479
    %v6481 = vpop.f32.mrf.mxu0
    %6482 = vdwg.mxu0
    %v6484 = vlaneseq
    %v6485 = vshrl.u32 %v6484, 7
    %v6486 = vsub.s32 0, %v6485
    %v6487 = vrot.slane %v1122, %v6486
    %v6488 = vlaneseq
    %v6489 = vshrl.u32 %v6488, 7
    %v6490 = vsub.s32 1, %v6489
    %v6491 = vrot.slane %v1122, %v6490
    %v6492 = vlaneseq
    %v6493 = vshrl.u32 %v6492, 7
    %v6494 = vsub.s32 2, %v6493
    %v6495 = vrot.slane %v1122, %v6494
    %v6499 = vadd.f32 %v6398, %v6487
    %v6500 = vadd.f32 %v6400, %v6491
    %v6501 = vadd.f32 %v6475, %v6495
    %v6502 = vadd.f32 %v6404, %v6487
    %v6503 = vadd.f32 %v6406, %v6491
    %v6504 = vadd.f32 %v6480, %v6495
    %v6505 = vsel %vm3499, %v6499, 0.0
    %v6506 = vsel %vm3500, %v6502, 0.0
    %v6507 = vadd.f32 %v6505, 0.0
    %v6508 = vadd.f32 %v6506, 0.0
    %v6509 = vsel %vm3509, %v6499, 0.0
    %v6510 = vsel %vm3510, %v6502, 0.0
    %6513 = vrot.lane.b32.xlu0 %v6509, 96
    %v6514 = vpop.permute.xlu0 %6513
    %6515 = vrot.lane.b32.xlu0 %v6510, 96
    %v6516 = vpop.permute.xlu0 %6515
    %v6519 = vadd.f32 %v6507, %v6514
    %v6520 = vadd.f32 %v6508, %v6516
    %v6521 = vsel %vm3527, %v6499, 0.0
    %v6522 = vsel %vm3528, %v6502, 0.0
    %6525 = vrot.lane.b32.xlu0 %v6521, 64
    %v6526 = vpop.permute.xlu0 %6525
    %6527 = vrot.lane.b32.xlu0 %v6522, 64
    %v6528 = vpop.permute.xlu0 %6527
    %v6531 = vadd.f32 %v6519, %v6526
    %v6532 = vadd.f32 %v6520, %v6528
    %v6533 = vsel %vm3545, %v6499, 0.0
    %v6534 = vsel %vm3546, %v6502, 0.0
    %6537 = vrot.lane.b32.xlu0 %v6533, 32
    %v6538 = vpop.permute.xlu0 %6537
    %6539 = vrot.lane.b32.xlu0 %v6534, 32
    %v6540 = vpop.permute.xlu0 %6539
    %v6543 = vadd.f32 %v6531, %v6538
    %v6544 = vadd.f32 %v6532, %v6540
    %v6545 = vsel %vm3563, %v6500, 0.0
    %v6546 = vsel %vm3564, %v6503, 0.0
    %v6547 = vadd.f32 %v6543, %v6545
    %v6548 = vadd.f32 %v6544, %v6546
    %v6549 = vsel %vm3573, %v6500, 0.0
    %v6550 = vsel %vm3574, %v6503, 0.0
    %6553 = vrot.lane.b32.xlu0 %v6549, 96
    %v6554 = vpop.permute.xlu0 %6553
    %6555 = vrot.lane.b32.xlu0 %v6550, 96
    %v6556 = vpop.permute.xlu0 %6555
    %v6559 = vadd.f32 %v6547, %v6554
    %v6560 = vadd.f32 %v6548, %v6556
    %v6561 = vsel %vm3591, %v6500, 0.0
    %v6562 = vsel %vm3592, %v6503, 0.0
    %6565 = vrot.lane.b32.xlu0 %v6561, 64
    %v6566 = vpop.permute.xlu0 %6565
    %6567 = vrot.lane.b32.xlu0 %v6562, 64
    %v6568 = vpop.permute.xlu0 %6567
    %v6571 = vadd.f32 %v6559, %v6566
    %v6572 = vadd.f32 %v6560, %v6568
    %v6573 = vsel %vm3609, %v6500, 0.0
    %v6574 = vsel %vm3610, %v6503, 0.0
    %6577 = vrot.lane.b32.xlu0 %v6573, 32
    %v6578 = vpop.permute.xlu0 %6577
    %6579 = vrot.lane.b32.xlu0 %v6574, 32
    %v6580 = vpop.permute.xlu0 %6579
    %v6583 = vadd.f32 %v6571, %v6578
    %v6584 = vadd.f32 %v6572, %v6580
    %v6585 = vsel %vm3627, %v6501, 0.0
    %v6586 = vsel %vm3628, %v6504, 0.0
    %v6587 = vadd.f32 %v6583, %v6585
    %v6588 = vadd.f32 %v6584, %v6586
    %v6589 = vsel %vm3637, %v6501, 0.0
    %v6590 = vsel %vm3638, %v6504, 0.0
    %6593 = vrot.lane.b32.xlu0 %v6589, 96
    %v6594 = vpop.permute.xlu0 %6593
    %6595 = vrot.lane.b32.xlu0 %v6590, 96
    %v6596 = vpop.permute.xlu0 %6595
    %v6599 = vadd.f32 %v6587, %v6594
    %v6600 = vadd.f32 %v6588, %v6596
    %v6601 = vsel %vm3655, %v6501, 0.0
    %v6602 = vsel %vm3656, %v6504, 0.0
    %6605 = vrot.lane.b32.xlu0 %v6601, 64
    %v6606 = vpop.permute.xlu0 %6605
    %6607 = vrot.lane.b32.xlu0 %v6602, 64
    %v6608 = vpop.permute.xlu0 %6607
    %v6611 = vadd.f32 %v6599, %v6606
    %v6612 = vadd.f32 %v6600, %v6608
    %v6613 = vadd.f32 %v6096, %v6611
    %v6614 = vadd.f32 %v6097, %v6612
    %v6616 = vlaneseq
    %v6617 = vshrl.u32 %v6616, 7
    %v6618 = vsub.s32 0, %v6617
    %v6619 = vrot.slane %v1174, %v6618
    %v6622 = vsel %vm3923, %v4536, 0
    %6624 = vmatprep.subr.mxu0 0.0
    %6625 = vmatpush1.msra.mxu0 0.0
    %6626 = vmatprep.subr.mxu0 0.0
    %6627 = vmatpush1.msra.mxu0 0.0
    %6628 = vmatprep.subr.mxu0 0.0
    %6629 = vmatpush1.msra.mxu0 0.0
    %6630 = vmatprep.subr.mxu0 0.0
    %6631 = vmatpush1.msra.mxu0 0.0
    %6632 = vmatprep.subr.mxu0 0.0
    %6633 = vmatpush1.msra.mxu0 0.0
    %6634 = vmatprep.subr.mxu0 0.0
    %6635 = vmatpush1.msra.mxu0 0.0
    %6636 = vmatprep.subr.mxu0 0.0
    %6637 = vmatpush1.msra.mxu0 0.0
    %6638 = vmatprep.subr.mxu0 0.0
    %6639 = vmatpush1.msra.mxu0 0.0
    %6640 = vmatprep.subr.mxu0 0.0
    %6641 = vmatpush1.msra.mxu0 0.0
    %6642 = vmatprep.subr.mxu0 0.0
    %6643 = vmatpush1.msra.mxu0 0.0
    %6644 = vmatprep.subr.mxu0 0.0
    %6645 = vmatpush1.msra.mxu0 0.0
    %6646 = vmatprep.subr.mxu0 0.0
    %6647 = vmatpush1.msra.mxu0 0.0
    %6648 = vmatprep.subr.mxu0 0.0
    %6649 = vmatpush1.msra.mxu0 %v1186
    %6650 = vmatprep.subr.mxu0 0.0
    %6651 = vmatpush1.msra.mxu0 %v1185
    %6652 = vmatprep.subr.mxu0 0.0
    %6653 = vmatpush1.msra.mxu0 %v1184
    %6654 = vmatprep.subr.mxu0 0.0
    %6655 = vmatpush1.msra.mxu0 %v1183
    %6656 = vmatprep.subr.mxu0 0.0
    %6657 = vmatpush2.msra.mxu0 0.0
    %6658 = vmatprep.subr.mxu0 0.0
    %6659 = vmatpush2.msra.mxu0 0.0
    %6660 = vmatprep.subr.mxu0 0.0
    %6661 = vmatpush2.msra.mxu0 0.0
    %6662 = vmatprep.subr.mxu0 0.0
    %6663 = vmatpush2.msra.mxu0 0.0
    %6664 = vmatprep.subr.mxu0 0.0
    %6665 = vmatpush2.msra.mxu0 0.0
    %6666 = vmatprep.subr.mxu0 0.0
    %6667 = vmatpush2.msra.mxu0 0.0
    %6668 = vmatprep.subr.mxu0 0.0
    %6669 = vmatpush2.msra.mxu0 0.0
    %6670 = vmatprep.subr.mxu0 0.0
    %6671 = vmatpush2.msra.mxu0 0.0
    %6672 = vmatprep.subr.mxu0 0.0
    %6673 = vmatpush2.msra.mxu0 0.0
    %6674 = vmatprep.subr.mxu0 0.0
    %6675 = vmatpush2.msra.mxu0 0.0
    %6676 = vmatprep.subr.mxu0 0.0
    %6677 = vmatpush2.msra.mxu0 0.0
    %6678 = vmatprep.subr.mxu0 0.0
    %6679 = vmatpush2.msra.mxu0 0.0
    %6680 = vmatprep.subr.mxu0 0.0
    %6681 = vmatpush2.msra.mxu0 0.0
    %6682 = vmatprep.subr.mxu0 0.0
    %6683 = vmatpush2.msra.mxu0 0.0
    %6684 = vmatprep.subr.mxu0 0.0
    %6685 = vmatpush2.msra.mxu0 0.0
    %6686 = vmatprep.subr.mxu0 0.0
    %6687 = vmatpush2.msra.mxu0 0.0
    %6688 = vmatprep.mubr.f32.mxu0 0.0
    %6689 = vmatmul.mubr.f32.gmra.mxu0 %v6622
    %v6690 = vpop.f32.mrf.mxu0
    %v6691 = vadd.f32 %v6619, %v6690
    %v6692 = vpop.f32.mrf.mxu0
    %6693 = vdwg.mxu0
    %v6695 = vlaneseq
    %v6696 = vshrl.u32 %v6695, 7
    %v6697 = vsub.s32 0, %v6696
    %v6698 = vrot.slane %v1172, %v6697
    %6700 = vmatprep.subr.mxu0 0.0
    %6701 = vmatpush1.msra.mxu0 0.0
    %6702 = vmatprep.subr.mxu0 0.0
    %6703 = vmatpush1.msra.mxu0 0.0
    %6704 = vmatprep.subr.mxu0 0.0
    %6705 = vmatpush1.msra.mxu0 0.0
    %6706 = vmatprep.subr.mxu0 0.0
    %6707 = vmatpush1.msra.mxu0 0.0
    %6708 = vmatprep.subr.mxu0 0.0
    %6709 = vmatpush1.msra.mxu0 0.0
    %6710 = vmatprep.subr.mxu0 0.0
    %6711 = vmatpush1.msra.mxu0 0.0
    %6712 = vmatprep.subr.mxu0 0.0
    %6713 = vmatpush1.msra.mxu0 0.0
    %6714 = vmatprep.subr.mxu0 0.0
    %6715 = vmatpush1.msra.mxu0 0.0
    %6716 = vmatprep.subr.mxu0 0.0
    %6717 = vmatpush1.msra.mxu0 0.0
    %6718 = vmatprep.subr.mxu0 0.0
    %6719 = vmatpush1.msra.mxu0 0.0
    %6720 = vmatprep.subr.mxu0 0.0
    %6721 = vmatpush1.msra.mxu0 0.0
    %6722 = vmatprep.subr.mxu0 0.0
    %6723 = vmatpush1.msra.mxu0 0.0
    %6724 = vmatprep.subr.mxu0 0.0
    %6725 = vmatpush1.msra.mxu0 %v1178
    %6726 = vmatprep.subr.mxu0 0.0
    %6727 = vmatpush1.msra.mxu0 %v1177
    %6728 = vmatprep.subr.mxu0 0.0
    %6729 = vmatpush1.msra.mxu0 %v1176
    %6730 = vmatprep.subr.mxu0 0.0
    %6731 = vmatpush1.msra.mxu0 %v1175
    %6732 = vmatprep.subr.mxu0 0.0
    %6733 = vmatpush2.msra.mxu0 0.0
    %6734 = vmatprep.subr.mxu0 0.0
    %6735 = vmatpush2.msra.mxu0 0.0
    %6736 = vmatprep.subr.mxu0 0.0
    %6737 = vmatpush2.msra.mxu0 0.0
    %6738 = vmatprep.subr.mxu0 0.0
    %6739 = vmatpush2.msra.mxu0 0.0
    %6740 = vmatprep.subr.mxu0 0.0
    %6741 = vmatpush2.msra.mxu0 0.0
    %6742 = vmatprep.subr.mxu0 0.0
    %6743 = vmatpush2.msra.mxu0 0.0
    %6744 = vmatprep.subr.mxu0 0.0
    %6745 = vmatpush2.msra.mxu0 0.0
    %6746 = vmatprep.subr.mxu0 0.0
    %6747 = vmatpush2.msra.mxu0 0.0
    %6748 = vmatprep.subr.mxu0 0.0
    %6749 = vmatpush2.msra.mxu0 0.0
    %6750 = vmatprep.subr.mxu0 0.0
    %6751 = vmatpush2.msra.mxu0 0.0
    %6752 = vmatprep.subr.mxu0 0.0
    %6753 = vmatpush2.msra.mxu0 0.0
    %6754 = vmatprep.subr.mxu0 0.0
    %6755 = vmatpush2.msra.mxu0 0.0
    %6756 = vmatprep.subr.mxu0 0.0
    %6757 = vmatpush2.msra.mxu0 0.0
    %6758 = vmatprep.subr.mxu0 0.0
    %6759 = vmatpush2.msra.mxu0 0.0
    %6760 = vmatprep.subr.mxu0 0.0
    %6761 = vmatpush2.msra.mxu0 0.0
    %6762 = vmatprep.subr.mxu0 0.0
    %6763 = vmatpush2.msra.mxu0 0.0
    %6764 = vmatprep.mubr.f32.mxu0 0.0
    %6765 = vmatmul.mubr.f32.gmra.mxu0 %v5653
    %v6766 = vpop.f32.mrf.mxu0
    %v6767 = vadd.f32 %v6698, %v6766
    %v6768 = vpop.f32.mrf.mxu0
    %6769 = vmatprep.mubr.f32.mxu0 0.0
    %6770 = vmatmul.mubr.f32.gmra.mxu0 %v5656
    %v6771 = vpop.f32.mrf.mxu0
    %v6772 = vadd.f32 %v6698, %v6771
    %v6773 = vpop.f32.mrf.mxu0
    %6774 = vdwg.mxu0
    %v6776 = vlaneseq
    %v6777 = vshrl.u32 %v6776, 7
    %v6778 = vsub.s32 0, %v6777
    %v6779 = vrot.slane %v1173, %v6778
    %6781 = vmatprep.subr.mxu0 0.0
    %6782 = vmatpush1.msra.mxu0 0.0
    %6783 = vmatprep.subr.mxu0 0.0
    %6784 = vmatpush1.msra.mxu0 0.0
    %6785 = vmatprep.subr.mxu0 0.0
    %6786 = vmatpush1.msra.mxu0 0.0
    %6787 = vmatprep.subr.mxu0 0.0
    %6788 = vmatpush1.msra.mxu0 0.0
    %6789 = vmatprep.subr.mxu0 0.0
    %6790 = vmatpush1.msra.mxu0 0.0
    %6791 = vmatprep.subr.mxu0 0.0
    %6792 = vmatpush1.msra.mxu0 0.0
    %6793 = vmatprep.subr.mxu0 0.0
    %6794 = vmatpush1.msra.mxu0 0.0
    %6795 = vmatprep.subr.mxu0 0.0
    %6796 = vmatpush1.msra.mxu0 0.0
    %6797 = vmatprep.subr.mxu0 0.0
    %6798 = vmatpush1.msra.mxu0 0.0
    %6799 = vmatprep.subr.mxu0 0.0
    %6800 = vmatpush1.msra.mxu0 0.0
    %6801 = vmatprep.subr.mxu0 0.0
    %6802 = vmatpush1.msra.mxu0 0.0
    %6803 = vmatprep.subr.mxu0 0.0
    %6804 = vmatpush1.msra.mxu0 0.0
    %6805 = vmatprep.subr.mxu0 0.0
    %6806 = vmatpush1.msra.mxu0 %v1182
    %6807 = vmatprep.subr.mxu0 0.0
    %6808 = vmatpush1.msra.mxu0 %v1181
    %6809 = vmatprep.subr.mxu0 0.0
    %6810 = vmatpush1.msra.mxu0 %v1180
    %6811 = vmatprep.subr.mxu0 0.0
    %6812 = vmatpush1.msra.mxu0 %v1179
    %6813 = vmatprep.subr.mxu0 0.0
    %6814 = vmatpush2.msra.mxu0 0.0
    %6815 = vmatprep.subr.mxu0 0.0
    %6816 = vmatpush2.msra.mxu0 0.0
    %6817 = vmatprep.subr.mxu0 0.0
    %6818 = vmatpush2.msra.mxu0 0.0
    %6819 = vmatprep.subr.mxu0 0.0
    %6820 = vmatpush2.msra.mxu0 0.0
    %6821 = vmatprep.subr.mxu0 0.0
    %6822 = vmatpush2.msra.mxu0 0.0
    %6823 = vmatprep.subr.mxu0 0.0
    %6824 = vmatpush2.msra.mxu0 0.0
    %6825 = vmatprep.subr.mxu0 0.0
    %6826 = vmatpush2.msra.mxu0 0.0
    %6827 = vmatprep.subr.mxu0 0.0
    %6828 = vmatpush2.msra.mxu0 0.0
    %6829 = vmatprep.subr.mxu0 0.0
    %6830 = vmatpush2.msra.mxu0 0.0
    %6831 = vmatprep.subr.mxu0 0.0
    %6832 = vmatpush2.msra.mxu0 0.0
    %6833 = vmatprep.subr.mxu0 0.0
    %6834 = vmatpush2.msra.mxu0 0.0
    %6835 = vmatprep.subr.mxu0 0.0
    %6836 = vmatpush2.msra.mxu0 0.0
    %6837 = vmatprep.subr.mxu0 0.0
    %6838 = vmatpush2.msra.mxu0 0.0
    %6839 = vmatprep.subr.mxu0 0.0
    %6840 = vmatpush2.msra.mxu0 0.0
    %6841 = vmatprep.subr.mxu0 0.0
    %6842 = vmatpush2.msra.mxu0 0.0
    %6843 = vmatprep.subr.mxu0 0.0
    %6844 = vmatpush2.msra.mxu0 0.0
    %6845 = vmatprep.mubr.f32.mxu0 0.0
    %6846 = vmatmul.mubr.f32.gmra.mxu0 %v4615
    %v6847 = vpop.f32.mrf.mxu0
    %v6848 = vadd.f32 %v6779, %v6847
    %v6849 = vpop.f32.mrf.mxu0
    %6850 = vmatprep.mubr.f32.mxu0 0.0
    %6851 = vmatmul.mubr.f32.gmra.mxu0 %v4618
    %v6852 = vpop.f32.mrf.mxu0
    %v6853 = vadd.f32 %v6779, %v6852
    %v6854 = vpop.f32.mrf.mxu0
    %6855 = vdwg.mxu0
    %v6857 = vsel %vm3923, %v6691, 0
    %v6860 = vsel %vm3923, %v6767, 0
    %v6863 = vsel %vm3923, %v6772, 0
    %6865 = vmatprep.subr.mxu0 0.0
    %6866 = vmatpush1.xpose.msra.mxu0 0.0
    %6867 = vmatprep.subr.mxu0 0.0
    %6868 = vmatpush1.xpose.msra.mxu0 0.0
    %6869 = vmatprep.subr.mxu0 0.0
    %6870 = vmatpush1.xpose.msra.mxu0 0.0
    %6871 = vmatprep.subr.mxu0 0.0
    %6872 = vmatpush1.xpose.msra.mxu0 0.0
    %6873 = vmatprep.subr.mxu0 0.0
    %6874 = vmatpush1.xpose.msra.mxu0 0.0
    %6875 = vmatprep.subr.mxu0 0.0
    %6876 = vmatpush1.xpose.msra.mxu0 0.0
    %6877 = vmatprep.subr.mxu0 0.0
    %6878 = vmatpush1.xpose.msra.mxu0 0.0
    %6879 = vmatprep.subr.mxu0 0.0
    %6880 = vmatpush1.xpose.msra.mxu0 0.0
    %6881 = vmatprep.subr.mxu0 0.0
    %6882 = vmatpush1.xpose.msra.mxu0 0.0
    %6883 = vmatprep.subr.mxu0 0.0
    %6884 = vmatpush1.xpose.msra.mxu0 0.0
    %6885 = vmatprep.subr.mxu0 0.0
    %6886 = vmatpush1.xpose.msra.mxu0 0.0
    %6887 = vmatprep.subr.mxu0 0.0
    %6888 = vmatpush1.xpose.msra.mxu0 0.0
    %6889 = vmatprep.subr.mxu0 0.0
    %6890 = vmatpush1.xpose.msra.mxu0 0.0
    %6891 = vmatprep.subr.mxu0 0.0
    %6892 = vmatpush1.xpose.msra.mxu0 0.0
    %6893 = vmatprep.subr.mxu0 0.0
    %6894 = vmatpush1.xpose.msra.mxu0 %v6863
    %6895 = vmatprep.subr.mxu0 0.0
    %6896 = vmatpush1.xpose.msra.mxu0 %v6860
    %6897 = vmatprep.subr.mxu0 0.0
    %6898 = vmatpush2.xpose.msra.mxu0 0.0
    %6899 = vmatprep.subr.mxu0 0.0
    %6900 = vmatpush2.xpose.msra.mxu0 0.0
    %6901 = vmatprep.subr.mxu0 0.0
    %6902 = vmatpush2.xpose.msra.mxu0 0.0
    %6903 = vmatprep.subr.mxu0 0.0
    %6904 = vmatpush2.xpose.msra.mxu0 0.0
    %6905 = vmatprep.subr.mxu0 0.0
    %6906 = vmatpush2.xpose.msra.mxu0 0.0
    %6907 = vmatprep.subr.mxu0 0.0
    %6908 = vmatpush2.xpose.msra.mxu0 0.0
    %6909 = vmatprep.subr.mxu0 0.0
    %6910 = vmatpush2.xpose.msra.mxu0 0.0
    %6911 = vmatprep.subr.mxu0 0.0
    %6912 = vmatpush2.xpose.msra.mxu0 0.0
    %6913 = vmatprep.subr.mxu0 0.0
    %6914 = vmatpush2.xpose.msra.mxu0 0.0
    %6915 = vmatprep.subr.mxu0 0.0
    %6916 = vmatpush2.xpose.msra.mxu0 0.0
    %6917 = vmatprep.subr.mxu0 0.0
    %6918 = vmatpush2.xpose.msra.mxu0 0.0
    %6919 = vmatprep.subr.mxu0 0.0
    %6920 = vmatpush2.xpose.msra.mxu0 0.0
    %6921 = vmatprep.subr.mxu0 0.0
    %6922 = vmatpush2.xpose.msra.mxu0 0.0
    %6923 = vmatprep.subr.mxu0 0.0
    %6924 = vmatpush2.xpose.msra.mxu0 0.0
    %6925 = vmatprep.subr.mxu0 0.0
    %6926 = vmatpush2.xpose.msra.mxu0 0.0
    %6927 = vmatprep.subr.mxu0 0.0
    %6928 = vmatpush2.xpose.msra.mxu0 0.0
    %6929 = vmatprep.mubr.f32.mxu0 0.0
    %6930 = vmatmul.mubr.f32.gmra.mxu0 %v6857
    %v6931 = vpop.f32.mrf.mxu0
    %v6932 = vadd.f32 0.0, %v6931
    %v6933 = vpop.f32.mrf.mxu0
    %6934 = vdwg.mxu0
    %v6935 = vsel %vm4008, %v6932, -1e+30
    %v6936 = vsel %vm4003, %v6935, -inf
    %6937 = vmax.xlane.f32.xlu0 %v6936
    %v6938 = vpop.xlane.xlu0 %6937
    %v6939 = vsel %vm4007, %v6938, 0.0
    %v6940 = vsub.f32 %v6935, %v6939
    %v6941 = vmul.f32 %v6940, 1.442695
    %v6942 = vpow.pop %v6941
    %v6943 = vsel %vm4008, %v6942, 0.0
    %v6944 = vsel %vm4003, %v6943, 0.0
    %6945 = vadd.xlane.f32.xlu0 %v6944
    %v6946 = vpop.xlane.xlu0 %6945
    %v6947 = vadd.f32 %v6946, 1e-16
    %v6948 = vrcp.pop %v6947
    %v6949 = vmul.f32 %v6943, %v6948
    %6950 = vrot.lane.b32.xlu0 %v6691, 96
    %v6951 = vpop.permute.xlu0 %6950
    %v6952 = vsel %vm3923, %v6951, 0
    %v6955 = vsel %vm3923, %v6848, 0
    %v6958 = vsel %vm3923, %v6853, 0
    %6960 = vmatprep.subr.mxu0 0.0
    %6961 = vmatpush1.xpose.msra.mxu0 0.0
    %6962 = vmatprep.subr.mxu0 0.0
    %6963 = vmatpush1.xpose.msra.mxu0 0.0
    %6964 = vmatprep.subr.mxu0 0.0
    %6965 = vmatpush1.xpose.msra.mxu0 0.0
    %6966 = vmatprep.subr.mxu0 0.0
    %6967 = vmatpush1.xpose.msra.mxu0 0.0
    %6968 = vmatprep.subr.mxu0 0.0
    %6969 = vmatpush1.xpose.msra.mxu0 0.0
    %6970 = vmatprep.subr.mxu0 0.0
    %6971 = vmatpush1.xpose.msra.mxu0 0.0
    %6972 = vmatprep.subr.mxu0 0.0
    %6973 = vmatpush1.xpose.msra.mxu0 0.0
    %6974 = vmatprep.subr.mxu0 0.0
    %6975 = vmatpush1.xpose.msra.mxu0 0.0
    %6976 = vmatprep.subr.mxu0 0.0
    %6977 = vmatpush1.xpose.msra.mxu0 0.0
    %6978 = vmatprep.subr.mxu0 0.0
    %6979 = vmatpush1.xpose.msra.mxu0 0.0
    %6980 = vmatprep.subr.mxu0 0.0
    %6981 = vmatpush1.xpose.msra.mxu0 0.0
    %6982 = vmatprep.subr.mxu0 0.0
    %6983 = vmatpush1.xpose.msra.mxu0 0.0
    %6984 = vmatprep.subr.mxu0 0.0
    %6985 = vmatpush1.xpose.msra.mxu0 0.0
    %6986 = vmatprep.subr.mxu0 0.0
    %6987 = vmatpush1.xpose.msra.mxu0 0.0
    %6988 = vmatprep.subr.mxu0 0.0
    %6989 = vmatpush1.xpose.msra.mxu0 %v6958
    %6990 = vmatprep.subr.mxu0 0.0
    %6991 = vmatpush1.xpose.msra.mxu0 %v6955
    %6992 = vmatprep.subr.mxu0 0.0
    %6993 = vmatpush2.xpose.msra.mxu0 0.0
    %6994 = vmatprep.subr.mxu0 0.0
    %6995 = vmatpush2.xpose.msra.mxu0 0.0
    %6996 = vmatprep.subr.mxu0 0.0
    %6997 = vmatpush2.xpose.msra.mxu0 0.0
    %6998 = vmatprep.subr.mxu0 0.0
    %6999 = vmatpush2.xpose.msra.mxu0 0.0
    %7000 = vmatprep.subr.mxu0 0.0
    %7001 = vmatpush2.xpose.msra.mxu0 0.0
    %7002 = vmatprep.subr.mxu0 0.0
    %7003 = vmatpush2.xpose.msra.mxu0 0.0
    %7004 = vmatprep.subr.mxu0 0.0
    %7005 = vmatpush2.xpose.msra.mxu0 0.0
    %7006 = vmatprep.subr.mxu0 0.0
    %7007 = vmatpush2.xpose.msra.mxu0 0.0
    %7008 = vmatprep.subr.mxu0 0.0
    %7009 = vmatpush2.xpose.msra.mxu0 0.0
    %7010 = vmatprep.subr.mxu0 0.0
    %7011 = vmatpush2.xpose.msra.mxu0 0.0
    %7012 = vmatprep.subr.mxu0 0.0
    %7013 = vmatpush2.xpose.msra.mxu0 0.0
    %7014 = vmatprep.subr.mxu0 0.0
    %7015 = vmatpush2.xpose.msra.mxu0 0.0
    %7016 = vmatprep.subr.mxu0 0.0
    %7017 = vmatpush2.xpose.msra.mxu0 0.0
    %7018 = vmatprep.subr.mxu0 0.0
    %7019 = vmatpush2.xpose.msra.mxu0 0.0
    %7020 = vmatprep.subr.mxu0 0.0
    %7021 = vmatpush2.xpose.msra.mxu0 0.0
    %7022 = vmatprep.subr.mxu0 0.0
    %7023 = vmatpush2.xpose.msra.mxu0 0.0
    %7024 = vmatprep.mubr.f32.mxu0 0.0
    %7025 = vmatmul.mubr.f32.gmra.mxu0 %v6952
    %v7026 = vpop.f32.mrf.mxu0
    %v7027 = vadd.f32 0.0, %v7026
    %v7028 = vpop.f32.mrf.mxu0
    %7029 = vdwg.mxu0
    %v7030 = vsel %vm4108, %v7027, -1e+30
    %v7031 = vsel %vm4003, %v7030, -inf
    %7032 = vmax.xlane.f32.xlu0 %v7031
    %v7033 = vpop.xlane.xlu0 %7032
    %v7034 = vsel %vm4107, %v7033, 0.0
    %v7035 = vsub.f32 %v7030, %v7034
    %v7036 = vmul.f32 %v7035, 1.442695
    %v7037 = vpow.pop %v7036
    %v7038 = vsel %vm4108, %v7037, 0.0
    %v7039 = vsel %vm4003, %v7038, 0.0
    %7040 = vadd.xlane.f32.xlu0 %v7039
    %v7041 = vpop.xlane.xlu0 %7040
    %v7042 = vadd.f32 %v7041, 1e-16
    %v7043 = vrcp.pop %v7042
    %v7044 = vmul.f32 %v7038, %v7043
    %7045 = vrot.lane.b32.xlu0 %v6848, 96
    %v7046 = vpop.permute.xlu0 %7045
    %7047 = vrot.lane.b32.xlu0 %v6853, 96
    %v7048 = vpop.permute.xlu0 %7047
    %v7052 = vsel %vm1192, %v7044, 0
    %7054 = vmatprep.subr.mxu0 0.0
    %7055 = vmatpush1.msra.mxu0 0.0
    %7056 = vmatprep.subr.mxu0 0.0
    %7057 = vmatpush1.msra.mxu0 0.0
    %7058 = vmatprep.subr.mxu0 0.0
    %7059 = vmatpush1.msra.mxu0 0.0
    %7060 = vmatprep.subr.mxu0 0.0
    %7061 = vmatpush1.msra.mxu0 0.0
    %7062 = vmatprep.subr.mxu0 0.0
    %7063 = vmatpush1.msra.mxu0 0.0
    %7064 = vmatprep.subr.mxu0 0.0
    %7065 = vmatpush1.msra.mxu0 0.0
    %7066 = vmatprep.subr.mxu0 0.0
    %7067 = vmatpush1.msra.mxu0 0.0
    %7068 = vmatprep.subr.mxu0 0.0
    %7069 = vmatpush1.msra.mxu0 0.0
    %7070 = vmatprep.subr.mxu0 0.0
    %7071 = vmatpush1.msra.mxu0 0.0
    %7072 = vmatprep.subr.mxu0 0.0
    %7073 = vmatpush1.msra.mxu0 0.0
    %7074 = vmatprep.subr.mxu0 0.0
    %7075 = vmatpush1.msra.mxu0 0.0
    %7076 = vmatprep.subr.mxu0 0.0
    %7077 = vmatpush1.msra.mxu0 0.0
    %7078 = vmatprep.subr.mxu0 0.0
    %7079 = vmatpush1.msra.mxu0 0.0
    %7080 = vmatprep.subr.mxu0 0.0
    %7081 = vmatpush1.msra.mxu0 0.0
    %7082 = vmatprep.subr.mxu0 0.0
    %7083 = vmatpush1.msra.mxu0 %v7048
    %7084 = vmatprep.subr.mxu0 0.0
    %7085 = vmatpush1.msra.mxu0 %v7046
    %7086 = vmatprep.subr.mxu0 0.0
    %7087 = vmatpush2.msra.mxu0 0.0
    %7088 = vmatprep.subr.mxu0 0.0
    %7089 = vmatpush2.msra.mxu0 0.0
    %7090 = vmatprep.subr.mxu0 0.0
    %7091 = vmatpush2.msra.mxu0 0.0
    %7092 = vmatprep.subr.mxu0 0.0
    %7093 = vmatpush2.msra.mxu0 0.0
    %7094 = vmatprep.subr.mxu0 0.0
    %7095 = vmatpush2.msra.mxu0 0.0
    %7096 = vmatprep.subr.mxu0 0.0
    %7097 = vmatpush2.msra.mxu0 0.0
    %7098 = vmatprep.subr.mxu0 0.0
    %7099 = vmatpush2.msra.mxu0 0.0
    %7100 = vmatprep.subr.mxu0 0.0
    %7101 = vmatpush2.msra.mxu0 0.0
    %7102 = vmatprep.subr.mxu0 0.0
    %7103 = vmatpush2.msra.mxu0 0.0
    %7104 = vmatprep.subr.mxu0 0.0
    %7105 = vmatpush2.msra.mxu0 0.0
    %7106 = vmatprep.subr.mxu0 0.0
    %7107 = vmatpush2.msra.mxu0 0.0
    %7108 = vmatprep.subr.mxu0 0.0
    %7109 = vmatpush2.msra.mxu0 0.0
    %7110 = vmatprep.subr.mxu0 0.0
    %7111 = vmatpush2.msra.mxu0 0.0
    %7112 = vmatprep.subr.mxu0 0.0
    %7113 = vmatpush2.msra.mxu0 0.0
    %7114 = vmatprep.subr.mxu0 0.0
    %7115 = vmatpush2.msra.mxu0 0.0
    %7116 = vmatprep.subr.mxu0 0.0
    %7117 = vmatpush2.msra.mxu0 0.0
    %7118 = vmatprep.mubr.f32.mxu0 0.0
    %7119 = vmatmul.mubr.f32.gmra.mxu0 %v7052
    %v7120 = vpop.f32.mrf.mxu0
    %v7121 = vadd.f32 0.0, %v7120
    %v7122 = vpop.f32.mrf.mxu0
    %7123 = vdwg.mxu0
    %7124 = vrot.lane.b32.xlu0 %v6767, 96
    %v7125 = vpop.permute.xlu0 %7124
    %7126 = vrot.lane.b32.xlu0 %v6772, 96
    %v7127 = vpop.permute.xlu0 %7126
    %v7131 = vsel %vm1192, %v6949, 0
    %7133 = vmatprep.subr.mxu0 0.0
    %7134 = vmatpush1.msra.mxu0 0.0
    %7135 = vmatprep.subr.mxu0 0.0
    %7136 = vmatpush1.msra.mxu0 0.0
    %7137 = vmatprep.subr.mxu0 0.0
    %7138 = vmatpush1.msra.mxu0 0.0
    %7139 = vmatprep.subr.mxu0 0.0
    %7140 = vmatpush1.msra.mxu0 0.0
    %7141 = vmatprep.subr.mxu0 0.0
    %7142 = vmatpush1.msra.mxu0 0.0
    %7143 = vmatprep.subr.mxu0 0.0
    %7144 = vmatpush1.msra.mxu0 0.0
    %7145 = vmatprep.subr.mxu0 0.0
    %7146 = vmatpush1.msra.mxu0 0.0
    %7147 = vmatprep.subr.mxu0 0.0
    %7148 = vmatpush1.msra.mxu0 0.0
    %7149 = vmatprep.subr.mxu0 0.0
    %7150 = vmatpush1.msra.mxu0 0.0
    %7151 = vmatprep.subr.mxu0 0.0
    %7152 = vmatpush1.msra.mxu0 0.0
    %7153 = vmatprep.subr.mxu0 0.0
    %7154 = vmatpush1.msra.mxu0 0.0
    %7155 = vmatprep.subr.mxu0 0.0
    %7156 = vmatpush1.msra.mxu0 0.0
    %7157 = vmatprep.subr.mxu0 0.0
    %7158 = vmatpush1.msra.mxu0 0.0
    %7159 = vmatprep.subr.mxu0 0.0
    %7160 = vmatpush1.msra.mxu0 0.0
    %7161 = vmatprep.subr.mxu0 0.0
    %7162 = vmatpush1.msra.mxu0 %v7127
    %7163 = vmatprep.subr.mxu0 0.0
    %7164 = vmatpush1.msra.mxu0 %v7125
    %7165 = vmatprep.subr.mxu0 0.0
    %7166 = vmatpush2.msra.mxu0 0.0
    %7167 = vmatprep.subr.mxu0 0.0
    %7168 = vmatpush2.msra.mxu0 0.0
    %7169 = vmatprep.subr.mxu0 0.0
    %7170 = vmatpush2.msra.mxu0 0.0
    %7171 = vmatprep.subr.mxu0 0.0
    %7172 = vmatpush2.msra.mxu0 0.0
    %7173 = vmatprep.subr.mxu0 0.0
    %7174 = vmatpush2.msra.mxu0 0.0
    %7175 = vmatprep.subr.mxu0 0.0
    %7176 = vmatpush2.msra.mxu0 0.0
    %7177 = vmatprep.subr.mxu0 0.0
    %7178 = vmatpush2.msra.mxu0 0.0
    %7179 = vmatprep.subr.mxu0 0.0
    %7180 = vmatpush2.msra.mxu0 0.0
    %7181 = vmatprep.subr.mxu0 0.0
    %7182 = vmatpush2.msra.mxu0 0.0
    %7183 = vmatprep.subr.mxu0 0.0
    %7184 = vmatpush2.msra.mxu0 0.0
    %7185 = vmatprep.subr.mxu0 0.0
    %7186 = vmatpush2.msra.mxu0 0.0
    %7187 = vmatprep.subr.mxu0 0.0
    %7188 = vmatpush2.msra.mxu0 0.0
    %7189 = vmatprep.subr.mxu0 0.0
    %7190 = vmatpush2.msra.mxu0 0.0
    %7191 = vmatprep.subr.mxu0 0.0
    %7192 = vmatpush2.msra.mxu0 0.0
    %7193 = vmatprep.subr.mxu0 0.0
    %7194 = vmatpush2.msra.mxu0 0.0
    %7195 = vmatprep.subr.mxu0 0.0
    %7196 = vmatpush2.msra.mxu0 0.0
    %7197 = vmatprep.mubr.f32.mxu0 0.0
    %7198 = vmatmul.mubr.f32.gmra.mxu0 %v7131
    %v7199 = vpop.f32.mrf.mxu0
    %v7200 = vadd.f32 %v7121, %v7199
    %v7201 = vpop.f32.mrf.mxu0
    %7202 = vdwg.mxu0
    %7203 = vrot.lane.b32.xlu0 %v6691, 64
    %v7204 = vpop.permute.xlu0 %7203
    %v7206 = vadd.f32 %v7200, %v7204
    %v7208 = vlaneseq
    %v7209 = vshrl.u32 %v7208, 7
    %v7210 = vsub.s32 0, %v7209
    %v7211 = vrot.slane %v1067, %v7210
    %v7214 = vsel %vm3923, %v5575, 0
    %v7217 = vsel %vm3923, %v5576, 0
    %7219 = vmatprep.subr.mxu0 0.0
    %7220 = vmatpush1.msra.mxu0 0.0
    %7221 = vmatprep.subr.mxu0 0.0
    %7222 = vmatpush1.msra.mxu0 0.0
    %7223 = vmatprep.subr.mxu0 0.0
    %7224 = vmatpush1.msra.mxu0 0.0
    %7225 = vmatprep.subr.mxu0 0.0
    %7226 = vmatpush1.msra.mxu0 0.0
    %7227 = vmatprep.subr.mxu0 0.0
    %7228 = vmatpush1.msra.mxu0 0.0
    %7229 = vmatprep.subr.mxu0 0.0
    %7230 = vmatpush1.msra.mxu0 0.0
    %7231 = vmatprep.subr.mxu0 0.0
    %7232 = vmatpush1.msra.mxu0 0.0
    %7233 = vmatprep.subr.mxu0 0.0
    %7234 = vmatpush1.msra.mxu0 0.0
    %7235 = vmatprep.subr.mxu0 0.0
    %7236 = vmatpush1.msra.mxu0 0.0
    %7237 = vmatprep.subr.mxu0 0.0
    %7238 = vmatpush1.msra.mxu0 0.0
    %7239 = vmatprep.subr.mxu0 0.0
    %7240 = vmatpush1.msra.mxu0 0.0
    %7241 = vmatprep.subr.mxu0 0.0
    %7242 = vmatpush1.msra.mxu0 0.0
    %7243 = vmatprep.subr.mxu0 0.0
    %7244 = vmatpush1.msra.mxu0 %v1071
    %7245 = vmatprep.subr.mxu0 0.0
    %7246 = vmatpush1.msra.mxu0 %v1070
    %7247 = vmatprep.subr.mxu0 0.0
    %7248 = vmatpush1.msra.mxu0 %v1069
    %7249 = vmatprep.subr.mxu0 0.0
    %7250 = vmatpush1.msra.mxu0 %v1068
    %7251 = vmatprep.subr.mxu0 0.0
    %7252 = vmatpush2.msra.mxu0 0.0
    %7253 = vmatprep.subr.mxu0 0.0
    %7254 = vmatpush2.msra.mxu0 0.0
    %7255 = vmatprep.subr.mxu0 0.0
    %7256 = vmatpush2.msra.mxu0 0.0
    %7257 = vmatprep.subr.mxu0 0.0
    %7258 = vmatpush2.msra.mxu0 0.0
    %7259 = vmatprep.subr.mxu0 0.0
    %7260 = vmatpush2.msra.mxu0 0.0
    %7261 = vmatprep.subr.mxu0 0.0
    %7262 = vmatpush2.msra.mxu0 0.0
    %7263 = vmatprep.subr.mxu0 0.0
    %7264 = vmatpush2.msra.mxu0 0.0
    %7265 = vmatprep.subr.mxu0 0.0
    %7266 = vmatpush2.msra.mxu0 0.0
    %7267 = vmatprep.subr.mxu0 0.0
    %7268 = vmatpush2.msra.mxu0 0.0
    %7269 = vmatprep.subr.mxu0 0.0
    %7270 = vmatpush2.msra.mxu0 0.0
    %7271 = vmatprep.subr.mxu0 0.0
    %7272 = vmatpush2.msra.mxu0 0.0
    %7273 = vmatprep.subr.mxu0 0.0
    %7274 = vmatpush2.msra.mxu0 0.0
    %7275 = vmatprep.subr.mxu0 0.0
    %7276 = vmatpush2.msra.mxu0 0.0
    %7277 = vmatprep.subr.mxu0 0.0
    %7278 = vmatpush2.msra.mxu0 0.0
    %7279 = vmatprep.subr.mxu0 0.0
    %7280 = vmatpush2.msra.mxu0 0.0
    %7281 = vmatprep.subr.mxu0 0.0
    %7282 = vmatpush2.msra.mxu0 0.0
    %7283 = vmatprep.mubr.f32.mxu0 0.0
    %7284 = vmatmul.mubr.f32.gmra.mxu0 %v7214
    %v7285 = vpop.f32.mrf.mxu0
    %v7286 = vadd.f32 %v7211, %v7285
    %v7287 = vpop.f32.mrf.mxu0
    %7288 = vmatprep.mubr.f32.mxu0 0.0
    %7289 = vmatmul.mubr.f32.gmra.mxu0 %v7217
    %v7290 = vpop.f32.mrf.mxu0
    %v7291 = vadd.f32 %v7211, %v7290
    %v7292 = vpop.f32.mrf.mxu0
    %7293 = vdwg.mxu0
    %v7295 = vlaneseq
    %v7296 = vshrl.u32 %v7295, 7
    %v7297 = vsub.s32 0, %v7296
    %v7298 = vrot.slane %v1057, %v7297
    %v7301 = vsel %vm3923, %v6613, 0
    %v7304 = vsel %vm3923, %v6614, 0
    %7306 = vmatprep.subr.mxu0 0.0
    %7307 = vmatpush1.msra.mxu0 0.0
    %7308 = vmatprep.subr.mxu0 0.0
    %7309 = vmatpush1.msra.mxu0 0.0
    %7310 = vmatprep.subr.mxu0 0.0
    %7311 = vmatpush1.msra.mxu0 0.0
    %7312 = vmatprep.subr.mxu0 0.0
    %7313 = vmatpush1.msra.mxu0 0.0
    %7314 = vmatprep.subr.mxu0 0.0
    %7315 = vmatpush1.msra.mxu0 0.0
    %7316 = vmatprep.subr.mxu0 0.0
    %7317 = vmatpush1.msra.mxu0 0.0
    %7318 = vmatprep.subr.mxu0 0.0
    %7319 = vmatpush1.msra.mxu0 0.0
    %7320 = vmatprep.subr.mxu0 0.0
    %7321 = vmatpush1.msra.mxu0 0.0
    %7322 = vmatprep.subr.mxu0 0.0
    %7323 = vmatpush1.msra.mxu0 0.0
    %7324 = vmatprep.subr.mxu0 0.0
    %7325 = vmatpush1.msra.mxu0 0.0
    %7326 = vmatprep.subr.mxu0 0.0
    %7327 = vmatpush1.msra.mxu0 0.0
    %7328 = vmatprep.subr.mxu0 0.0
    %7329 = vmatpush1.msra.mxu0 0.0
    %7330 = vmatprep.subr.mxu0 0.0
    %7331 = vmatpush1.msra.mxu0 %v1061
    %7332 = vmatprep.subr.mxu0 0.0
    %7333 = vmatpush1.msra.mxu0 %v1060
    %7334 = vmatprep.subr.mxu0 0.0
    %7335 = vmatpush1.msra.mxu0 %v1059
    %7336 = vmatprep.subr.mxu0 0.0
    %7337 = vmatpush1.msra.mxu0 %v1058
    %7338 = vmatprep.subr.mxu0 0.0
    %7339 = vmatpush2.msra.mxu0 0.0
    %7340 = vmatprep.subr.mxu0 0.0
    %7341 = vmatpush2.msra.mxu0 0.0
    %7342 = vmatprep.subr.mxu0 0.0
    %7343 = vmatpush2.msra.mxu0 0.0
    %7344 = vmatprep.subr.mxu0 0.0
    %7345 = vmatpush2.msra.mxu0 0.0
    %7346 = vmatprep.subr.mxu0 0.0
    %7347 = vmatpush2.msra.mxu0 0.0
    %7348 = vmatprep.subr.mxu0 0.0
    %7349 = vmatpush2.msra.mxu0 0.0
    %7350 = vmatprep.subr.mxu0 0.0
    %7351 = vmatpush2.msra.mxu0 0.0
    %7352 = vmatprep.subr.mxu0 0.0
    %7353 = vmatpush2.msra.mxu0 0.0
    %7354 = vmatprep.subr.mxu0 0.0
    %7355 = vmatpush2.msra.mxu0 0.0
    %7356 = vmatprep.subr.mxu0 0.0
    %7357 = vmatpush2.msra.mxu0 0.0
    %7358 = vmatprep.subr.mxu0 0.0
    %7359 = vmatpush2.msra.mxu0 0.0
    %7360 = vmatprep.subr.mxu0 0.0
    %7361 = vmatpush2.msra.mxu0 0.0
    %7362 = vmatprep.subr.mxu0 0.0
    %7363 = vmatpush2.msra.mxu0 0.0
    %7364 = vmatprep.subr.mxu0 0.0
    %7365 = vmatpush2.msra.mxu0 0.0
    %7366 = vmatprep.subr.mxu0 0.0
    %7367 = vmatpush2.msra.mxu0 0.0
    %7368 = vmatprep.subr.mxu0 0.0
    %7369 = vmatpush2.msra.mxu0 0.0
    %7370 = vmatprep.mubr.f32.mxu0 0.0
    %7371 = vmatmul.mubr.f32.gmra.mxu0 %v7301
    %v7372 = vpop.f32.mrf.mxu0
    %v7373 = vadd.f32 %v7298, %v7372
    %v7374 = vpop.f32.mrf.mxu0
    %7375 = vmatprep.mubr.f32.mxu0 0.0
    %7376 = vmatmul.mubr.f32.gmra.mxu0 %v7304
    %v7377 = vpop.f32.mrf.mxu0
    %v7378 = vadd.f32 %v7298, %v7377
    %v7379 = vpop.f32.mrf.mxu0
    %7380 = vdwg.mxu0
    %v7382 = vlaneseq
    %v7383 = vshrl.u32 %v7382, 7
    %v7384 = vsub.s32 0, %v7383
    %v7385 = vrot.slane %v1062, %v7384
    %v7388 = vsel %vm3923, %v7206, 0
    %7390 = vmatprep.subr.mxu0 0.0
    %7391 = vmatpush1.msra.mxu0 0.0
    %7392 = vmatprep.subr.mxu0 0.0
    %7393 = vmatpush1.msra.mxu0 0.0
    %7394 = vmatprep.subr.mxu0 0.0
    %7395 = vmatpush1.msra.mxu0 0.0
    %7396 = vmatprep.subr.mxu0 0.0
    %7397 = vmatpush1.msra.mxu0 0.0
    %7398 = vmatprep.subr.mxu0 0.0
    %7399 = vmatpush1.msra.mxu0 0.0
    %7400 = vmatprep.subr.mxu0 0.0
    %7401 = vmatpush1.msra.mxu0 0.0
    %7402 = vmatprep.subr.mxu0 0.0
    %7403 = vmatpush1.msra.mxu0 0.0
    %7404 = vmatprep.subr.mxu0 0.0
    %7405 = vmatpush1.msra.mxu0 0.0
    %7406 = vmatprep.subr.mxu0 0.0
    %7407 = vmatpush1.msra.mxu0 0.0
    %7408 = vmatprep.subr.mxu0 0.0
    %7409 = vmatpush1.msra.mxu0 0.0
    %7410 = vmatprep.subr.mxu0 0.0
    %7411 = vmatpush1.msra.mxu0 0.0
    %7412 = vmatprep.subr.mxu0 0.0
    %7413 = vmatpush1.msra.mxu0 0.0
    %7414 = vmatprep.subr.mxu0 0.0
    %7415 = vmatpush1.msra.mxu0 %v1066
    %7416 = vmatprep.subr.mxu0 0.0
    %7417 = vmatpush1.msra.mxu0 %v1065
    %7418 = vmatprep.subr.mxu0 0.0
    %7419 = vmatpush1.msra.mxu0 %v1064
    %7420 = vmatprep.subr.mxu0 0.0
    %7421 = vmatpush1.msra.mxu0 %v1063
    %7422 = vmatprep.subr.mxu0 0.0
    %7423 = vmatpush2.msra.mxu0 0.0
    %7424 = vmatprep.subr.mxu0 0.0
    %7425 = vmatpush2.msra.mxu0 0.0
    %7426 = vmatprep.subr.mxu0 0.0
    %7427 = vmatpush2.msra.mxu0 0.0
    %7428 = vmatprep.subr.mxu0 0.0
    %7429 = vmatpush2.msra.mxu0 0.0
    %7430 = vmatprep.subr.mxu0 0.0
    %7431 = vmatpush2.msra.mxu0 0.0
    %7432 = vmatprep.subr.mxu0 0.0
    %7433 = vmatpush2.msra.mxu0 0.0
    %7434 = vmatprep.subr.mxu0 0.0
    %7435 = vmatpush2.msra.mxu0 0.0
    %7436 = vmatprep.subr.mxu0 0.0
    %7437 = vmatpush2.msra.mxu0 0.0
    %7438 = vmatprep.subr.mxu0 0.0
    %7439 = vmatpush2.msra.mxu0 0.0
    %7440 = vmatprep.subr.mxu0 0.0
    %7441 = vmatpush2.msra.mxu0 0.0
    %7442 = vmatprep.subr.mxu0 0.0
    %7443 = vmatpush2.msra.mxu0 0.0
    %7444 = vmatprep.subr.mxu0 0.0
    %7445 = vmatpush2.msra.mxu0 0.0
    %7446 = vmatprep.subr.mxu0 0.0
    %7447 = vmatpush2.msra.mxu0 0.0
    %7448 = vmatprep.subr.mxu0 0.0
    %7449 = vmatpush2.msra.mxu0 0.0
    %7450 = vmatprep.subr.mxu0 0.0
    %7451 = vmatpush2.msra.mxu0 0.0
    %7452 = vmatprep.subr.mxu0 0.0
    %7453 = vmatpush2.msra.mxu0 0.0
    %7454 = vmatprep.mubr.f32.mxu0 0.0
    %7455 = vmatmul.mubr.f32.gmra.mxu0 %v7388
    %v7456 = vpop.f32.mrf.mxu0
    %v7457 = vadd.f32 %v7385, %v7456
    %v7458 = vpop.f32.mrf.mxu0
    %7459 = vdwg.mxu0
    %v7461 = vlaneseq
    %v7462 = vshrl.u32 %v7461, 7
    %v7463 = vsub.s32 0, %v7462
    %v7464 = vrot.slane %v977, %v7463
    %v7467 = vsel %vm3923, %v7286, 0
    %v7470 = vsel %vm3923, %v7291, 0
    %7472 = vmatprep.subr.mxu0 0.0
    %7473 = vmatpush1.msra.mxu0 0.0
    %7474 = vmatprep.subr.mxu0 0.0
    %7475 = vmatpush1.msra.mxu0 0.0
    %7476 = vmatprep.subr.mxu0 0.0
    %7477 = vmatpush1.msra.mxu0 0.0
    %7478 = vmatprep.subr.mxu0 0.0
    %7479 = vmatpush1.msra.mxu0 0.0
    %7480 = vmatprep.subr.mxu0 0.0
    %7481 = vmatpush1.msra.mxu0 0.0
    %7482 = vmatprep.subr.mxu0 0.0
    %7483 = vmatpush1.msra.mxu0 0.0
    %7484 = vmatprep.subr.mxu0 0.0
    %7485 = vmatpush1.msra.mxu0 0.0
    %7486 = vmatprep.subr.mxu0 0.0
    %7487 = vmatpush1.msra.mxu0 0.0
    %7488 = vmatprep.subr.mxu0 0.0
    %7489 = vmatpush1.msra.mxu0 0.0
    %7490 = vmatprep.subr.mxu0 0.0
    %7491 = vmatpush1.msra.mxu0 0.0
    %7492 = vmatprep.subr.mxu0 0.0
    %7493 = vmatpush1.msra.mxu0 0.0
    %7494 = vmatprep.subr.mxu0 0.0
    %7495 = vmatpush1.msra.mxu0 0.0
    %7496 = vmatprep.subr.mxu0 0.0
    %7497 = vmatpush1.msra.mxu0 %v981
    %7498 = vmatprep.subr.mxu0 0.0
    %7499 = vmatpush1.msra.mxu0 %v980
    %7500 = vmatprep.subr.mxu0 0.0
    %7501 = vmatpush1.msra.mxu0 %v979
    %7502 = vmatprep.subr.mxu0 0.0
    %7503 = vmatpush1.msra.mxu0 %v978
    %7504 = vmatprep.subr.mxu0 0.0
    %7505 = vmatpush2.msra.mxu0 0.0
    %7506 = vmatprep.subr.mxu0 0.0
    %7507 = vmatpush2.msra.mxu0 0.0
    %7508 = vmatprep.subr.mxu0 0.0
    %7509 = vmatpush2.msra.mxu0 0.0
    %7510 = vmatprep.subr.mxu0 0.0
    %7511 = vmatpush2.msra.mxu0 0.0
    %7512 = vmatprep.subr.mxu0 0.0
    %7513 = vmatpush2.msra.mxu0 0.0
    %7514 = vmatprep.subr.mxu0 0.0
    %7515 = vmatpush2.msra.mxu0 0.0
    %7516 = vmatprep.subr.mxu0 0.0
    %7517 = vmatpush2.msra.mxu0 0.0
    %7518 = vmatprep.subr.mxu0 0.0
    %7519 = vmatpush2.msra.mxu0 0.0
    %7520 = vmatprep.subr.mxu0 0.0
    %7521 = vmatpush2.msra.mxu0 0.0
    %7522 = vmatprep.subr.mxu0 0.0
    %7523 = vmatpush2.msra.mxu0 0.0
    %7524 = vmatprep.subr.mxu0 0.0
    %7525 = vmatpush2.msra.mxu0 0.0
    %7526 = vmatprep.subr.mxu0 0.0
    %7527 = vmatpush2.msra.mxu0 0.0
    %7528 = vmatprep.subr.mxu0 0.0
    %7529 = vmatpush2.msra.mxu0 0.0
    %7530 = vmatprep.subr.mxu0 0.0
    %7531 = vmatpush2.msra.mxu0 0.0
    %7532 = vmatprep.subr.mxu0 0.0
    %7533 = vmatpush2.msra.mxu0 0.0
    %7534 = vmatprep.subr.mxu0 0.0
    %7535 = vmatpush2.msra.mxu0 0.0
    %7536 = vmatprep.mubr.f32.mxu0 0.0
    %7537 = vmatmul.mubr.f32.gmra.mxu0 %v7467
    %v7538 = vpop.f32.mrf.mxu0
    %v7539 = vadd.f32 %v7464, %v7538
    %v7540 = vpop.f32.mrf.mxu0
    %7541 = vmatprep.mubr.f32.mxu0 0.0
    %7542 = vmatmul.mubr.f32.gmra.mxu0 %v7470
    %v7543 = vpop.f32.mrf.mxu0
    %v7544 = vadd.f32 %v7464, %v7543
    %v7545 = vpop.f32.mrf.mxu0
    %7546 = vdwg.mxu0
    %v7547 = vtanh.pop %v7539
    %v7548 = vtanh.pop %v7544
    %vm7549 = vcmask 64512
    %7550 = vst.msk [vmem:[%s127] sm:$0xff] %vm7549, %v7547
    %7551 = vst.msk [vmem:[%s127 + $0x8] sm:$0xff] %vm7549, %v7548
    %v7553 = vlaneseq
    %v7554 = vshrl.u32 %v7553, 7
    %v7555 = vsub.s32 0, %v7554
    %v7556 = vrot.slane %v967, %v7555
    %v7559 = vsel %vm3923, %v7373, 0
    %v7562 = vsel %vm3923, %v7378, 0
    %7564 = vmatprep.subr.mxu0 0.0
    %7565 = vmatpush1.msra.mxu0 0.0
    %7566 = vmatprep.subr.mxu0 0.0
    %7567 = vmatpush1.msra.mxu0 0.0
    %7568 = vmatprep.subr.mxu0 0.0
    %7569 = vmatpush1.msra.mxu0 0.0
    %7570 = vmatprep.subr.mxu0 0.0
    %7571 = vmatpush1.msra.mxu0 0.0
    %7572 = vmatprep.subr.mxu0 0.0
    %7573 = vmatpush1.msra.mxu0 0.0
    %7574 = vmatprep.subr.mxu0 0.0
    %7575 = vmatpush1.msra.mxu0 0.0
    %7576 = vmatprep.subr.mxu0 0.0
    %7577 = vmatpush1.msra.mxu0 0.0
    %7578 = vmatprep.subr.mxu0 0.0
    %7579 = vmatpush1.msra.mxu0 0.0
    %7580 = vmatprep.subr.mxu0 0.0
    %7581 = vmatpush1.msra.mxu0 0.0
    %7582 = vmatprep.subr.mxu0 0.0
    %7583 = vmatpush1.msra.mxu0 0.0
    %7584 = vmatprep.subr.mxu0 0.0
    %7585 = vmatpush1.msra.mxu0 0.0
    %7586 = vmatprep.subr.mxu0 0.0
    %7587 = vmatpush1.msra.mxu0 0.0
    %7588 = vmatprep.subr.mxu0 0.0
    %7589 = vmatpush1.msra.mxu0 %v971
    %7590 = vmatprep.subr.mxu0 0.0
    %7591 = vmatpush1.msra.mxu0 %v970
    %7592 = vmatprep.subr.mxu0 0.0
    %7593 = vmatpush1.msra.mxu0 %v969
    %7594 = vmatprep.subr.mxu0 0.0
    %7595 = vmatpush1.msra.mxu0 %v968
    %7596 = vmatprep.subr.mxu0 0.0
    %7597 = vmatpush2.msra.mxu0 0.0
    %7598 = vmatprep.subr.mxu0 0.0
    %7599 = vmatpush2.msra.mxu0 0.0
    %7600 = vmatprep.subr.mxu0 0.0
    %7601 = vmatpush2.msra.mxu0 0.0
    %7602 = vmatprep.subr.mxu0 0.0
    %7603 = vmatpush2.msra.mxu0 0.0
    %7604 = vmatprep.subr.mxu0 0.0
    %7605 = vmatpush2.msra.mxu0 0.0
    %7606 = vmatprep.subr.mxu0 0.0
    %7607 = vmatpush2.msra.mxu0 0.0
    %7608 = vmatprep.subr.mxu0 0.0
    %7609 = vmatpush2.msra.mxu0 0.0
    %7610 = vmatprep.subr.mxu0 0.0
    %7611 = vmatpush2.msra.mxu0 0.0
    %7612 = vmatprep.subr.mxu0 0.0
    %7613 = vmatpush2.msra.mxu0 0.0
    %7614 = vmatprep.subr.mxu0 0.0
    %7615 = vmatpush2.msra.mxu0 0.0
    %7616 = vmatprep.subr.mxu0 0.0
    %7617 = vmatpush2.msra.mxu0 0.0
    %7618 = vmatprep.subr.mxu0 0.0
    %7619 = vmatpush2.msra.mxu0 0.0
    %7620 = vmatprep.subr.mxu0 0.0
    %7621 = vmatpush2.msra.mxu0 0.0
    %7622 = vmatprep.subr.mxu0 0.0
    %7623 = vmatpush2.msra.mxu0 0.0
    %7624 = vmatprep.subr.mxu0 0.0
    %7625 = vmatpush2.msra.mxu0 0.0
    %7626 = vmatprep.subr.mxu0 0.0
    %7627 = vmatpush2.msra.mxu0 0.0
    %7628 = vmatprep.mubr.f32.mxu0 0.0
    %7629 = vmatmul.mubr.f32.gmra.mxu0 %v7559
    %v7630 = vpop.f32.mrf.mxu0
    %v7631 = vadd.f32 %v7556, %v7630
    %v7632 = vpop.f32.mrf.mxu0
    %7633 = vmatprep.mubr.f32.mxu0 0.0
    %7634 = vmatmul.mubr.f32.gmra.mxu0 %v7562
    %v7635 = vpop.f32.mrf.mxu0
    %v7636 = vadd.f32 %v7556, %v7635
    %v7637 = vpop.f32.mrf.mxu0
    %7638 = vdwg.mxu0
    %v7639 = vtanh.pop %v7631
    %v7640 = vtanh.pop %v7636
    %7641 = vst.msk [vmem:[%s129] sm:$0xff] %vm7549, %v7639
    %7642 = vst.msk [vmem:[%s129 + $0x8] sm:$0xff] %vm7549, %v7640
    %v7644 = vlaneseq
    %v7645 = vshrl.u32 %v7644, 7
    %v7646 = vsub.s32 0, %v7645
    %v7647 = vrot.slane %v972, %v7646
    %v7650 = vsel %vm3923, %v7457, 0
    %7652 = vmatprep.subr.mxu0 0.0
    %7653 = vmatpush1.msra.mxu0 0.0
    %7654 = vmatprep.subr.mxu0 0.0
    %7655 = vmatpush1.msra.mxu0 0.0
    %7656 = vmatprep.subr.mxu0 0.0
    %7657 = vmatpush1.msra.mxu0 0.0
    %7658 = vmatprep.subr.mxu0 0.0
    %7659 = vmatpush1.msra.mxu0 0.0
    %7660 = vmatprep.subr.mxu0 0.0
    %7661 = vmatpush1.msra.mxu0 0.0
    %7662 = vmatprep.subr.mxu0 0.0
    %7663 = vmatpush1.msra.mxu0 0.0
    %7664 = vmatprep.subr.mxu0 0.0
    %7665 = vmatpush1.msra.mxu0 0.0
    %7666 = vmatprep.subr.mxu0 0.0
    %7667 = vmatpush1.msra.mxu0 0.0
    %7668 = vmatprep.subr.mxu0 0.0
    %7669 = vmatpush1.msra.mxu0 0.0
    %7670 = vmatprep.subr.mxu0 0.0
    %7671 = vmatpush1.msra.mxu0 0.0
    %7672 = vmatprep.subr.mxu0 0.0
    %7673 = vmatpush1.msra.mxu0 0.0
    %7674 = vmatprep.subr.mxu0 0.0
    %7675 = vmatpush1.msra.mxu0 0.0
    %7676 = vmatprep.subr.mxu0 0.0
    %7677 = vmatpush1.msra.mxu0 %v976
    %7678 = vmatprep.subr.mxu0 0.0
    %7679 = vmatpush1.msra.mxu0 %v975
    %7680 = vmatprep.subr.mxu0 0.0
    %7681 = vmatpush1.msra.mxu0 %v974
    %7682 = vmatprep.subr.mxu0 0.0
    %7683 = vmatpush1.msra.mxu0 %v973
    %7684 = vmatprep.subr.mxu0 0.0
    %7685 = vmatpush2.msra.mxu0 0.0
    %7686 = vmatprep.subr.mxu0 0.0
    %7687 = vmatpush2.msra.mxu0 0.0
    %7688 = vmatprep.subr.mxu0 0.0
    %7689 = vmatpush2.msra.mxu0 0.0
    %7690 = vmatprep.subr.mxu0 0.0
    %7691 = vmatpush2.msra.mxu0 0.0
    %7692 = vmatprep.subr.mxu0 0.0
    %7693 = vmatpush2.msra.mxu0 0.0
    %7694 = vmatprep.subr.mxu0 0.0
    %7695 = vmatpush2.msra.mxu0 0.0
    %7696 = vmatprep.subr.mxu0 0.0
    %7697 = vmatpush2.msra.mxu0 0.0
    %7698 = vmatprep.subr.mxu0 0.0
    %7699 = vmatpush2.msra.mxu0 0.0
    %7700 = vmatprep.subr.mxu0 0.0
    %7701 = vmatpush2.msra.mxu0 0.0
    %7702 = vmatprep.subr.mxu0 0.0
    %7703 = vmatpush2.msra.mxu0 0.0
    %7704 = vmatprep.subr.mxu0 0.0
    %7705 = vmatpush2.msra.mxu0 0.0
    %7706 = vmatprep.subr.mxu0 0.0
    %7707 = vmatpush2.msra.mxu0 0.0
    %7708 = vmatprep.subr.mxu0 0.0
    %7709 = vmatpush2.msra.mxu0 0.0
    %7710 = vmatprep.subr.mxu0 0.0
    %7711 = vmatpush2.msra.mxu0 0.0
    %7712 = vmatprep.subr.mxu0 0.0
    %7713 = vmatpush2.msra.mxu0 0.0
    %7714 = vmatprep.subr.mxu0 0.0
    %7715 = vmatpush2.msra.mxu0 0.0
    %7716 = vmatprep.mubr.f32.mxu0 0.0
    %7717 = vmatmul.mubr.f32.gmra.mxu0 %v7650
    %v7718 = vpop.f32.mrf.mxu0
    %v7719 = vadd.f32 %v7647, %v7718
    %v7720 = vpop.f32.mrf.mxu0
    %7721 = vdwg.mxu0
    %v7722 = vtanh.pop %v7719
    %vm7723 = vcmask 60416
    %7724 = vst.msk [vmem:[#allocation86] sm:$0xf] %vm7723, %v7722
    // Predicated region
    $region474: #{tpu_custom_call.1} parent=1 // pred_check
      _
    $region475: #{tpu_custom_call.1} parent=1 // pred_check_branch
      %7726 = sbr.rel (0) target = $region477
    $region476: #{tpu_custom_call.1} parent=1 // pred_region
      _
    $region477: #{tpu_custom_call.1} parent=1 // pred_fallthru
      _
    // Predicated region
    $region478: #{tpu_custom_call.1} parent=1 // pred_check
      _
    $region479: #{tpu_custom_call.1} parent=1 // pred_check_branch
      %7728 = sbr.rel (0) target = $region481
    $region480: #{tpu_custom_call.1} parent=1 // pred_region
      _
    $region481: #{tpu_custom_call.1} parent=1 // pred_fallthru
      _
    // Predicated region
    $region482: #{tpu_custom_call.1} parent=1 // pred_check
      _
    $region483: #{tpu_custom_call.1} parent=1 // pred_check_branch
      %7730 = sbr.rel (0) target = $region485
    $region484: #{tpu_custom_call.1} parent=1 // pred_region
      %s7732 = ssub.s32 64, 64
      %7733 = vsyncadd [#allocation4], %s7732
      %s7735 = sshll.u32 [#allocation86], 4
      %s7736 = int_to_ptr.vmem [resolvable:$true] %s7735
      %7738 = dma.vmem_to_hbm [thread:$0]  %s7736, 64, %s131, [#allocation4]
    $region485: #{tpu_custom_call.1} parent=1 // pred_fallthru
      _
    // Predicated region
    $region486: #{tpu_custom_call.1} parent=1 // pred_check
      _
    $region487: #{tpu_custom_call.1} parent=1 // pred_check_branch
      %7740 = sbr.rel (0) target = $region489
    $region488: #{tpu_custom_call.1} parent=1 // pred_region
      _
    $region489: #{tpu_custom_call.1} parent=1 // pred_fallthru
      _
    // Predicated region
    $region490: #{tpu_custom_call.1} parent=1 // pred_check
      _
    $region491: #{tpu_custom_call.1} parent=1 // pred_check_branch
      %7742 = sbr.rel (0) target = $region493
    $region492: #{tpu_custom_call.1} parent=1 // pred_region
      _
    $region493: #{tpu_custom_call.1} parent=1 // pred_fallthru
      _
    // Predicated region
    $region494: #{tpu_custom_call.1} parent=1 // pred_check
      _
    $region495: #{tpu_custom_call.1} parent=1 // pred_check_branch
      %7744 = sbr.rel (0) target = $region497
    $region496: #{tpu_custom_call.1} parent=1 // pred_region
      %7745 = dma.done [#allocation4], 64
    $region497: #{tpu_custom_call.1} parent=1 // pred_fallthru
      _
    %7746 = vsyncpa [#allocation3], 1
    %7747 = vsyncpa [#allocation6], 1
    %7748 = vsyncpa [#allocation9], 1
    %7749 = vsyncpa [#allocation12], 1
    %7750 = vsyncpa [#allocation15], 1
    %7751 = vsyncpa [#allocation18], 1
    %7752 = vsyncpa [#allocation21], 1
    %7753 = vsyncpa [#allocation24], 1
    %7754 = vsyncpa [#allocation27], 1
    %7755 = vsyncpa [#allocation30], 1
    %7756 = vsyncpa [#allocation33], 1
    %7757 = vsyncpa [#allocation36], 1
    %7758 = vsyncpa [#allocation39], 1
    %7759 = vsyncpa [#allocation42], 1
    %7760 = vsyncpa [#allocation45], 1
    %7761 = vsyncpa [#allocation48], 1
    %7762 = vsyncpa [#allocation51], 1
    %7763 = vsyncpa [#allocation54], 1
    %7764 = vsyncpa [#allocation57], 1
    %7765 = vsyncpa [#allocation60], 1
    %7766 = vsyncpa [#allocation63], 1
    %7767 = vsyncpa [#allocation66], 1
    %7768 = vsyncpa [#allocation69], 1
    %7769 = vsyncpa [#allocation72], 1
    %7770 = vsyncpa [#allocation75], 1
    %7771 = vsyncpa [#allocation78], 1
    %7772 = vsyncpa [#allocation81], 1
    %7773 = vsyncpa [#allocation84], 1
    %7774 = vsyncpa [#allocation4], 1

</llo_original>
